<compile_context>
chip_gen: v7x
topology: tpu7x:2x2x1
jax: 0.10.0
libtpu: 0.0.40
codegen_flags: <defaults>
</compile_context>

<pallas_src>
import jax
import jax.numpy as jnp
from jax.experimental import pallas as pl
from jax.experimental.pallas import tpu as pltpu

# ----------------------------- config (small) -----------------------------
B = 2                 # batch
C = 3                 # image channels
IMG = 32              # image height/width
PATCH = 16            # patch size (as in clip-vit-base-patch16)
GRID = IMG // PATCH   # 2
N_PATCH = GRID * GRID # 4 patches
T_VALID = N_PATCH + 1 # 5 tokens (CLS + patches)
T = 8                 # padded token count (sublane aligned); padded keys are masked
BT = B * T            # 16 = folded batch*tokens (matmul M dim)
D = 256               # vision hidden size (scaled-down CLIP)
HEADS = 4
HEAD_DIM = D // HEADS # 64 (matches CLIP's per-head dim)
MLP = 4 * D           # 1024
N_LAYERS = 2
VE_OUT = 768          # "image feature" dim (ve_hidden_size in VisionProj)
PROJ = 512            # VisionProj output dim
CPP = C * PATCH * PATCH
EPS = 1e-5
L2_EPS = 1e-12        # torch F.normalize-style epsilon


# ----------------------------- fused kernel -----------------------------
def _ln(x, g, b):
    """LayerNorm over the last (lane) dim, f32 math."""
    mean = jnp.mean(x, axis=-1, keepdims=True)
    xc = x - mean
    var = jnp.mean(xc * xc, axis=-1, keepdims=True)
    return xc * jax.lax.rsqrt(var + EPS) * g + b


def _fused_vit_kernel(
    # inputs
    patches_ref, patch_w_ref, tok_add_ref, mask_ref, pre_g_ref, pre_b_ref,
    ln1_g_ref, ln1_b_ref, qkv_w_ref, qkv_b_ref, o_w_ref, o_b_ref,
    ln2_g_ref, ln2_b_ref, fc1_w_ref, fc1_b_ref, fc2_w_ref, fc2_b_ref,
    post_g_ref, post_b_ref, vis_w_ref, vproj_w_ref, vproj_b_ref,
    # output
    out_ref,
):
    """Single grid step.  Whole forward for all B images, activations register-resident."""
    # ---- patch embedding + CLS + pos + pre-LN : one full-tile compute ----
    pe = jnp.dot(patches_ref[...], patch_w_ref[...],
                 preferred_element_type=jnp.float32)                 # (BT, D)
    h = _ln(pe + tok_add_ref[...], pre_g_ref[...], pre_b_ref[...])   # (BT, D) f32

    scale = HEAD_DIM ** -0.5
    mask_bias = mask_ref[...]                                        # (BT, BT): 0 / -1e30

    for l in range(N_LAYERS):
        # ---- self-attention block ----
        x = _ln(h, ln1_g_ref[l], ln1_b_ref[l])
        qkv = jnp.dot(x.astype(jnp.bfloat16), qkv_w_ref[l],
                      preferred_element_type=jnp.float32) + qkv_b_ref[l]   # (BT, 3D)

        head_outs = []
        for hh in range(HEADS):
            lo = hh * HEAD_DIM
            qh = (qkv[:, lo:lo + HEAD_DIM] * scale).astype(jnp.bfloat16)
            kh = qkv[:, D + lo:D + lo + HEAD_DIM].astype(jnp.bfloat16)
            vh = qkv[:, 2 * D + lo:2 * D + lo + HEAD_DIM].astype(jnp.bfloat16)
            s = jax.lax.dot_general(qh, kh, (((1,), (1,)), ((), ())),
                                    preferred_element_type=jnp.float32)    # q @ k^T (BT, BT)
            s = s + mask_bias                 # block-diagonal batch mask + padded-key mask
            s = s - jnp.max(s, axis=-1, keepdims=True)
            probs = jnp.exp(s)
            probs = probs / jnp.sum(probs, axis=-1, keepdims=True)
            head_outs.append(jnp.dot(probs.astype(jnp.bfloat16), vh,
                                     preferred_element_type=jnp.float32))  # (BT, HEAD_DIM)
        attn = jnp.concatenate(head_outs, axis=-1)                          # (BT, D)

        h = h + jnp.dot(attn.astype(jnp.bfloat16), o_w_ref[l],
                        preferred_element_type=jnp.float32) + o_b_ref[l]

        # ---- MLP block (quick_gelu) ----
        x = _ln(h, ln2_g_ref[l], ln2_b_ref[l])
        y = jnp.dot(x.astype(jnp.bfloat16), fc1_w_ref[l],
                    preferred_element_type=jnp.float32) + fc1_b_ref[l]
        y = y * jax.nn.sigmoid(1.702 * y)
        h = h + jnp.dot(y.astype(jnp.bfloat16), fc2_w_ref[l],
                        preferred_element_type=jnp.float32) + fc2_b_ref[l]

    # ---- head: post-LN(CLS rows) -> visual_projection -> L2-normalize -> VisionProj ----
    pooled = jnp.concatenate([h[b * T:b * T + 1, :] for b in range(B)], axis=0)  # (B, D)
    pooled = _ln(pooled, post_g_ref[...], post_b_ref[...])
    feats = jnp.dot(pooled.astype(jnp.bfloat16), vis_w_ref[...],
                    preferred_element_type=jnp.float32)                          # (B, VE_OUT)
    inv = jax.lax.rsqrt(jnp.sum(feats * feats, axis=-1, keepdims=True) + L2_EPS)
    fn = feats * inv                                                             # L2-normalized
    out_ref[...] = (jnp.dot(fn.astype(jnp.bfloat16), vproj_w_ref[...],
                            preferred_element_type=jnp.float32)
                    + vproj_b_ref[...]).astype(out_ref.dtype)                    # (B, PROJ)


# ----------------------------- parameters -----------------------------
def init_params(key):
    keys = iter(jax.random.split(key, 64))

    def nrm(shape, scale=0.02):
        return scale * jax.random.normal(next(keys), shape, jnp.float32)

    class_emb = nrm((D,))
    pos_emb = nrm((T_VALID, D))
    # Token additive table: row0 = class+pos0, rows 1..4 = pos, padded rows = 0.
    tok_add = jnp.zeros((T, D), jnp.float32).at[:T_VALID].set(pos_emb).at[0].add(class_emb)

    p = {
        # conv patch embedding, PyTorch weight layout (D, C, P, P), no bias (as in CLIP)
        "patch_w": nrm((D, C, PATCH, PATCH)).reshape(D, CPP).T.astype(jnp.bfloat16),
        "tok_add": tok_add,
        "pre_ln_g": jnp.ones((1, D), jnp.float32),
        "pre_ln_b": jnp.zeros((1, D), jnp.float32),
        "post_ln_g": jnp.ones((1, D), jnp.float32),
        "post_ln_b": jnp.zeros((1, D), jnp.float32),
        "visual_proj_w": nrm((D, VE_OUT)).astype(jnp.bfloat16),      # CLIP visual_projection (no bias)
        "vision_proj_w": nrm((VE_OUT, PROJ)).astype(jnp.bfloat16),   # VisionProj Linear(768, 512)
        "vision_proj_b": nrm((PROJ,)).reshape(1, PROJ),
    }

    qkv_w, qkv_b, o_w, o_b = [], [], [], []
    fc1_w, fc1_b, fc2_w, fc2_b = [], [], [], []
    for _ in range(N_LAYERS):
        qw, kw, vw = nrm((D, D)), nrm((D, D)), nrm((D, D))
        qb, kb, vb = nrm((D,)), nrm((D,)), nrm((D,))
        qkv_w.append(jnp.concatenate([qw, kw, vw], axis=1))          # fused QKV (D, 3D)
        qkv_b.append(jnp.concatenate([qb, kb, vb]).reshape(1, 3 * D))
        o_w.append(nrm((D, D)));     o_b.append(nrm((D,)).reshape(1, D))
        fc1_w.append(nrm((D, MLP))); fc1_b.append(nrm((MLP,)).reshape(1, MLP))
        fc2_w.append(nrm((MLP, D))); fc2_b.append(nrm((D,)).reshape(1, D))

    p["ln1_g"] = jnp.ones((N_LAYERS, 1, D), jnp.float32)
    p["ln1_b"] = jnp.zeros((N_LAYERS, 1, D), jnp.float32)
    p["ln2_g"] = jnp.ones((N_LAYERS, 1, D), jnp.float32)
    p["ln2_b"] = jnp.zeros((N_LAYERS, 1, D), jnp.float32)
    p["qkv_w"] = jnp.stack(qkv_w).astype(jnp.bfloat16)
    p["qkv_b"] = jnp.stack(qkv_b)
    p["o_w"] = jnp.stack(o_w).astype(jnp.bfloat16)
    p["o_b"] = jnp.stack(o_b)
    p["fc1_w"] = jnp.stack(fc1_w).astype(jnp.bfloat16)
    p["fc1_b"] = jnp.stack(fc1_b)
    p["fc2_w"] = jnp.stack(fc2_w).astype(jnp.bfloat16)
    p["fc2_b"] = jnp.stack(fc2_b)
    return p


# ----------------------------- forward -----------------------------
def vision_encoder_forward(images, params):
    """images: (B, C, IMG, IMG) NCHW -> (B, PROJ)."""
    p = params

    # Patch extraction: conv(stride=patch) == matmul on flattened patches (cheap XLA relayout).
    x = images.reshape(B, C, GRID, PATCH, GRID, PATCH)
    patches = x.transpose(0, 2, 4, 1, 3, 5).reshape(B, N_PATCH, CPP)
    # Pad to T token rows (row 0 = CLS slot, rows > N_PATCH = pad) so the embed matmul is a
    # single full-tile compute inside the kernel; fold batch into the row (sublane) axis.
    padded = jnp.zeros((B, T, CPP), jnp.float32).at[:, 1:1 + N_PATCH, :].set(patches)
    padded = padded.reshape(BT, CPP).astype(jnp.bfloat16)

    tok_add = jnp.tile(p["tok_add"], (B, 1))                      # (BT, D) CLS + pos per image

    # Block-diagonal attention-mask bias: key j attends to query i only if same image and
    # key row is a valid (non-pad) token.
    tok = jnp.arange(BT)
    same_img = (tok[:, None] // T) == (tok[None, :] // T)
    key_valid = (tok[None, :] % T) < T_VALID
    mask_bias = jnp.where(same_img & key_valid, 0.0, -1e30).astype(jnp.float32)

    def full(shape):  # full-array resident VMEM block (read from HBM exactly once)
        return pl.BlockSpec(shape, lambda i: (0,) * len(shape))

    in_specs = [
        full((BT, CPP)),                                          # padded patches
        full((CPP, D)),                                           # patch_w
        full((BT, D)),                                            # tok_add (CLS+pos)
        full((BT, BT)),                                           # attention mask bias
        full((1, D)), full((1, D)),                               # pre-LN g/b
        full((N_LAYERS, 1, D)), full((N_LAYERS, 1, D)),           # ln1 g/b
        full((N_LAYERS, D, 3 * D)), full((N_LAYERS, 1, 3 * D)),   # fused QKV w/b
        full((N_LAYERS, D, D)), full((N_LAYERS, 1, D)),           # out-proj w/b
        full((N_LAYERS, 1, D)), full((N_LAYERS, 1, D)),           # ln2 g/b
        full((N_LAYERS, D, MLP)), full((N_LAYERS, 1, MLP)),       # fc1 w/b
        full((N_LAYERS, MLP, D)), full((N_LAYERS, 1, D)),         # fc2 w/b
        full((1, D)), full((1, D)),                               # post-LN g/b
        full((D, VE_OUT)),                                        # visual_projection
        full((VE_OUT, PROJ)), full((1, PROJ)),                    # VisionProj w/b
    ]

    out = pl.pallas_call(
        _fused_vit_kernel,
        out_shape=jax.ShapeDtypeStruct((B, PROJ), jnp.float32),
        grid_spec=pltpu.PrefetchScalarGridSpec(
            num_scalar_prefetch=0,
            grid=(1,),                       # single step: all weights resident, no re-DMA
            in_specs=in_specs,
            out_specs=full((B, PROJ)),
        ),
        compiler_params=pltpu.CompilerParams(
            dimension_semantics=("arbitrary",),
            vmem_limit_bytes=32 << 20),      # ~4.7 MB weights (+buffers) — ample headroom
    )(
        padded, p["patch_w"], tok_add, mask_bias, p["pre_ln_g"], p["pre_ln_b"],
        p["ln1_g"], p["ln1_b"], p["qkv_w"], p["qkv_b"], p["o_w"], p["o_b"],
        p["ln2_g"], p["ln2_b"], p["fc1_w"], p["fc1_b"], p["fc2_w"], p["fc2_b"],
        p["post_ln_g"], p["post_ln_b"], p["visual_proj_w"],
        p["vision_proj_w"], p["vision_proj_b"],
    )
    return out


# ----------------------------- main -----------------------------
if __name__ == "__main__":
    key = jax.random.PRNGKey(0)
    pkey, xkey = jax.random.split(key)
    params = init_params(pkey)
    images = jax.random.normal(xkey, (B, C, IMG, IMG), jnp.float32)

    fwd = jax.jit(lambda im: vision_encoder_forward(im, params))
    out = fwd(images)
    jax.block_until_ready(out)
    assert out.shape == (B, PROJ) and out.dtype == jnp.float32
    assert bool(jnp.all(jnp.isfinite(out)))
    print("KERNEL_OK")
</pallas_src>

<mosaic_0001>
module attributes {stable_mosaic.version = 11 : i64} {
  func.func @_fused_vit_kernel(%arg0: i32, %arg1: memref<16x768xbf16, #tpu.memory_space<vmem>>, %arg2: memref<768x256xbf16, #tpu.memory_space<vmem>>, %arg3: memref<16x256xf32, #tpu.memory_space<vmem>>, %arg4: memref<16x16xf32, #tpu.memory_space<vmem>>, %arg5: memref<1x256xf32, #tpu.memory_space<vmem>>, %arg6: memref<1x256xf32, #tpu.memory_space<vmem>>, %arg7: memref<2x1x256xf32, #tpu.memory_space<vmem>>, %arg8: memref<2x1x256xf32, #tpu.memory_space<vmem>>, %arg9: memref<2x256x768xbf16, #tpu.memory_space<vmem>>, %arg10: memref<2x1x768xf32, #tpu.memory_space<vmem>>, %arg11: memref<2x256x256xbf16, #tpu.memory_space<vmem>>, %arg12: memref<2x1x256xf32, #tpu.memory_space<vmem>>, %arg13: memref<2x1x256xf32, #tpu.memory_space<vmem>>, %arg14: memref<2x1x256xf32, #tpu.memory_space<vmem>>, %arg15: memref<2x256x1024xbf16, #tpu.memory_space<vmem>>, %arg16: memref<2x1x1024xf32, #tpu.memory_space<vmem>>, %arg17: memref<2x1024x256xbf16, #tpu.memory_space<vmem>>, %arg18: memref<2x1x256xf32, #tpu.memory_space<vmem>>, %arg19: memref<1x256xf32, #tpu.memory_space<vmem>>, %arg20: memref<1x256xf32, #tpu.memory_space<vmem>>, %arg21: memref<256x768xbf16, #tpu.memory_space<vmem>>, %arg22: memref<768x512xbf16, #tpu.memory_space<vmem>>, %arg23: memref<1x512xf32, #tpu.memory_space<vmem>>, %arg24: memref<2x512xf32, #tpu.memory_space<vmem>>) attributes {dimension_semantics = [#tpu.dimension_semantics<arbitrary>], iteration_bounds = array<i64: 1>, scalar_prefetch = 0 : i64, scratch_operands = 0 : i64, tpu.core_type = #tpu.core_type<tc>, window_params = [{pipeline_mode = #tpu.pipeline_mode<synchronous>, transform_indices = @transform_0, window_bounds = array<i64: 16, 768>}, {pipeline_mode = #tpu.pipeline_mode<synchronous>, transform_indices = @transform_1, window_bounds = array<i64: 768, 256>}, {pipeline_mode = #tpu.pipeline_mode<synchronous>, transform_indices = @transform_2, window_bounds = array<i64: 16, 256>}, {pipeline_mode = #tpu.pipeline_mode<synchronous>, transform_indices = @transform_3, window_bounds = array<i64: 16, 16>}, {pipeline_mode = #tpu.pipeline_mode<synchronous>, transform_indices = @transform_4, window_bounds = array<i64: 1, 256>}, {pipeline_mode = #tpu.pipeline_mode<synchronous>, transform_indices = @transform_5, window_bounds = array<i64: 1, 256>}, {pipeline_mode = #tpu.pipeline_mode<synchronous>, transform_indices = @transform_6, window_bounds = array<i64: 2, 1, 256>}, {pipeline_mode = #tpu.pipeline_mode<synchronous>, transform_indices = @transform_7, window_bounds = array<i64: 2, 1, 256>}, {pipeline_mode = #tpu.pipeline_mode<synchronous>, transform_indices = @transform_8, window_bounds = array<i64: 2, 256, 768>}, {pipeline_mode = #tpu.pipeline_mode<synchronous>, transform_indices = @transform_9, window_bounds = array<i64: 2, 1, 768>}, {pipeline_mode = #tpu.pipeline_mode<synchronous>, transform_indices = @transform_10, window_bounds = array<i64: 2, 256, 256>}, {pipeline_mode = #tpu.pipeline_mode<synchronous>, transform_indices = @transform_11, window_bounds = array<i64: 2, 1, 256>}, {pipeline_mode = #tpu.pipeline_mode<synchronous>, transform_indices = @transform_12, window_bounds = array<i64: 2, 1, 256>}, {pipeline_mode = #tpu.pipeline_mode<synchronous>, transform_indices = @transform_13, window_bounds = array<i64: 2, 1, 256>}, {pipeline_mode = #tpu.pipeline_mode<synchronous>, transform_indices = @transform_14, window_bounds = array<i64: 2, 256, 1024>}, {pipeline_mode = #tpu.pipeline_mode<synchronous>, transform_indices = @transform_15, window_bounds = array<i64: 2, 1, 1024>}, {pipeline_mode = #tpu.pipeline_mode<synchronous>, transform_indices = @transform_16, window_bounds = array<i64: 2, 1024, 256>}, {pipeline_mode = #tpu.pipeline_mode<synchronous>, transform_indices = @transform_17, window_bounds = array<i64: 2, 1, 256>}, {pipeline_mode = #tpu.pipeline_mode<synchronous>, transform_indices = @transform_18, window_bounds = array<i64: 1, 256>}, {pipeline_mode = #tpu.pipeline_mode<synchronous>, transform_indices = @transform_19, window_bounds = array<i64: 1, 256>}, {pipeline_mode = #tpu.pipeline_mode<synchronous>, transform_indices = @transform_20, window_bounds = array<i64: 256, 768>}, {pipeline_mode = #tpu.pipeline_mode<synchronous>, transform_indices = @transform_21, window_bounds = array<i64: 768, 512>}, {pipeline_mode = #tpu.pipeline_mode<synchronous>, transform_indices = @transform_22, window_bounds = array<i64: 1, 512>}, {pipeline_mode = #tpu.pipeline_mode<synchronous>, transform_indices = @transform_23, window_bounds = array<i64: 2, 512>}]} {
    %c0 = arith.constant 0 : index
    %c0_0 = arith.constant 0 : index
    %0 = vector.load %arg1[%c0, %c0_0] : memref<16x768xbf16, #tpu.memory_space<vmem>>, vector<16x768xbf16>
    %c0_1 = arith.constant 0 : index
    %c0_2 = arith.constant 0 : index
    %1 = vector.load %arg2[%c0_1, %c0_2] : memref<768x256xbf16, #tpu.memory_space<vmem>>, vector<768x256xbf16>
    %cst = arith.constant dense<0.000000e+00> : vector<16x256xf32>
    %2 = tpu.matmul %0, %1, %cst {dimension_numbers = #tpu.dot_dimension_numbers<[1], [0], [0], [1], [0, 0, 1, 1], [], []>} : vector<16x768xbf16>, vector<768x256xbf16>, vector<16x256xf32> -> vector<16x256xf32>
    %c0_3 = arith.constant 0 : index
    %c0_4 = arith.constant 0 : index
    %3 = vector.load %arg3[%c0_3, %c0_4] : memref<16x256xf32, #tpu.memory_space<vmem>>, vector<16x256xf32>
    %4 = arith.addf %2, %3 : vector<16x256xf32>
    %c0_5 = arith.constant 0 : index
    %c0_6 = arith.constant 0 : index
    %5 = vector.load %arg5[%c0_5, %c0_6] : memref<1x256xf32, #tpu.memory_space<vmem>>, vector<1x256xf32>
    %c0_7 = arith.constant 0 : index
    %c0_8 = arith.constant 0 : index
    %6 = vector.load %arg6[%c0_7, %c0_8] : memref<1x256xf32, #tpu.memory_space<vmem>>, vector<1x256xf32>
    %cst_9 = arith.constant dense<0.000000e+00> : vector<16xf32>
    %7 = vector.multi_reduction <add>, %4, %cst_9 [1] : vector<16x256xf32> to vector<16xf32>
    %8 = vector.shape_cast %7 : vector<16xf32> to vector<16x1xf32>
    %cst_10 = arith.constant 2.560000e+02 : f32
    %9 = vector.broadcast %cst_10 : f32 to vector<16x1xf32>
    %10 = arith.divf %8, %9 : vector<16x1xf32>
    %11 = vector.broadcast %10 : vector<16x1xf32> to vector<16x256xf32>
    %12 = arith.subf %4, %11 : vector<16x256xf32>
    %13 = arith.mulf %12, %12 : vector<16x256xf32>
    %cst_11 = arith.constant dense<0.000000e+00> : vector<16xf32>
    %14 = vector.multi_reduction <add>, %13, %cst_11 [1] : vector<16x256xf32> to vector<16xf32>
    %15 = vector.shape_cast %14 : vector<16xf32> to vector<16x1xf32>
    %cst_12 = arith.constant 2.560000e+02 : f32
    %16 = vector.broadcast %cst_12 : f32 to vector<16x1xf32>
    %17 = arith.divf %15, %16 : vector<16x1xf32>
    %cst_13 = arith.constant 9.99999974E-6 : f32
    %18 = vector.broadcast %cst_13 : f32 to vector<16x1xf32>
    %19 = arith.addf %17, %18 : vector<16x1xf32>
    %20 = math.rsqrt %19 : vector<16x1xf32>
    %21 = vector.broadcast %20 : vector<16x1xf32> to vector<16x256xf32>
    %22 = arith.mulf %12, %21 : vector<16x256xf32>
    %23 = vector.broadcast %5 : vector<1x256xf32> to vector<16x256xf32>
    %24 = arith.mulf %22, %23 : vector<16x256xf32>
    %25 = vector.broadcast %6 : vector<1x256xf32> to vector<16x256xf32>
    %26 = arith.addf %24, %25 : vector<16x256xf32>
    %c0_14 = arith.constant 0 : index
    %c0_15 = arith.constant 0 : index
    %27 = vector.load %arg4[%c0_14, %c0_15] : memref<16x16xf32, #tpu.memory_space<vmem>>, vector<16x16xf32>
    %c0_16 = arith.constant 0 : index
    %c0_17 = arith.constant 0 : index
    %c0_18 = arith.constant 0 : index
    %28 = vector.load %arg7[%c0_16, %c0_17, %c0_18] : memref<2x1x256xf32, #tpu.memory_space<vmem>>, vector<1x1x256xf32>
    %29 = vector.shape_cast %28 : vector<1x1x256xf32> to vector<1x256xf32>
    %c0_19 = arith.constant 0 : index
    %c0_20 = arith.constant 0 : index
    %c0_21 = arith.constant 0 : index
    %30 = vector.load %arg8[%c0_19, %c0_20, %c0_21] : memref<2x1x256xf32, #tpu.memory_space<vmem>>, vector<1x1x256xf32>
    %31 = vector.shape_cast %30 : vector<1x1x256xf32> to vector<1x256xf32>
    %cst_22 = arith.constant dense<0.000000e+00> : vector<16xf32>
    %32 = vector.multi_reduction <add>, %26, %cst_22 [1] : vector<16x256xf32> to vector<16xf32>
    %33 = vector.shape_cast %32 : vector<16xf32> to vector<16x1xf32>
    %cst_23 = arith.constant 2.560000e+02 : f32
    %34 = vector.broadcast %cst_23 : f32 to vector<16x1xf32>
    %35 = arith.divf %33, %34 : vector<16x1xf32>
    %36 = vector.broadcast %35 : vector<16x1xf32> to vector<16x256xf32>
    %37 = arith.subf %26, %36 : vector<16x256xf32>
    %38 = arith.mulf %37, %37 : vector<16x256xf32>
    %cst_24 = arith.constant dense<0.000000e+00> : vector<16xf32>
    %39 = vector.multi_reduction <add>, %38, %cst_24 [1] : vector<16x256xf32> to vector<16xf32>
    %40 = vector.shape_cast %39 : vector<16xf32> to vector<16x1xf32>
    %cst_25 = arith.constant 2.560000e+02 : f32
    %41 = vector.broadcast %cst_25 : f32 to vector<16x1xf32>
    %42 = arith.divf %40, %41 : vector<16x1xf32>
    %cst_26 = arith.constant 9.99999974E-6 : f32
    %43 = vector.broadcast %cst_26 : f32 to vector<16x1xf32>
    %44 = arith.addf %42, %43 : vector<16x1xf32>
    %45 = math.rsqrt %44 : vector<16x1xf32>
    %46 = vector.broadcast %45 : vector<16x1xf32> to vector<16x256xf32>
    %47 = arith.mulf %37, %46 : vector<16x256xf32>
    %48 = vector.broadcast %29 : vector<1x256xf32> to vector<16x256xf32>
    %49 = arith.mulf %47, %48 : vector<16x256xf32>
    %50 = vector.broadcast %31 : vector<1x256xf32> to vector<16x256xf32>
    %51 = arith.addf %49, %50 : vector<16x256xf32>
    %52 = arith.truncf %51 : vector<16x256xf32> to vector<16x256xbf16>
    %c0_27 = arith.constant 0 : index
    %c0_28 = arith.constant 0 : index
    %c0_29 = arith.constant 0 : index
    %53 = vector.load %arg9[%c0_27, %c0_28, %c0_29] : memref<2x256x768xbf16, #tpu.memory_space<vmem>>, vector<1x256x768xbf16>
    %54 = vector.shape_cast %53 : vector<1x256x768xbf16> to vector<256x768xbf16>
    %cst_30 = arith.constant dense<0.000000e+00> : vector<16x768xf32>
    %55 = tpu.matmul %52, %54, %cst_30 {dimension_numbers = #tpu.dot_dimension_numbers<[1], [0], [0], [1], [0, 0, 1, 1], [], []>} : vector<16x256xbf16>, vector<256x768xbf16>, vector<16x768xf32> -> vector<16x768xf32>
    %c0_31 = arith.constant 0 : index
    %c0_32 = arith.constant 0 : index
    %c0_33 = arith.constant 0 : index
    %56 = vector.load %arg10[%c0_31, %c0_32, %c0_33] : memref<2x1x768xf32, #tpu.memory_space<vmem>>, vector<1x1x768xf32>
    %57 = vector.shape_cast %56 : vector<1x1x768xf32> to vector<1x768xf32>
    %58 = vector.broadcast %57 : vector<1x768xf32> to vector<16x768xf32>
    %59 = arith.addf %55, %58 : vector<16x768xf32>
    %60 = vector.extract_strided_slice %59 {offsets = [0, 0], sizes = [16, 64], strides = [1, 1]} : vector<16x768xf32> to vector<16x64xf32>
    %cst_34 = arith.constant 1.250000e-01 : f32
    %61 = vector.broadcast %cst_34 : f32 to vector<16x64xf32>
    %62 = arith.mulf %60, %61 : vector<16x64xf32>
    %63 = arith.truncf %62 : vector<16x64xf32> to vector<16x64xbf16>
    %64 = vector.extract_strided_slice %59 {offsets = [0, 256], sizes = [16, 64], strides = [1, 1]} : vector<16x768xf32> to vector<16x64xf32>
    %65 = arith.truncf %64 : vector<16x64xf32> to vector<16x64xbf16>
    %66 = vector.extract_strided_slice %59 {offsets = [0, 512], sizes = [16, 64], strides = [1, 1]} : vector<16x768xf32> to vector<16x64xf32>
    %67 = arith.truncf %66 : vector<16x64xf32> to vector<16x64xbf16>
    %cst_35 = arith.constant dense<0.000000e+00> : vector<16x16xf32>
    %68 = tpu.matmul %63, %65, %cst_35 {dimension_numbers = #tpu.dot_dimension_numbers<[1], [1], [0], [0], [0, 0, 1, 0], [], []>} : vector<16x64xbf16>, vector<16x64xbf16>, vector<16x16xf32> -> vector<16x16xf32>
    %69 = arith.addf %68, %27 : vector<16x16xf32>
    %cst_36 = arith.constant dense<0xFF800000> : vector<16xf32>
    %70 = vector.multi_reduction <maximumf>, %69, %cst_36 [1] : vector<16x16xf32> to vector<16xf32>
    %71 = vector.shape_cast %70 : vector<16xf32> to vector<16x1xf32>
    %72 = vector.broadcast %71 : vector<16x1xf32> to vector<16x16xf32>
    %73 = arith.subf %69, %72 : vector<16x16xf32>
    %74 = math.exp %73 : vector<16x16xf32>
    %cst_37 = arith.constant dense<0.000000e+00> : vector<16xf32>
    %75 = vector.multi_reduction <add>, %74, %cst_37 [1] : vector<16x16xf32> to vector<16xf32>
    %76 = vector.shape_cast %75 : vector<16xf32> to vector<16x1xf32>
    %77 = vector.broadcast %76 : vector<16x1xf32> to vector<16x16xf32>
    %78 = arith.divf %74, %77 : vector<16x16xf32>
    %79 = arith.truncf %78 : vector<16x16xf32> to vector<16x16xbf16>
    %cst_38 = arith.constant dense<0.000000e+00> : vector<16x64xf32>
    %80 = tpu.matmul %79, %67, %cst_38 {dimension_numbers = #tpu.dot_dimension_numbers<[1], [0], [0], [1], [0, 0, 1, 1], [], []>} : vector<16x16xbf16>, vector<16x64xbf16>, vector<16x64xf32> -> vector<16x64xf32>
    %81 = vector.extract_strided_slice %59 {offsets = [0, 64], sizes = [16, 64], strides = [1, 1]} : vector<16x768xf32> to vector<16x64xf32>
    %cst_39 = arith.constant 1.250000e-01 : f32
    %82 = vector.broadcast %cst_39 : f32 to vector<16x64xf32>
    %83 = arith.mulf %81, %82 : vector<16x64xf32>
    %84 = arith.truncf %83 : vector<16x64xf32> to vector<16x64xbf16>
    %85 = vector.extract_strided_slice %59 {offsets = [0, 320], sizes = [16, 64], strides = [1, 1]} : vector<16x768xf32> to vector<16x64xf32>
    %86 = arith.truncf %85 : vector<16x64xf32> to vector<16x64xbf16>
    %87 = vector.extract_strided_slice %59 {offsets = [0, 576], sizes = [16, 64], strides = [1, 1]} : vector<16x768xf32> to vector<16x64xf32>
    %88 = arith.truncf %87 : vector<16x64xf32> to vector<16x64xbf16>
    %cst_40 = arith.constant dense<0.000000e+00> : vector<16x16xf32>
    %89 = tpu.matmul %84, %86, %cst_40 {dimension_numbers = #tpu.dot_dimension_numbers<[1], [1], [0], [0], [0, 0, 1, 0], [], []>} : vector<16x64xbf16>, vector<16x64xbf16>, vector<16x16xf32> -> vector<16x16xf32>
    %90 = arith.addf %89, %27 : vector<16x16xf32>
    %cst_41 = arith.constant dense<0xFF800000> : vector<16xf32>
    %91 = vector.multi_reduction <maximumf>, %90, %cst_41 [1] : vector<16x16xf32> to vector<16xf32>
    %92 = vector.shape_cast %91 : vector<16xf32> to vector<16x1xf32>
    %93 = vector.broadcast %92 : vector<16x1xf32> to vector<16x16xf32>
    %94 = arith.subf %90, %93 : vector<16x16xf32>
    %95 = math.exp %94 : vector<16x16xf32>
    %cst_42 = arith.constant dense<0.000000e+00> : vector<16xf32>
    %96 = vector.multi_reduction <add>, %95, %cst_42 [1] : vector<16x16xf32> to vector<16xf32>
    %97 = vector.shape_cast %96 : vector<16xf32> to vector<16x1xf32>
    %98 = vector.broadcast %97 : vector<16x1xf32> to vector<16x16xf32>
    %99 = arith.divf %95, %98 : vector<16x16xf32>
    %100 = arith.truncf %99 : vector<16x16xf32> to vector<16x16xbf16>
    %cst_43 = arith.constant dense<0.000000e+00> : vector<16x64xf32>
    %101 = tpu.matmul %100, %88, %cst_43 {dimension_numbers = #tpu.dot_dimension_numbers<[1], [0], [0], [1], [0, 0, 1, 1], [], []>} : vector<16x16xbf16>, vector<16x64xbf16>, vector<16x64xf32> -> vector<16x64xf32>
    %102 = vector.extract_strided_slice %59 {offsets = [0, 128], sizes = [16, 64], strides = [1, 1]} : vector<16x768xf32> to vector<16x64xf32>
    %cst_44 = arith.constant 1.250000e-01 : f32
    %103 = vector.broadcast %cst_44 : f32 to vector<16x64xf32>
    %104 = arith.mulf %102, %103 : vector<16x64xf32>
    %105 = arith.truncf %104 : vector<16x64xf32> to vector<16x64xbf16>
    %106 = vector.extract_strided_slice %59 {offsets = [0, 384], sizes = [16, 64], strides = [1, 1]} : vector<16x768xf32> to vector<16x64xf32>
    %107 = arith.truncf %106 : vector<16x64xf32> to vector<16x64xbf16>
    %108 = vector.extract_strided_slice %59 {offsets = [0, 640], sizes = [16, 64], strides = [1, 1]} : vector<16x768xf32> to vector<16x64xf32>
    %109 = arith.truncf %108 : vector<16x64xf32> to vector<16x64xbf16>
    %cst_45 = arith.constant dense<0.000000e+00> : vector<16x16xf32>
    %110 = tpu.matmul %105, %107, %cst_45 {dimension_numbers = #tpu.dot_dimension_numbers<[1], [1], [0], [0], [0, 0, 1, 0], [], []>} : vector<16x64xbf16>, vector<16x64xbf16>, vector<16x16xf32> -> vector<16x16xf32>
    %111 = arith.addf %110, %27 : vector<16x16xf32>
    %cst_46 = arith.constant dense<0xFF800000> : vector<16xf32>
    %112 = vector.multi_reduction <maximumf>, %111, %cst_46 [1] : vector<16x16xf32> to vector<16xf32>
    %113 = vector.shape_cast %112 : vector<16xf32> to vector<16x1xf32>
    %114 = vector.broadcast %113 : vector<16x1xf32> to vector<16x16xf32>
    %115 = arith.subf %111, %114 : vector<16x16xf32>
    %116 = math.exp %115 : vector<16x16xf32>
    %cst_47 = arith.constant dense<0.000000e+00> : vector<16xf32>
    %117 = vector.multi_reduction <add>, %116, %cst_47 [1] : vector<16x16xf32> to vector<16xf32>
    %118 = vector.shape_cast %117 : vector<16xf32> to vector<16x1xf32>
    %119 = vector.broadcast %118 : vector<16x1xf32> to vector<16x16xf32>
    %120 = arith.divf %116, %119 : vector<16x16xf32>
    %121 = arith.truncf %120 : vector<16x16xf32> to vector<16x16xbf16>
    %cst_48 = arith.constant dense<0.000000e+00> : vector<16x64xf32>
    %122 = tpu.matmul %121, %109, %cst_48 {dimension_numbers = #tpu.dot_dimension_numbers<[1], [0], [0], [1], [0, 0, 1, 1], [], []>} : vector<16x16xbf16>, vector<16x64xbf16>, vector<16x64xf32> -> vector<16x64xf32>
    %123 = vector.extract_strided_slice %59 {offsets = [0, 192], sizes = [16, 64], strides = [1, 1]} : vector<16x768xf32> to vector<16x64xf32>
    %cst_49 = arith.constant 1.250000e-01 : f32
    %124 = vector.broadcast %cst_49 : f32 to vector<16x64xf32>
    %125 = arith.mulf %123, %124 : vector<16x64xf32>
    %126 = arith.truncf %125 : vector<16x64xf32> to vector<16x64xbf16>
    %127 = vector.extract_strided_slice %59 {offsets = [0, 448], sizes = [16, 64], strides = [1, 1]} : vector<16x768xf32> to vector<16x64xf32>
    %128 = arith.truncf %127 : vector<16x64xf32> to vector<16x64xbf16>
    %129 = vector.extract_strided_slice %59 {offsets = [0, 704], sizes = [16, 64], strides = [1, 1]} : vector<16x768xf32> to vector<16x64xf32>
    %130 = arith.truncf %129 : vector<16x64xf32> to vector<16x64xbf16>
    %cst_50 = arith.constant dense<0.000000e+00> : vector<16x16xf32>
    %131 = tpu.matmul %126, %128, %cst_50 {dimension_numbers = #tpu.dot_dimension_numbers<[1], [1], [0], [0], [0, 0, 1, 0], [], []>} : vector<16x64xbf16>, vector<16x64xbf16>, vector<16x16xf32> -> vector<16x16xf32>
    %132 = arith.addf %131, %27 : vector<16x16xf32>
    %cst_51 = arith.constant dense<0xFF800000> : vector<16xf32>
    %133 = vector.multi_reduction <maximumf>, %132, %cst_51 [1] : vector<16x16xf32> to vector<16xf32>
    %134 = vector.shape_cast %133 : vector<16xf32> to vector<16x1xf32>
    %135 = vector.broadcast %134 : vector<16x1xf32> to vector<16x16xf32>
    %136 = arith.subf %132, %135 : vector<16x16xf32>
    %137 = math.exp %136 : vector<16x16xf32>
    %cst_52 = arith.constant dense<0.000000e+00> : vector<16xf32>
    %138 = vector.multi_reduction <add>, %137, %cst_52 [1] : vector<16x16xf32> to vector<16xf32>
    %139 = vector.shape_cast %138 : vector<16xf32> to vector<16x1xf32>
    %140 = vector.broadcast %139 : vector<16x1xf32> to vector<16x16xf32>
    %141 = arith.divf %137, %140 : vector<16x16xf32>
    %142 = arith.truncf %141 : vector<16x16xf32> to vector<16x16xbf16>
    %cst_53 = arith.constant dense<0.000000e+00> : vector<16x64xf32>
    %143 = tpu.matmul %142, %130, %cst_53 {dimension_numbers = #tpu.dot_dimension_numbers<[1], [0], [0], [1], [0, 0, 1, 1], [], []>} : vector<16x16xbf16>, vector<16x64xbf16>, vector<16x64xf32> -> vector<16x64xf32>
    %144 = tpu.concatenate %80, %101, %122, %143 in 1 : vector<16x64xf32>, vector<16x64xf32>, vector<16x64xf32>, vector<16x64xf32> -> vector<16x256xf32>
    %145 = arith.truncf %144 : vector<16x256xf32> to vector<16x256xbf16>
    %c0_54 = arith.constant 0 : index
    %c0_55 = arith.constant 0 : index
    %c0_56 = arith.constant 0 : index
    %146 = vector.load %arg11[%c0_54, %c0_55, %c0_56] : memref<2x256x256xbf16, #tpu.memory_space<vmem>>, vector<1x256x256xbf16>
    %147 = vector.shape_cast %146 : vector<1x256x256xbf16> to vector<256x256xbf16>
    %cst_57 = arith.constant dense<0.000000e+00> : vector<16x256xf32>
    %148 = tpu.matmul %145, %147, %cst_57 {dimension_numbers = #tpu.dot_dimension_numbers<[1], [0], [0], [1], [0, 0, 1, 1], [], []>} : vector<16x256xbf16>, vector<256x256xbf16>, vector<16x256xf32> -> vector<16x256xf32>
    %149 = arith.addf %26, %148 : vector<16x256xf32>
    %c0_58 = arith.constant 0 : index
    %c0_59 = arith.constant 0 : index
    %c0_60 = arith.constant 0 : index
    %150 = vector.load %arg12[%c0_58, %c0_59, %c0_60] : memref<2x1x256xf32, #tpu.memory_space<vmem>>, vector<1x1x256xf32>
    %151 = vector.shape_cast %150 : vector<1x1x256xf32> to vector<1x256xf32>
    %152 = vector.broadcast %151 : vector<1x256xf32> to vector<16x256xf32>
    %153 = arith.addf %149, %152 : vector<16x256xf32>
    %c0_61 = arith.constant 0 : index
    %c0_62 = arith.constant 0 : index
    %c0_63 = arith.constant 0 : index
    %154 = vector.load %arg13[%c0_61, %c0_62, %c0_63] : memref<2x1x256xf32, #tpu.memory_space<vmem>>, vector<1x1x256xf32>
    %155 = vector.shape_cast %154 : vector<1x1x256xf32> to vector<1x256xf32>
    %c0_64 = arith.constant 0 : index
    %c0_65 = arith.constant 0 : index
    %c0_66 = arith.constant 0 : index
    %156 = vector.load %arg14[%c0_64, %c0_65, %c0_66] : memref<2x1x256xf32, #tpu.memory_space<vmem>>, vector<1x1x256xf32>
    %157 = vector.shape_cast %156 : vector<1x1x256xf32> to vector<1x256xf32>
    %cst_67 = arith.constant dense<0.000000e+00> : vector<16xf32>
    %158 = vector.multi_reduction <add>, %153, %cst_67 [1] : vector<16x256xf32> to vector<16xf32>
    %159 = vector.shape_cast %158 : vector<16xf32> to vector<16x1xf32>
    %cst_68 = arith.constant 2.560000e+02 : f32
    %160 = vector.broadcast %cst_68 : f32 to vector<16x1xf32>
    %161 = arith.divf %159, %160 : vector<16x1xf32>
    %162 = vector.broadcast %161 : vector<16x1xf32> to vector<16x256xf32>
    %163 = arith.subf %153, %162 : vector<16x256xf32>
    %164 = arith.mulf %163, %163 : vector<16x256xf32>
    %cst_69 = arith.constant dense<0.000000e+00> : vector<16xf32>
    %165 = vector.multi_reduction <add>, %164, %cst_69 [1] : vector<16x256xf32> to vector<16xf32>
    %166 = vector.shape_cast %165 : vector<16xf32> to vector<16x1xf32>
    %cst_70 = arith.constant 2.560000e+02 : f32
    %167 = vector.broadcast %cst_70 : f32 to vector<16x1xf32>
    %168 = arith.divf %166, %167 : vector<16x1xf32>
    %cst_71 = arith.constant 9.99999974E-6 : f32
    %169 = vector.broadcast %cst_71 : f32 to vector<16x1xf32>
    %170 = arith.addf %168, %169 : vector<16x1xf32>
    %171 = math.rsqrt %170 : vector<16x1xf32>
    %172 = vector.broadcast %171 : vector<16x1xf32> to vector<16x256xf32>
    %173 = arith.mulf %163, %172 : vector<16x256xf32>
    %174 = vector.broadcast %155 : vector<1x256xf32> to vector<16x256xf32>
    %175 = arith.mulf %173, %174 : vector<16x256xf32>
    %176 = vector.broadcast %157 : vector<1x256xf32> to vector<16x256xf32>
    %177 = arith.addf %175, %176 : vector<16x256xf32>
    %178 = arith.truncf %177 : vector<16x256xf32> to vector<16x256xbf16>
    %c0_72 = arith.constant 0 : index
    %c0_73 = arith.constant 0 : index
    %c0_74 = arith.constant 0 : index
    %179 = vector.load %arg15[%c0_72, %c0_73, %c0_74] : memref<2x256x1024xbf16, #tpu.memory_space<vmem>>, vector<1x256x1024xbf16>
    %180 = vector.shape_cast %179 : vector<1x256x1024xbf16> to vector<256x1024xbf16>
    %cst_75 = arith.constant dense<0.000000e+00> : vector<16x1024xf32>
    %181 = tpu.matmul %178, %180, %cst_75 {dimension_numbers = #tpu.dot_dimension_numbers<[1], [0], [0], [1], [0, 0, 1, 1], [], []>} : vector<16x256xbf16>, vector<256x1024xbf16>, vector<16x1024xf32> -> vector<16x1024xf32>
    %c0_76 = arith.constant 0 : index
    %c0_77 = arith.constant 0 : index
    %c0_78 = arith.constant 0 : index
    %182 = vector.load %arg16[%c0_76, %c0_77, %c0_78] : memref<2x1x1024xf32, #tpu.memory_space<vmem>>, vector<1x1x1024xf32>
    %183 = vector.shape_cast %182 : vector<1x1x1024xf32> to vector<1x1024xf32>
    %184 = vector.broadcast %183 : vector<1x1024xf32> to vector<16x1024xf32>
    %185 = arith.addf %181, %184 : vector<16x1024xf32>
    %cst_79 = arith.constant 1.702000e+00 : f32
    %186 = vector.broadcast %cst_79 : f32 to vector<16x1024xf32>
    %187 = arith.mulf %186, %185 : vector<16x1024xf32>
    %188 = arith.negf %187 : vector<16x1024xf32>
    %189 = math.exp %188 : vector<16x1024xf32>
    %cst_80 = arith.constant 1.000000e+00 : f32
    %190 = vector.broadcast %cst_80 : f32 to vector<16x1024xf32>
    %191 = arith.addf %190, %189 : vector<16x1024xf32>
    %192 = arith.divf %190, %191 : vector<16x1024xf32>
    %193 = arith.mulf %185, %192 : vector<16x1024xf32>
    %194 = arith.truncf %193 : vector<16x1024xf32> to vector<16x1024xbf16>
    %c0_81 = arith.constant 0 : index
    %c0_82 = arith.constant 0 : index
    %c0_83 = arith.constant 0 : index
    %195 = vector.load %arg17[%c0_81, %c0_82, %c0_83] : memref<2x1024x256xbf16, #tpu.memory_space<vmem>>, vector<1x1024x256xbf16>
    %196 = vector.shape_cast %195 : vector<1x1024x256xbf16> to vector<1024x256xbf16>
    %cst_84 = arith.constant dense<0.000000e+00> : vector<16x256xf32>
    %197 = tpu.matmul %194, %196, %cst_84 {dimension_numbers = #tpu.dot_dimension_numbers<[1], [0], [0], [1], [0, 0, 1, 1], [], []>} : vector<16x1024xbf16>, vector<1024x256xbf16>, vector<16x256xf32> -> vector<16x256xf32>
    %198 = arith.addf %153, %197 : vector<16x256xf32>
    %c0_85 = arith.constant 0 : index
    %c0_86 = arith.constant 0 : index
    %c0_87 = arith.constant 0 : index
    %199 = vector.load %arg18[%c0_85, %c0_86, %c0_87] : memref<2x1x256xf32, #tpu.memory_space<vmem>>, vector<1x1x256xf32>
    %200 = vector.shape_cast %199 : vector<1x1x256xf32> to vector<1x256xf32>
    %201 = vector.broadcast %200 : vector<1x256xf32> to vector<16x256xf32>
    %202 = arith.addf %198, %201 : vector<16x256xf32>
    %c1 = arith.constant 1 : index
    %c0_88 = arith.constant 0 : index
    %c0_89 = arith.constant 0 : index
    %203 = vector.load %arg7[%c1, %c0_88, %c0_89] : memref<2x1x256xf32, #tpu.memory_space<vmem>>, vector<1x1x256xf32>
    %204 = vector.shape_cast %203 : vector<1x1x256xf32> to vector<1x256xf32>
    %c1_90 = arith.constant 1 : index
    %c0_91 = arith.constant 0 : index
    %c0_92 = arith.constant 0 : index
    %205 = vector.load %arg8[%c1_90, %c0_91, %c0_92] : memref<2x1x256xf32, #tpu.memory_space<vmem>>, vector<1x1x256xf32>
    %206 = vector.shape_cast %205 : vector<1x1x256xf32> to vector<1x256xf32>
    %cst_93 = arith.constant dense<0.000000e+00> : vector<16xf32>
    %207 = vector.multi_reduction <add>, %202, %cst_93 [1] : vector<16x256xf32> to vector<16xf32>
    %208 = vector.shape_cast %207 : vector<16xf32> to vector<16x1xf32>
    %cst_94 = arith.constant 2.560000e+02 : f32
    %209 = vector.broadcast %cst_94 : f32 to vector<16x1xf32>
    %210 = arith.divf %208, %209 : vector<16x1xf32>
    %211 = vector.broadcast %210 : vector<16x1xf32> to vector<16x256xf32>
    %212 = arith.subf %202, %211 : vector<16x256xf32>
    %213 = arith.mulf %212, %212 : vector<16x256xf32>
    %cst_95 = arith.constant dense<0.000000e+00> : vector<16xf32>
    %214 = vector.multi_reduction <add>, %213, %cst_95 [1] : vector<16x256xf32> to vector<16xf32>
    %215 = vector.shape_cast %214 : vector<16xf32> to vector<16x1xf32>
    %cst_96 = arith.constant 2.560000e+02 : f32
    %216 = vector.broadcast %cst_96 : f32 to vector<16x1xf32>
    %217 = arith.divf %215, %216 : vector<16x1xf32>
    %cst_97 = arith.constant 9.99999974E-6 : f32
    %218 = vector.broadcast %cst_97 : f32 to vector<16x1xf32>
    %219 = arith.addf %217, %218 : vector<16x1xf32>
    %220 = math.rsqrt %219 : vector<16x1xf32>
    %221 = vector.broadcast %220 : vector<16x1xf32> to vector<16x256xf32>
    %222 = arith.mulf %212, %221 : vector<16x256xf32>
    %223 = vector.broadcast %204 : vector<1x256xf32> to vector<16x256xf32>
    %224 = arith.mulf %222, %223 : vector<16x256xf32>
    %225 = vector.broadcast %206 : vector<1x256xf32> to vector<16x256xf32>
    %226 = arith.addf %224, %225 : vector<16x256xf32>
    %227 = arith.truncf %226 : vector<16x256xf32> to vector<16x256xbf16>
    %c1_98 = arith.constant 1 : index
    %c0_99 = arith.constant 0 : index
    %c0_100 = arith.constant 0 : index
    %228 = vector.load %arg9[%c1_98, %c0_99, %c0_100] : memref<2x256x768xbf16, #tpu.memory_space<vmem>>, vector<1x256x768xbf16>
    %229 = vector.shape_cast %228 : vector<1x256x768xbf16> to vector<256x768xbf16>
    %cst_101 = arith.constant dense<0.000000e+00> : vector<16x768xf32>
    %230 = tpu.matmul %227, %229, %cst_101 {dimension_numbers = #tpu.dot_dimension_numbers<[1], [0], [0], [1], [0, 0, 1, 1], [], []>} : vector<16x256xbf16>, vector<256x768xbf16>, vector<16x768xf32> -> vector<16x768xf32>
    %c1_102 = arith.constant 1 : index
    %c0_103 = arith.constant 0 : index
    %c0_104 = arith.constant 0 : index
    %231 = vector.load %arg10[%c1_102, %c0_103, %c0_104] : memref<2x1x768xf32, #tpu.memory_space<vmem>>, vector<1x1x768xf32>
    %232 = vector.shape_cast %231 : vector<1x1x768xf32> to vector<1x768xf32>
    %233 = vector.broadcast %232 : vector<1x768xf32> to vector<16x768xf32>
    %234 = arith.addf %230, %233 : vector<16x768xf32>
    %235 = vector.extract_strided_slice %234 {offsets = [0, 0], sizes = [16, 64], strides = [1, 1]} : vector<16x768xf32> to vector<16x64xf32>
    %cst_105 = arith.constant 1.250000e-01 : f32
    %236 = vector.broadcast %cst_105 : f32 to vector<16x64xf32>
    %237 = arith.mulf %235, %236 : vector<16x64xf32>
    %238 = arith.truncf %237 : vector<16x64xf32> to vector<16x64xbf16>
    %239 = vector.extract_strided_slice %234 {offsets = [0, 256], sizes = [16, 64], strides = [1, 1]} : vector<16x768xf32> to vector<16x64xf32>
    %240 = arith.truncf %239 : vector<16x64xf32> to vector<16x64xbf16>
    %241 = vector.extract_strided_slice %234 {offsets = [0, 512], sizes = [16, 64], strides = [1, 1]} : vector<16x768xf32> to vector<16x64xf32>
    %242 = arith.truncf %241 : vector<16x64xf32> to vector<16x64xbf16>
    %cst_106 = arith.constant dense<0.000000e+00> : vector<16x16xf32>
    %243 = tpu.matmul %238, %240, %cst_106 {dimension_numbers = #tpu.dot_dimension_numbers<[1], [1], [0], [0], [0, 0, 1, 0], [], []>} : vector<16x64xbf16>, vector<16x64xbf16>, vector<16x16xf32> -> vector<16x16xf32>
    %244 = arith.addf %243, %27 : vector<16x16xf32>
    %cst_107 = arith.constant dense<0xFF800000> : vector<16xf32>
    %245 = vector.multi_reduction <maximumf>, %244, %cst_107 [1] : vector<16x16xf32> to vector<16xf32>
    %246 = vector.shape_cast %245 : vector<16xf32> to vector<16x1xf32>
    %247 = vector.broadcast %246 : vector<16x1xf32> to vector<16x16xf32>
    %248 = arith.subf %244, %247 : vector<16x16xf32>
    %249 = math.exp %248 : vector<16x16xf32>
    %cst_108 = arith.constant dense<0.000000e+00> : vector<16xf32>
    %250 = vector.multi_reduction <add>, %249, %cst_108 [1] : vector<16x16xf32> to vector<16xf32>
    %251 = vector.shape_cast %250 : vector<16xf32> to vector<16x1xf32>
    %252 = vector.broadcast %251 : vector<16x1xf32> to vector<16x16xf32>
    %253 = arith.divf %249, %252 : vector<16x16xf32>
    %254 = arith.truncf %253 : vector<16x16xf32> to vector<16x16xbf16>
    %cst_109 = arith.constant dense<0.000000e+00> : vector<16x64xf32>
    %255 = tpu.matmul %254, %242, %cst_109 {dimension_numbers = #tpu.dot_dimension_numbers<[1], [0], [0], [1], [0, 0, 1, 1], [], []>} : vector<16x16xbf16>, vector<16x64xbf16>, vector<16x64xf32> -> vector<16x64xf32>
    %256 = vector.extract_strided_slice %234 {offsets = [0, 64], sizes = [16, 64], strides = [1, 1]} : vector<16x768xf32> to vector<16x64xf32>
    %cst_110 = arith.constant 1.250000e-01 : f32
    %257 = vector.broadcast %cst_110 : f32 to vector<16x64xf32>
    %258 = arith.mulf %256, %257 : vector<16x64xf32>
    %259 = arith.truncf %258 : vector<16x64xf32> to vector<16x64xbf16>
    %260 = vector.extract_strided_slice %234 {offsets = [0, 320], sizes = [16, 64], strides = [1, 1]} : vector<16x768xf32> to vector<16x64xf32>
    %261 = arith.truncf %260 : vector<16x64xf32> to vector<16x64xbf16>
    %262 = vector.extract_strided_slice %234 {offsets = [0, 576], sizes = [16, 64], strides = [1, 1]} : vector<16x768xf32> to vector<16x64xf32>
    %263 = arith.truncf %262 : vector<16x64xf32> to vector<16x64xbf16>
    %cst_111 = arith.constant dense<0.000000e+00> : vector<16x16xf32>
    %264 = tpu.matmul %259, %261, %cst_111 {dimension_numbers = #tpu.dot_dimension_numbers<[1], [1], [0], [0], [0, 0, 1, 0], [], []>} : vector<16x64xbf16>, vector<16x64xbf16>, vector<16x16xf32> -> vector<16x16xf32>
    %265 = arith.addf %264, %27 : vector<16x16xf32>
    %cst_112 = arith.constant dense<0xFF800000> : vector<16xf32>
    %266 = vector.multi_reduction <maximumf>, %265, %cst_112 [1] : vector<16x16xf32> to vector<16xf32>
    %267 = vector.shape_cast %266 : vector<16xf32> to vector<16x1xf32>
    %268 = vector.broadcast %267 : vector<16x1xf32> to vector<16x16xf32>
    %269 = arith.subf %265, %268 : vector<16x16xf32>
    %270 = math.exp %269 : vector<16x16xf32>
    %cst_113 = arith.constant dense<0.000000e+00> : vector<16xf32>
    %271 = vector.multi_reduction <add>, %270, %cst_113 [1] : vector<16x16xf32> to vector<16xf32>
    %272 = vector.shape_cast %271 : vector<16xf32> to vector<16x1xf32>
    %273 = vector.broadcast %272 : vector<16x1xf32> to vector<16x16xf32>
    %274 = arith.divf %270, %273 : vector<16x16xf32>
    %275 = arith.truncf %274 : vector<16x16xf32> to vector<16x16xbf16>
    %cst_114 = arith.constant dense<0.000000e+00> : vector<16x64xf32>
    %276 = tpu.matmul %275, %263, %cst_114 {dimension_numbers = #tpu.dot_dimension_numbers<[1], [0], [0], [1], [0, 0, 1, 1], [], []>} : vector<16x16xbf16>, vector<16x64xbf16>, vector<16x64xf32> -> vector<16x64xf32>
    %277 = vector.extract_strided_slice %234 {offsets = [0, 128], sizes = [16, 64], strides = [1, 1]} : vector<16x768xf32> to vector<16x64xf32>
    %cst_115 = arith.constant 1.250000e-01 : f32
    %278 = vector.broadcast %cst_115 : f32 to vector<16x64xf32>
    %279 = arith.mulf %277, %278 : vector<16x64xf32>
    %280 = arith.truncf %279 : vector<16x64xf32> to vector<16x64xbf16>
    %281 = vector.extract_strided_slice %234 {offsets = [0, 384], sizes = [16, 64], strides = [1, 1]} : vector<16x768xf32> to vector<16x64xf32>
    %282 = arith.truncf %281 : vector<16x64xf32> to vector<16x64xbf16>
    %283 = vector.extract_strided_slice %234 {offsets = [0, 640], sizes = [16, 64], strides = [1, 1]} : vector<16x768xf32> to vector<16x64xf32>
    %284 = arith.truncf %283 : vector<16x64xf32> to vector<16x64xbf16>
    %cst_116 = arith.constant dense<0.000000e+00> : vector<16x16xf32>
    %285 = tpu.matmul %280, %282, %cst_116 {dimension_numbers = #tpu.dot_dimension_numbers<[1], [1], [0], [0], [0, 0, 1, 0], [], []>} : vector<16x64xbf16>, vector<16x64xbf16>, vector<16x16xf32> -> vector<16x16xf32>
    %286 = arith.addf %285, %27 : vector<16x16xf32>
    %cst_117 = arith.constant dense<0xFF800000> : vector<16xf32>
    %287 = vector.multi_reduction <maximumf>, %286, %cst_117 [1] : vector<16x16xf32> to vector<16xf32>
    %288 = vector.shape_cast %287 : vector<16xf32> to vector<16x1xf32>
    %289 = vector.broadcast %288 : vector<16x1xf32> to vector<16x16xf32>
    %290 = arith.subf %286, %289 : vector<16x16xf32>
    %291 = math.exp %290 : vector<16x16xf32>
    %cst_118 = arith.constant dense<0.000000e+00> : vector<16xf32>
    %292 = vector.multi_reduction <add>, %291, %cst_118 [1] : vector<16x16xf32> to vector<16xf32>
    %293 = vector.shape_cast %292 : vector<16xf32> to vector<16x1xf32>
    %294 = vector.broadcast %293 : vector<16x1xf32> to vector<16x16xf32>
    %295 = arith.divf %291, %294 : vector<16x16xf32>
    %296 = arith.truncf %295 : vector<16x16xf32> to vector<16x16xbf16>
    %cst_119 = arith.constant dense<0.000000e+00> : vector<16x64xf32>
    %297 = tpu.matmul %296, %284, %cst_119 {dimension_numbers = #tpu.dot_dimension_numbers<[1], [0], [0], [1], [0, 0, 1, 1], [], []>} : vector<16x16xbf16>, vector<16x64xbf16>, vector<16x64xf32> -> vector<16x64xf32>
    %298 = vector.extract_strided_slice %234 {offsets = [0, 192], sizes = [16, 64], strides = [1, 1]} : vector<16x768xf32> to vector<16x64xf32>
    %cst_120 = arith.constant 1.250000e-01 : f32
    %299 = vector.broadcast %cst_120 : f32 to vector<16x64xf32>
    %300 = arith.mulf %298, %299 : vector<16x64xf32>
    %301 = arith.truncf %300 : vector<16x64xf32> to vector<16x64xbf16>
    %302 = vector.extract_strided_slice %234 {offsets = [0, 448], sizes = [16, 64], strides = [1, 1]} : vector<16x768xf32> to vector<16x64xf32>
    %303 = arith.truncf %302 : vector<16x64xf32> to vector<16x64xbf16>
    %304 = vector.extract_strided_slice %234 {offsets = [0, 704], sizes = [16, 64], strides = [1, 1]} : vector<16x768xf32> to vector<16x64xf32>
    %305 = arith.truncf %304 : vector<16x64xf32> to vector<16x64xbf16>
    %cst_121 = arith.constant dense<0.000000e+00> : vector<16x16xf32>
    %306 = tpu.matmul %301, %303, %cst_121 {dimension_numbers = #tpu.dot_dimension_numbers<[1], [1], [0], [0], [0, 0, 1, 0], [], []>} : vector<16x64xbf16>, vector<16x64xbf16>, vector<16x16xf32> -> vector<16x16xf32>
    %307 = arith.addf %306, %27 : vector<16x16xf32>
    %cst_122 = arith.constant dense<0xFF800000> : vector<16xf32>
    %308 = vector.multi_reduction <maximumf>, %307, %cst_122 [1] : vector<16x16xf32> to vector<16xf32>
    %309 = vector.shape_cast %308 : vector<16xf32> to vector<16x1xf32>
    %310 = vector.broadcast %309 : vector<16x1xf32> to vector<16x16xf32>
    %311 = arith.subf %307, %310 : vector<16x16xf32>
    %312 = math.exp %311 : vector<16x16xf32>
    %cst_123 = arith.constant dense<0.000000e+00> : vector<16xf32>
    %313 = vector.multi_reduction <add>, %312, %cst_123 [1] : vector<16x16xf32> to vector<16xf32>
    %314 = vector.shape_cast %313 : vector<16xf32> to vector<16x1xf32>
    %315 = vector.broadcast %314 : vector<16x1xf32> to vector<16x16xf32>
    %316 = arith.divf %312, %315 : vector<16x16xf32>
    %317 = arith.truncf %316 : vector<16x16xf32> to vector<16x16xbf16>
    %cst_124 = arith.constant dense<0.000000e+00> : vector<16x64xf32>
    %318 = tpu.matmul %317, %305, %cst_124 {dimension_numbers = #tpu.dot_dimension_numbers<[1], [0], [0], [1], [0, 0, 1, 1], [], []>} : vector<16x16xbf16>, vector<16x64xbf16>, vector<16x64xf32> -> vector<16x64xf32>
    %319 = tpu.concatenate %255, %276, %297, %318 in 1 : vector<16x64xf32>, vector<16x64xf32>, vector<16x64xf32>, vector<16x64xf32> -> vector<16x256xf32>
    %320 = arith.truncf %319 : vector<16x256xf32> to vector<16x256xbf16>
    %c1_125 = arith.constant 1 : index
    %c0_126 = arith.constant 0 : index
    %c0_127 = arith.constant 0 : index
    %321 = vector.load %arg11[%c1_125, %c0_126, %c0_127] : memref<2x256x256xbf16, #tpu.memory_space<vmem>>, vector<1x256x256xbf16>
    %322 = vector.shape_cast %321 : vector<1x256x256xbf16> to vector<256x256xbf16>
    %cst_128 = arith.constant dense<0.000000e+00> : vector<16x256xf32>
    %323 = tpu.matmul %320, %322, %cst_128 {dimension_numbers = #tpu.dot_dimension_numbers<[1], [0], [0], [1], [0, 0, 1, 1], [], []>} : vector<16x256xbf16>, vector<256x256xbf16>, vector<16x256xf32> -> vector<16x256xf32>
    %324 = arith.addf %202, %323 : vector<16x256xf32>
    %c1_129 = arith.constant 1 : index
    %c0_130 = arith.constant 0 : index
    %c0_131 = arith.constant 0 : index
    %325 = vector.load %arg12[%c1_129, %c0_130, %c0_131] : memref<2x1x256xf32, #tpu.memory_space<vmem>>, vector<1x1x256xf32>
    %326 = vector.shape_cast %325 : vector<1x1x256xf32> to vector<1x256xf32>
    %327 = vector.broadcast %326 : vector<1x256xf32> to vector<16x256xf32>
    %328 = arith.addf %324, %327 : vector<16x256xf32>
    %c1_132 = arith.constant 1 : index
    %c0_133 = arith.constant 0 : index
    %c0_134 = arith.constant 0 : index
    %329 = vector.load %arg13[%c1_132, %c0_133, %c0_134] : memref<2x1x256xf32, #tpu.memory_space<vmem>>, vector<1x1x256xf32>
    %330 = vector.shape_cast %329 : vector<1x1x256xf32> to vector<1x256xf32>
    %c1_135 = arith.constant 1 : index
    %c0_136 = arith.constant 0 : index
    %c0_137 = arith.constant 0 : index
    %331 = vector.load %arg14[%c1_135, %c0_136, %c0_137] : memref<2x1x256xf32, #tpu.memory_space<vmem>>, vector<1x1x256xf32>
    %332 = vector.shape_cast %331 : vector<1x1x256xf32> to vector<1x256xf32>
    %cst_138 = arith.constant dense<0.000000e+00> : vector<16xf32>
    %333 = vector.multi_reduction <add>, %328, %cst_138 [1] : vector<16x256xf32> to vector<16xf32>
    %334 = vector.shape_cast %333 : vector<16xf32> to vector<16x1xf32>
    %cst_139 = arith.constant 2.560000e+02 : f32
    %335 = vector.broadcast %cst_139 : f32 to vector<16x1xf32>
    %336 = arith.divf %334, %335 : vector<16x1xf32>
    %337 = vector.broadcast %336 : vector<16x1xf32> to vector<16x256xf32>
    %338 = arith.subf %328, %337 : vector<16x256xf32>
    %339 = arith.mulf %338, %338 : vector<16x256xf32>
    %cst_140 = arith.constant dense<0.000000e+00> : vector<16xf32>
    %340 = vector.multi_reduction <add>, %339, %cst_140 [1] : vector<16x256xf32> to vector<16xf32>
    %341 = vector.shape_cast %340 : vector<16xf32> to vector<16x1xf32>
    %cst_141 = arith.constant 2.560000e+02 : f32
    %342 = vector.broadcast %cst_141 : f32 to vector<16x1xf32>
    %343 = arith.divf %341, %342 : vector<16x1xf32>
    %cst_142 = arith.constant 9.99999974E-6 : f32
    %344 = vector.broadcast %cst_142 : f32 to vector<16x1xf32>
    %345 = arith.addf %343, %344 : vector<16x1xf32>
    %346 = math.rsqrt %345 : vector<16x1xf32>
    %347 = vector.broadcast %346 : vector<16x1xf32> to vector<16x256xf32>
    %348 = arith.mulf %338, %347 : vector<16x256xf32>
    %349 = vector.broadcast %330 : vector<1x256xf32> to vector<16x256xf32>
    %350 = arith.mulf %348, %349 : vector<16x256xf32>
    %351 = vector.broadcast %332 : vector<1x256xf32> to vector<16x256xf32>
    %352 = arith.addf %350, %351 : vector<16x256xf32>
    %353 = arith.truncf %352 : vector<16x256xf32> to vector<16x256xbf16>
    %c1_143 = arith.constant 1 : index
    %c0_144 = arith.constant 0 : index
    %c0_145 = arith.constant 0 : index
    %354 = vector.load %arg15[%c1_143, %c0_144, %c0_145] : memref<2x256x1024xbf16, #tpu.memory_space<vmem>>, vector<1x256x1024xbf16>
    %355 = vector.shape_cast %354 : vector<1x256x1024xbf16> to vector<256x1024xbf16>
    %cst_146 = arith.constant dense<0.000000e+00> : vector<16x1024xf32>
    %356 = tpu.matmul %353, %355, %cst_146 {dimension_numbers = #tpu.dot_dimension_numbers<[1], [0], [0], [1], [0, 0, 1, 1], [], []>} : vector<16x256xbf16>, vector<256x1024xbf16>, vector<16x1024xf32> -> vector<16x1024xf32>
    %c1_147 = arith.constant 1 : index
    %c0_148 = arith.constant 0 : index
    %c0_149 = arith.constant 0 : index
    %357 = vector.load %arg16[%c1_147, %c0_148, %c0_149] : memref<2x1x1024xf32, #tpu.memory_space<vmem>>, vector<1x1x1024xf32>
    %358 = vector.shape_cast %357 : vector<1x1x1024xf32> to vector<1x1024xf32>
    %359 = vector.broadcast %358 : vector<1x1024xf32> to vector<16x1024xf32>
    %360 = arith.addf %356, %359 : vector<16x1024xf32>
    %cst_150 = arith.constant 1.702000e+00 : f32
    %361 = vector.broadcast %cst_150 : f32 to vector<16x1024xf32>
    %362 = arith.mulf %361, %360 : vector<16x1024xf32>
    %363 = arith.negf %362 : vector<16x1024xf32>
    %364 = math.exp %363 : vector<16x1024xf32>
    %cst_151 = arith.constant 1.000000e+00 : f32
    %365 = vector.broadcast %cst_151 : f32 to vector<16x1024xf32>
    %366 = arith.addf %365, %364 : vector<16x1024xf32>
    %367 = arith.divf %365, %366 : vector<16x1024xf32>
    %368 = arith.mulf %360, %367 : vector<16x1024xf32>
    %369 = arith.truncf %368 : vector<16x1024xf32> to vector<16x1024xbf16>
    %c1_152 = arith.constant 1 : index
    %c0_153 = arith.constant 0 : index
    %c0_154 = arith.constant 0 : index
    %370 = vector.load %arg17[%c1_152, %c0_153, %c0_154] : memref<2x1024x256xbf16, #tpu.memory_space<vmem>>, vector<1x1024x256xbf16>
    %371 = vector.shape_cast %370 : vector<1x1024x256xbf16> to vector<1024x256xbf16>
    %cst_155 = arith.constant dense<0.000000e+00> : vector<16x256xf32>
    %372 = tpu.matmul %369, %371, %cst_155 {dimension_numbers = #tpu.dot_dimension_numbers<[1], [0], [0], [1], [0, 0, 1, 1], [], []>} : vector<16x1024xbf16>, vector<1024x256xbf16>, vector<16x256xf32> -> vector<16x256xf32>
    %373 = arith.addf %328, %372 : vector<16x256xf32>
    %c1_156 = arith.constant 1 : index
    %c0_157 = arith.constant 0 : index
    %c0_158 = arith.constant 0 : index
    %374 = vector.load %arg18[%c1_156, %c0_157, %c0_158] : memref<2x1x256xf32, #tpu.memory_space<vmem>>, vector<1x1x256xf32>
    %375 = vector.shape_cast %374 : vector<1x1x256xf32> to vector<1x256xf32>
    %376 = vector.broadcast %375 : vector<1x256xf32> to vector<16x256xf32>
    %377 = arith.addf %373, %376 : vector<16x256xf32>
    %378 = vector.extract_strided_slice %377 {offsets = [0, 0], sizes = [1, 256], strides = [1, 1]} : vector<16x256xf32> to vector<1x256xf32>
    %379 = vector.extract_strided_slice %377 {offsets = [8, 0], sizes = [1, 256], strides = [1, 1]} : vector<16x256xf32> to vector<1x256xf32>
    %380 = tpu.concatenate %378, %379 in 0 : vector<1x256xf32>, vector<1x256xf32> -> vector<2x256xf32>
    %c0_159 = arith.constant 0 : index
    %c0_160 = arith.constant 0 : index
    %381 = vector.load %arg19[%c0_159, %c0_160] : memref<1x256xf32, #tpu.memory_space<vmem>>, vector<1x256xf32>
    %c0_161 = arith.constant 0 : index
    %c0_162 = arith.constant 0 : index
    %382 = vector.load %arg20[%c0_161, %c0_162] : memref<1x256xf32, #tpu.memory_space<vmem>>, vector<1x256xf32>
    %cst_163 = arith.constant dense<0.000000e+00> : vector<2xf32>
    %383 = vector.multi_reduction <add>, %380, %cst_163 [1] : vector<2x256xf32> to vector<2xf32>
    %384 = vector.shape_cast %383 : vector<2xf32> to vector<2x1xf32>
    %cst_164 = arith.constant 2.560000e+02 : f32
    %385 = vector.broadcast %cst_164 : f32 to vector<2x1xf32>
    %386 = arith.divf %384, %385 : vector<2x1xf32>
    %387 = vector.broadcast %386 : vector<2x1xf32> to vector<2x256xf32>
    %388 = arith.subf %380, %387 : vector<2x256xf32>
    %389 = arith.mulf %388, %388 : vector<2x256xf32>
    %cst_165 = arith.constant dense<0.000000e+00> : vector<2xf32>
    %390 = vector.multi_reduction <add>, %389, %cst_165 [1] : vector<2x256xf32> to vector<2xf32>
    %391 = vector.shape_cast %390 : vector<2xf32> to vector<2x1xf32>
    %cst_166 = arith.constant 2.560000e+02 : f32
    %392 = vector.broadcast %cst_166 : f32 to vector<2x1xf32>
    %393 = arith.divf %391, %392 : vector<2x1xf32>
    %cst_167 = arith.constant 9.99999974E-6 : f32
    %394 = vector.broadcast %cst_167 : f32 to vector<2x1xf32>
    %395 = arith.addf %393, %394 : vector<2x1xf32>
    %396 = math.rsqrt %395 : vector<2x1xf32>
    %397 = vector.broadcast %396 : vector<2x1xf32> to vector<2x256xf32>
    %398 = arith.mulf %388, %397 : vector<2x256xf32>
    %399 = vector.broadcast %381 : vector<1x256xf32> to vector<2x256xf32>
    %400 = arith.mulf %398, %399 : vector<2x256xf32>
    %401 = vector.broadcast %382 : vector<1x256xf32> to vector<2x256xf32>
    %402 = arith.addf %400, %401 : vector<2x256xf32>
    %403 = arith.truncf %402 : vector<2x256xf32> to vector<2x256xbf16>
    %c0_168 = arith.constant 0 : index
    %c0_169 = arith.constant 0 : index
    %404 = vector.load %arg21[%c0_168, %c0_169] : memref<256x768xbf16, #tpu.memory_space<vmem>>, vector<256x768xbf16>
    %cst_170 = arith.constant dense<0.000000e+00> : vector<2x768xf32>
    %405 = tpu.matmul %403, %404, %cst_170 {dimension_numbers = #tpu.dot_dimension_numbers<[1], [0], [0], [1], [0, 0, 1, 1], [], []>} : vector<2x256xbf16>, vector<256x768xbf16>, vector<2x768xf32> -> vector<2x768xf32>
    %406 = arith.mulf %405, %405 : vector<2x768xf32>
    %cst_171 = arith.constant dense<0.000000e+00> : vector<2xf32>
    %407 = vector.multi_reduction <add>, %406, %cst_171 [1] : vector<2x768xf32> to vector<2xf32>
    %408 = vector.shape_cast %407 : vector<2xf32> to vector<2x1xf32>
    %cst_172 = arith.constant 9.99999996E-13 : f32
    %409 = vector.broadcast %cst_172 : f32 to vector<2x1xf32>
    %410 = arith.addf %408, %409 : vector<2x1xf32>
    %411 = math.rsqrt %410 : vector<2x1xf32>
    %412 = vector.broadcast %411 : vector<2x1xf32> to vector<2x768xf32>
    %413 = arith.mulf %405, %412 : vector<2x768xf32>
    %414 = arith.truncf %413 : vector<2x768xf32> to vector<2x768xbf16>
    %c0_173 = arith.constant 0 : index
    %c0_174 = arith.constant 0 : index
    %415 = vector.load %arg22[%c0_173, %c0_174] : memref<768x512xbf16, #tpu.memory_space<vmem>>, vector<768x512xbf16>
    %cst_175 = arith.constant dense<0.000000e+00> : vector<2x512xf32>
    %416 = tpu.matmul %414, %415, %cst_175 {dimension_numbers = #tpu.dot_dimension_numbers<[1], [0], [0], [1], [0, 0, 1, 1], [], []>} : vector<2x768xbf16>, vector<768x512xbf16>, vector<2x512xf32> -> vector<2x512xf32>
    %c0_176 = arith.constant 0 : index
    %c0_177 = arith.constant 0 : index
    %417 = vector.load %arg23[%c0_176, %c0_177] : memref<1x512xf32, #tpu.memory_space<vmem>>, vector<1x512xf32>
    %418 = vector.broadcast %417 : vector<1x512xf32> to vector<2x512xf32>
    %419 = arith.addf %416, %418 : vector<2x512xf32>
    %c0_178 = arith.constant 0 : index
    %c0_179 = arith.constant 0 : index
    %420 = vector.load %arg24[%c0_178, %c0_179] : memref<2x512xf32, #tpu.memory_space<vmem>>, vector<2x512xf32>
    tpu.vector_store %arg24[%c0_178, %c0_179], %419 {strides = array<i32>} : memref<2x512xf32, #tpu.memory_space<vmem>>, vector<2x512xf32>,
    return
  }
  func.func @transform_0(%arg0: i32) -> (i32, i32) {
    %c0_i32 = arith.constant 0 : i32
    %c0_i32_0 = arith.constant 0 : i32
    %c0_i32_1 = arith.constant 0 : i32
    return %c0_i32, %c0_i32_0 : i32, i32
  }
  func.func @transform_1(%arg0: i32) -> (i32, i32) {
    %c0_i32 = arith.constant 0 : i32
    %c0_i32_0 = arith.constant 0 : i32
    %c0_i32_1 = arith.constant 0 : i32
    return %c0_i32, %c0_i32_0 : i32, i32
  }
  func.func @transform_2(%arg0: i32) -> (i32, i32) {
    %c0_i32 = arith.constant 0 : i32
    %c0_i32_0 = arith.constant 0 : i32
    %c0_i32_1 = arith.constant 0 : i32
    return %c0_i32, %c0_i32_0 : i32, i32
  }
  func.func @transform_3(%arg0: i32) -> (i32, i32) {
    %c0_i32 = arith.constant 0 : i32
    %c0_i32_0 = arith.constant 0 : i32
    %c0_i32_1 = arith.constant 0 : i32
    return %c0_i32, %c0_i32_0 : i32, i32
  }
  func.func @transform_4(%arg0: i32) -> (i32, i32) {
    %c0_i32 = arith.constant 0 : i32
    %c0_i32_0 = arith.constant 0 : i32
    %c0_i32_1 = arith.constant 0 : i32
    return %c0_i32, %c0_i32_0 : i32, i32
  }
  func.func @transform_5(%arg0: i32) -> (i32, i32) {
    %c0_i32 = arith.constant 0 : i32
    %c0_i32_0 = arith.constant 0 : i32
    %c0_i32_1 = arith.constant 0 : i32
    return %c0_i32, %c0_i32_0 : i32, i32
  }
  func.func @transform_6(%arg0: i32) -> (i32, i32, i32) {
    %c0_i32 = arith.constant 0 : i32
    %c0_i32_0 = arith.constant 0 : i32
    %c0_i32_1 = arith.constant 0 : i32
    %c0_i32_2 = arith.constant 0 : i32
    return %c0_i32, %c0_i32_0, %c0_i32_1 : i32, i32, i32
  }
  func.func @transform_7(%arg0: i32) -> (i32, i32, i32) {
    %c0_i32 = arith.constant 0 : i32
    %c0_i32_0 = arith.constant 0 : i32
    %c0_i32_1 = arith.constant 0 : i32
    %c0_i32_2 = arith.constant 0 : i32
    return %c0_i32, %c0_i32_0, %c0_i32_1 : i32, i32, i32
  }
  func.func @transform_8(%arg0: i32) -> (i32, i32, i32) {
    %c0_i32 = arith.constant 0 : i32
    %c0_i32_0 = arith.constant 0 : i32
    %c0_i32_1 = arith.constant 0 : i32
    %c0_i32_2 = arith.constant 0 : i32
    return %c0_i32, %c0_i32_0, %c0_i32_1 : i32, i32, i32
  }
  func.func @transform_9(%arg0: i32) -> (i32, i32, i32) {
    %c0_i32 = arith.constant 0 : i32
    %c0_i32_0 = arith.constant 0 : i32
    %c0_i32_1 = arith.constant 0 : i32
    %c0_i32_2 = arith.constant 0 : i32
    return %c0_i32, %c0_i32_0, %c0_i32_1 : i32, i32, i32
  }
  func.func @transform_10(%arg0: i32) -> (i32, i32, i32) {
    %c0_i32 = arith.constant 0 : i32
    %c0_i32_0 = arith.constant 0 : i32
    %c0_i32_1 = arith.constant 0 : i32
    %c0_i32_2 = arith.constant 0 : i32
    return %c0_i32, %c0_i32_0, %c0_i32_1 : i32, i32, i32
  }
  func.func @transform_11(%arg0: i32) -> (i32, i32, i32) {
    %c0_i32 = arith.constant 0 : i32
    %c0_i32_0 = arith.constant 0 : i32
    %c0_i32_1 = arith.constant 0 : i32
    %c0_i32_2 = arith.constant 0 : i32
    return %c0_i32, %c0_i32_0, %c0_i32_1 : i32, i32, i32
  }
  func.func @transform_12(%arg0: i32) -> (i32, i32, i32) {
    %c0_i32 = arith.constant 0 : i32
    %c0_i32_0 = arith.constant 0 : i32
    %c0_i32_1 = arith.constant 0 : i32
    %c0_i32_2 = arith.constant 0 : i32
    return %c0_i32, %c0_i32_0, %c0_i32_1 : i32, i32, i32
  }
  func.func @transform_13(%arg0: i32) -> (i32, i32, i32) {
    %c0_i32 = arith.constant 0 : i32
    %c0_i32_0 = arith.constant 0 : i32
    %c0_i32_1 = arith.constant 0 : i32
    %c0_i32_2 = arith.constant 0 : i32
    return %c0_i32, %c0_i32_0, %c0_i32_1 : i32, i32, i32
  }
  func.func @transform_14(%arg0: i32) -> (i32, i32, i32) {
    %c0_i32 = arith.constant 0 : i32
    %c0_i32_0 = arith.constant 0 : i32
    %c0_i32_1 = arith.constant 0 : i32
    %c0_i32_2 = arith.constant 0 : i32
    return %c0_i32, %c0_i32_0, %c0_i32_1 : i32, i32, i32
  }
  func.func @transform_15(%arg0: i32) -> (i32, i32, i32) {
    %c0_i32 = arith.constant 0 : i32
    %c0_i32_0 = arith.constant 0 : i32
    %c0_i32_1 = arith.constant 0 : i32
    %c0_i32_2 = arith.constant 0 : i32
    return %c0_i32, %c0_i32_0, %c0_i32_1 : i32, i32, i32
  }
  func.func @transform_16(%arg0: i32) -> (i32, i32, i32) {
    %c0_i32 = arith.constant 0 : i32
    %c0_i32_0 = arith.constant 0 : i32
    %c0_i32_1 = arith.constant 0 : i32
    %c0_i32_2 = arith.constant 0 : i32
    return %c0_i32, %c0_i32_0, %c0_i32_1 : i32, i32, i32
  }
  func.func @transform_17(%arg0: i32) -> (i32, i32, i32) {
    %c0_i32 = arith.constant 0 : i32
    %c0_i32_0 = arith.constant 0 : i32
    %c0_i32_1 = arith.constant 0 : i32
    %c0_i32_2 = arith.constant 0 : i32
    return %c0_i32, %c0_i32_0, %c0_i32_1 : i32, i32, i32
  }
  func.func @transform_18(%arg0: i32) -> (i32, i32) {
    %c0_i32 = arith.constant 0 : i32
    %c0_i32_0 = arith.constant 0 : i32
    %c0_i32_1 = arith.constant 0 : i32
    return %c0_i32, %c0_i32_0 : i32, i32
  }
  func.func @transform_19(%arg0: i32) -> (i32, i32) {
    %c0_i32 = arith.constant 0 : i32
    %c0_i32_0 = arith.constant 0 : i32
    %c0_i32_1 = arith.constant 0 : i32
    return %c0_i32, %c0_i32_0 : i32, i32
  }
  func.func @transform_20(%arg0: i32) -> (i32, i32) {
    %c0_i32 = arith.constant 0 : i32
    %c0_i32_0 = arith.constant 0 : i32
    %c0_i32_1 = arith.constant 0 : i32
    return %c0_i32, %c0_i32_0 : i32, i32
  }
  func.func @transform_21(%arg0: i32) -> (i32, i32) {
    %c0_i32 = arith.constant 0 : i32
    %c0_i32_0 = arith.constant 0 : i32
    %c0_i32_1 = arith.constant 0 : i32
    return %c0_i32, %c0_i32_0 : i32, i32
  }
  func.func @transform_22(%arg0: i32) -> (i32, i32) {
    %c0_i32 = arith.constant 0 : i32
    %c0_i32_0 = arith.constant 0 : i32
    %c0_i32_1 = arith.constant 0 : i32
    return %c0_i32, %c0_i32_0 : i32, i32
  }
  func.func @transform_23(%arg0: i32) -> (i32, i32) {
    %c0_i32 = arith.constant 0 : i32
    %c0_i32_0 = arith.constant 0 : i32
    %c0_i32_1 = arith.constant 0 : i32
    return %c0_i32, %c0_i32_0 : i32, i32
  }
}

</mosaic_0001>

<llo_original>
// kernel: _lambda_.1
$region0: #{_lambda_.1}
  #allocation0 [shape = 'u32[]', space=smem, size = 0x4, offset = 0x4, fixed_abs, tag = 'smem constant byte address 0x4 - core index']
  #allocation1 [shape = 'u32[144,128]{1,0:T(1,128)}', space=vmem, size = 0x12000, scoped, tag = 'internal scratch']
  %s0 = inlined_call_operand.vmem [shape: bf16[16,768], index: 0, kind: input, shape index: {}]
  %s1 = inlined_call_operand.vmem [shape: bf16[768,256], index: 1, kind: input, shape index: {}]
  %s2 = inlined_call_operand.vmem [shape: f32[16,256], index: 2, kind: input, shape index: {}]
  %s3 = inlined_call_operand.vmem [shape: f32[16,16], index: 3, kind: input, shape index: {}]
  %s4 = inlined_call_operand.vmem [shape: f32[1,256], index: 4, kind: input, shape index: {}, may-alias: {4,18}]
  %s5 = inlined_call_operand.vmem [shape: f32[1,256], index: 5, kind: input, shape index: {}, may-alias: {5,19}]
  %s6 = inlined_call_operand.vmem [shape: f32[2,1,256], index: 6, kind: input, shape index: {}, may-alias: {6,12}]
  %s7 = inlined_call_operand.vmem [shape: f32[2,1,256], index: 7, kind: input, shape index: {}, may-alias: {7,13}]
  %s8 = inlined_call_operand.vmem [shape: bf16[2,256,768], index: 8, kind: input, shape index: {}]
  %s9 = inlined_call_operand.vmem [shape: f32[2,1,768], index: 9, kind: input, shape index: {}]
  %s10 = inlined_call_operand.vmem [shape: bf16[2,256,256], index: 10, kind: input, shape index: {}]
  %s11 = inlined_call_operand.vmem [shape: f32[2,1,256], index: 11, kind: input, shape index: {}]
  %s12 = inlined_call_operand.vmem [shape: f32[2,1,256], index: 12, kind: input, shape index: {}, may-alias: {6,12}]
  %s13 = inlined_call_operand.vmem [shape: f32[2,1,256], index: 13, kind: input, shape index: {}, may-alias: {7,13}]
  %s14 = inlined_call_operand.vmem [shape: bf16[2,256,1024], index: 14, kind: input, shape index: {}]
  %s15 = inlined_call_operand.vmem [shape: f32[2,1,1024], index: 15, kind: input, shape index: {}]
  %s16 = inlined_call_operand.vmem [shape: bf16[2,1024,256], index: 16, kind: input, shape index: {}]
  %s17 = inlined_call_operand.vmem [shape: f32[2,1,256], index: 17, kind: input, shape index: {}]
  %s18 = inlined_call_operand.vmem [shape: f32[1,256], index: 18, kind: input, shape index: {}, may-alias: {4,18}]
  %s19 = inlined_call_operand.vmem [shape: f32[1,256], index: 19, kind: input, shape index: {}, may-alias: {5,19}]
  %s20 = inlined_call_operand.vmem [shape: bf16[256,768], index: 20, kind: input, shape index: {}]
  %s21 = inlined_call_operand.vmem [shape: bf16[768,512], index: 21, kind: input, shape index: {}]
  %s22 = inlined_call_operand.vmem [shape: f32[1,512], index: 22, kind: input, shape index: {}]
  %s23 = inlined_call_operand.hbm [shape: f32[2,512], index: 23, kind: output, shape index: {}]
  %s24 = sld [smem:[#allocation0]]
  $region102: #{_lambda_.1} parent=0
    _
  %s26 = ssub.s32 1, %s24
  %s27 = scalar_select 0, %s26, %s24
  $region1: #{_lambda_.1} parent=0
    #allocation2 [shape = 'u8[4096]{0}', space=vmem, size = 0x1000, scoped, tag = 'output window, operand 0, single buffered']
    #allocation3 [shape = 's32[1]{0}', space=sflag, size = 0x4, scoped, tag = 'scoped memory for _lambda_.1']
    %28 = vsyncpa [#allocation3], 0
    // Predicated region
    $region2: #{_lambda_.1} parent=1 // pred_check
      _
    $region3: #{_lambda_.1} parent=1 // pred_check_branch
      %30 = sbr.rel (0) target = $region5
    $region4: #{_lambda_.1} parent=1 // pred_region
      _
    $region5: #{_lambda_.1} parent=1 // pred_fallthru
      _
    // Predicated region
    $region6: #{_lambda_.1} parent=1 // pred_check
      _
    $region7: #{_lambda_.1} parent=1 // pred_check_branch
      %32 = sbr.rel (0) target = $region9
    $region8: #{_lambda_.1} parent=1 // pred_region
      _
    $region9: #{_lambda_.1} parent=1 // pred_fallthru
      _
    // Predicated region
    $region10: #{_lambda_.1} parent=1 // pred_check
      _
    $region11: #{_lambda_.1} parent=1 // pred_check_branch
      %34 = sbr.rel (0) target = $region13
    $region12: #{_lambda_.1} parent=1 // pred_region
      _
    $region13: #{_lambda_.1} parent=1 // pred_fallthru
      _
    // Predicated region
    $region14: #{_lambda_.1} parent=1 // pred_check
      _
    $region15: #{_lambda_.1} parent=1 // pred_check_branch
      %36 = sbr.rel (0) target = $region17
    $region16: #{_lambda_.1} parent=1 // pred_region
      _
    $region17: #{_lambda_.1} parent=1 // pred_fallthru
      _
    // Predicated region
    $region18: #{_lambda_.1} parent=1 // pred_check
      _
    $region19: #{_lambda_.1} parent=1 // pred_check_branch
      %38 = sbr.rel (0) target = $region21
    $region20: #{_lambda_.1} parent=1 // pred_region
      _
    $region21: #{_lambda_.1} parent=1 // pred_fallthru
      _
    // Predicated region
    $region22: #{_lambda_.1} parent=1 // pred_check
      _
    $region23: #{_lambda_.1} parent=1 // pred_check_branch
      %40 = sbr.rel (0) target = $region25
    $region24: #{_lambda_.1} parent=1 // pred_region
      _
    $region25: #{_lambda_.1} parent=1 // pred_fallthru
      _
    // Predicated region
    $region26: #{_lambda_.1} parent=1 // pred_check
      _
    $region27: #{_lambda_.1} parent=1 // pred_check_branch
      %42 = sbr.rel (0) target = $region29
    $region28: #{_lambda_.1} parent=1 // pred_region
      _
    $region29: #{_lambda_.1} parent=1 // pred_fallthru
      _
    // Predicated region
    $region30: #{_lambda_.1} parent=1 // pred_check
      _
    $region31: #{_lambda_.1} parent=1 // pred_check_branch
      %44 = sbr.rel (0) target = $region33
    $region32: #{_lambda_.1} parent=1 // pred_region
      _
    $region33: #{_lambda_.1} parent=1 // pred_fallthru
      _
    // Predicated region
    $region34: #{_lambda_.1} parent=1 // pred_check
      _
    $region35: #{_lambda_.1} parent=1 // pred_check_branch
      %46 = sbr.rel (0) target = $region37
    $region36: #{_lambda_.1} parent=1 // pred_region
      _
    $region37: #{_lambda_.1} parent=1 // pred_fallthru
      _
    // Predicated region
    $region38: #{_lambda_.1} parent=1 // pred_check
      _
    $region39: #{_lambda_.1} parent=1 // pred_check_branch
      %48 = sbr.rel (0) target = $region41
    $region40: #{_lambda_.1} parent=1 // pred_region
      _
    $region41: #{_lambda_.1} parent=1 // pred_fallthru
      _
    // Predicated region
    $region42: #{_lambda_.1} parent=1 // pred_check
      _
    $region43: #{_lambda_.1} parent=1 // pred_check_branch
      %50 = sbr.rel (0) target = $region45
    $region44: #{_lambda_.1} parent=1 // pred_region
      _
    $region45: #{_lambda_.1} parent=1 // pred_fallthru
      _
    // Predicated region
    $region46: #{_lambda_.1} parent=1 // pred_check
      _
    $region47: #{_lambda_.1} parent=1 // pred_check_branch
      %52 = sbr.rel (0) target = $region49
    $region48: #{_lambda_.1} parent=1 // pred_region
      _
    $region49: #{_lambda_.1} parent=1 // pred_fallthru
      _
    // Predicated region
    $region50: #{_lambda_.1} parent=1 // pred_check
      _
    $region51: #{_lambda_.1} parent=1 // pred_check_branch
      %54 = sbr.rel (0) target = $region53
    $region52: #{_lambda_.1} parent=1 // pred_region
      _
    $region53: #{_lambda_.1} parent=1 // pred_fallthru
      _
    // Predicated region
    $region54: #{_lambda_.1} parent=1 // pred_check
      _
    $region55: #{_lambda_.1} parent=1 // pred_check_branch
      %56 = sbr.rel (0) target = $region57
    $region56: #{_lambda_.1} parent=1 // pred_region
      _
    $region57: #{_lambda_.1} parent=1 // pred_fallthru
      _
    // Predicated region
    $region58: #{_lambda_.1} parent=1 // pred_check
      _
    $region59: #{_lambda_.1} parent=1 // pred_check_branch
      %58 = sbr.rel (0) target = $region61
    $region60: #{_lambda_.1} parent=1 // pred_region
      _
    $region61: #{_lambda_.1} parent=1 // pred_fallthru
      _
    // Predicated region
    $region62: #{_lambda_.1} parent=1 // pred_check
      _
    $region63: #{_lambda_.1} parent=1 // pred_check_branch
      %60 = sbr.rel (0) target = $region65
    $region64: #{_lambda_.1} parent=1 // pred_region
      _
    $region65: #{_lambda_.1} parent=1 // pred_fallthru
      _
    // Predicated region
    $region66: #{_lambda_.1} parent=1 // pred_check
      _
    $region67: #{_lambda_.1} parent=1 // pred_check_branch
      %62 = sbr.rel (0) target = $region69
    $region68: #{_lambda_.1} parent=1 // pred_region
      _
    $region69: #{_lambda_.1} parent=1 // pred_fallthru
      _
    // Predicated region
    $region70: #{_lambda_.1} parent=1 // pred_check
      _
    $region71: #{_lambda_.1} parent=1 // pred_check_branch
      %64 = sbr.rel (0) target = $region73
    $region72: #{_lambda_.1} parent=1 // pred_region
      _
    $region73: #{_lambda_.1} parent=1 // pred_fallthru
      _
    // Predicated region
    $region74: #{_lambda_.1} parent=1 // pred_check
      _
    $region75: #{_lambda_.1} parent=1 // pred_check_branch
      %66 = sbr.rel (0) target = $region77
    $region76: #{_lambda_.1} parent=1 // pred_region
      _
    $region77: #{_lambda_.1} parent=1 // pred_fallthru
      _
    // Predicated region
    $region78: #{_lambda_.1} parent=1 // pred_check
      _
    $region79: #{_lambda_.1} parent=1 // pred_check_branch
      %68 = sbr.rel (0) target = $region81
    $region80: #{_lambda_.1} parent=1 // pred_region
      _
    $region81: #{_lambda_.1} parent=1 // pred_fallthru
      _
    // Predicated region
    $region82: #{_lambda_.1} parent=1 // pred_check
      _
    $region83: #{_lambda_.1} parent=1 // pred_check_branch
      %70 = sbr.rel (0) target = $region85
    $region84: #{_lambda_.1} parent=1 // pred_region
      _
    $region85: #{_lambda_.1} parent=1 // pred_fallthru
      _
    // Predicated region
    $region86: #{_lambda_.1} parent=1 // pred_check
      _
    $region87: #{_lambda_.1} parent=1 // pred_check_branch
      %72 = sbr.rel (0) target = $region89
    $region88: #{_lambda_.1} parent=1 // pred_region
      _
    $region89: #{_lambda_.1} parent=1 // pred_fallthru
      _
    // Predicated region
    $region90: #{_lambda_.1} parent=1 // pred_check
      _
    $region91: #{_lambda_.1} parent=1 // pred_check_branch
      %74 = sbr.rel (0) target = $region93
    $region92: #{_lambda_.1} parent=1 // pred_region
      _
    $region93: #{_lambda_.1} parent=1 // pred_fallthru
      _
    %v76 = vld [vmem:[%s0] sm:$0xff]
    %v77 = vld [vmem:[%s0 + $0x8] sm:$0xff]
    %v78 = vld [vmem:[%s0 + $0x10] sm:$0xff]
    %v79 = vld [vmem:[%s0 + $0x18] sm:$0xff]
    %v80 = vld [vmem:[%s0 + $0x20] sm:$0xff]
    %v81 = vld [vmem:[%s0 + $0x28] sm:$0xff]
    %v82 = vld [vmem:[%s1] sm:$0xff]
    %v83 = vld [vmem:[%s1 + $0x8] sm:$0xff]
    %v84 = vld [vmem:[%s1 + $0x10] sm:$0xff]
    %v85 = vld [vmem:[%s1 + $0x18] sm:$0xff]
    %v86 = vld [vmem:[%s1 + $0x20] sm:$0xff]
    %v87 = vld [vmem:[%s1 + $0x28] sm:$0xff]
    %v88 = vld [vmem:[%s1 + $0x30] sm:$0xff]
    %v89 = vld [vmem:[%s1 + $0x38] sm:$0xff]
    %v90 = vld [vmem:[%s1 + $0x40] sm:$0xff]
    %v91 = vld [vmem:[%s1 + $0x48] sm:$0xff]
    %v92 = vld [vmem:[%s1 + $0x50] sm:$0xff]
    %v93 = vld [vmem:[%s1 + $0x58] sm:$0xff]
    %v94 = vld [vmem:[%s1 + $0x60] sm:$0xff]
    %v95 = vld [vmem:[%s1 + $0x68] sm:$0xff]
    %v96 = vld [vmem:[%s1 + $0x70] sm:$0xff]
    %v97 = vld [vmem:[%s1 + $0x78] sm:$0xff]
    %v98 = vld [vmem:[%s1 + $0x80] sm:$0xff]
    %v99 = vld [vmem:[%s1 + $0x88] sm:$0xff]
    %v100 = vld [vmem:[%s1 + $0x90] sm:$0xff]
    %v101 = vld [vmem:[%s1 + $0x98] sm:$0xff]
    %v102 = vld [vmem:[%s1 + $0xa0] sm:$0xff]
    %v103 = vld [vmem:[%s1 + $0xa8] sm:$0xff]
    %v104 = vld [vmem:[%s1 + $0xb0] sm:$0xff]
    %v105 = vld [vmem:[%s1 + $0xb8] sm:$0xff]
    %v106 = vld [vmem:[%s1 + $0xc0] sm:$0xff]
    %v107 = vld [vmem:[%s1 + $0xc8] sm:$0xff]
    %v108 = vld [vmem:[%s1 + $0xd0] sm:$0xff]
    %v109 = vld [vmem:[%s1 + $0xd8] sm:$0xff]
    %v110 = vld [vmem:[%s1 + $0xe0] sm:$0xff]
    %v111 = vld [vmem:[%s1 + $0xe8] sm:$0xff]
    %v112 = vld [vmem:[%s1 + $0xf0] sm:$0xff]
    %v113 = vld [vmem:[%s1 + $0xf8] sm:$0xff]
    %v114 = vld [vmem:[%s1 + $0x100] sm:$0xff]
    %v115 = vld [vmem:[%s1 + $0x108] sm:$0xff]
    %v116 = vld [vmem:[%s1 + $0x110] sm:$0xff]
    %v117 = vld [vmem:[%s1 + $0x118] sm:$0xff]
    %v118 = vld [vmem:[%s1 + $0x120] sm:$0xff]
    %v119 = vld [vmem:[%s1 + $0x128] sm:$0xff]
    %v120 = vld [vmem:[%s1 + $0x130] sm:$0xff]
    %v121 = vld [vmem:[%s1 + $0x138] sm:$0xff]
    %v122 = vld [vmem:[%s1 + $0x140] sm:$0xff]
    %v123 = vld [vmem:[%s1 + $0x148] sm:$0xff]
    %v124 = vld [vmem:[%s1 + $0x150] sm:$0xff]
    %v125 = vld [vmem:[%s1 + $0x158] sm:$0xff]
    %v126 = vld [vmem:[%s1 + $0x160] sm:$0xff]
    %v127 = vld [vmem:[%s1 + $0x168] sm:$0xff]
    %v128 = vld [vmem:[%s1 + $0x170] sm:$0xff]
    %v129 = vld [vmem:[%s1 + $0x178] sm:$0xff]
    %v130 = vld [vmem:[%s1 + $0x180] sm:$0xff]
    %v131 = vld [vmem:[%s1 + $0x188] sm:$0xff]
    %v132 = vld [vmem:[%s1 + $0x190] sm:$0xff]
    %v133 = vld [vmem:[%s1 + $0x198] sm:$0xff]
    %v134 = vld [vmem:[%s1 + $0x1a0] sm:$0xff]
    %v135 = vld [vmem:[%s1 + $0x1a8] sm:$0xff]
    %v136 = vld [vmem:[%s1 + $0x1b0] sm:$0xff]
    %v137 = vld [vmem:[%s1 + $0x1b8] sm:$0xff]
    %v138 = vld [vmem:[%s1 + $0x1c0] sm:$0xff]
    %v139 = vld [vmem:[%s1 + $0x1c8] sm:$0xff]
    %v140 = vld [vmem:[%s1 + $0x1d0] sm:$0xff]
    %v141 = vld [vmem:[%s1 + $0x1d8] sm:$0xff]
    %v142 = vld [vmem:[%s1 + $0x1e0] sm:$0xff]
    %v143 = vld [vmem:[%s1 + $0x1e8] sm:$0xff]
    %v144 = vld [vmem:[%s1 + $0x1f0] sm:$0xff]
    %v145 = vld [vmem:[%s1 + $0x1f8] sm:$0xff]
    %v146 = vld [vmem:[%s1 + $0x200] sm:$0xff]
    %v147 = vld [vmem:[%s1 + $0x208] sm:$0xff]
    %v148 = vld [vmem:[%s1 + $0x210] sm:$0xff]
    %v149 = vld [vmem:[%s1 + $0x218] sm:$0xff]
    %v150 = vld [vmem:[%s1 + $0x220] sm:$0xff]
    %v151 = vld [vmem:[%s1 + $0x228] sm:$0xff]
    %v152 = vld [vmem:[%s1 + $0x230] sm:$0xff]
    %v153 = vld [vmem:[%s1 + $0x238] sm:$0xff]
    %v154 = vld [vmem:[%s1 + $0x240] sm:$0xff]
    %v155 = vld [vmem:[%s1 + $0x248] sm:$0xff]
    %v156 = vld [vmem:[%s1 + $0x250] sm:$0xff]
    %v157 = vld [vmem:[%s1 + $0x258] sm:$0xff]
    %v158 = vld [vmem:[%s1 + $0x260] sm:$0xff]
    %v159 = vld [vmem:[%s1 + $0x268] sm:$0xff]
    %v160 = vld [vmem:[%s1 + $0x270] sm:$0xff]
    %v161 = vld [vmem:[%s1 + $0x278] sm:$0xff]
    %v162 = vld [vmem:[%s1 + $0x280] sm:$0xff]
    %v163 = vld [vmem:[%s1 + $0x288] sm:$0xff]
    %v164 = vld [vmem:[%s1 + $0x290] sm:$0xff]
    %v165 = vld [vmem:[%s1 + $0x298] sm:$0xff]
    %v166 = vld [vmem:[%s1 + $0x2a0] sm:$0xff]
    %v167 = vld [vmem:[%s1 + $0x2a8] sm:$0xff]
    %v168 = vld [vmem:[%s1 + $0x2b0] sm:$0xff]
    %v169 = vld [vmem:[%s1 + $0x2b8] sm:$0xff]
    %v170 = vld [vmem:[%s1 + $0x2c0] sm:$0xff]
    %v171 = vld [vmem:[%s1 + $0x2c8] sm:$0xff]
    %v172 = vld [vmem:[%s1 + $0x2d0] sm:$0xff]
    %v173 = vld [vmem:[%s1 + $0x2d8] sm:$0xff]
    %v174 = vld [vmem:[%s1 + $0x2e0] sm:$0xff]
    %v175 = vld [vmem:[%s1 + $0x2e8] sm:$0xff]
    %v176 = vld [vmem:[%s1 + $0x2f0] sm:$0xff]
    %v177 = vld [vmem:[%s1 + $0x2f8] sm:$0xff]
    %v178 = vld [vmem:[%s2] sm:$0xff]
    %v179 = vld [vmem:[%s2 + $0x8] sm:$0xff]
    %v180 = vld [vmem:[%s2 + $0x10] sm:$0xff]
    %v181 = vld [vmem:[%s2 + $0x18] sm:$0xff]
    %v188 = vunpack.c.l.b16 %v76
    %v189 = vunpack.c.h.b16 %v76
    %v190 = vunpack.c.l.b16 %v77
    %v191 = vunpack.c.h.b16 %v77
    %v192 = vunpack.c.l.b16 %v78
    %v193 = vunpack.c.h.b16 %v78
    %v194 = vunpack.c.l.b16 %v79
    %v195 = vunpack.c.h.b16 %v79
    %v196 = vunpack.c.l.b16 %v80
    %v197 = vunpack.c.h.b16 %v80
    %v198 = vunpack.c.l.b16 %v81
    %v199 = vunpack.c.h.b16 %v81
    %v200 = vpack.c.b16 %v194, %v188
    %v201 = vpack.c.b16 %v195, %v189
    %v202 = vpack.c.b16 %v196, %v190
    %v203 = vpack.c.b16 %v197, %v191
    %v204 = vpack.c.b16 %v198, %v192
    %v205 = vpack.c.b16 %v199, %v193
    %v308 = vunpack.c.l.b16 %v82
    %v309 = vunpack.c.h.b16 %v82
    %v310 = vunpack.c.l.b16 %v83
    %v311 = vunpack.c.h.b16 %v83
    %v312 = vunpack.c.l.b16 %v84
    %v313 = vunpack.c.h.b16 %v84
    %v314 = vunpack.c.l.b16 %v85
    %v315 = vunpack.c.h.b16 %v85
    %v316 = vunpack.c.l.b16 %v86
    %v317 = vunpack.c.h.b16 %v86
    %v318 = vunpack.c.l.b16 %v87
    %v319 = vunpack.c.h.b16 %v87
    %v320 = vunpack.c.l.b16 %v88
    %v321 = vunpack.c.h.b16 %v88
    %v322 = vunpack.c.l.b16 %v89
    %v323 = vunpack.c.h.b16 %v89
    %v324 = vunpack.c.l.b16 %v90
    %v325 = vunpack.c.h.b16 %v90
    %v326 = vunpack.c.l.b16 %v91
    %v327 = vunpack.c.h.b16 %v91
    %v328 = vunpack.c.l.b16 %v92
    %v329 = vunpack.c.h.b16 %v92
    %v330 = vunpack.c.l.b16 %v93
    %v331 = vunpack.c.h.b16 %v93
    %v332 = vunpack.c.l.b16 %v94
    %v333 = vunpack.c.h.b16 %v94
    %v334 = vunpack.c.l.b16 %v95
    %v335 = vunpack.c.h.b16 %v95
    %v336 = vunpack.c.l.b16 %v96
    %v337 = vunpack.c.h.b16 %v96
    %v338 = vunpack.c.l.b16 %v97
    %v339 = vunpack.c.h.b16 %v97
    %v340 = vunpack.c.l.b16 %v98
    %v341 = vunpack.c.h.b16 %v98
    %v342 = vunpack.c.l.b16 %v99
    %v343 = vunpack.c.h.b16 %v99
    %v344 = vunpack.c.l.b16 %v100
    %v345 = vunpack.c.h.b16 %v100
    %v346 = vunpack.c.l.b16 %v101
    %v347 = vunpack.c.h.b16 %v101
    %v348 = vunpack.c.l.b16 %v102
    %v349 = vunpack.c.h.b16 %v102
    %v350 = vunpack.c.l.b16 %v103
    %v351 = vunpack.c.h.b16 %v103
    %v352 = vunpack.c.l.b16 %v104
    %v353 = vunpack.c.h.b16 %v104
    %v354 = vunpack.c.l.b16 %v105
    %v355 = vunpack.c.h.b16 %v105
    %v356 = vunpack.c.l.b16 %v106
    %v357 = vunpack.c.h.b16 %v106
    %v358 = vunpack.c.l.b16 %v107
    %v359 = vunpack.c.h.b16 %v107
    %v360 = vunpack.c.l.b16 %v108
    %v361 = vunpack.c.h.b16 %v108
    %v362 = vunpack.c.l.b16 %v109
    %v363 = vunpack.c.h.b16 %v109
    %v364 = vunpack.c.l.b16 %v110
    %v365 = vunpack.c.h.b16 %v110
    %v366 = vunpack.c.l.b16 %v111
    %v367 = vunpack.c.h.b16 %v111
    %v368 = vunpack.c.l.b16 %v112
    %v369 = vunpack.c.h.b16 %v112
    %v370 = vunpack.c.l.b16 %v113
    %v371 = vunpack.c.h.b16 %v113
    %v372 = vunpack.c.l.b16 %v114
    %v373 = vunpack.c.h.b16 %v114
    %v374 = vunpack.c.l.b16 %v115
    %v375 = vunpack.c.h.b16 %v115
    %v376 = vunpack.c.l.b16 %v116
    %v377 = vunpack.c.h.b16 %v116
    %v378 = vunpack.c.l.b16 %v117
    %v379 = vunpack.c.h.b16 %v117
    %v380 = vunpack.c.l.b16 %v118
    %v381 = vunpack.c.h.b16 %v118
    %v382 = vunpack.c.l.b16 %v119
    %v383 = vunpack.c.h.b16 %v119
    %v384 = vunpack.c.l.b16 %v120
    %v385 = vunpack.c.h.b16 %v120
    %v386 = vunpack.c.l.b16 %v121
    %v387 = vunpack.c.h.b16 %v121
    %v388 = vunpack.c.l.b16 %v122
    %v389 = vunpack.c.h.b16 %v122
    %v390 = vunpack.c.l.b16 %v123
    %v391 = vunpack.c.h.b16 %v123
    %v392 = vunpack.c.l.b16 %v124
    %v393 = vunpack.c.h.b16 %v124
    %v394 = vunpack.c.l.b16 %v125
    %v395 = vunpack.c.h.b16 %v125
    %v396 = vunpack.c.l.b16 %v126
    %v397 = vunpack.c.h.b16 %v126
    %v398 = vunpack.c.l.b16 %v127
    %v399 = vunpack.c.h.b16 %v127
    %v400 = vunpack.c.l.b16 %v128
    %v401 = vunpack.c.h.b16 %v128
    %v402 = vunpack.c.l.b16 %v129
    %v403 = vunpack.c.h.b16 %v129
    %v404 = vunpack.c.l.b16 %v130
    %v405 = vunpack.c.h.b16 %v130
    %v406 = vunpack.c.l.b16 %v131
    %v407 = vunpack.c.h.b16 %v131
    %v408 = vunpack.c.l.b16 %v132
    %v409 = vunpack.c.h.b16 %v132
    %v410 = vunpack.c.l.b16 %v133
    %v411 = vunpack.c.h.b16 %v133
    %v412 = vunpack.c.l.b16 %v134
    %v413 = vunpack.c.h.b16 %v134
    %v414 = vunpack.c.l.b16 %v135
    %v415 = vunpack.c.h.b16 %v135
    %v416 = vunpack.c.l.b16 %v136
    %v417 = vunpack.c.h.b16 %v136
    %v418 = vunpack.c.l.b16 %v137
    %v419 = vunpack.c.h.b16 %v137
    %v420 = vunpack.c.l.b16 %v138
    %v421 = vunpack.c.h.b16 %v138
    %v422 = vunpack.c.l.b16 %v139
    %v423 = vunpack.c.h.b16 %v139
    %v424 = vunpack.c.l.b16 %v140
    %v425 = vunpack.c.h.b16 %v140
    %v426 = vunpack.c.l.b16 %v141
    %v427 = vunpack.c.h.b16 %v141
    %v428 = vunpack.c.l.b16 %v142
    %v429 = vunpack.c.h.b16 %v142
    %v430 = vunpack.c.l.b16 %v143
    %v431 = vunpack.c.h.b16 %v143
    %v432 = vunpack.c.l.b16 %v144
    %v433 = vunpack.c.h.b16 %v144
    %v434 = vunpack.c.l.b16 %v145
    %v435 = vunpack.c.h.b16 %v145
    %v436 = vunpack.c.l.b16 %v146
    %v437 = vunpack.c.h.b16 %v146
    %v438 = vunpack.c.l.b16 %v147
    %v439 = vunpack.c.h.b16 %v147
    %v440 = vunpack.c.l.b16 %v148
    %v441 = vunpack.c.h.b16 %v148
    %v442 = vunpack.c.l.b16 %v149
    %v443 = vunpack.c.h.b16 %v149
    %v444 = vunpack.c.l.b16 %v150
    %v445 = vunpack.c.h.b16 %v150
    %v446 = vunpack.c.l.b16 %v151
    %v447 = vunpack.c.h.b16 %v151
    %v448 = vunpack.c.l.b16 %v152
    %v449 = vunpack.c.h.b16 %v152
    %v450 = vunpack.c.l.b16 %v153
    %v451 = vunpack.c.h.b16 %v153
    %v452 = vunpack.c.l.b16 %v154
    %v453 = vunpack.c.h.b16 %v154
    %v454 = vunpack.c.l.b16 %v155
    %v455 = vunpack.c.h.b16 %v155
    %v456 = vunpack.c.l.b16 %v156
    %v457 = vunpack.c.h.b16 %v156
    %v458 = vunpack.c.l.b16 %v157
    %v459 = vunpack.c.h.b16 %v157
    %v460 = vunpack.c.l.b16 %v158
    %v461 = vunpack.c.h.b16 %v158
    %v462 = vunpack.c.l.b16 %v159
    %v463 = vunpack.c.h.b16 %v159
    %v464 = vunpack.c.l.b16 %v160
    %v465 = vunpack.c.h.b16 %v160
    %v466 = vunpack.c.l.b16 %v161
    %v467 = vunpack.c.h.b16 %v161
    %v468 = vunpack.c.l.b16 %v162
    %v469 = vunpack.c.h.b16 %v162
    %v470 = vunpack.c.l.b16 %v163
    %v471 = vunpack.c.h.b16 %v163
    %v472 = vunpack.c.l.b16 %v164
    %v473 = vunpack.c.h.b16 %v164
    %v474 = vunpack.c.l.b16 %v165
    %v475 = vunpack.c.h.b16 %v165
    %v476 = vunpack.c.l.b16 %v166
    %v477 = vunpack.c.h.b16 %v166
    %v478 = vunpack.c.l.b16 %v167
    %v479 = vunpack.c.h.b16 %v167
    %v480 = vunpack.c.l.b16 %v168
    %v481 = vunpack.c.h.b16 %v168
    %v482 = vunpack.c.l.b16 %v169
    %v483 = vunpack.c.h.b16 %v169
    %v484 = vunpack.c.l.b16 %v170
    %v485 = vunpack.c.h.b16 %v170
    %v486 = vunpack.c.l.b16 %v171
    %v487 = vunpack.c.h.b16 %v171
    %v488 = vunpack.c.l.b16 %v172
    %v489 = vunpack.c.h.b16 %v172
    %v490 = vunpack.c.l.b16 %v173
    %v491 = vunpack.c.h.b16 %v173
    %v492 = vunpack.c.l.b16 %v174
    %v493 = vunpack.c.h.b16 %v174
    %v494 = vunpack.c.l.b16 %v175
    %v495 = vunpack.c.h.b16 %v175
    %v496 = vunpack.c.l.b16 %v176
    %v497 = vunpack.c.h.b16 %v176
    %v498 = vunpack.c.l.b16 %v177
    %v499 = vunpack.c.h.b16 %v177
    %v500 = vpack.c.b16 %v310, %v308
    %v501 = vpack.c.b16 %v311, %v309
    %v502 = vpack.c.b16 %v314, %v312
    %v503 = vpack.c.b16 %v315, %v313
    %v504 = vpack.c.b16 %v318, %v316
    %v505 = vpack.c.b16 %v319, %v317
    %v506 = vpack.c.b16 %v322, %v320
    %v507 = vpack.c.b16 %v323, %v321
    %v508 = vpack.c.b16 %v326, %v324
    %v509 = vpack.c.b16 %v327, %v325
    %v510 = vpack.c.b16 %v330, %v328
    %v511 = vpack.c.b16 %v331, %v329
    %v512 = vpack.c.b16 %v334, %v332
    %v513 = vpack.c.b16 %v335, %v333
    %v514 = vpack.c.b16 %v338, %v336
    %v515 = vpack.c.b16 %v339, %v337
    %v516 = vpack.c.b16 %v342, %v340
    %v517 = vpack.c.b16 %v343, %v341
    %v518 = vpack.c.b16 %v346, %v344
    %v519 = vpack.c.b16 %v347, %v345
    %v520 = vpack.c.b16 %v350, %v348
    %v521 = vpack.c.b16 %v351, %v349
    %v522 = vpack.c.b16 %v354, %v352
    %v523 = vpack.c.b16 %v355, %v353
    %v524 = vpack.c.b16 %v358, %v356
    %v525 = vpack.c.b16 %v359, %v357
    %v526 = vpack.c.b16 %v362, %v360
    %v527 = vpack.c.b16 %v363, %v361
    %v528 = vpack.c.b16 %v366, %v364
    %v529 = vpack.c.b16 %v367, %v365
    %v530 = vpack.c.b16 %v370, %v368
    %v531 = vpack.c.b16 %v371, %v369
    %v532 = vpack.c.b16 %v374, %v372
    %v533 = vpack.c.b16 %v375, %v373
    %v534 = vpack.c.b16 %v378, %v376
    %v535 = vpack.c.b16 %v379, %v377
    %v536 = vpack.c.b16 %v382, %v380
    %v537 = vpack.c.b16 %v383, %v381
    %v538 = vpack.c.b16 %v386, %v384
    %v539 = vpack.c.b16 %v387, %v385
    %v540 = vpack.c.b16 %v390, %v388
    %v541 = vpack.c.b16 %v391, %v389
    %v542 = vpack.c.b16 %v394, %v392
    %v543 = vpack.c.b16 %v395, %v393
    %v544 = vpack.c.b16 %v398, %v396
    %v545 = vpack.c.b16 %v399, %v397
    %v546 = vpack.c.b16 %v402, %v400
    %v547 = vpack.c.b16 %v403, %v401
    %v548 = vpack.c.b16 %v406, %v404
    %v549 = vpack.c.b16 %v407, %v405
    %v550 = vpack.c.b16 %v410, %v408
    %v551 = vpack.c.b16 %v411, %v409
    %v552 = vpack.c.b16 %v414, %v412
    %v553 = vpack.c.b16 %v415, %v413
    %v554 = vpack.c.b16 %v418, %v416
    %v555 = vpack.c.b16 %v419, %v417
    %v556 = vpack.c.b16 %v422, %v420
    %v557 = vpack.c.b16 %v423, %v421
    %v558 = vpack.c.b16 %v426, %v424
    %v559 = vpack.c.b16 %v427, %v425
    %v560 = vpack.c.b16 %v430, %v428
    %v561 = vpack.c.b16 %v431, %v429
    %v562 = vpack.c.b16 %v434, %v432
    %v563 = vpack.c.b16 %v435, %v433
    %v564 = vpack.c.b16 %v438, %v436
    %v565 = vpack.c.b16 %v439, %v437
    %v566 = vpack.c.b16 %v442, %v440
    %v567 = vpack.c.b16 %v443, %v441
    %v568 = vpack.c.b16 %v446, %v444
    %v569 = vpack.c.b16 %v447, %v445
    %v570 = vpack.c.b16 %v450, %v448
    %v571 = vpack.c.b16 %v451, %v449
    %v572 = vpack.c.b16 %v454, %v452
    %v573 = vpack.c.b16 %v455, %v453
    %v574 = vpack.c.b16 %v458, %v456
    %v575 = vpack.c.b16 %v459, %v457
    %v576 = vpack.c.b16 %v462, %v460
    %v577 = vpack.c.b16 %v463, %v461
    %v578 = vpack.c.b16 %v466, %v464
    %v579 = vpack.c.b16 %v467, %v465
    %v580 = vpack.c.b16 %v470, %v468
    %v581 = vpack.c.b16 %v471, %v469
    %v582 = vpack.c.b16 %v474, %v472
    %v583 = vpack.c.b16 %v475, %v473
    %v584 = vpack.c.b16 %v478, %v476
    %v585 = vpack.c.b16 %v479, %v477
    %v586 = vpack.c.b16 %v482, %v480
    %v587 = vpack.c.b16 %v483, %v481
    %v588 = vpack.c.b16 %v486, %v484
    %v589 = vpack.c.b16 %v487, %v485
    %v590 = vpack.c.b16 %v490, %v488
    %v591 = vpack.c.b16 %v491, %v489
    %v592 = vpack.c.b16 %v494, %v492
    %v593 = vpack.c.b16 %v495, %v493
    %v594 = vpack.c.b16 %v498, %v496
    %v595 = vpack.c.b16 %v499, %v497
    %692 = vmatprep.subr.bf16.mxu0 %v501
    %693 = vmatpush1.bf16.msra.mxu0 %v500
    %694 = vmatprep.subr.bf16.mxu0 %v503
    %695 = vmatpush1.bf16.msra.mxu0 %v502
    %696 = vmatprep.subr.bf16.mxu0 %v505
    %697 = vmatpush1.bf16.msra.mxu0 %v504
    %698 = vmatprep.subr.bf16.mxu0 %v507
    %699 = vmatpush1.bf16.msra.mxu0 %v506
    %700 = vmatprep.subr.bf16.mxu0 %v509
    %701 = vmatpush1.bf16.msra.mxu0 %v508
    %702 = vmatprep.subr.bf16.mxu0 %v511
    %703 = vmatpush1.bf16.msra.mxu0 %v510
    %704 = vmatprep.subr.bf16.mxu0 %v513
    %705 = vmatpush1.bf16.msra.mxu0 %v512
    %706 = vmatprep.subr.bf16.mxu0 %v515
    %707 = vmatpush1.bf16.msra.mxu0 %v514
    %708 = vmatprep.subr.bf16.mxu0 %v517
    %709 = vmatpush1.bf16.msra.mxu0 %v516
    %710 = vmatprep.subr.bf16.mxu0 %v519
    %711 = vmatpush1.bf16.msra.mxu0 %v518
    %712 = vmatprep.subr.bf16.mxu0 %v521
    %713 = vmatpush1.bf16.msra.mxu0 %v520
    %714 = vmatprep.subr.bf16.mxu0 %v523
    %715 = vmatpush1.bf16.msra.mxu0 %v522
    %716 = vmatprep.subr.bf16.mxu0 %v525
    %717 = vmatpush1.bf16.msra.mxu0 %v524
    %718 = vmatprep.subr.bf16.mxu0 %v527
    %719 = vmatpush1.bf16.msra.mxu0 %v526
    %720 = vmatprep.subr.bf16.mxu0 %v529
    %721 = vmatpush1.bf16.msra.mxu0 %v528
    %722 = vmatprep.subr.bf16.mxu0 %v531
    %723 = vmatpush1.bf16.msra.mxu0 %v530
    %724 = vmatprep.mubr.bf16.mxu0 %v201
    %725 = vmatmul.mubr.bf16.gmra.mrb[0].mxu0 %v200
    %v726 = vpop.f32.mrb[0].mxu0
    %v727 = vadd.f32 %v178, %v726
    %v728 = vpop.f32.mrb[0].mxu0
    %v729 = vadd.f32 %v179, %v728
    %v730 = vpop.f32.mrb[0].mxu0
    %v731 = vadd.f32 %v180, %v730
    %v732 = vpop.f32.mrb[0].mxu0
    %v733 = vadd.f32 %v181, %v732
    %734 = vdwg.mxu0
    %735 = vmatprep.subr.bf16.mxu0 %v533
    %736 = vmatpush1.bf16.msra.mxu0 %v532
    %737 = vmatprep.subr.bf16.mxu0 %v535
    %738 = vmatpush1.bf16.msra.mxu0 %v534
    %739 = vmatprep.subr.bf16.mxu0 %v537
    %740 = vmatpush1.bf16.msra.mxu0 %v536
    %741 = vmatprep.subr.bf16.mxu0 %v539
    %742 = vmatpush1.bf16.msra.mxu0 %v538
    %743 = vmatprep.subr.bf16.mxu0 %v541
    %744 = vmatpush1.bf16.msra.mxu0 %v540
    %745 = vmatprep.subr.bf16.mxu0 %v543
    %746 = vmatpush1.bf16.msra.mxu0 %v542
    %747 = vmatprep.subr.bf16.mxu0 %v545
    %748 = vmatpush1.bf16.msra.mxu0 %v544
    %749 = vmatprep.subr.bf16.mxu0 %v547
    %750 = vmatpush1.bf16.msra.mxu0 %v546
    %751 = vmatprep.subr.bf16.mxu0 %v549
    %752 = vmatpush1.bf16.msra.mxu0 %v548
    %753 = vmatprep.subr.bf16.mxu0 %v551
    %754 = vmatpush1.bf16.msra.mxu0 %v550
    %755 = vmatprep.subr.bf16.mxu0 %v553
    %756 = vmatpush1.bf16.msra.mxu0 %v552
    %757 = vmatprep.subr.bf16.mxu0 %v555
    %758 = vmatpush1.bf16.msra.mxu0 %v554
    %759 = vmatprep.subr.bf16.mxu0 %v557
    %760 = vmatpush1.bf16.msra.mxu0 %v556
    %761 = vmatprep.subr.bf16.mxu0 %v559
    %762 = vmatpush1.bf16.msra.mxu0 %v558
    %763 = vmatprep.subr.bf16.mxu0 %v561
    %764 = vmatpush1.bf16.msra.mxu0 %v560
    %765 = vmatprep.subr.bf16.mxu0 %v563
    %766 = vmatpush1.bf16.msra.mxu0 %v562
    %767 = vmatprep.mubr.bf16.mxu0 %v203
    %768 = vmatmul.mubr.bf16.gmra.mrb[0].mxu0 %v202
    %v769 = vpop.f32.mrb[0].mxu0
    %v770 = vadd.f32 %v727, %v769
    %v771 = vpop.f32.mrb[0].mxu0
    %v772 = vadd.f32 %v729, %v771
    %v773 = vpop.f32.mrb[0].mxu0
    %v774 = vadd.f32 %v731, %v773
    %v775 = vpop.f32.mrb[0].mxu0
    %v776 = vadd.f32 %v733, %v775
    %777 = vdwg.mxu0
    %778 = vmatprep.subr.bf16.mxu0 %v565
    %779 = vmatpush1.bf16.msra.mxu0 %v564
    %780 = vmatprep.subr.bf16.mxu0 %v567
    %781 = vmatpush1.bf16.msra.mxu0 %v566
    %782 = vmatprep.subr.bf16.mxu0 %v569
    %783 = vmatpush1.bf16.msra.mxu0 %v568
    %784 = vmatprep.subr.bf16.mxu0 %v571
    %785 = vmatpush1.bf16.msra.mxu0 %v570
    %786 = vmatprep.subr.bf16.mxu0 %v573
    %787 = vmatpush1.bf16.msra.mxu0 %v572
    %788 = vmatprep.subr.bf16.mxu0 %v575
    %789 = vmatpush1.bf16.msra.mxu0 %v574
    %790 = vmatprep.subr.bf16.mxu0 %v577
    %791 = vmatpush1.bf16.msra.mxu0 %v576
    %792 = vmatprep.subr.bf16.mxu0 %v579
    %793 = vmatpush1.bf16.msra.mxu0 %v578
    %794 = vmatprep.subr.bf16.mxu0 %v581
    %795 = vmatpush1.bf16.msra.mxu0 %v580
    %796 = vmatprep.subr.bf16.mxu0 %v583
    %797 = vmatpush1.bf16.msra.mxu0 %v582
    %798 = vmatprep.subr.bf16.mxu0 %v585
    %799 = vmatpush1.bf16.msra.mxu0 %v584
    %800 = vmatprep.subr.bf16.mxu0 %v587
    %801 = vmatpush1.bf16.msra.mxu0 %v586
    %802 = vmatprep.subr.bf16.mxu0 %v589
    %803 = vmatpush1.bf16.msra.mxu0 %v588
    %804 = vmatprep.subr.bf16.mxu0 %v591
    %805 = vmatpush1.bf16.msra.mxu0 %v590
    %806 = vmatprep.subr.bf16.mxu0 %v593
    %807 = vmatpush1.bf16.msra.mxu0 %v592
    %808 = vmatprep.subr.bf16.mxu0 %v595
    %809 = vmatpush1.bf16.msra.mxu0 %v594
    %810 = vmatprep.mubr.bf16.mxu0 %v205
    %811 = vmatmul.mubr.bf16.gmra.mrb[0].mxu0 %v204
    %v812 = vpop.f32.mrb[0].mxu0
    %v813 = vadd.f32 %v770, %v812
    %v814 = vpop.f32.mrb[0].mxu0
    %v815 = vadd.f32 %v772, %v814
    %v816 = vpop.f32.mrb[0].mxu0
    %v817 = vadd.f32 %v774, %v816
    %v818 = vpop.f32.mrb[0].mxu0
    %v819 = vadd.f32 %v776, %v818
    %820 = vdwg.mxu0
    %v821 = vld [vmem:[%s4] sm:$0x3]
    %v822 = vld [vmem:[%s5] sm:$0x3]
    %v823 = vadd.f32 %v813, %v815
    %824 = vadd.xlane.f32.xlu0 %v823
    %v825 = vpop.xlane.xlu0 %824
    %v826 = vadd.f32 %v817, %v819
    %827 = vadd.xlane.f32.xlu0 %v826
    %v828 = vpop.xlane.xlu0 %827
    %v829 = vrcp.pop 256.0
    %v830 = vmul.f32 %v825, %v829
    %v831 = vmul.f32 %v828, %v829
    %v832 = vsub.f32 %v813, %v830
    %v833 = vsub.f32 %v815, %v830
    %v834 = vsub.f32 %v817, %v831
    %v835 = vsub.f32 %v819, %v831
    %v836 = vmul.f32 %v832, %v832
    %v837 = vmul.f32 %v833, %v833
    %v838 = vmul.f32 %v834, %v834
    %v839 = vmul.f32 %v835, %v835
    %v840 = vadd.f32 %v836, %v837
    %841 = vadd.xlane.f32.xlu0 %v840
    %v842 = vpop.xlane.xlu0 %841
    %v843 = vadd.f32 %v838, %v839
    %844 = vadd.xlane.f32.xlu0 %v843
    %v845 = vpop.xlane.xlu0 %844
    %v846 = vmul.f32 %v842, %v829
    %v847 = vmul.f32 %v845, %v829
    %v848 = vadd.f32 %v846, 1e-05
    %v849 = vadd.f32 %v847, 1e-05
    %v850 = vrsqrt.pop %v848
    %v851 = vrsqrt.pop %v849
    %v852 = vmul.f32 %v832, %v850
    %v853 = vmul.f32 %v833, %v850
    %v854 = vmul.f32 %v834, %v851
    %v855 = vmul.f32 %v835, %v851
    %v857 = vlaneseq
    %v858 = vshrl.u32 %v857, 7
    %v859 = vsub.s32 0, %v858
    %v860 = vrot.slane %v821, %v859
    %v861 = vlaneseq
    %v862 = vshrl.u32 %v861, 7
    %v863 = vsub.s32 1, %v862
    %v864 = vrot.slane %v821, %v863
    %v867 = vmul.f32 %v852, %v860
    %v868 = vmul.f32 %v853, %v864
    %v869 = vmul.f32 %v854, %v860
    %v870 = vmul.f32 %v855, %v864
    %v872 = vlaneseq
    %v873 = vshrl.u32 %v872, 7
    %v874 = vsub.s32 0, %v873
    %v875 = vrot.slane %v822, %v874
    %v876 = vlaneseq
    %v877 = vshrl.u32 %v876, 7
    %v878 = vsub.s32 1, %v877
    %v879 = vrot.slane %v822, %v878
    %v882 = vadd.f32 %v867, %v875
    %v883 = vadd.f32 %v868, %v879
    %v884 = vadd.f32 %v869, %v875
    %v885 = vadd.f32 %v870, %v879
    %v886 = vld [vmem:[%s3] sm:$0xff]
    %v887 = vld [vmem:[%s3 + $0x8] sm:$0xff]
    %v888 = vld [vmem:[%s6] sm:$0x3]
    %v889 = vld [vmem:[%s7] sm:$0x3]
    %v890 = vadd.f32 %v882, %v883
    %891 = vadd.xlane.f32.xlu0 %v890
    %v892 = vpop.xlane.xlu0 %891
    %v893 = vadd.f32 %v884, %v885
    %894 = vadd.xlane.f32.xlu0 %v893
    %v895 = vpop.xlane.xlu0 %894
    %v896 = vmul.f32 %v892, %v829
    %v897 = vmul.f32 %v895, %v829
    %v898 = vsub.f32 %v882, %v896
    %v899 = vsub.f32 %v883, %v896
    %v900 = vsub.f32 %v884, %v897
    %v901 = vsub.f32 %v885, %v897
    %v902 = vmul.f32 %v898, %v898
    %v903 = vmul.f32 %v899, %v899
    %v904 = vmul.f32 %v900, %v900
    %v905 = vmul.f32 %v901, %v901
    %v906 = vadd.f32 %v902, %v903
    %907 = vadd.xlane.f32.xlu0 %v906
    %v908 = vpop.xlane.xlu0 %907
    %v909 = vadd.f32 %v904, %v905
    %910 = vadd.xlane.f32.xlu0 %v909
    %v911 = vpop.xlane.xlu0 %910
    %v912 = vmul.f32 %v908, %v829
    %v913 = vmul.f32 %v911, %v829
    %v914 = vadd.f32 %v912, 1e-05
    %v915 = vadd.f32 %v913, 1e-05
    %v916 = vrsqrt.pop %v914
    %v917 = vrsqrt.pop %v915
    %v918 = vmul.f32 %v898, %v916
    %v919 = vmul.f32 %v899, %v916
    %v920 = vmul.f32 %v900, %v917
    %v921 = vmul.f32 %v901, %v917
    %v923 = vlaneseq
    %v924 = vshrl.u32 %v923, 7
    %v925 = vsub.s32 0, %v924
    %v926 = vrot.slane %v888, %v925
    %v927 = vlaneseq
    %v928 = vshrl.u32 %v927, 7
    %v929 = vsub.s32 1, %v928
    %v930 = vrot.slane %v888, %v929
    %v933 = vmul.f32 %v918, %v926
    %v934 = vmul.f32 %v919, %v930
    %v935 = vmul.f32 %v920, %v926
    %v936 = vmul.f32 %v921, %v930
    %v938 = vlaneseq
    %v939 = vshrl.u32 %v938, 7
    %v940 = vsub.s32 0, %v939
    %v941 = vrot.slane %v889, %v940
    %v942 = vlaneseq
    %v943 = vshrl.u32 %v942, 7
    %v944 = vsub.s32 1, %v943
    %v945 = vrot.slane %v889, %v944
    %v948 = vadd.f32 %v933, %v941
    %v949 = vadd.f32 %v934, %v945
    %v950 = vadd.f32 %v935, %v941
    %v951 = vadd.f32 %v936, %v945
    %v952 = vpack.c.bf16 %v950, %v948
    %v953 = vpack.c.bf16 %v951, %v949
    %v954 = vld [vmem:[%s8] sm:$0xff]
    %v955 = vld [vmem:[%s8 + $0x8] sm:$0xff]
    %v956 = vld [vmem:[%s8 + $0x10] sm:$0xff]
    %v957 = vld [vmem:[%s8 + $0x18] sm:$0xff]
    %v958 = vld [vmem:[%s8 + $0x20] sm:$0xff]
    %v959 = vld [vmem:[%s8 + $0x28] sm:$0xff]
    %v960 = vld [vmem:[%s8 + $0x30] sm:$0xff]
    %v961 = vld [vmem:[%s8 + $0x38] sm:$0xff]
    %v962 = vld [vmem:[%s8 + $0x40] sm:$0xff]
    %v963 = vld [vmem:[%s8 + $0x48] sm:$0xff]
    %v964 = vld [vmem:[%s8 + $0x50] sm:$0xff]
    %v965 = vld [vmem:[%s8 + $0x58] sm:$0xff]
    %v966 = vld [vmem:[%s8 + $0x60] sm:$0xff]
    %v967 = vld [vmem:[%s8 + $0x68] sm:$0xff]
    %v968 = vld [vmem:[%s8 + $0x70] sm:$0xff]
    %v969 = vld [vmem:[%s8 + $0x78] sm:$0xff]
    %v970 = vld [vmem:[%s8 + $0x80] sm:$0xff]
    %v971 = vld [vmem:[%s8 + $0x88] sm:$0xff]
    %v972 = vld [vmem:[%s8 + $0x90] sm:$0xff]
    %v973 = vld [vmem:[%s8 + $0x98] sm:$0xff]
    %v974 = vld [vmem:[%s8 + $0xa0] sm:$0xff]
    %v975 = vld [vmem:[%s8 + $0xa8] sm:$0xff]
    %v976 = vld [vmem:[%s8 + $0xb0] sm:$0xff]
    %v977 = vld [vmem:[%s8 + $0xb8] sm:$0xff]
    %v978 = vld [vmem:[%s8 + $0xc0] sm:$0xff]
    %v979 = vld [vmem:[%s8 + $0xc8] sm:$0xff]
    %v980 = vld [vmem:[%s8 + $0xd0] sm:$0xff]
    %v981 = vld [vmem:[%s8 + $0xd8] sm:$0xff]
    %v982 = vld [vmem:[%s8 + $0xe0] sm:$0xff]
    %v983 = vld [vmem:[%s8 + $0xe8] sm:$0xff]
    %v984 = vld [vmem:[%s8 + $0xf0] sm:$0xff]
    %v985 = vld [vmem:[%s8 + $0xf8] sm:$0xff]
    %v986 = vld [vmem:[%s8 + $0x100] sm:$0xff]
    %v987 = vld [vmem:[%s8 + $0x108] sm:$0xff]
    %v988 = vld [vmem:[%s8 + $0x110] sm:$0xff]
    %v989 = vld [vmem:[%s8 + $0x118] sm:$0xff]
    %v990 = vld [vmem:[%s8 + $0x120] sm:$0xff]
    %v991 = vld [vmem:[%s8 + $0x128] sm:$0xff]
    %v992 = vld [vmem:[%s8 + $0x130] sm:$0xff]
    %v993 = vld [vmem:[%s8 + $0x138] sm:$0xff]
    %v994 = vld [vmem:[%s8 + $0x140] sm:$0xff]
    %v995 = vld [vmem:[%s8 + $0x148] sm:$0xff]
    %v996 = vld [vmem:[%s8 + $0x150] sm:$0xff]
    %v997 = vld [vmem:[%s8 + $0x158] sm:$0xff]
    %v998 = vld [vmem:[%s8 + $0x160] sm:$0xff]
    %v999 = vld [vmem:[%s8 + $0x168] sm:$0xff]
    %v1000 = vld [vmem:[%s8 + $0x170] sm:$0xff]
    %v1001 = vld [vmem:[%s8 + $0x178] sm:$0xff]
    %v1002 = vld [vmem:[%s8 + $0x180] sm:$0xff]
    %v1003 = vld [vmem:[%s8 + $0x188] sm:$0xff]
    %v1004 = vld [vmem:[%s8 + $0x190] sm:$0xff]
    %v1005 = vld [vmem:[%s8 + $0x198] sm:$0xff]
    %v1006 = vld [vmem:[%s8 + $0x1a0] sm:$0xff]
    %v1007 = vld [vmem:[%s8 + $0x1a8] sm:$0xff]
    %v1008 = vld [vmem:[%s8 + $0x1b0] sm:$0xff]
    %v1009 = vld [vmem:[%s8 + $0x1b8] sm:$0xff]
    %v1010 = vld [vmem:[%s8 + $0x1c0] sm:$0xff]
    %v1011 = vld [vmem:[%s8 + $0x1c8] sm:$0xff]
    %v1012 = vld [vmem:[%s8 + $0x1d0] sm:$0xff]
    %v1013 = vld [vmem:[%s8 + $0x1d8] sm:$0xff]
    %v1014 = vld [vmem:[%s8 + $0x1e0] sm:$0xff]
    %v1015 = vld [vmem:[%s8 + $0x1e8] sm:$0xff]
    %v1016 = vld [vmem:[%s8 + $0x1f0] sm:$0xff]
    %v1017 = vld [vmem:[%s8 + $0x1f8] sm:$0xff]
    %v1018 = vld [vmem:[%s8 + $0x200] sm:$0xff]
    %v1019 = vld [vmem:[%s8 + $0x208] sm:$0xff]
    %v1020 = vld [vmem:[%s8 + $0x210] sm:$0xff]
    %v1021 = vld [vmem:[%s8 + $0x218] sm:$0xff]
    %v1022 = vld [vmem:[%s8 + $0x220] sm:$0xff]
    %v1023 = vld [vmem:[%s8 + $0x228] sm:$0xff]
    %v1024 = vld [vmem:[%s8 + $0x230] sm:$0xff]
    %v1025 = vld [vmem:[%s8 + $0x238] sm:$0xff]
    %v1026 = vld [vmem:[%s8 + $0x240] sm:$0xff]
    %v1027 = vld [vmem:[%s8 + $0x248] sm:$0xff]
    %v1028 = vld [vmem:[%s8 + $0x250] sm:$0xff]
    %v1029 = vld [vmem:[%s8 + $0x258] sm:$0xff]
    %v1030 = vld [vmem:[%s8 + $0x260] sm:$0xff]
    %v1031 = vld [vmem:[%s8 + $0x268] sm:$0xff]
    %v1032 = vld [vmem:[%s8 + $0x270] sm:$0xff]
    %v1033 = vld [vmem:[%s8 + $0x278] sm:$0xff]
    %v1034 = vld [vmem:[%s8 + $0x280] sm:$0xff]
    %v1035 = vld [vmem:[%s8 + $0x288] sm:$0xff]
    %v1036 = vld [vmem:[%s8 + $0x290] sm:$0xff]
    %v1037 = vld [vmem:[%s8 + $0x298] sm:$0xff]
    %v1038 = vld [vmem:[%s8 + $0x2a0] sm:$0xff]
    %v1039 = vld [vmem:[%s8 + $0x2a8] sm:$0xff]
    %v1040 = vld [vmem:[%s8 + $0x2b0] sm:$0xff]
    %v1041 = vld [vmem:[%s8 + $0x2b8] sm:$0xff]
    %v1042 = vld [vmem:[%s8 + $0x2c0] sm:$0xff]
    %v1043 = vld [vmem:[%s8 + $0x2c8] sm:$0xff]
    %v1044 = vld [vmem:[%s8 + $0x2d0] sm:$0xff]
    %v1045 = vld [vmem:[%s8 + $0x2d8] sm:$0xff]
    %v1046 = vld [vmem:[%s8 + $0x2e0] sm:$0xff]
    %v1047 = vld [vmem:[%s8 + $0x2e8] sm:$0xff]
    %v1048 = vld [vmem:[%s8 + $0x2f0] sm:$0xff]
    %v1049 = vld [vmem:[%s8 + $0x2f8] sm:$0xff]
    %v1050 = vld [vmem:[%s9] sm:$0x3f]
    %v1052 = vlaneseq
    %v1053 = vshrl.u32 %v1052, 7
    %v1054 = vsub.s32 0, %v1053
    %v1055 = vrot.slane %v1050, %v1054
    %v1056 = vlaneseq
    %v1057 = vshrl.u32 %v1056, 7
    %v1058 = vsub.s32 1, %v1057
    %v1059 = vrot.slane %v1050, %v1058
    %v1060 = vlaneseq
    %v1061 = vshrl.u32 %v1060, 7
    %v1062 = vsub.s32 2, %v1061
    %v1063 = vrot.slane %v1050, %v1062
    %v1064 = vlaneseq
    %v1065 = vshrl.u32 %v1064, 7
    %v1066 = vsub.s32 3, %v1065
    %v1067 = vrot.slane %v1050, %v1066
    %v1068 = vlaneseq
    %v1069 = vshrl.u32 %v1068, 7
    %v1070 = vsub.s32 4, %v1069
    %v1071 = vrot.slane %v1050, %v1070
    %v1072 = vlaneseq
    %v1073 = vshrl.u32 %v1072, 7
    %v1074 = vsub.s32 5, %v1073
    %v1075 = vrot.slane %v1050, %v1074
    %v1178 = vunpack.c.l.b16 %v954
    %v1179 = vunpack.c.h.b16 %v954
    %v1180 = vunpack.c.l.b16 %v955
    %v1181 = vunpack.c.h.b16 %v955
    %v1182 = vunpack.c.l.b16 %v956
    %v1183 = vunpack.c.h.b16 %v956
    %v1184 = vunpack.c.l.b16 %v957
    %v1185 = vunpack.c.h.b16 %v957
    %v1186 = vunpack.c.l.b16 %v958
    %v1187 = vunpack.c.h.b16 %v958
    %v1188 = vunpack.c.l.b16 %v959
    %v1189 = vunpack.c.h.b16 %v959
    %v1190 = vunpack.c.l.b16 %v960
    %v1191 = vunpack.c.h.b16 %v960
    %v1192 = vunpack.c.l.b16 %v961
    %v1193 = vunpack.c.h.b16 %v961
    %v1194 = vunpack.c.l.b16 %v962
    %v1195 = vunpack.c.h.b16 %v962
    %v1196 = vunpack.c.l.b16 %v963
    %v1197 = vunpack.c.h.b16 %v963
    %v1198 = vunpack.c.l.b16 %v964
    %v1199 = vunpack.c.h.b16 %v964
    %v1200 = vunpack.c.l.b16 %v965
    %v1201 = vunpack.c.h.b16 %v965
    %v1202 = vunpack.c.l.b16 %v966
    %v1203 = vunpack.c.h.b16 %v966
    %v1204 = vunpack.c.l.b16 %v967
    %v1205 = vunpack.c.h.b16 %v967
    %v1206 = vunpack.c.l.b16 %v968
    %v1207 = vunpack.c.h.b16 %v968
    %v1208 = vunpack.c.l.b16 %v969
    %v1209 = vunpack.c.h.b16 %v969
    %v1210 = vunpack.c.l.b16 %v970
    %v1211 = vunpack.c.h.b16 %v970
    %v1212 = vunpack.c.l.b16 %v971
    %v1213 = vunpack.c.h.b16 %v971
    %v1214 = vunpack.c.l.b16 %v972
    %v1215 = vunpack.c.h.b16 %v972
    %v1216 = vunpack.c.l.b16 %v973
    %v1217 = vunpack.c.h.b16 %v973
    %v1218 = vunpack.c.l.b16 %v974
    %v1219 = vunpack.c.h.b16 %v974
    %v1220 = vunpack.c.l.b16 %v975
    %v1221 = vunpack.c.h.b16 %v975
    %v1222 = vunpack.c.l.b16 %v976
    %v1223 = vunpack.c.h.b16 %v976
    %v1224 = vunpack.c.l.b16 %v977
    %v1225 = vunpack.c.h.b16 %v977
    %v1226 = vunpack.c.l.b16 %v978
    %v1227 = vunpack.c.h.b16 %v978
    %v1228 = vunpack.c.l.b16 %v979
    %v1229 = vunpack.c.h.b16 %v979
    %v1230 = vunpack.c.l.b16 %v980
    %v1231 = vunpack.c.h.b16 %v980
    %v1232 = vunpack.c.l.b16 %v981
    %v1233 = vunpack.c.h.b16 %v981
    %v1234 = vunpack.c.l.b16 %v982
    %v1235 = vunpack.c.h.b16 %v982
    %v1236 = vunpack.c.l.b16 %v983
    %v1237 = vunpack.c.h.b16 %v983
    %v1238 = vunpack.c.l.b16 %v984
    %v1239 = vunpack.c.h.b16 %v984
    %v1240 = vunpack.c.l.b16 %v985
    %v1241 = vunpack.c.h.b16 %v985
    %v1242 = vunpack.c.l.b16 %v986
    %v1243 = vunpack.c.h.b16 %v986
    %v1244 = vunpack.c.l.b16 %v987
    %v1245 = vunpack.c.h.b16 %v987
    %v1246 = vunpack.c.l.b16 %v988
    %v1247 = vunpack.c.h.b16 %v988
    %v1248 = vunpack.c.l.b16 %v989
    %v1249 = vunpack.c.h.b16 %v989
    %v1250 = vunpack.c.l.b16 %v990
    %v1251 = vunpack.c.h.b16 %v990
    %v1252 = vunpack.c.l.b16 %v991
    %v1253 = vunpack.c.h.b16 %v991
    %v1254 = vunpack.c.l.b16 %v992
    %v1255 = vunpack.c.h.b16 %v992
    %v1256 = vunpack.c.l.b16 %v993
    %v1257 = vunpack.c.h.b16 %v993
    %v1258 = vunpack.c.l.b16 %v994
    %v1259 = vunpack.c.h.b16 %v994
    %v1260 = vunpack.c.l.b16 %v995
    %v1261 = vunpack.c.h.b16 %v995
    %v1262 = vunpack.c.l.b16 %v996
    %v1263 = vunpack.c.h.b16 %v996
    %v1264 = vunpack.c.l.b16 %v997
    %v1265 = vunpack.c.h.b16 %v997
    %v1266 = vunpack.c.l.b16 %v998
    %v1267 = vunpack.c.h.b16 %v998
    %v1268 = vunpack.c.l.b16 %v999
    %v1269 = vunpack.c.h.b16 %v999
    %v1270 = vunpack.c.l.b16 %v1000
    %v1271 = vunpack.c.h.b16 %v1000
    %v1272 = vunpack.c.l.b16 %v1001
    %v1273 = vunpack.c.h.b16 %v1001
    %v1274 = vunpack.c.l.b16 %v1002
    %v1275 = vunpack.c.h.b16 %v1002
    %v1276 = vunpack.c.l.b16 %v1003
    %v1277 = vunpack.c.h.b16 %v1003
    %v1278 = vunpack.c.l.b16 %v1004
    %v1279 = vunpack.c.h.b16 %v1004
    %v1280 = vunpack.c.l.b16 %v1005
    %v1281 = vunpack.c.h.b16 %v1005
    %v1282 = vunpack.c.l.b16 %v1006
    %v1283 = vunpack.c.h.b16 %v1006
    %v1284 = vunpack.c.l.b16 %v1007
    %v1285 = vunpack.c.h.b16 %v1007
    %v1286 = vunpack.c.l.b16 %v1008
    %v1287 = vunpack.c.h.b16 %v1008
    %v1288 = vunpack.c.l.b16 %v1009
    %v1289 = vunpack.c.h.b16 %v1009
    %v1290 = vunpack.c.l.b16 %v1010
    %v1291 = vunpack.c.h.b16 %v1010
    %v1292 = vunpack.c.l.b16 %v1011
    %v1293 = vunpack.c.h.b16 %v1011
    %v1294 = vunpack.c.l.b16 %v1012
    %v1295 = vunpack.c.h.b16 %v1012
    %v1296 = vunpack.c.l.b16 %v1013
    %v1297 = vunpack.c.h.b16 %v1013
    %v1298 = vunpack.c.l.b16 %v1014
    %v1299 = vunpack.c.h.b16 %v1014
    %v1300 = vunpack.c.l.b16 %v1015
    %v1301 = vunpack.c.h.b16 %v1015
    %v1302 = vunpack.c.l.b16 %v1016
    %v1303 = vunpack.c.h.b16 %v1016
    %v1304 = vunpack.c.l.b16 %v1017
    %v1305 = vunpack.c.h.b16 %v1017
    %v1306 = vunpack.c.l.b16 %v1018
    %v1307 = vunpack.c.h.b16 %v1018
    %v1308 = vunpack.c.l.b16 %v1019
    %v1309 = vunpack.c.h.b16 %v1019
    %v1310 = vunpack.c.l.b16 %v1020
    %v1311 = vunpack.c.h.b16 %v1020
    %v1312 = vunpack.c.l.b16 %v1021
    %v1313 = vunpack.c.h.b16 %v1021
    %v1314 = vunpack.c.l.b16 %v1022
    %v1315 = vunpack.c.h.b16 %v1022
    %v1316 = vunpack.c.l.b16 %v1023
    %v1317 = vunpack.c.h.b16 %v1023
    %v1318 = vunpack.c.l.b16 %v1024
    %v1319 = vunpack.c.h.b16 %v1024
    %v1320 = vunpack.c.l.b16 %v1025
    %v1321 = vunpack.c.h.b16 %v1025
    %v1322 = vunpack.c.l.b16 %v1026
    %v1323 = vunpack.c.h.b16 %v1026
    %v1324 = vunpack.c.l.b16 %v1027
    %v1325 = vunpack.c.h.b16 %v1027
    %v1326 = vunpack.c.l.b16 %v1028
    %v1327 = vunpack.c.h.b16 %v1028
    %v1328 = vunpack.c.l.b16 %v1029
    %v1329 = vunpack.c.h.b16 %v1029
    %v1330 = vunpack.c.l.b16 %v1030
    %v1331 = vunpack.c.h.b16 %v1030
    %v1332 = vunpack.c.l.b16 %v1031
    %v1333 = vunpack.c.h.b16 %v1031
    %v1334 = vunpack.c.l.b16 %v1032
    %v1335 = vunpack.c.h.b16 %v1032
    %v1336 = vunpack.c.l.b16 %v1033
    %v1337 = vunpack.c.h.b16 %v1033
    %v1338 = vunpack.c.l.b16 %v1034
    %v1339 = vunpack.c.h.b16 %v1034
    %v1340 = vunpack.c.l.b16 %v1035
    %v1341 = vunpack.c.h.b16 %v1035
    %v1342 = vunpack.c.l.b16 %v1036
    %v1343 = vunpack.c.h.b16 %v1036
    %v1344 = vunpack.c.l.b16 %v1037
    %v1345 = vunpack.c.h.b16 %v1037
    %v1346 = vunpack.c.l.b16 %v1038
    %v1347 = vunpack.c.h.b16 %v1038
    %v1348 = vunpack.c.l.b16 %v1039
    %v1349 = vunpack.c.h.b16 %v1039
    %v1350 = vunpack.c.l.b16 %v1040
    %v1351 = vunpack.c.h.b16 %v1040
    %v1352 = vunpack.c.l.b16 %v1041
    %v1353 = vunpack.c.h.b16 %v1041
    %v1354 = vunpack.c.l.b16 %v1042
    %v1355 = vunpack.c.h.b16 %v1042
    %v1356 = vunpack.c.l.b16 %v1043
    %v1357 = vunpack.c.h.b16 %v1043
    %v1358 = vunpack.c.l.b16 %v1044
    %v1359 = vunpack.c.h.b16 %v1044
    %v1360 = vunpack.c.l.b16 %v1045
    %v1361 = vunpack.c.h.b16 %v1045
    %v1362 = vunpack.c.l.b16 %v1046
    %v1363 = vunpack.c.h.b16 %v1046
    %v1364 = vunpack.c.l.b16 %v1047
    %v1365 = vunpack.c.h.b16 %v1047
    %v1366 = vunpack.c.l.b16 %v1048
    %v1367 = vunpack.c.h.b16 %v1048
    %v1368 = vunpack.c.l.b16 %v1049
    %v1369 = vunpack.c.h.b16 %v1049
    %v1370 = vpack.c.b16 %v1184, %v1178
    %v1371 = vpack.c.b16 %v1185, %v1179
    %v1372 = vpack.c.b16 %v1186, %v1180
    %v1373 = vpack.c.b16 %v1187, %v1181
    %v1374 = vpack.c.b16 %v1188, %v1182
    %v1375 = vpack.c.b16 %v1189, %v1183
    %v1376 = vpack.c.b16 %v1196, %v1190
    %v1377 = vpack.c.b16 %v1197, %v1191
    %v1378 = vpack.c.b16 %v1198, %v1192
    %v1379 = vpack.c.b16 %v1199, %v1193
    %v1380 = vpack.c.b16 %v1200, %v1194
    %v1381 = vpack.c.b16 %v1201, %v1195
    %v1382 = vpack.c.b16 %v1208, %v1202
    %v1383 = vpack.c.b16 %v1209, %v1203
    %v1384 = vpack.c.b16 %v1210, %v1204
    %v1385 = vpack.c.b16 %v1211, %v1205
    %v1386 = vpack.c.b16 %v1212, %v1206
    %v1387 = vpack.c.b16 %v1213, %v1207
    %v1388 = vpack.c.b16 %v1220, %v1214
    %v1389 = vpack.c.b16 %v1221, %v1215
    %v1390 = vpack.c.b16 %v1222, %v1216
    %v1391 = vpack.c.b16 %v1223, %v1217
    %v1392 = vpack.c.b16 %v1224, %v1218
    %v1393 = vpack.c.b16 %v1225, %v1219
    %v1394 = vpack.c.b16 %v1232, %v1226
    %v1395 = vpack.c.b16 %v1233, %v1227
    %v1396 = vpack.c.b16 %v1234, %v1228
    %v1397 = vpack.c.b16 %v1235, %v1229
    %v1398 = vpack.c.b16 %v1236, %v1230
    %v1399 = vpack.c.b16 %v1237, %v1231
    %v1400 = vpack.c.b16 %v1244, %v1238
    %v1401 = vpack.c.b16 %v1245, %v1239
    %v1402 = vpack.c.b16 %v1246, %v1240
    %v1403 = vpack.c.b16 %v1247, %v1241
    %v1404 = vpack.c.b16 %v1248, %v1242
    %v1405 = vpack.c.b16 %v1249, %v1243
    %v1406 = vpack.c.b16 %v1256, %v1250
    %v1407 = vpack.c.b16 %v1257, %v1251
    %v1408 = vpack.c.b16 %v1258, %v1252
    %v1409 = vpack.c.b16 %v1259, %v1253
    %v1410 = vpack.c.b16 %v1260, %v1254
    %v1411 = vpack.c.b16 %v1261, %v1255
    %v1412 = vpack.c.b16 %v1268, %v1262
    %v1413 = vpack.c.b16 %v1269, %v1263
    %v1414 = vpack.c.b16 %v1270, %v1264
    %v1415 = vpack.c.b16 %v1271, %v1265
    %v1416 = vpack.c.b16 %v1272, %v1266
    %v1417 = vpack.c.b16 %v1273, %v1267
    %v1418 = vpack.c.b16 %v1280, %v1274
    %v1419 = vpack.c.b16 %v1281, %v1275
    %v1420 = vpack.c.b16 %v1282, %v1276
    %v1421 = vpack.c.b16 %v1283, %v1277
    %v1422 = vpack.c.b16 %v1284, %v1278
    %v1423 = vpack.c.b16 %v1285, %v1279
    %v1424 = vpack.c.b16 %v1292, %v1286
    %v1425 = vpack.c.b16 %v1293, %v1287
    %v1426 = vpack.c.b16 %v1294, %v1288
    %v1427 = vpack.c.b16 %v1295, %v1289
    %v1428 = vpack.c.b16 %v1296, %v1290
    %v1429 = vpack.c.b16 %v1297, %v1291
    %v1430 = vpack.c.b16 %v1304, %v1298
    %v1431 = vpack.c.b16 %v1305, %v1299
    %v1432 = vpack.c.b16 %v1306, %v1300
    %v1433 = vpack.c.b16 %v1307, %v1301
    %v1434 = vpack.c.b16 %v1308, %v1302
    %v1435 = vpack.c.b16 %v1309, %v1303
    %v1436 = vpack.c.b16 %v1316, %v1310
    %v1437 = vpack.c.b16 %v1317, %v1311
    %v1438 = vpack.c.b16 %v1318, %v1312
    %v1439 = vpack.c.b16 %v1319, %v1313
    %v1440 = vpack.c.b16 %v1320, %v1314
    %v1441 = vpack.c.b16 %v1321, %v1315
    %v1442 = vpack.c.b16 %v1328, %v1322
    %v1443 = vpack.c.b16 %v1329, %v1323
    %v1444 = vpack.c.b16 %v1330, %v1324
    %v1445 = vpack.c.b16 %v1331, %v1325
    %v1446 = vpack.c.b16 %v1332, %v1326
    %v1447 = vpack.c.b16 %v1333, %v1327
    %v1448 = vpack.c.b16 %v1340, %v1334
    %v1449 = vpack.c.b16 %v1341, %v1335
    %v1450 = vpack.c.b16 %v1342, %v1336
    %v1451 = vpack.c.b16 %v1343, %v1337
    %v1452 = vpack.c.b16 %v1344, %v1338
    %v1453 = vpack.c.b16 %v1345, %v1339
    %v1454 = vpack.c.b16 %v1352, %v1346
    %v1455 = vpack.c.b16 %v1353, %v1347
    %v1456 = vpack.c.b16 %v1354, %v1348
    %v1457 = vpack.c.b16 %v1355, %v1349
    %v1458 = vpack.c.b16 %v1356, %v1350
    %v1459 = vpack.c.b16 %v1357, %v1351
    %v1460 = vpack.c.b16 %v1364, %v1358
    %v1461 = vpack.c.b16 %v1365, %v1359
    %v1462 = vpack.c.b16 %v1366, %v1360
    %v1463 = vpack.c.b16 %v1367, %v1361
    %v1464 = vpack.c.b16 %v1368, %v1362
    %v1465 = vpack.c.b16 %v1369, %v1363
    %1562 = vmatprep.subr.bf16.mxu0 %v1371
    %1563 = vmatpush1.bf16.msra.mxu0 %v1370
    %1564 = vmatprep.subr.bf16.mxu0 %v1377
    %1565 = vmatpush1.bf16.msra.mxu0 %v1376
    %1566 = vmatprep.subr.bf16.mxu0 %v1383
    %1567 = vmatpush1.bf16.msra.mxu0 %v1382
    %1568 = vmatprep.subr.bf16.mxu0 %v1389
    %1569 = vmatpush1.bf16.msra.mxu0 %v1388
    %1570 = vmatprep.subr.bf16.mxu0 %v1395
    %1571 = vmatpush1.bf16.msra.mxu0 %v1394
    %1572 = vmatprep.subr.bf16.mxu0 %v1401
    %1573 = vmatpush1.bf16.msra.mxu0 %v1400
    %1574 = vmatprep.subr.bf16.mxu0 %v1407
    %1575 = vmatpush1.bf16.msra.mxu0 %v1406
    %1576 = vmatprep.subr.bf16.mxu0 %v1413
    %1577 = vmatpush1.bf16.msra.mxu0 %v1412
    %1578 = vmatprep.subr.bf16.mxu0 %v1419
    %1579 = vmatpush1.bf16.msra.mxu0 %v1418
    %1580 = vmatprep.subr.bf16.mxu0 %v1425
    %1581 = vmatpush1.bf16.msra.mxu0 %v1424
    %1582 = vmatprep.subr.bf16.mxu0 %v1431
    %1583 = vmatpush1.bf16.msra.mxu0 %v1430
    %1584 = vmatprep.subr.bf16.mxu0 %v1437
    %1585 = vmatpush1.bf16.msra.mxu0 %v1436
    %1586 = vmatprep.subr.bf16.mxu0 %v1443
    %1587 = vmatpush1.bf16.msra.mxu0 %v1442
    %1588 = vmatprep.subr.bf16.mxu0 %v1449
    %1589 = vmatpush1.bf16.msra.mxu0 %v1448
    %1590 = vmatprep.subr.bf16.mxu0 %v1455
    %1591 = vmatpush1.bf16.msra.mxu0 %v1454
    %1592 = vmatprep.subr.bf16.mxu0 %v1461
    %1593 = vmatpush1.bf16.msra.mxu0 %v1460
    %1594 = vmatprep.mubr.bf16.mxu0 %v953
    %1595 = vmatmul.mubr.bf16.gmra.mrb[0].mxu0 %v952
    %v1596 = vpop.f32.mrb[0].mxu0
    %v1597 = vadd.f32 %v1055, %v1596
    %v1598 = vpop.f32.mrb[0].mxu0
    %v1599 = vadd.f32 %v1059, %v1598
    %v1600 = vpop.f32.mrb[0].mxu0
    %v1601 = vadd.f32 %v1055, %v1600
    %v1602 = vpop.f32.mrb[0].mxu0
    %v1603 = vadd.f32 %v1059, %v1602
    %1604 = vdwg.mxu0
    %1605 = vmatprep.subr.bf16.mxu0 %v1373
    %1606 = vmatpush1.bf16.msra.mxu0 %v1372
    %1607 = vmatprep.subr.bf16.mxu0 %v1379
    %1608 = vmatpush1.bf16.msra.mxu0 %v1378
    %1609 = vmatprep.subr.bf16.mxu0 %v1385
    %1610 = vmatpush1.bf16.msra.mxu0 %v1384
    %1611 = vmatprep.subr.bf16.mxu0 %v1391
    %1612 = vmatpush1.bf16.msra.mxu0 %v1390
    %1613 = vmatprep.subr.bf16.mxu0 %v1397
    %1614 = vmatpush1.bf16.msra.mxu0 %v1396
    %1615 = vmatprep.subr.bf16.mxu0 %v1403
    %1616 = vmatpush1.bf16.msra.mxu0 %v1402
    %1617 = vmatprep.subr.bf16.mxu0 %v1409
    %1618 = vmatpush1.bf16.msra.mxu0 %v1408
    %1619 = vmatprep.subr.bf16.mxu0 %v1415
    %1620 = vmatpush1.bf16.msra.mxu0 %v1414
    %1621 = vmatprep.subr.bf16.mxu0 %v1421
    %1622 = vmatpush1.bf16.msra.mxu0 %v1420
    %1623 = vmatprep.subr.bf16.mxu0 %v1427
    %1624 = vmatpush1.bf16.msra.mxu0 %v1426
    %1625 = vmatprep.subr.bf16.mxu0 %v1433
    %1626 = vmatpush1.bf16.msra.mxu0 %v1432
    %1627 = vmatprep.subr.bf16.mxu0 %v1439
    %1628 = vmatpush1.bf16.msra.mxu0 %v1438
    %1629 = vmatprep.subr.bf16.mxu0 %v1445
    %1630 = vmatpush1.bf16.msra.mxu0 %v1444
    %1631 = vmatprep.subr.bf16.mxu0 %v1451
    %1632 = vmatpush1.bf16.msra.mxu0 %v1450
    %1633 = vmatprep.subr.bf16.mxu0 %v1457
    %1634 = vmatpush1.bf16.msra.mxu0 %v1456
    %1635 = vmatprep.subr.bf16.mxu0 %v1463
    %1636 = vmatpush1.bf16.msra.mxu0 %v1462
    %1637 = vmatprep.mubr.bf16.mxu0 %v953
    %1638 = vmatmul.mubr.bf16.gmra.mrb[0].mxu0 %v952
    %v1639 = vpop.f32.mrb[0].mxu0
    %v1640 = vadd.f32 %v1063, %v1639
    %v1641 = vpop.f32.mrb[0].mxu0
    %v1642 = vadd.f32 %v1067, %v1641
    %v1643 = vpop.f32.mrb[0].mxu0
    %v1644 = vadd.f32 %v1063, %v1643
    %v1645 = vpop.f32.mrb[0].mxu0
    %v1646 = vadd.f32 %v1067, %v1645
    %1647 = vdwg.mxu0
    %1648 = vmatprep.subr.bf16.mxu0 %v1375
    %1649 = vmatpush1.bf16.msra.mxu0 %v1374
    %1650 = vmatprep.subr.bf16.mxu0 %v1381
    %1651 = vmatpush1.bf16.msra.mxu0 %v1380
    %1652 = vmatprep.subr.bf16.mxu0 %v1387
    %1653 = vmatpush1.bf16.msra.mxu0 %v1386
    %1654 = vmatprep.subr.bf16.mxu0 %v1393
    %1655 = vmatpush1.bf16.msra.mxu0 %v1392
    %1656 = vmatprep.subr.bf16.mxu0 %v1399
    %1657 = vmatpush1.bf16.msra.mxu0 %v1398
    %1658 = vmatprep.subr.bf16.mxu0 %v1405
    %1659 = vmatpush1.bf16.msra.mxu0 %v1404
    %1660 = vmatprep.subr.bf16.mxu0 %v1411
    %1661 = vmatpush1.bf16.msra.mxu0 %v1410
    %1662 = vmatprep.subr.bf16.mxu0 %v1417
    %1663 = vmatpush1.bf16.msra.mxu0 %v1416
    %1664 = vmatprep.subr.bf16.mxu0 %v1423
    %1665 = vmatpush1.bf16.msra.mxu0 %v1422
    %1666 = vmatprep.subr.bf16.mxu0 %v1429
    %1667 = vmatpush1.bf16.msra.mxu0 %v1428
    %1668 = vmatprep.subr.bf16.mxu0 %v1435
    %1669 = vmatpush1.bf16.msra.mxu0 %v1434
    %1670 = vmatprep.subr.bf16.mxu0 %v1441
    %1671 = vmatpush1.bf16.msra.mxu0 %v1440
    %1672 = vmatprep.subr.bf16.mxu0 %v1447
    %1673 = vmatpush1.bf16.msra.mxu0 %v1446
    %1674 = vmatprep.subr.bf16.mxu0 %v1453
    %1675 = vmatpush1.bf16.msra.mxu0 %v1452
    %1676 = vmatprep.subr.bf16.mxu0 %v1459
    %1677 = vmatpush1.bf16.msra.mxu0 %v1458
    %1678 = vmatprep.subr.bf16.mxu0 %v1465
    %1679 = vmatpush1.bf16.msra.mxu0 %v1464
    %1680 = vmatprep.mubr.bf16.mxu0 %v953
    %1681 = vmatmul.mubr.bf16.gmra.mrb[0].mxu0 %v952
    %v1682 = vpop.f32.mrb[0].mxu0
    %v1683 = vadd.f32 %v1071, %v1682
    %v1684 = vpop.f32.mrb[0].mxu0
    %v1685 = vadd.f32 %v1075, %v1684
    %v1686 = vpop.f32.mrb[0].mxu0
    %v1687 = vadd.f32 %v1071, %v1686
    %v1688 = vpop.f32.mrb[0].mxu0
    %v1689 = vadd.f32 %v1075, %v1688
    %1690 = vdwg.mxu0
    %v1691 = vmul.f32 %v1597, 0.125
    %v1692 = vmul.f32 %v1601, 0.125
    %v1693 = vpack.c.bf16 %v1692, %v1691
    %v1694 = vpack.c.bf16 %v1644, %v1640
    %v1695 = vpack.c.bf16 %v1687, %v1683
    %vm1696 = vcmask 523264
    %v1698 = vsel %vm1696, %v1693, 0
    %v1701 = vsel %vm1696, %v1694, 0
    %1703 = vmatprep.subr.bf16.mxu0 0
    %1704 = vmatpush1.bf16.xpose.msra.mxu0 %v1701
    %1705 = vmatprep.subr.bf16.mxu0 0
    %1706 = vmatpush1.bf16.xpose.msra.mxu0 0
    %1707 = vmatprep.subr.bf16.mxu0 0
    %1708 = vmatpush1.bf16.xpose.msra.mxu0 0
    %1709 = vmatprep.subr.bf16.mxu0 0
    %1710 = vmatpush1.bf16.xpose.msra.mxu0 0
    %1711 = vmatprep.subr.bf16.mxu0 0
    %1712 = vmatpush1.bf16.xpose.msra.mxu0 0
    %1713 = vmatprep.subr.bf16.mxu0 0
    %1714 = vmatpush1.bf16.xpose.msra.mxu0 0
    %1715 = vmatprep.subr.bf16.mxu0 0
    %1716 = vmatpush1.bf16.xpose.msra.mxu0 0
    %1717 = vmatprep.subr.bf16.mxu0 0
    %1718 = vmatpush1.bf16.xpose.msra.mxu0 0
    %1719 = vmatprep.subr.bf16.mxu0 0
    %1720 = vmatpush1.bf16.xpose.msra.mxu0 0
    %1721 = vmatprep.subr.bf16.mxu0 0
    %1722 = vmatpush1.bf16.xpose.msra.mxu0 0
    %1723 = vmatprep.subr.bf16.mxu0 0
    %1724 = vmatpush1.bf16.xpose.msra.mxu0 0
    %1725 = vmatprep.subr.bf16.mxu0 0
    %1726 = vmatpush1.bf16.xpose.msra.mxu0 0
    %1727 = vmatprep.subr.bf16.mxu0 0
    %1728 = vmatpush1.bf16.xpose.msra.mxu0 0
    %1729 = vmatprep.subr.bf16.mxu0 0
    %1730 = vmatpush1.bf16.xpose.msra.mxu0 0
    %1731 = vmatprep.subr.bf16.mxu0 0
    %1732 = vmatpush1.bf16.xpose.msra.mxu0 0
    %1733 = vmatprep.subr.bf16.mxu0 0
    %1734 = vmatpush1.bf16.xpose.msra.mxu0 0
    %1735 = vmatprep.mubr.bf16.mxu0 0
    %1736 = vmatmul.mubr.bf16.gmra.mrb[0].mxu0 %v1698
    %v1737 = vpop.f32.mrb[0].mxu0
    %v1738 = vadd.f32 %v886, %v1737
    %v1739 = vpop.f32.mrb[0].mxu0
    %v1740 = vpop.f32.mrb[0].mxu0
    %v1741 = vadd.f32 %v887, %v1740
    %v1742 = vpop.f32.mrb[0].mxu0
    %1743 = vdwg.mxu0
    %vm1744 = vcmask 130048
    %v1745 = vsel %vm1744, %v1738, -inf
    %1746 = vmax.xlane.f32.xlu0 %v1745
    %v1747 = vpop.xlane.xlu0 %1746
    %v1748 = vsel %vm1744, %v1741, -inf
    %1749 = vmax.xlane.f32.xlu0 %v1748
    %v1750 = vpop.xlane.xlu0 %1749
    %v1751 = vsub.f32 %v1738, %v1747
    %v1752 = vsub.f32 %v1741, %v1750
    %v1753 = vmul.f32 %v1751, 1.442695
    %v1754 = vpow.pop %v1753
    %v1755 = vmul.f32 %v1752, 1.442695
    %v1756 = vpow.pop %v1755
    %v1757 = vsel %vm1744, %v1754, 0.0
    %1758 = vadd.xlane.f32.xlu0 %v1757
    %v1759 = vpop.xlane.xlu0 %1758
    %v1760 = vsel %vm1744, %v1756, 0.0
    %1761 = vadd.xlane.f32.xlu0 %v1760
    %v1762 = vpop.xlane.xlu0 %1761
    %v1763 = vrcp.pop %v1759
    %v1764 = vmul.f32 %v1754, %v1763
    %v1765 = vrcp.pop %v1762
    %v1766 = vmul.f32 %v1756, %v1765
    %v1767 = vpack.c.bf16 %v1766, %v1764
    %v1769 = vsel %vm1744, %v1767, 0
    %1771 = vmatprep.subr.bf16.mxu0 0
    %1772 = vmatpush1.bf16.msra.mxu0 %v1695
    %1773 = vmatprep.subr.bf16.mxu0 0
    %1774 = vmatpush1.bf16.msra.mxu0 0
    %1775 = vmatprep.subr.bf16.mxu0 0
    %1776 = vmatpush1.bf16.msra.mxu0 0
    %1777 = vmatprep.subr.bf16.mxu0 0
    %1778 = vmatpush1.bf16.msra.mxu0 0
    %1779 = vmatprep.subr.bf16.mxu0 0
    %1780 = vmatpush1.bf16.msra.mxu0 0
    %1781 = vmatprep.subr.bf16.mxu0 0
    %1782 = vmatpush1.bf16.msra.mxu0 0
    %1783 = vmatprep.subr.bf16.mxu0 0
    %1784 = vmatpush1.bf16.msra.mxu0 0
    %1785 = vmatprep.subr.bf16.mxu0 0
    %1786 = vmatpush1.bf16.msra.mxu0 0
    %1787 = vmatprep.subr.bf16.mxu0 0
    %1788 = vmatpush1.bf16.msra.mxu0 0
    %1789 = vmatprep.subr.bf16.mxu0 0
    %1790 = vmatpush1.bf16.msra.mxu0 0
    %1791 = vmatprep.subr.bf16.mxu0 0
    %1792 = vmatpush1.bf16.msra.mxu0 0
    %1793 = vmatprep.subr.bf16.mxu0 0
    %1794 = vmatpush1.bf16.msra.mxu0 0
    %1795 = vmatprep.subr.bf16.mxu0 0
    %1796 = vmatpush1.bf16.msra.mxu0 0
    %1797 = vmatprep.subr.bf16.mxu0 0
    %1798 = vmatpush1.bf16.msra.mxu0 0
    %1799 = vmatprep.subr.bf16.mxu0 0
    %1800 = vmatpush1.bf16.msra.mxu0 0
    %1801 = vmatprep.subr.bf16.mxu0 0
    %1802 = vmatpush1.bf16.msra.mxu0 0
    %1803 = vmatprep.mubr.bf16.mxu0 0
    %1804 = vmatmul.mubr.bf16.gmra.mrb[0].mxu0 %v1769
    %v1805 = vpop.f32.mrb[0].mxu0
    %v1806 = vadd.f32 0.0, %v1805
    %v1807 = vpop.f32.mrb[0].mxu0
    %v1808 = vpop.f32.mrb[0].mxu0
    %v1809 = vadd.f32 0.0, %v1808
    %v1810 = vpop.f32.mrb[0].mxu0
    %1811 = vdwg.mxu0
    %1813 = vrot.lane.b32.xlu0 %v1693, 64
    %v1814 = vpop.permute.xlu0 %1813
    %1816 = vrot.lane.b32.xlu0 %v1694, 64
    %v1817 = vpop.permute.xlu0 %1816
    %v1819 = vsel %vm1696, %v1814, 0
    %v1822 = vsel %vm1696, %v1817, 0
    %1824 = vmatprep.subr.bf16.mxu0 0
    %1825 = vmatpush1.bf16.xpose.msra.mxu0 %v1822
    %1826 = vmatprep.subr.bf16.mxu0 0
    %1827 = vmatpush1.bf16.xpose.msra.mxu0 0
    %1828 = vmatprep.subr.bf16.mxu0 0
    %1829 = vmatpush1.bf16.xpose.msra.mxu0 0
    %1830 = vmatprep.subr.bf16.mxu0 0
    %1831 = vmatpush1.bf16.xpose.msra.mxu0 0
    %1832 = vmatprep.subr.bf16.mxu0 0
    %1833 = vmatpush1.bf16.xpose.msra.mxu0 0
    %1834 = vmatprep.subr.bf16.mxu0 0
    %1835 = vmatpush1.bf16.xpose.msra.mxu0 0
    %1836 = vmatprep.subr.bf16.mxu0 0
    %1837 = vmatpush1.bf16.xpose.msra.mxu0 0
    %1838 = vmatprep.subr.bf16.mxu0 0
    %1839 = vmatpush1.bf16.xpose.msra.mxu0 0
    %1840 = vmatprep.subr.bf16.mxu0 0
    %1841 = vmatpush1.bf16.xpose.msra.mxu0 0
    %1842 = vmatprep.subr.bf16.mxu0 0
    %1843 = vmatpush1.bf16.xpose.msra.mxu0 0
    %1844 = vmatprep.subr.bf16.mxu0 0
    %1845 = vmatpush1.bf16.xpose.msra.mxu0 0
    %1846 = vmatprep.subr.bf16.mxu0 0
    %1847 = vmatpush1.bf16.xpose.msra.mxu0 0
    %1848 = vmatprep.subr.bf16.mxu0 0
    %1849 = vmatpush1.bf16.xpose.msra.mxu0 0
    %1850 = vmatprep.subr.bf16.mxu0 0
    %1851 = vmatpush1.bf16.xpose.msra.mxu0 0
    %1852 = vmatprep.subr.bf16.mxu0 0
    %1853 = vmatpush1.bf16.xpose.msra.mxu0 0
    %1854 = vmatprep.subr.bf16.mxu0 0
    %1855 = vmatpush1.bf16.xpose.msra.mxu0 0
    %1856 = vmatprep.mubr.bf16.mxu0 0
    %1857 = vmatmul.mubr.bf16.gmra.mrb[0].mxu0 %v1819
    %v1858 = vpop.f32.mrb[0].mxu0
    %v1859 = vadd.f32 %v886, %v1858
    %v1860 = vpop.f32.mrb[0].mxu0
    %v1861 = vpop.f32.mrb[0].mxu0
    %v1862 = vadd.f32 %v887, %v1861
    %v1863 = vpop.f32.mrb[0].mxu0
    %1864 = vdwg.mxu0
    %v1865 = vsel %vm1744, %v1859, -inf
    %1866 = vmax.xlane.f32.xlu0 %v1865
    %v1867 = vpop.xlane.xlu0 %1866
    %v1868 = vsel %vm1744, %v1862, -inf
    %1869 = vmax.xlane.f32.xlu0 %v1868
    %v1870 = vpop.xlane.xlu0 %1869
    %v1871 = vsub.f32 %v1859, %v1867
    %v1872 = vsub.f32 %v1862, %v1870
    %v1873 = vmul.f32 %v1871, 1.442695
    %v1874 = vpow.pop %v1873
    %v1875 = vmul.f32 %v1872, 1.442695
    %v1876 = vpow.pop %v1875
    %v1877 = vsel %vm1744, %v1874, 0.0
    %1878 = vadd.xlane.f32.xlu0 %v1877
    %v1879 = vpop.xlane.xlu0 %1878
    %v1880 = vsel %vm1744, %v1876, 0.0
    %1881 = vadd.xlane.f32.xlu0 %v1880
    %v1882 = vpop.xlane.xlu0 %1881
    %v1883 = vrcp.pop %v1879
    %v1884 = vmul.f32 %v1874, %v1883
    %v1885 = vrcp.pop %v1882
    %v1886 = vmul.f32 %v1876, %v1885
    %v1887 = vpack.c.bf16 %v1886, %v1884
    %1889 = vrot.lane.b32.xlu0 %v1695, 64
    %v1890 = vpop.permute.xlu0 %1889
    %v1893 = vsel %vm1744, %v1887, 0
    %1895 = vmatprep.subr.bf16.mxu0 0
    %1896 = vmatpush1.bf16.msra.mxu0 %v1890
    %1897 = vmatprep.subr.bf16.mxu0 0
    %1898 = vmatpush1.bf16.msra.mxu0 0
    %1899 = vmatprep.subr.bf16.mxu0 0
    %1900 = vmatpush1.bf16.msra.mxu0 0
    %1901 = vmatprep.subr.bf16.mxu0 0
    %1902 = vmatpush1.bf16.msra.mxu0 0
    %1903 = vmatprep.subr.bf16.mxu0 0
    %1904 = vmatpush1.bf16.msra.mxu0 0
    %1905 = vmatprep.subr.bf16.mxu0 0
    %1906 = vmatpush1.bf16.msra.mxu0 0
    %1907 = vmatprep.subr.bf16.mxu0 0
    %1908 = vmatpush1.bf16.msra.mxu0 0
    %1909 = vmatprep.subr.bf16.mxu0 0
    %1910 = vmatpush1.bf16.msra.mxu0 0
    %1911 = vmatprep.subr.bf16.mxu0 0
    %1912 = vmatpush1.bf16.msra.mxu0 0
    %1913 = vmatprep.subr.bf16.mxu0 0
    %1914 = vmatpush1.bf16.msra.mxu0 0
    %1915 = vmatprep.subr.bf16.mxu0 0
    %1916 = vmatpush1.bf16.msra.mxu0 0
    %1917 = vmatprep.subr.bf16.mxu0 0
    %1918 = vmatpush1.bf16.msra.mxu0 0
    %1919 = vmatprep.subr.bf16.mxu0 0
    %1920 = vmatpush1.bf16.msra.mxu0 0
    %1921 = vmatprep.subr.bf16.mxu0 0
    %1922 = vmatpush1.bf16.msra.mxu0 0
    %1923 = vmatprep.subr.bf16.mxu0 0
    %1924 = vmatpush1.bf16.msra.mxu0 0
    %1925 = vmatprep.subr.bf16.mxu0 0
    %1926 = vmatpush1.bf16.msra.mxu0 0
    %1927 = vmatprep.mubr.bf16.mxu0 0
    %1928 = vmatmul.mubr.bf16.gmra.mrb[0].mxu0 %v1893
    %v1929 = vpop.f32.mrb[0].mxu0
    %v1930 = vadd.f32 0.0, %v1929
    %v1931 = vpop.f32.mrb[0].mxu0
    %v1932 = vpop.f32.mrb[0].mxu0
    %v1933 = vadd.f32 0.0, %v1932
    %v1934 = vpop.f32.mrb[0].mxu0
    %1935 = vdwg.mxu0
    %v1936 = vmul.f32 %v1599, 0.125
    %v1937 = vmul.f32 %v1603, 0.125
    %v1938 = vpack.c.bf16 %v1937, %v1936
    %v1939 = vpack.c.bf16 %v1646, %v1642
    %v1940 = vpack.c.bf16 %v1689, %v1685
    %v1942 = vsel %vm1696, %v1938, 0
    %v1945 = vsel %vm1696, %v1939, 0
    %1947 = vmatprep.subr.bf16.mxu0 0
    %1948 = vmatpush1.bf16.xpose.msra.mxu0 %v1945
    %1949 = vmatprep.subr.bf16.mxu0 0
    %1950 = vmatpush1.bf16.xpose.msra.mxu0 0
    %1951 = vmatprep.subr.bf16.mxu0 0
    %1952 = vmatpush1.bf16.xpose.msra.mxu0 0
    %1953 = vmatprep.subr.bf16.mxu0 0
    %1954 = vmatpush1.bf16.xpose.msra.mxu0 0
    %1955 = vmatprep.subr.bf16.mxu0 0
    %1956 = vmatpush1.bf16.xpose.msra.mxu0 0
    %1957 = vmatprep.subr.bf16.mxu0 0
    %1958 = vmatpush1.bf16.xpose.msra.mxu0 0
    %1959 = vmatprep.subr.bf16.mxu0 0
    %1960 = vmatpush1.bf16.xpose.msra.mxu0 0
    %1961 = vmatprep.subr.bf16.mxu0 0
    %1962 = vmatpush1.bf16.xpose.msra.mxu0 0
    %1963 = vmatprep.subr.bf16.mxu0 0
    %1964 = vmatpush1.bf16.xpose.msra.mxu0 0
    %1965 = vmatprep.subr.bf16.mxu0 0
    %1966 = vmatpush1.bf16.xpose.msra.mxu0 0
    %1967 = vmatprep.subr.bf16.mxu0 0
    %1968 = vmatpush1.bf16.xpose.msra.mxu0 0
    %1969 = vmatprep.subr.bf16.mxu0 0
    %1970 = vmatpush1.bf16.xpose.msra.mxu0 0
    %1971 = vmatprep.subr.bf16.mxu0 0
    %1972 = vmatpush1.bf16.xpose.msra.mxu0 0
    %1973 = vmatprep.subr.bf16.mxu0 0
    %1974 = vmatpush1.bf16.xpose.msra.mxu0 0
    %1975 = vmatprep.subr.bf16.mxu0 0
    %1976 = vmatpush1.bf16.xpose.msra.mxu0 0
    %1977 = vmatprep.subr.bf16.mxu0 0
    %1978 = vmatpush1.bf16.xpose.msra.mxu0 0
    %1979 = vmatprep.mubr.bf16.mxu0 0
    %1980 = vmatmul.mubr.bf16.gmra.mrb[0].mxu0 %v1942
    %v1981 = vpop.f32.mrb[0].mxu0
    %v1982 = vadd.f32 %v886, %v1981
    %v1983 = vpop.f32.mrb[0].mxu0
    %v1984 = vpop.f32.mrb[0].mxu0
    %v1985 = vadd.f32 %v887, %v1984
    %v1986 = vpop.f32.mrb[0].mxu0
    %1987 = vdwg.mxu0
    %v1988 = vsel %vm1744, %v1982, -inf
    %1989 = vmax.xlane.f32.xlu0 %v1988
    %v1990 = vpop.xlane.xlu0 %1989
    %v1991 = vsel %vm1744, %v1985, -inf
    %1992 = vmax.xlane.f32.xlu0 %v1991
    %v1993 = vpop.xlane.xlu0 %1992
    %v1994 = vsub.f32 %v1982, %v1990
    %v1995 = vsub.f32 %v1985, %v1993
    %v1996 = vmul.f32 %v1994, 1.442695
    %v1997 = vpow.pop %v1996
    %v1998 = vmul.f32 %v1995, 1.442695
    %v1999 = vpow.pop %v1998
    %v2000 = vsel %vm1744, %v1997, 0.0
    %2001 = vadd.xlane.f32.xlu0 %v2000
    %v2002 = vpop.xlane.xlu0 %2001
    %v2003 = vsel %vm1744, %v1999, 0.0
    %2004 = vadd.xlane.f32.xlu0 %v2003
    %v2005 = vpop.xlane.xlu0 %2004
    %v2006 = vrcp.pop %v2002
    %v2007 = vmul.f32 %v1997, %v2006
    %v2008 = vrcp.pop %v2005
    %v2009 = vmul.f32 %v1999, %v2008
    %v2010 = vpack.c.bf16 %v2009, %v2007
    %v2012 = vsel %vm1744, %v2010, 0
    %2014 = vmatprep.subr.bf16.mxu0 0
    %2015 = vmatpush1.bf16.msra.mxu0 %v1940
    %2016 = vmatprep.subr.bf16.mxu0 0
    %2017 = vmatpush1.bf16.msra.mxu0 0
    %2018 = vmatprep.subr.bf16.mxu0 0
    %2019 = vmatpush1.bf16.msra.mxu0 0
    %2020 = vmatprep.subr.bf16.mxu0 0
    %2021 = vmatpush1.bf16.msra.mxu0 0
    %2022 = vmatprep.subr.bf16.mxu0 0
    %2023 = vmatpush1.bf16.msra.mxu0 0
    %2024 = vmatprep.subr.bf16.mxu0 0
    %2025 = vmatpush1.bf16.msra.mxu0 0
    %2026 = vmatprep.subr.bf16.mxu0 0
    %2027 = vmatpush1.bf16.msra.mxu0 0
    %2028 = vmatprep.subr.bf16.mxu0 0
    %2029 = vmatpush1.bf16.msra.mxu0 0
    %2030 = vmatprep.subr.bf16.mxu0 0
    %2031 = vmatpush1.bf16.msra.mxu0 0
    %2032 = vmatprep.subr.bf16.mxu0 0
    %2033 = vmatpush1.bf16.msra.mxu0 0
    %2034 = vmatprep.subr.bf16.mxu0 0
    %2035 = vmatpush1.bf16.msra.mxu0 0
    %2036 = vmatprep.subr.bf16.mxu0 0
    %2037 = vmatpush1.bf16.msra.mxu0 0
    %2038 = vmatprep.subr.bf16.mxu0 0
    %2039 = vmatpush1.bf16.msra.mxu0 0
    %2040 = vmatprep.subr.bf16.mxu0 0
    %2041 = vmatpush1.bf16.msra.mxu0 0
    %2042 = vmatprep.subr.bf16.mxu0 0
    %2043 = vmatpush1.bf16.msra.mxu0 0
    %2044 = vmatprep.subr.bf16.mxu0 0
    %2045 = vmatpush1.bf16.msra.mxu0 0
    %2046 = vmatprep.mubr.bf16.mxu0 0
    %2047 = vmatmul.mubr.bf16.gmra.mrb[0].mxu0 %v2012
    %v2048 = vpop.f32.mrb[0].mxu0
    %v2049 = vadd.f32 0.0, %v2048
    %v2050 = vpop.f32.mrb[0].mxu0
    %v2051 = vpop.f32.mrb[0].mxu0
    %v2052 = vadd.f32 0.0, %v2051
    %v2053 = vpop.f32.mrb[0].mxu0
    %2054 = vdwg.mxu0
    %2056 = vrot.lane.b32.xlu0 %v1938, 64
    %v2057 = vpop.permute.xlu0 %2056
    %2059 = vrot.lane.b32.xlu0 %v1939, 64
    %v2060 = vpop.permute.xlu0 %2059
    %v2062 = vsel %vm1696, %v2057, 0
    %v2065 = vsel %vm1696, %v2060, 0
    %2067 = vmatprep.subr.bf16.mxu0 0
    %2068 = vmatpush1.bf16.xpose.msra.mxu0 %v2065
    %2069 = vmatprep.subr.bf16.mxu0 0
    %2070 = vmatpush1.bf16.xpose.msra.mxu0 0
    %2071 = vmatprep.subr.bf16.mxu0 0
    %2072 = vmatpush1.bf16.xpose.msra.mxu0 0
    %2073 = vmatprep.subr.bf16.mxu0 0
    %2074 = vmatpush1.bf16.xpose.msra.mxu0 0
    %2075 = vmatprep.subr.bf16.mxu0 0
    %2076 = vmatpush1.bf16.xpose.msra.mxu0 0
    %2077 = vmatprep.subr.bf16.mxu0 0
    %2078 = vmatpush1.bf16.xpose.msra.mxu0 0
    %2079 = vmatprep.subr.bf16.mxu0 0
    %2080 = vmatpush1.bf16.xpose.msra.mxu0 0
    %2081 = vmatprep.subr.bf16.mxu0 0
    %2082 = vmatpush1.bf16.xpose.msra.mxu0 0
    %2083 = vmatprep.subr.bf16.mxu0 0
    %2084 = vmatpush1.bf16.xpose.msra.mxu0 0
    %2085 = vmatprep.subr.bf16.mxu0 0
    %2086 = vmatpush1.bf16.xpose.msra.mxu0 0
    %2087 = vmatprep.subr.bf16.mxu0 0
    %2088 = vmatpush1.bf16.xpose.msra.mxu0 0
    %2089 = vmatprep.subr.bf16.mxu0 0
    %2090 = vmatpush1.bf16.xpose.msra.mxu0 0
    %2091 = vmatprep.subr.bf16.mxu0 0
    %2092 = vmatpush1.bf16.xpose.msra.mxu0 0
    %2093 = vmatprep.subr.bf16.mxu0 0
    %2094 = vmatpush1.bf16.xpose.msra.mxu0 0
    %2095 = vmatprep.subr.bf16.mxu0 0
    %2096 = vmatpush1.bf16.xpose.msra.mxu0 0
    %2097 = vmatprep.subr.bf16.mxu0 0
    %2098 = vmatpush1.bf16.xpose.msra.mxu0 0
    %2099 = vmatprep.mubr.bf16.mxu0 0
    %2100 = vmatmul.mubr.bf16.gmra.mrb[0].mxu0 %v2062
    %v2101 = vpop.f32.mrb[0].mxu0
    %v2102 = vadd.f32 %v886, %v2101
    %v2103 = vpop.f32.mrb[0].mxu0
    %v2104 = vpop.f32.mrb[0].mxu0
    %v2105 = vadd.f32 %v887, %v2104
    %v2106 = vpop.f32.mrb[0].mxu0
    %2107 = vdwg.mxu0
    %v2108 = vsel %vm1744, %v2102, -inf
    %2109 = vmax.xlane.f32.xlu0 %v2108
    %v2110 = vpop.xlane.xlu0 %2109
    %v2111 = vsel %vm1744, %v2105, -inf
    %2112 = vmax.xlane.f32.xlu0 %v2111
    %v2113 = vpop.xlane.xlu0 %2112
    %v2114 = vsub.f32 %v2102, %v2110
    %v2115 = vsub.f32 %v2105, %v2113
    %v2116 = vmul.f32 %v2114, 1.442695
    %v2117 = vpow.pop %v2116
    %v2118 = vmul.f32 %v2115, 1.442695
    %v2119 = vpow.pop %v2118
    %v2120 = vsel %vm1744, %v2117, 0.0
    %2121 = vadd.xlane.f32.xlu0 %v2120
    %v2122 = vpop.xlane.xlu0 %2121
    %v2123 = vsel %vm1744, %v2119, 0.0
    %2124 = vadd.xlane.f32.xlu0 %v2123
    %v2125 = vpop.xlane.xlu0 %2124
    %v2126 = vrcp.pop %v2122
    %v2127 = vmul.f32 %v2117, %v2126
    %v2128 = vrcp.pop %v2125
    %v2129 = vmul.f32 %v2119, %v2128
    %v2130 = vpack.c.bf16 %v2129, %v2127
    %2132 = vrot.lane.b32.xlu0 %v1940, 64
    %v2133 = vpop.permute.xlu0 %2132
    %v2136 = vsel %vm1744, %v2130, 0
    %2138 = vmatprep.subr.bf16.mxu0 0
    %2139 = vmatpush1.bf16.msra.mxu0 %v2133
    %2140 = vmatprep.subr.bf16.mxu0 0
    %2141 = vmatpush1.bf16.msra.mxu0 0
    %2142 = vmatprep.subr.bf16.mxu0 0
    %2143 = vmatpush1.bf16.msra.mxu0 0
    %2144 = vmatprep.subr.bf16.mxu0 0
    %2145 = vmatpush1.bf16.msra.mxu0 0
    %2146 = vmatprep.subr.bf16.mxu0 0
    %2147 = vmatpush1.bf16.msra.mxu0 0
    %2148 = vmatprep.subr.bf16.mxu0 0
    %2149 = vmatpush1.bf16.msra.mxu0 0
    %2150 = vmatprep.subr.bf16.mxu0 0
    %2151 = vmatpush1.bf16.msra.mxu0 0
    %2152 = vmatprep.subr.bf16.mxu0 0
    %2153 = vmatpush1.bf16.msra.mxu0 0
    %2154 = vmatprep.subr.bf16.mxu0 0
    %2155 = vmatpush1.bf16.msra.mxu0 0
    %2156 = vmatprep.subr.bf16.mxu0 0
    %2157 = vmatpush1.bf16.msra.mxu0 0
    %2158 = vmatprep.subr.bf16.mxu0 0
    %2159 = vmatpush1.bf16.msra.mxu0 0
    %2160 = vmatprep.subr.bf16.mxu0 0
    %2161 = vmatpush1.bf16.msra.mxu0 0
    %2162 = vmatprep.subr.bf16.mxu0 0
    %2163 = vmatpush1.bf16.msra.mxu0 0
    %2164 = vmatprep.subr.bf16.mxu0 0
    %2165 = vmatpush1.bf16.msra.mxu0 0
    %2166 = vmatprep.subr.bf16.mxu0 0
    %2167 = vmatpush1.bf16.msra.mxu0 0
    %2168 = vmatprep.subr.bf16.mxu0 0
    %2169 = vmatpush1.bf16.msra.mxu0 0
    %2170 = vmatprep.mubr.bf16.mxu0 0
    %2171 = vmatmul.mubr.bf16.gmra.mrb[0].mxu0 %v2136
    %v2172 = vpop.f32.mrb[0].mxu0
    %v2173 = vadd.f32 0.0, %v2172
    %v2174 = vpop.f32.mrb[0].mxu0
    %v2175 = vpop.f32.mrb[0].mxu0
    %v2176 = vadd.f32 0.0, %v2175
    %v2177 = vpop.f32.mrb[0].mxu0
    %2178 = vdwg.mxu0
    %2181 = vrot.lane.b32.xlu0 %v1930, 64
    %v2182 = vpop.permute.xlu0 %2181
    %2183 = vrot.lane.b32.xlu0 %v1933, 64
    %v2184 = vpop.permute.xlu0 %2183
    %2189 = vrot.lane.b32.xlu0 %v2173, 64
    %v2190 = vpop.permute.xlu0 %2189
    %2191 = vrot.lane.b32.xlu0 %v2176, 64
    %v2192 = vpop.permute.xlu0 %2191
    %v2195 = vsel %vm1696, %v1806, %v2182
    %v2196 = vsel %vm1696, %v1809, %v2184
    %v2197 = vsel %vm1696, %v2049, %v2190
    %v2198 = vsel %vm1696, %v2052, %v2192
    %v2199 = vpack.c.bf16 %v2196, %v2195
    %v2200 = vpack.c.bf16 %v2198, %v2197
    %v2201 = vld [vmem:[%s10] sm:$0xff]
    %v2202 = vld [vmem:[%s10 + $0x8] sm:$0xff]
    %v2203 = vld [vmem:[%s10 + $0x10] sm:$0xff]
    %v2204 = vld [vmem:[%s10 + $0x18] sm:$0xff]
    %v2205 = vld [vmem:[%s10 + $0x20] sm:$0xff]
    %v2206 = vld [vmem:[%s10 + $0x28] sm:$0xff]
    %v2207 = vld [vmem:[%s10 + $0x30] sm:$0xff]
    %v2208 = vld [vmem:[%s10 + $0x38] sm:$0xff]
    %v2209 = vld [vmem:[%s10 + $0x40] sm:$0xff]
    %v2210 = vld [vmem:[%s10 + $0x48] sm:$0xff]
    %v2211 = vld [vmem:[%s10 + $0x50] sm:$0xff]
    %v2212 = vld [vmem:[%s10 + $0x58] sm:$0xff]
    %v2213 = vld [vmem:[%s10 + $0x60] sm:$0xff]
    %v2214 = vld [vmem:[%s10 + $0x68] sm:$0xff]
    %v2215 = vld [vmem:[%s10 + $0x70] sm:$0xff]
    %v2216 = vld [vmem:[%s10 + $0x78] sm:$0xff]
    %v2217 = vld [vmem:[%s10 + $0x80] sm:$0xff]
    %v2218 = vld [vmem:[%s10 + $0x88] sm:$0xff]
    %v2219 = vld [vmem:[%s10 + $0x90] sm:$0xff]
    %v2220 = vld [vmem:[%s10 + $0x98] sm:$0xff]
    %v2221 = vld [vmem:[%s10 + $0xa0] sm:$0xff]
    %v2222 = vld [vmem:[%s10 + $0xa8] sm:$0xff]
    %v2223 = vld [vmem:[%s10 + $0xb0] sm:$0xff]
    %v2224 = vld [vmem:[%s10 + $0xb8] sm:$0xff]
    %v2225 = vld [vmem:[%s10 + $0xc0] sm:$0xff]
    %v2226 = vld [vmem:[%s10 + $0xc8] sm:$0xff]
    %v2227 = vld [vmem:[%s10 + $0xd0] sm:$0xff]
    %v2228 = vld [vmem:[%s10 + $0xd8] sm:$0xff]
    %v2229 = vld [vmem:[%s10 + $0xe0] sm:$0xff]
    %v2230 = vld [vmem:[%s10 + $0xe8] sm:$0xff]
    %v2231 = vld [vmem:[%s10 + $0xf0] sm:$0xff]
    %v2232 = vld [vmem:[%s10 + $0xf8] sm:$0xff]
    %v2265 = vunpack.c.l.b16 %v2201
    %v2266 = vunpack.c.h.b16 %v2201
    %v2267 = vunpack.c.l.b16 %v2202
    %v2268 = vunpack.c.h.b16 %v2202
    %v2269 = vunpack.c.l.b16 %v2203
    %v2270 = vunpack.c.h.b16 %v2203
    %v2271 = vunpack.c.l.b16 %v2204
    %v2272 = vunpack.c.h.b16 %v2204
    %v2273 = vunpack.c.l.b16 %v2205
    %v2274 = vunpack.c.h.b16 %v2205
    %v2275 = vunpack.c.l.b16 %v2206
    %v2276 = vunpack.c.h.b16 %v2206
    %v2277 = vunpack.c.l.b16 %v2207
    %v2278 = vunpack.c.h.b16 %v2207
    %v2279 = vunpack.c.l.b16 %v2208
    %v2280 = vunpack.c.h.b16 %v2208
    %v2281 = vunpack.c.l.b16 %v2209
    %v2282 = vunpack.c.h.b16 %v2209
    %v2283 = vunpack.c.l.b16 %v2210
    %v2284 = vunpack.c.h.b16 %v2210
    %v2285 = vunpack.c.l.b16 %v2211
    %v2286 = vunpack.c.h.b16 %v2211
    %v2287 = vunpack.c.l.b16 %v2212
    %v2288 = vunpack.c.h.b16 %v2212
    %v2289 = vunpack.c.l.b16 %v2213
    %v2290 = vunpack.c.h.b16 %v2213
    %v2291 = vunpack.c.l.b16 %v2214
    %v2292 = vunpack.c.h.b16 %v2214
    %v2293 = vunpack.c.l.b16 %v2215
    %v2294 = vunpack.c.h.b16 %v2215
    %v2295 = vunpack.c.l.b16 %v2216
    %v2296 = vunpack.c.h.b16 %v2216
    %v2297 = vunpack.c.l.b16 %v2217
    %v2298 = vunpack.c.h.b16 %v2217
    %v2299 = vunpack.c.l.b16 %v2218
    %v2300 = vunpack.c.h.b16 %v2218
    %v2301 = vunpack.c.l.b16 %v2219
    %v2302 = vunpack.c.h.b16 %v2219
    %v2303 = vunpack.c.l.b16 %v2220
    %v2304 = vunpack.c.h.b16 %v2220
    %v2305 = vunpack.c.l.b16 %v2221
    %v2306 = vunpack.c.h.b16 %v2221
    %v2307 = vunpack.c.l.b16 %v2222
    %v2308 = vunpack.c.h.b16 %v2222
    %v2309 = vunpack.c.l.b16 %v2223
    %v2310 = vunpack.c.h.b16 %v2223
    %v2311 = vunpack.c.l.b16 %v2224
    %v2312 = vunpack.c.h.b16 %v2224
    %v2313 = vunpack.c.l.b16 %v2225
    %v2314 = vunpack.c.h.b16 %v2225
    %v2315 = vunpack.c.l.b16 %v2226
    %v2316 = vunpack.c.h.b16 %v2226
    %v2317 = vunpack.c.l.b16 %v2227
    %v2318 = vunpack.c.h.b16 %v2227
    %v2319 = vunpack.c.l.b16 %v2228
    %v2320 = vunpack.c.h.b16 %v2228
    %v2321 = vunpack.c.l.b16 %v2229
    %v2322 = vunpack.c.h.b16 %v2229
    %v2323 = vunpack.c.l.b16 %v2230
    %v2324 = vunpack.c.h.b16 %v2230
    %v2325 = vunpack.c.l.b16 %v2231
    %v2326 = vunpack.c.h.b16 %v2231
    %v2327 = vunpack.c.l.b16 %v2232
    %v2328 = vunpack.c.h.b16 %v2232
    %v2329 = vpack.c.b16 %v2267, %v2265
    %v2330 = vpack.c.b16 %v2268, %v2266
    %v2331 = vpack.c.b16 %v2271, %v2269
    %v2332 = vpack.c.b16 %v2272, %v2270
    %v2333 = vpack.c.b16 %v2275, %v2273
    %v2334 = vpack.c.b16 %v2276, %v2274
    %v2335 = vpack.c.b16 %v2279, %v2277
    %v2336 = vpack.c.b16 %v2280, %v2278
    %v2337 = vpack.c.b16 %v2283, %v2281
    %v2338 = vpack.c.b16 %v2284, %v2282
    %v2339 = vpack.c.b16 %v2287, %v2285
    %v2340 = vpack.c.b16 %v2288, %v2286
    %v2341 = vpack.c.b16 %v2291, %v2289
    %v2342 = vpack.c.b16 %v2292, %v2290
    %v2343 = vpack.c.b16 %v2295, %v2293
    %v2344 = vpack.c.b16 %v2296, %v2294
    %v2345 = vpack.c.b16 %v2299, %v2297
    %v2346 = vpack.c.b16 %v2300, %v2298
    %v2347 = vpack.c.b16 %v2303, %v2301
    %v2348 = vpack.c.b16 %v2304, %v2302
    %v2349 = vpack.c.b16 %v2307, %v2305
    %v2350 = vpack.c.b16 %v2308, %v2306
    %v2351 = vpack.c.b16 %v2311, %v2309
    %v2352 = vpack.c.b16 %v2312, %v2310
    %v2353 = vpack.c.b16 %v2315, %v2313
    %v2354 = vpack.c.b16 %v2316, %v2314
    %v2355 = vpack.c.b16 %v2319, %v2317
    %v2356 = vpack.c.b16 %v2320, %v2318
    %v2357 = vpack.c.b16 %v2323, %v2321
    %v2358 = vpack.c.b16 %v2324, %v2322
    %v2359 = vpack.c.b16 %v2327, %v2325
    %v2360 = vpack.c.b16 %v2328, %v2326
    %2393 = vmatprep.subr.bf16.mxu0 %v2330
    %2394 = vmatpush1.bf16.msra.mxu0 %v2329
    %2395 = vmatprep.subr.bf16.mxu0 %v2332
    %2396 = vmatpush1.bf16.msra.mxu0 %v2331
    %2397 = vmatprep.subr.bf16.mxu0 %v2334
    %2398 = vmatpush1.bf16.msra.mxu0 %v2333
    %2399 = vmatprep.subr.bf16.mxu0 %v2336
    %2400 = vmatpush1.bf16.msra.mxu0 %v2335
    %2401 = vmatprep.subr.bf16.mxu0 %v2338
    %2402 = vmatpush1.bf16.msra.mxu0 %v2337
    %2403 = vmatprep.subr.bf16.mxu0 %v2340
    %2404 = vmatpush1.bf16.msra.mxu0 %v2339
    %2405 = vmatprep.subr.bf16.mxu0 %v2342
    %2406 = vmatpush1.bf16.msra.mxu0 %v2341
    %2407 = vmatprep.subr.bf16.mxu0 %v2344
    %2408 = vmatpush1.bf16.msra.mxu0 %v2343
    %2409 = vmatprep.subr.bf16.mxu0 %v2346
    %2410 = vmatpush1.bf16.msra.mxu0 %v2345
    %2411 = vmatprep.subr.bf16.mxu0 %v2348
    %2412 = vmatpush1.bf16.msra.mxu0 %v2347
    %2413 = vmatprep.subr.bf16.mxu0 %v2350
    %2414 = vmatpush1.bf16.msra.mxu0 %v2349
    %2415 = vmatprep.subr.bf16.mxu0 %v2352
    %2416 = vmatpush1.bf16.msra.mxu0 %v2351
    %2417 = vmatprep.subr.bf16.mxu0 %v2354
    %2418 = vmatpush1.bf16.msra.mxu0 %v2353
    %2419 = vmatprep.subr.bf16.mxu0 %v2356
    %2420 = vmatpush1.bf16.msra.mxu0 %v2355
    %2421 = vmatprep.subr.bf16.mxu0 %v2358
    %2422 = vmatpush1.bf16.msra.mxu0 %v2357
    %2423 = vmatprep.subr.bf16.mxu0 %v2360
    %2424 = vmatpush1.bf16.msra.mxu0 %v2359
    %2425 = vmatprep.mubr.bf16.mxu0 %v2200
    %2426 = vmatmul.mubr.bf16.gmra.mrb[0].mxu0 %v2199
    %v2427 = vpop.f32.mrb[0].mxu0
    %v2428 = vadd.f32 0.0, %v2427
    %v2429 = vpop.f32.mrb[0].mxu0
    %v2430 = vadd.f32 0.0, %v2429
    %v2431 = vpop.f32.mrb[0].mxu0
    %v2432 = vadd.f32 0.0, %v2431
    %v2433 = vpop.f32.mrb[0].mxu0
    %v2434 = vadd.f32 0.0, %v2433
    %2435 = vdwg.mxu0
    %v2436 = vadd.f32 %v882, %v2428
    %v2437 = vadd.f32 %v883, %v2430
    %v2438 = vadd.f32 %v884, %v2432
    %v2439 = vadd.f32 %v885, %v2434
    %v2440 = vld [vmem:[%s11] sm:$0x3]
    %v2442 = vlaneseq
    %v2443 = vshrl.u32 %v2442, 7
    %v2444 = vsub.s32 0, %v2443
    %v2445 = vrot.slane %v2440, %v2444
    %v2446 = vlaneseq
    %v2447 = vshrl.u32 %v2446, 7
    %v2448 = vsub.s32 1, %v2447
    %v2449 = vrot.slane %v2440, %v2448
    %v2452 = vadd.f32 %v2436, %v2445
    %v2453 = vadd.f32 %v2437, %v2449
    %v2454 = vadd.f32 %v2438, %v2445
    %v2455 = vadd.f32 %v2439, %v2449
    %v2456 = vld [vmem:[%s12] sm:$0x3]
    %v2457 = vld [vmem:[%s13] sm:$0x3]
    %v2458 = vadd.f32 %v2452, %v2453
    %2459 = vadd.xlane.f32.xlu0 %v2458
    %v2460 = vpop.xlane.xlu0 %2459
    %v2461 = vadd.f32 %v2454, %v2455
    %2462 = vadd.xlane.f32.xlu0 %v2461
    %v2463 = vpop.xlane.xlu0 %2462
    %v2464 = vmul.f32 %v2460, %v829
    %v2465 = vmul.f32 %v2463, %v829
    %v2466 = vsub.f32 %v2452, %v2464
    %v2467 = vsub.f32 %v2453, %v2464
    %v2468 = vsub.f32 %v2454, %v2465
    %v2469 = vsub.f32 %v2455, %v2465
    %v2470 = vmul.f32 %v2466, %v2466
    %v2471 = vmul.f32 %v2467, %v2467
    %v2472 = vmul.f32 %v2468, %v2468
    %v2473 = vmul.f32 %v2469, %v2469
    %v2474 = vadd.f32 %v2470, %v2471
    %2475 = vadd.xlane.f32.xlu0 %v2474
    %v2476 = vpop.xlane.xlu0 %2475
    %v2477 = vadd.f32 %v2472, %v2473
    %2478 = vadd.xlane.f32.xlu0 %v2477
    %v2479 = vpop.xlane.xlu0 %2478
    %v2480 = vmul.f32 %v2476, %v829
    %v2481 = vmul.f32 %v2479, %v829
    %v2482 = vadd.f32 %v2480, 1e-05
    %v2483 = vadd.f32 %v2481, 1e-05
    %v2484 = vrsqrt.pop %v2482
    %v2485 = vrsqrt.pop %v2483
    %v2486 = vmul.f32 %v2466, %v2484
    %v2487 = vmul.f32 %v2467, %v2484
    %v2488 = vmul.f32 %v2468, %v2485
    %v2489 = vmul.f32 %v2469, %v2485
    %v2491 = vlaneseq
    %v2492 = vshrl.u32 %v2491, 7
    %v2493 = vsub.s32 0, %v2492
    %v2494 = vrot.slane %v2456, %v2493
    %v2495 = vlaneseq
    %v2496 = vshrl.u32 %v2495, 7
    %v2497 = vsub.s32 1, %v2496
    %v2498 = vrot.slane %v2456, %v2497
    %v2501 = vmul.f32 %v2486, %v2494
    %v2502 = vmul.f32 %v2487, %v2498
    %v2503 = vmul.f32 %v2488, %v2494
    %v2504 = vmul.f32 %v2489, %v2498
    %v2506 = vlaneseq
    %v2507 = vshrl.u32 %v2506, 7
    %v2508 = vsub.s32 0, %v2507
    %v2509 = vrot.slane %v2457, %v2508
    %v2510 = vlaneseq
    %v2511 = vshrl.u32 %v2510, 7
    %v2512 = vsub.s32 1, %v2511
    %v2513 = vrot.slane %v2457, %v2512
    %v2516 = vadd.f32 %v2501, %v2509
    %v2517 = vadd.f32 %v2502, %v2513
    %v2518 = vadd.f32 %v2503, %v2509
    %v2519 = vadd.f32 %v2504, %v2513
    %v2520 = vpack.c.bf16 %v2518, %v2516
    %v2521 = vpack.c.bf16 %v2519, %v2517
    %v2522 = vld [vmem:[%s14] sm:$0xff]
    %v2523 = vld [vmem:[%s14 + $0x8] sm:$0xff]
    %v2524 = vld [vmem:[%s14 + $0x10] sm:$0xff]
    %v2525 = vld [vmem:[%s14 + $0x18] sm:$0xff]
    %v2526 = vld [vmem:[%s14 + $0x20] sm:$0xff]
    %v2527 = vld [vmem:[%s14 + $0x28] sm:$0xff]
    %v2528 = vld [vmem:[%s14 + $0x30] sm:$0xff]
    %v2529 = vld [vmem:[%s14 + $0x38] sm:$0xff]
    %v2530 = vld [vmem:[%s14 + $0x40] sm:$0xff]
    %v2531 = vld [vmem:[%s14 + $0x48] sm:$0xff]
    %v2532 = vld [vmem:[%s14 + $0x50] sm:$0xff]
    %v2533 = vld [vmem:[%s14 + $0x58] sm:$0xff]
    %v2534 = vld [vmem:[%s14 + $0x60] sm:$0xff]
    %v2535 = vld [vmem:[%s14 + $0x68] sm:$0xff]
    %v2536 = vld [vmem:[%s14 + $0x70] sm:$0xff]
    %v2537 = vld [vmem:[%s14 + $0x78] sm:$0xff]
    %v2538 = vld [vmem:[%s14 + $0x80] sm:$0xff]
    %v2539 = vld [vmem:[%s14 + $0x88] sm:$0xff]
    %v2540 = vld [vmem:[%s14 + $0x90] sm:$0xff]
    %v2541 = vld [vmem:[%s14 + $0x98] sm:$0xff]
    %v2542 = vld [vmem:[%s14 + $0xa0] sm:$0xff]
    %v2543 = vld [vmem:[%s14 + $0xa8] sm:$0xff]
    %v2544 = vld [vmem:[%s14 + $0xb0] sm:$0xff]
    %v2545 = vld [vmem:[%s14 + $0xb8] sm:$0xff]
    %v2546 = vld [vmem:[%s14 + $0xc0] sm:$0xff]
    %v2547 = vld [vmem:[%s14 + $0xc8] sm:$0xff]
    %v2548 = vld [vmem:[%s14 + $0xd0] sm:$0xff]
    %v2549 = vld [vmem:[%s14 + $0xd8] sm:$0xff]
    %v2550 = vld [vmem:[%s14 + $0xe0] sm:$0xff]
    %v2551 = vld [vmem:[%s14 + $0xe8] sm:$0xff]
    %v2552 = vld [vmem:[%s14 + $0xf0] sm:$0xff]
    %v2553 = vld [vmem:[%s14 + $0xf8] sm:$0xff]
    %v2554 = vld [vmem:[%s14 + $0x100] sm:$0xff]
    %v2555 = vld [vmem:[%s14 + $0x108] sm:$0xff]
    %v2556 = vld [vmem:[%s14 + $0x110] sm:$0xff]
    %v2557 = vld [vmem:[%s14 + $0x118] sm:$0xff]
    %v2558 = vld [vmem:[%s14 + $0x120] sm:$0xff]
    %v2559 = vld [vmem:[%s14 + $0x128] sm:$0xff]
    %v2560 = vld [vmem:[%s14 + $0x130] sm:$0xff]
    %v2561 = vld [vmem:[%s14 + $0x138] sm:$0xff]
    %v2562 = vld [vmem:[%s14 + $0x140] sm:$0xff]
    %v2563 = vld [vmem:[%s14 + $0x148] sm:$0xff]
    %v2564 = vld [vmem:[%s14 + $0x150] sm:$0xff]
    %v2565 = vld [vmem:[%s14 + $0x158] sm:$0xff]
    %v2566 = vld [vmem:[%s14 + $0x160] sm:$0xff]
    %v2567 = vld [vmem:[%s14 + $0x168] sm:$0xff]
    %v2568 = vld [vmem:[%s14 + $0x170] sm:$0xff]
    %v2569 = vld [vmem:[%s14 + $0x178] sm:$0xff]
    %v2570 = vld [vmem:[%s14 + $0x180] sm:$0xff]
    %v2571 = vld [vmem:[%s14 + $0x188] sm:$0xff]
    %v2572 = vld [vmem:[%s14 + $0x190] sm:$0xff]
    %v2573 = vld [vmem:[%s14 + $0x198] sm:$0xff]
    %v2574 = vld [vmem:[%s14 + $0x1a0] sm:$0xff]
    %v2575 = vld [vmem:[%s14 + $0x1a8] sm:$0xff]
    %v2576 = vld [vmem:[%s14 + $0x1b0] sm:$0xff]
    %v2577 = vld [vmem:[%s14 + $0x1b8] sm:$0xff]
    %v2578 = vld [vmem:[%s14 + $0x1c0] sm:$0xff]
    %v2579 = vld [vmem:[%s14 + $0x1c8] sm:$0xff]
    %v2580 = vld [vmem:[%s14 + $0x1d0] sm:$0xff]
    %v2581 = vld [vmem:[%s14 + $0x1d8] sm:$0xff]
    %v2582 = vld [vmem:[%s14 + $0x1e0] sm:$0xff]
    %v2583 = vld [vmem:[%s14 + $0x1e8] sm:$0xff]
    %v2584 = vld [vmem:[%s14 + $0x1f0] sm:$0xff]
    %v2585 = vld [vmem:[%s14 + $0x1f8] sm:$0xff]
    %v2586 = vld [vmem:[%s14 + $0x200] sm:$0xff]
    %v2587 = vld [vmem:[%s14 + $0x208] sm:$0xff]
    %v2588 = vld [vmem:[%s14 + $0x210] sm:$0xff]
    %v2589 = vld [vmem:[%s14 + $0x218] sm:$0xff]
    %v2590 = vld [vmem:[%s14 + $0x220] sm:$0xff]
    %v2591 = vld [vmem:[%s14 + $0x228] sm:$0xff]
    %v2592 = vld [vmem:[%s14 + $0x230] sm:$0xff]
    %v2593 = vld [vmem:[%s14 + $0x238] sm:$0xff]
    %v2594 = vld [vmem:[%s14 + $0x240] sm:$0xff]
    %v2595 = vld [vmem:[%s14 + $0x248] sm:$0xff]
    %v2596 = vld [vmem:[%s14 + $0x250] sm:$0xff]
    %v2597 = vld [vmem:[%s14 + $0x258] sm:$0xff]
    %v2598 = vld [vmem:[%s14 + $0x260] sm:$0xff]
    %v2599 = vld [vmem:[%s14 + $0x268] sm:$0xff]
    %v2600 = vld [vmem:[%s14 + $0x270] sm:$0xff]
    %v2601 = vld [vmem:[%s14 + $0x278] sm:$0xff]
    %v2602 = vld [vmem:[%s14 + $0x280] sm:$0xff]
    %v2603 = vld [vmem:[%s14 + $0x288] sm:$0xff]
    %v2604 = vld [vmem:[%s14 + $0x290] sm:$0xff]
    %v2605 = vld [vmem:[%s14 + $0x298] sm:$0xff]
    %v2606 = vld [vmem:[%s14 + $0x2a0] sm:$0xff]
    %v2607 = vld [vmem:[%s14 + $0x2a8] sm:$0xff]
    %v2608 = vld [vmem:[%s14 + $0x2b0] sm:$0xff]
    %v2609 = vld [vmem:[%s14 + $0x2b8] sm:$0xff]
    %v2610 = vld [vmem:[%s14 + $0x2c0] sm:$0xff]
    %v2611 = vld [vmem:[%s14 + $0x2c8] sm:$0xff]
    %v2612 = vld [vmem:[%s14 + $0x2d0] sm:$0xff]
    %v2613 = vld [vmem:[%s14 + $0x2d8] sm:$0xff]
    %v2614 = vld [vmem:[%s14 + $0x2e0] sm:$0xff]
    %v2615 = vld [vmem:[%s14 + $0x2e8] sm:$0xff]
    %v2616 = vld [vmem:[%s14 + $0x2f0] sm:$0xff]
    %v2617 = vld [vmem:[%s14 + $0x2f8] sm:$0xff]
    %v2618 = vld [vmem:[%s14 + $0x300] sm:$0xff]
    %v2619 = vld [vmem:[%s14 + $0x308] sm:$0xff]
    %v2620 = vld [vmem:[%s14 + $0x310] sm:$0xff]
    %v2621 = vld [vmem:[%s14 + $0x318] sm:$0xff]
    %v2622 = vld [vmem:[%s14 + $0x320] sm:$0xff]
    %v2623 = vld [vmem:[%s14 + $0x328] sm:$0xff]
    %v2624 = vld [vmem:[%s14 + $0x330] sm:$0xff]
    %v2625 = vld [vmem:[%s14 + $0x338] sm:$0xff]
    %v2626 = vld [vmem:[%s14 + $0x340] sm:$0xff]
    %v2627 = vld [vmem:[%s14 + $0x348] sm:$0xff]
    %v2628 = vld [vmem:[%s14 + $0x350] sm:$0xff]
    %v2629 = vld [vmem:[%s14 + $0x358] sm:$0xff]
    %v2630 = vld [vmem:[%s14 + $0x360] sm:$0xff]
    %v2631 = vld [vmem:[%s14 + $0x368] sm:$0xff]
    %v2632 = vld [vmem:[%s14 + $0x370] sm:$0xff]
    %v2633 = vld [vmem:[%s14 + $0x378] sm:$0xff]
    %v2634 = vld [vmem:[%s14 + $0x380] sm:$0xff]
    %v2635 = vld [vmem:[%s14 + $0x388] sm:$0xff]
    %v2636 = vld [vmem:[%s14 + $0x390] sm:$0xff]
    %v2637 = vld [vmem:[%s14 + $0x398] sm:$0xff]
    %v2638 = vld [vmem:[%s14 + $0x3a0] sm:$0xff]
    %v2639 = vld [vmem:[%s14 + $0x3a8] sm:$0xff]
    %v2640 = vld [vmem:[%s14 + $0x3b0] sm:$0xff]
    %v2641 = vld [vmem:[%s14 + $0x3b8] sm:$0xff]
    %v2642 = vld [vmem:[%s14 + $0x3c0] sm:$0xff]
    %v2643 = vld [vmem:[%s14 + $0x3c8] sm:$0xff]
    %v2644 = vld [vmem:[%s14 + $0x3d0] sm:$0xff]
    %v2645 = vld [vmem:[%s14 + $0x3d8] sm:$0xff]
    %v2646 = vld [vmem:[%s14 + $0x3e0] sm:$0xff]
    %v2647 = vld [vmem:[%s14 + $0x3e8] sm:$0xff]
    %v2648 = vld [vmem:[%s14 + $0x3f0] sm:$0xff]
    %v2649 = vld [vmem:[%s14 + $0x3f8] sm:$0xff]
    %v2650 = vld [vmem:[%s15] sm:$0xff]
    %v2652 = vlaneseq
    %v2653 = vshrl.u32 %v2652, 7
    %v2654 = vsub.s32 0, %v2653
    %v2655 = vrot.slane %v2650, %v2654
    %v2656 = vlaneseq
    %v2657 = vshrl.u32 %v2656, 7
    %v2658 = vsub.s32 1, %v2657
    %v2659 = vrot.slane %v2650, %v2658
    %v2660 = vlaneseq
    %v2661 = vshrl.u32 %v2660, 7
    %v2662 = vsub.s32 2, %v2661
    %v2663 = vrot.slane %v2650, %v2662
    %v2664 = vlaneseq
    %v2665 = vshrl.u32 %v2664, 7
    %v2666 = vsub.s32 3, %v2665
    %v2667 = vrot.slane %v2650, %v2666
    %v2668 = vlaneseq
    %v2669 = vshrl.u32 %v2668, 7
    %v2670 = vsub.s32 4, %v2669
    %v2671 = vrot.slane %v2650, %v2670
    %v2672 = vlaneseq
    %v2673 = vshrl.u32 %v2672, 7
    %v2674 = vsub.s32 5, %v2673
    %v2675 = vrot.slane %v2650, %v2674
    %v2676 = vlaneseq
    %v2677 = vshrl.u32 %v2676, 7
    %v2678 = vsub.s32 6, %v2677
    %v2679 = vrot.slane %v2650, %v2678
    %v2680 = vlaneseq
    %v2681 = vshrl.u32 %v2680, 7
    %v2682 = vsub.s32 7, %v2681
    %v2683 = vrot.slane %v2650, %v2682
    %v2820 = vunpack.c.l.b16 %v2522
    %v2821 = vunpack.c.h.b16 %v2522
    %v2822 = vunpack.c.l.b16 %v2523
    %v2823 = vunpack.c.h.b16 %v2523
    %v2824 = vunpack.c.l.b16 %v2524
    %v2825 = vunpack.c.h.b16 %v2524
    %v2826 = vunpack.c.l.b16 %v2525
    %v2827 = vunpack.c.h.b16 %v2525
    %v2828 = vunpack.c.l.b16 %v2526
    %v2829 = vunpack.c.h.b16 %v2526
    %v2830 = vunpack.c.l.b16 %v2527
    %v2831 = vunpack.c.h.b16 %v2527
    %v2832 = vunpack.c.l.b16 %v2528
    %v2833 = vunpack.c.h.b16 %v2528
    %v2834 = vunpack.c.l.b16 %v2529
    %v2835 = vunpack.c.h.b16 %v2529
    %v2836 = vunpack.c.l.b16 %v2530
    %v2837 = vunpack.c.h.b16 %v2530
    %v2838 = vunpack.c.l.b16 %v2531
    %v2839 = vunpack.c.h.b16 %v2531
    %v2840 = vunpack.c.l.b16 %v2532
    %v2841 = vunpack.c.h.b16 %v2532
    %v2842 = vunpack.c.l.b16 %v2533
    %v2843 = vunpack.c.h.b16 %v2533
    %v2844 = vunpack.c.l.b16 %v2534
    %v2845 = vunpack.c.h.b16 %v2534
    %v2846 = vunpack.c.l.b16 %v2535
    %v2847 = vunpack.c.h.b16 %v2535
    %v2848 = vunpack.c.l.b16 %v2536
    %v2849 = vunpack.c.h.b16 %v2536
    %v2850 = vunpack.c.l.b16 %v2537
    %v2851 = vunpack.c.h.b16 %v2537
    %v2852 = vunpack.c.l.b16 %v2538
    %v2853 = vunpack.c.h.b16 %v2538
    %v2854 = vunpack.c.l.b16 %v2539
    %v2855 = vunpack.c.h.b16 %v2539
    %v2856 = vunpack.c.l.b16 %v2540
    %v2857 = vunpack.c.h.b16 %v2540
    %v2858 = vunpack.c.l.b16 %v2541
    %v2859 = vunpack.c.h.b16 %v2541
    %v2860 = vunpack.c.l.b16 %v2542
    %v2861 = vunpack.c.h.b16 %v2542
    %v2862 = vunpack.c.l.b16 %v2543
    %v2863 = vunpack.c.h.b16 %v2543
    %v2864 = vunpack.c.l.b16 %v2544
    %v2865 = vunpack.c.h.b16 %v2544
    %v2866 = vunpack.c.l.b16 %v2545
    %v2867 = vunpack.c.h.b16 %v2545
    %v2868 = vunpack.c.l.b16 %v2546
    %v2869 = vunpack.c.h.b16 %v2546
    %v2870 = vunpack.c.l.b16 %v2547
    %v2871 = vunpack.c.h.b16 %v2547
    %v2872 = vunpack.c.l.b16 %v2548
    %v2873 = vunpack.c.h.b16 %v2548
    %v2874 = vunpack.c.l.b16 %v2549
    %v2875 = vunpack.c.h.b16 %v2549
    %v2876 = vunpack.c.l.b16 %v2550
    %v2877 = vunpack.c.h.b16 %v2550
    %v2878 = vunpack.c.l.b16 %v2551
    %v2879 = vunpack.c.h.b16 %v2551
    %v2880 = vunpack.c.l.b16 %v2552
    %v2881 = vunpack.c.h.b16 %v2552
    %v2882 = vunpack.c.l.b16 %v2553
    %v2883 = vunpack.c.h.b16 %v2553
    %v2884 = vunpack.c.l.b16 %v2554
    %v2885 = vunpack.c.h.b16 %v2554
    %v2886 = vunpack.c.l.b16 %v2555
    %v2887 = vunpack.c.h.b16 %v2555
    %v2888 = vunpack.c.l.b16 %v2556
    %v2889 = vunpack.c.h.b16 %v2556
    %v2890 = vunpack.c.l.b16 %v2557
    %v2891 = vunpack.c.h.b16 %v2557
    %v2892 = vunpack.c.l.b16 %v2558
    %v2893 = vunpack.c.h.b16 %v2558
    %v2894 = vunpack.c.l.b16 %v2559
    %v2895 = vunpack.c.h.b16 %v2559
    %v2896 = vunpack.c.l.b16 %v2560
    %v2897 = vunpack.c.h.b16 %v2560
    %v2898 = vunpack.c.l.b16 %v2561
    %v2899 = vunpack.c.h.b16 %v2561
    %v2900 = vunpack.c.l.b16 %v2562
    %v2901 = vunpack.c.h.b16 %v2562
    %v2902 = vunpack.c.l.b16 %v2563
    %v2903 = vunpack.c.h.b16 %v2563
    %v2904 = vunpack.c.l.b16 %v2564
    %v2905 = vunpack.c.h.b16 %v2564
    %v2906 = vunpack.c.l.b16 %v2565
    %v2907 = vunpack.c.h.b16 %v2565
    %v2908 = vunpack.c.l.b16 %v2566
    %v2909 = vunpack.c.h.b16 %v2566
    %v2910 = vunpack.c.l.b16 %v2567
    %v2911 = vunpack.c.h.b16 %v2567
    %v2912 = vunpack.c.l.b16 %v2568
    %v2913 = vunpack.c.h.b16 %v2568
    %v2914 = vunpack.c.l.b16 %v2569
    %v2915 = vunpack.c.h.b16 %v2569
    %v2916 = vunpack.c.l.b16 %v2570
    %v2917 = vunpack.c.h.b16 %v2570
    %v2918 = vunpack.c.l.b16 %v2571
    %v2919 = vunpack.c.h.b16 %v2571
    %v2920 = vunpack.c.l.b16 %v2572
    %v2921 = vunpack.c.h.b16 %v2572
    %v2922 = vunpack.c.l.b16 %v2573
    %v2923 = vunpack.c.h.b16 %v2573
    %v2924 = vunpack.c.l.b16 %v2574
    %v2925 = vunpack.c.h.b16 %v2574
    %v2926 = vunpack.c.l.b16 %v2575
    %v2927 = vunpack.c.h.b16 %v2575
    %v2928 = vunpack.c.l.b16 %v2576
    %v2929 = vunpack.c.h.b16 %v2576
    %v2930 = vunpack.c.l.b16 %v2577
    %v2931 = vunpack.c.h.b16 %v2577
    %v2932 = vunpack.c.l.b16 %v2578
    %v2933 = vunpack.c.h.b16 %v2578
    %v2934 = vunpack.c.l.b16 %v2579
    %v2935 = vunpack.c.h.b16 %v2579
    %v2936 = vunpack.c.l.b16 %v2580
    %v2937 = vunpack.c.h.b16 %v2580
    %v2938 = vunpack.c.l.b16 %v2581
    %v2939 = vunpack.c.h.b16 %v2581
    %v2940 = vunpack.c.l.b16 %v2582
    %v2941 = vunpack.c.h.b16 %v2582
    %v2942 = vunpack.c.l.b16 %v2583
    %v2943 = vunpack.c.h.b16 %v2583
    %v2944 = vunpack.c.l.b16 %v2584
    %v2945 = vunpack.c.h.b16 %v2584
    %v2946 = vunpack.c.l.b16 %v2585
    %v2947 = vunpack.c.h.b16 %v2585
    %v2948 = vunpack.c.l.b16 %v2586
    %v2949 = vunpack.c.h.b16 %v2586
    %v2950 = vunpack.c.l.b16 %v2587
    %v2951 = vunpack.c.h.b16 %v2587
    %v2952 = vunpack.c.l.b16 %v2588
    %v2953 = vunpack.c.h.b16 %v2588
    %v2954 = vunpack.c.l.b16 %v2589
    %v2955 = vunpack.c.h.b16 %v2589
    %v2956 = vunpack.c.l.b16 %v2590
    %v2957 = vunpack.c.h.b16 %v2590
    %v2958 = vunpack.c.l.b16 %v2591
    %v2959 = vunpack.c.h.b16 %v2591
    %v2960 = vunpack.c.l.b16 %v2592
    %v2961 = vunpack.c.h.b16 %v2592
    %v2962 = vunpack.c.l.b16 %v2593
    %v2963 = vunpack.c.h.b16 %v2593
    %v2964 = vunpack.c.l.b16 %v2594
    %v2965 = vunpack.c.h.b16 %v2594
    %v2966 = vunpack.c.l.b16 %v2595
    %v2967 = vunpack.c.h.b16 %v2595
    %v2968 = vunpack.c.l.b16 %v2596
    %v2969 = vunpack.c.h.b16 %v2596
    %v2970 = vunpack.c.l.b16 %v2597
    %v2971 = vunpack.c.h.b16 %v2597
    %v2972 = vunpack.c.l.b16 %v2598
    %v2973 = vunpack.c.h.b16 %v2598
    %v2974 = vunpack.c.l.b16 %v2599
    %v2975 = vunpack.c.h.b16 %v2599
    %v2976 = vunpack.c.l.b16 %v2600
    %v2977 = vunpack.c.h.b16 %v2600
    %v2978 = vunpack.c.l.b16 %v2601
    %v2979 = vunpack.c.h.b16 %v2601
    %v2980 = vunpack.c.l.b16 %v2602
    %v2981 = vunpack.c.h.b16 %v2602
    %v2982 = vunpack.c.l.b16 %v2603
    %v2983 = vunpack.c.h.b16 %v2603
    %v2984 = vunpack.c.l.b16 %v2604
    %v2985 = vunpack.c.h.b16 %v2604
    %v2986 = vunpack.c.l.b16 %v2605
    %v2987 = vunpack.c.h.b16 %v2605
    %v2988 = vunpack.c.l.b16 %v2606
    %v2989 = vunpack.c.h.b16 %v2606
    %v2990 = vunpack.c.l.b16 %v2607
    %v2991 = vunpack.c.h.b16 %v2607
    %v2992 = vunpack.c.l.b16 %v2608
    %v2993 = vunpack.c.h.b16 %v2608
    %v2994 = vunpack.c.l.b16 %v2609
    %v2995 = vunpack.c.h.b16 %v2609
    %v2996 = vunpack.c.l.b16 %v2610
    %v2997 = vunpack.c.h.b16 %v2610
    %v2998 = vunpack.c.l.b16 %v2611
    %v2999 = vunpack.c.h.b16 %v2611
    %v3000 = vunpack.c.l.b16 %v2612
    %v3001 = vunpack.c.h.b16 %v2612
    %v3002 = vunpack.c.l.b16 %v2613
    %v3003 = vunpack.c.h.b16 %v2613
    %v3004 = vunpack.c.l.b16 %v2614
    %v3005 = vunpack.c.h.b16 %v2614
    %v3006 = vunpack.c.l.b16 %v2615
    %v3007 = vunpack.c.h.b16 %v2615
    %v3008 = vunpack.c.l.b16 %v2616
    %v3009 = vunpack.c.h.b16 %v2616
    %v3010 = vunpack.c.l.b16 %v2617
    %v3011 = vunpack.c.h.b16 %v2617
    %v3012 = vunpack.c.l.b16 %v2618
    %v3013 = vunpack.c.h.b16 %v2618
    %v3014 = vunpack.c.l.b16 %v2619
    %v3015 = vunpack.c.h.b16 %v2619
    %v3016 = vunpack.c.l.b16 %v2620
    %v3017 = vunpack.c.h.b16 %v2620
    %v3018 = vunpack.c.l.b16 %v2621
    %v3019 = vunpack.c.h.b16 %v2621
    %v3020 = vunpack.c.l.b16 %v2622
    %v3021 = vunpack.c.h.b16 %v2622
    %v3022 = vunpack.c.l.b16 %v2623
    %v3023 = vunpack.c.h.b16 %v2623
    %v3024 = vunpack.c.l.b16 %v2624
    %v3025 = vunpack.c.h.b16 %v2624
    %v3026 = vunpack.c.l.b16 %v2625
    %v3027 = vunpack.c.h.b16 %v2625
    %v3028 = vunpack.c.l.b16 %v2626
    %v3029 = vunpack.c.h.b16 %v2626
    %v3030 = vunpack.c.l.b16 %v2627
    %v3031 = vunpack.c.h.b16 %v2627
    %v3032 = vunpack.c.l.b16 %v2628
    %v3033 = vunpack.c.h.b16 %v2628
    %v3034 = vunpack.c.l.b16 %v2629
    %v3035 = vunpack.c.h.b16 %v2629
    %v3036 = vunpack.c.l.b16 %v2630
    %v3037 = vunpack.c.h.b16 %v2630
    %v3038 = vunpack.c.l.b16 %v2631
    %v3039 = vunpack.c.h.b16 %v2631
    %v3040 = vunpack.c.l.b16 %v2632
    %v3041 = vunpack.c.h.b16 %v2632
    %v3042 = vunpack.c.l.b16 %v2633
    %v3043 = vunpack.c.h.b16 %v2633
    %v3044 = vunpack.c.l.b16 %v2634
    %v3045 = vunpack.c.h.b16 %v2634
    %v3046 = vunpack.c.l.b16 %v2635
    %v3047 = vunpack.c.h.b16 %v2635
    %v3048 = vunpack.c.l.b16 %v2636
    %v3049 = vunpack.c.h.b16 %v2636
    %v3050 = vunpack.c.l.b16 %v2637
    %v3051 = vunpack.c.h.b16 %v2637
    %v3052 = vunpack.c.l.b16 %v2638
    %v3053 = vunpack.c.h.b16 %v2638
    %v3054 = vunpack.c.l.b16 %v2639
    %v3055 = vunpack.c.h.b16 %v2639
    %v3056 = vunpack.c.l.b16 %v2640
    %v3057 = vunpack.c.h.b16 %v2640
    %v3058 = vunpack.c.l.b16 %v2641
    %v3059 = vunpack.c.h.b16 %v2641
    %v3060 = vunpack.c.l.b16 %v2642
    %v3061 = vunpack.c.h.b16 %v2642
    %v3062 = vunpack.c.l.b16 %v2643
    %v3063 = vunpack.c.h.b16 %v2643
    %v3064 = vunpack.c.l.b16 %v2644
    %v3065 = vunpack.c.h.b16 %v2644
    %v3066 = vunpack.c.l.b16 %v2645
    %v3067 = vunpack.c.h.b16 %v2645
    %v3068 = vunpack.c.l.b16 %v2646
    %v3069 = vunpack.c.h.b16 %v2646
    %v3070 = vunpack.c.l.b16 %v2647
    %v3071 = vunpack.c.h.b16 %v2647
    %v3072 = vunpack.c.l.b16 %v2648
    %v3073 = vunpack.c.h.b16 %v2648
    %v3074 = vunpack.c.l.b16 %v2649
    %v3075 = vunpack.c.h.b16 %v2649
    %v3076 = vpack.c.b16 %v2828, %v2820
    %v3077 = vpack.c.b16 %v2829, %v2821
    %v3078 = vpack.c.b16 %v2830, %v2822
    %v3079 = vpack.c.b16 %v2831, %v2823
    %v3080 = vpack.c.b16 %v2832, %v2824
    %v3081 = vpack.c.b16 %v2833, %v2825
    %v3082 = vpack.c.b16 %v2834, %v2826
    %v3083 = vpack.c.b16 %v2835, %v2827
    %v3084 = vpack.c.b16 %v2844, %v2836
    %v3085 = vpack.c.b16 %v2845, %v2837
    %v3086 = vpack.c.b16 %v2846, %v2838
    %v3087 = vpack.c.b16 %v2847, %v2839
    %v3088 = vpack.c.b16 %v2848, %v2840
    %v3089 = vpack.c.b16 %v2849, %v2841
    %v3090 = vpack.c.b16 %v2850, %v2842
    %v3091 = vpack.c.b16 %v2851, %v2843
    %v3092 = vpack.c.b16 %v2860, %v2852
    %v3093 = vpack.c.b16 %v2861, %v2853
    %v3094 = vpack.c.b16 %v2862, %v2854
    %v3095 = vpack.c.b16 %v2863, %v2855
    %v3096 = vpack.c.b16 %v2864, %v2856
    %v3097 = vpack.c.b16 %v2865, %v2857
    %v3098 = vpack.c.b16 %v2866, %v2858
    %v3099 = vpack.c.b16 %v2867, %v2859
    %v3100 = vpack.c.b16 %v2876, %v2868
    %v3101 = vpack.c.b16 %v2877, %v2869
    %v3102 = vpack.c.b16 %v2878, %v2870
    %v3103 = vpack.c.b16 %v2879, %v2871
    %v3104 = vpack.c.b16 %v2880, %v2872
    %v3105 = vpack.c.b16 %v2881, %v2873
    %v3106 = vpack.c.b16 %v2882, %v2874
    %v3107 = vpack.c.b16 %v2883, %v2875
    %v3108 = vpack.c.b16 %v2892, %v2884
    %v3109 = vpack.c.b16 %v2893, %v2885
    %v3110 = vpack.c.b16 %v2894, %v2886
    %v3111 = vpack.c.b16 %v2895, %v2887
    %v3112 = vpack.c.b16 %v2896, %v2888
    %v3113 = vpack.c.b16 %v2897, %v2889
    %v3114 = vpack.c.b16 %v2898, %v2890
    %v3115 = vpack.c.b16 %v2899, %v2891
    %v3116 = vpack.c.b16 %v2908, %v2900
    %v3117 = vpack.c.b16 %v2909, %v2901
    %v3118 = vpack.c.b16 %v2910, %v2902
    %v3119 = vpack.c.b16 %v2911, %v2903
    %v3120 = vpack.c.b16 %v2912, %v2904
    %v3121 = vpack.c.b16 %v2913, %v2905
    %v3122 = vpack.c.b16 %v2914, %v2906
    %v3123 = vpack.c.b16 %v2915, %v2907
    %v3124 = vpack.c.b16 %v2924, %v2916
    %v3125 = vpack.c.b16 %v2925, %v2917
    %v3126 = vpack.c.b16 %v2926, %v2918
    %v3127 = vpack.c.b16 %v2927, %v2919
    %v3128 = vpack.c.b16 %v2928, %v2920
    %v3129 = vpack.c.b16 %v2929, %v2921
    %v3130 = vpack.c.b16 %v2930, %v2922
    %v3131 = vpack.c.b16 %v2931, %v2923
    %v3132 = vpack.c.b16 %v2940, %v2932
    %v3133 = vpack.c.b16 %v2941, %v2933
    %v3134 = vpack.c.b16 %v2942, %v2934
    %v3135 = vpack.c.b16 %v2943, %v2935
    %v3136 = vpack.c.b16 %v2944, %v2936
    %v3137 = vpack.c.b16 %v2945, %v2937
    %v3138 = vpack.c.b16 %v2946, %v2938
    %v3139 = vpack.c.b16 %v2947, %v2939
    %v3140 = vpack.c.b16 %v2956, %v2948
    %v3141 = vpack.c.b16 %v2957, %v2949
    %v3142 = vpack.c.b16 %v2958, %v2950
    %v3143 = vpack.c.b16 %v2959, %v2951
    %v3144 = vpack.c.b16 %v2960, %v2952
    %v3145 = vpack.c.b16 %v2961, %v2953
    %v3146 = vpack.c.b16 %v2962, %v2954
    %v3147 = vpack.c.b16 %v2963, %v2955
    %v3148 = vpack.c.b16 %v2972, %v2964
    %v3149 = vpack.c.b16 %v2973, %v2965
    %v3150 = vpack.c.b16 %v2974, %v2966
    %v3151 = vpack.c.b16 %v2975, %v2967
    %v3152 = vpack.c.b16 %v2976, %v2968
    %v3153 = vpack.c.b16 %v2977, %v2969
    %v3154 = vpack.c.b16 %v2978, %v2970
    %v3155 = vpack.c.b16 %v2979, %v2971
    %v3156 = vpack.c.b16 %v2988, %v2980
    %v3157 = vpack.c.b16 %v2989, %v2981
    %v3158 = vpack.c.b16 %v2990, %v2982
    %v3159 = vpack.c.b16 %v2991, %v2983
    %v3160 = vpack.c.b16 %v2992, %v2984
    %v3161 = vpack.c.b16 %v2993, %v2985
    %v3162 = vpack.c.b16 %v2994, %v2986
    %v3163 = vpack.c.b16 %v2995, %v2987
    %v3164 = vpack.c.b16 %v3004, %v2996
    %v3165 = vpack.c.b16 %v3005, %v2997
    %v3166 = vpack.c.b16 %v3006, %v2998
    %v3167 = vpack.c.b16 %v3007, %v2999
    %v3168 = vpack.c.b16 %v3008, %v3000
    %v3169 = vpack.c.b16 %v3009, %v3001
    %v3170 = vpack.c.b16 %v3010, %v3002
    %v3171 = vpack.c.b16 %v3011, %v3003
    %v3172 = vpack.c.b16 %v3020, %v3012
    %v3173 = vpack.c.b16 %v3021, %v3013
    %v3174 = vpack.c.b16 %v3022, %v3014
    %v3175 = vpack.c.b16 %v3023, %v3015
    %v3176 = vpack.c.b16 %v3024, %v3016
    %v3177 = vpack.c.b16 %v3025, %v3017
    %v3178 = vpack.c.b16 %v3026, %v3018
    %v3179 = vpack.c.b16 %v3027, %v3019
    %v3180 = vpack.c.b16 %v3036, %v3028
    %v3181 = vpack.c.b16 %v3037, %v3029
    %v3182 = vpack.c.b16 %v3038, %v3030
    %v3183 = vpack.c.b16 %v3039, %v3031
    %v3184 = vpack.c.b16 %v3040, %v3032
    %v3185 = vpack.c.b16 %v3041, %v3033
    %v3186 = vpack.c.b16 %v3042, %v3034
    %v3187 = vpack.c.b16 %v3043, %v3035
    %v3188 = vpack.c.b16 %v3052, %v3044
    %v3189 = vpack.c.b16 %v3053, %v3045
    %v3190 = vpack.c.b16 %v3054, %v3046
    %v3191 = vpack.c.b16 %v3055, %v3047
    %v3192 = vpack.c.b16 %v3056, %v3048
    %v3193 = vpack.c.b16 %v3057, %v3049
    %v3194 = vpack.c.b16 %v3058, %v3050
    %v3195 = vpack.c.b16 %v3059, %v3051
    %v3196 = vpack.c.b16 %v3068, %v3060
    %v3197 = vpack.c.b16 %v3069, %v3061
    %v3198 = vpack.c.b16 %v3070, %v3062
    %v3199 = vpack.c.b16 %v3071, %v3063
    %v3200 = vpack.c.b16 %v3072, %v3064
    %v3201 = vpack.c.b16 %v3073, %v3065
    %v3202 = vpack.c.b16 %v3074, %v3066
    %v3203 = vpack.c.b16 %v3075, %v3067
    %3332 = vmatprep.subr.bf16.mxu0 %v3077
    %3333 = vmatpush1.bf16.msra.mxu0 %v3076
    %3334 = vmatprep.subr.bf16.mxu0 %v3085
    %3335 = vmatpush1.bf16.msra.mxu0 %v3084
    %3336 = vmatprep.subr.bf16.mxu0 %v3093
    %3337 = vmatpush1.bf16.msra.mxu0 %v3092
    %3338 = vmatprep.subr.bf16.mxu0 %v3101
    %3339 = vmatpush1.bf16.msra.mxu0 %v3100
    %3340 = vmatprep.subr.bf16.mxu0 %v3109
    %3341 = vmatpush1.bf16.msra.mxu0 %v3108
    %3342 = vmatprep.subr.bf16.mxu0 %v3117
    %3343 = vmatpush1.bf16.msra.mxu0 %v3116
    %3344 = vmatprep.subr.bf16.mxu0 %v3125
    %3345 = vmatpush1.bf16.msra.mxu0 %v3124
    %3346 = vmatprep.subr.bf16.mxu0 %v3133
    %3347 = vmatpush1.bf16.msra.mxu0 %v3132
    %3348 = vmatprep.subr.bf16.mxu0 %v3141
    %3349 = vmatpush1.bf16.msra.mxu0 %v3140
    %3350 = vmatprep.subr.bf16.mxu0 %v3149
    %3351 = vmatpush1.bf16.msra.mxu0 %v3148
    %3352 = vmatprep.subr.bf16.mxu0 %v3157
    %3353 = vmatpush1.bf16.msra.mxu0 %v3156
    %3354 = vmatprep.subr.bf16.mxu0 %v3165
    %3355 = vmatpush1.bf16.msra.mxu0 %v3164
    %3356 = vmatprep.subr.bf16.mxu0 %v3173
    %3357 = vmatpush1.bf16.msra.mxu0 %v3172
    %3358 = vmatprep.subr.bf16.mxu0 %v3181
    %3359 = vmatpush1.bf16.msra.mxu0 %v3180
    %3360 = vmatprep.subr.bf16.mxu0 %v3189
    %3361 = vmatpush1.bf16.msra.mxu0 %v3188
    %3362 = vmatprep.subr.bf16.mxu0 %v3197
    %3363 = vmatpush1.bf16.msra.mxu0 %v3196
    %3364 = vmatprep.mubr.bf16.mxu0 %v2521
    %3365 = vmatmul.mubr.bf16.gmra.mrb[0].mxu0 %v2520
    %v3366 = vpop.f32.mrb[0].mxu0
    %v3367 = vadd.f32 %v2655, %v3366
    %v3368 = vpop.f32.mrb[0].mxu0
    %v3369 = vadd.f32 %v2659, %v3368
    %v3370 = vpop.f32.mrb[0].mxu0
    %v3371 = vadd.f32 %v2655, %v3370
    %v3372 = vpop.f32.mrb[0].mxu0
    %v3373 = vadd.f32 %v2659, %v3372
    %3374 = vdwg.mxu0
    %3375 = vmatprep.subr.bf16.mxu0 %v3079
    %3376 = vmatpush1.bf16.msra.mxu0 %v3078
    %3377 = vmatprep.subr.bf16.mxu0 %v3087
    %3378 = vmatpush1.bf16.msra.mxu0 %v3086
    %3379 = vmatprep.subr.bf16.mxu0 %v3095
    %3380 = vmatpush1.bf16.msra.mxu0 %v3094
    %3381 = vmatprep.subr.bf16.mxu0 %v3103
    %3382 = vmatpush1.bf16.msra.mxu0 %v3102
    %3383 = vmatprep.subr.bf16.mxu0 %v3111
    %3384 = vmatpush1.bf16.msra.mxu0 %v3110
    %3385 = vmatprep.subr.bf16.mxu0 %v3119
    %3386 = vmatpush1.bf16.msra.mxu0 %v3118
    %3387 = vmatprep.subr.bf16.mxu0 %v3127
    %3388 = vmatpush1.bf16.msra.mxu0 %v3126
    %3389 = vmatprep.subr.bf16.mxu0 %v3135
    %3390 = vmatpush1.bf16.msra.mxu0 %v3134
    %3391 = vmatprep.subr.bf16.mxu0 %v3143
    %3392 = vmatpush1.bf16.msra.mxu0 %v3142
    %3393 = vmatprep.subr.bf16.mxu0 %v3151
    %3394 = vmatpush1.bf16.msra.mxu0 %v3150
    %3395 = vmatprep.subr.bf16.mxu0 %v3159
    %3396 = vmatpush1.bf16.msra.mxu0 %v3158
    %3397 = vmatprep.subr.bf16.mxu0 %v3167
    %3398 = vmatpush1.bf16.msra.mxu0 %v3166
    %3399 = vmatprep.subr.bf16.mxu0 %v3175
    %3400 = vmatpush1.bf16.msra.mxu0 %v3174
    %3401 = vmatprep.subr.bf16.mxu0 %v3183
    %3402 = vmatpush1.bf16.msra.mxu0 %v3182
    %3403 = vmatprep.subr.bf16.mxu0 %v3191
    %3404 = vmatpush1.bf16.msra.mxu0 %v3190
    %3405 = vmatprep.subr.bf16.mxu0 %v3199
    %3406 = vmatpush1.bf16.msra.mxu0 %v3198
    %3407 = vmatprep.mubr.bf16.mxu0 %v2521
    %3408 = vmatmul.mubr.bf16.gmra.mrb[0].mxu0 %v2520
    %v3409 = vpop.f32.mrb[0].mxu0
    %v3410 = vadd.f32 %v2663, %v3409
    %v3411 = vpop.f32.mrb[0].mxu0
    %v3412 = vadd.f32 %v2667, %v3411
    %v3413 = vpop.f32.mrb[0].mxu0
    %v3414 = vadd.f32 %v2663, %v3413
    %v3415 = vpop.f32.mrb[0].mxu0
    %v3416 = vadd.f32 %v2667, %v3415
    %3417 = vdwg.mxu0
    %3418 = vmatprep.subr.bf16.mxu0 %v3081
    %3419 = vmatpush1.bf16.msra.mxu0 %v3080
    %3420 = vmatprep.subr.bf16.mxu0 %v3089
    %3421 = vmatpush1.bf16.msra.mxu0 %v3088
    %3422 = vmatprep.subr.bf16.mxu0 %v3097
    %3423 = vmatpush1.bf16.msra.mxu0 %v3096
    %3424 = vmatprep.subr.bf16.mxu0 %v3105
    %3425 = vmatpush1.bf16.msra.mxu0 %v3104
    %3426 = vmatprep.subr.bf16.mxu0 %v3113
    %3427 = vmatpush1.bf16.msra.mxu0 %v3112
    %3428 = vmatprep.subr.bf16.mxu0 %v3121
    %3429 = vmatpush1.bf16.msra.mxu0 %v3120
    %3430 = vmatprep.subr.bf16.mxu0 %v3129
    %3431 = vmatpush1.bf16.msra.mxu0 %v3128
    %3432 = vmatprep.subr.bf16.mxu0 %v3137
    %3433 = vmatpush1.bf16.msra.mxu0 %v3136
    %3434 = vmatprep.subr.bf16.mxu0 %v3145
    %3435 = vmatpush1.bf16.msra.mxu0 %v3144
    %3436 = vmatprep.subr.bf16.mxu0 %v3153
    %3437 = vmatpush1.bf16.msra.mxu0 %v3152
    %3438 = vmatprep.subr.bf16.mxu0 %v3161
    %3439 = vmatpush1.bf16.msra.mxu0 %v3160
    %3440 = vmatprep.subr.bf16.mxu0 %v3169
    %3441 = vmatpush1.bf16.msra.mxu0 %v3168
    %3442 = vmatprep.subr.bf16.mxu0 %v3177
    %3443 = vmatpush1.bf16.msra.mxu0 %v3176
    %3444 = vmatprep.subr.bf16.mxu0 %v3185
    %3445 = vmatpush1.bf16.msra.mxu0 %v3184
    %3446 = vmatprep.subr.bf16.mxu0 %v3193
    %3447 = vmatpush1.bf16.msra.mxu0 %v3192
    %3448 = vmatprep.subr.bf16.mxu0 %v3201
    %3449 = vmatpush1.bf16.msra.mxu0 %v3200
    %3450 = vmatprep.mubr.bf16.mxu0 %v2521
    %3451 = vmatmul.mubr.bf16.gmra.mrb[0].mxu0 %v2520
    %v3452 = vpop.f32.mrb[0].mxu0
    %v3453 = vadd.f32 %v2671, %v3452
    %v3454 = vpop.f32.mrb[0].mxu0
    %v3455 = vadd.f32 %v2675, %v3454
    %v3456 = vpop.f32.mrb[0].mxu0
    %v3457 = vadd.f32 %v2671, %v3456
    %v3458 = vpop.f32.mrb[0].mxu0
    %v3459 = vadd.f32 %v2675, %v3458
    %3460 = vdwg.mxu0
    %3461 = vmatprep.subr.bf16.mxu0 %v3083
    %3462 = vmatpush1.bf16.msra.mxu0 %v3082
    %3463 = vmatprep.subr.bf16.mxu0 %v3091
    %3464 = vmatpush1.bf16.msra.mxu0 %v3090
    %3465 = vmatprep.subr.bf16.mxu0 %v3099
    %3466 = vmatpush1.bf16.msra.mxu0 %v3098
    %3467 = vmatprep.subr.bf16.mxu0 %v3107
    %3468 = vmatpush1.bf16.msra.mxu0 %v3106
    %3469 = vmatprep.subr.bf16.mxu0 %v3115
    %3470 = vmatpush1.bf16.msra.mxu0 %v3114
    %3471 = vmatprep.subr.bf16.mxu0 %v3123
    %3472 = vmatpush1.bf16.msra.mxu0 %v3122
    %3473 = vmatprep.subr.bf16.mxu0 %v3131
    %3474 = vmatpush1.bf16.msra.mxu0 %v3130
    %3475 = vmatprep.subr.bf16.mxu0 %v3139
    %3476 = vmatpush1.bf16.msra.mxu0 %v3138
    %3477 = vmatprep.subr.bf16.mxu0 %v3147
    %3478 = vmatpush1.bf16.msra.mxu0 %v3146
    %3479 = vmatprep.subr.bf16.mxu0 %v3155
    %3480 = vmatpush1.bf16.msra.mxu0 %v3154
    %3481 = vmatprep.subr.bf16.mxu0 %v3163
    %3482 = vmatpush1.bf16.msra.mxu0 %v3162
    %3483 = vmatprep.subr.bf16.mxu0 %v3171
    %3484 = vmatpush1.bf16.msra.mxu0 %v3170
    %3485 = vmatprep.subr.bf16.mxu0 %v3179
    %3486 = vmatpush1.bf16.msra.mxu0 %v3178
    %3487 = vmatprep.subr.bf16.mxu0 %v3187
    %3488 = vmatpush1.bf16.msra.mxu0 %v3186
    %3489 = vmatprep.subr.bf16.mxu0 %v3195
    %3490 = vmatpush1.bf16.msra.mxu0 %v3194
    %3491 = vmatprep.subr.bf16.mxu0 %v3203
    %3492 = vmatpush1.bf16.msra.mxu0 %v3202
    %3493 = vmatprep.mubr.bf16.mxu0 %v2521
    %3494 = vmatmul.mubr.bf16.gmra.mrb[0].mxu0 %v2520
    %v3495 = vpop.f32.mrb[0].mxu0
    %v3496 = vadd.f32 %v2679, %v3495
    %v3497 = vpop.f32.mrb[0].mxu0
    %v3498 = vadd.f32 %v2683, %v3497
    %v3499 = vpop.f32.mrb[0].mxu0
    %v3500 = vadd.f32 %v2679, %v3499
    %v3501 = vpop.f32.mrb[0].mxu0
    %v3502 = vadd.f32 %v2683, %v3501
    %3503 = vdwg.mxu0
    %v3504 = vmul.f32 %v3367, 1.702
    %v3505 = vmul.f32 %v3369, 1.702
    %v3506 = vmul.f32 %v3410, 1.702
    %v3507 = vmul.f32 %v3412, 1.702
    %v3508 = vmul.f32 %v3453, 1.702
    %v3509 = vmul.f32 %v3455, 1.702
    %v3510 = vmul.f32 %v3496, 1.702
    %v3511 = vmul.f32 %v3498, 1.702
    %v3512 = vmul.f32 %v3371, 1.702
    %v3513 = vmul.f32 %v3373, 1.702
    %v3514 = vmul.f32 %v3414, 1.702
    %v3515 = vmul.f32 %v3416, 1.702
    %v3516 = vmul.f32 %v3457, 1.702
    %v3517 = vmul.f32 %v3459, 1.702
    %v3518 = vmul.f32 %v3500, 1.702
    %v3519 = vmul.f32 %v3502, 1.702
    %v3520 = vxor.u32 %v3504, 2147483648
    %v3521 = vxor.u32 %v3505, 2147483648
    %v3522 = vxor.u32 %v3506, 2147483648
    %v3523 = vxor.u32 %v3507, 2147483648
    %v3524 = vxor.u32 %v3508, 2147483648
    %v3525 = vxor.u32 %v3509, 2147483648
    %v3526 = vxor.u32 %v3510, 2147483648
    %v3527 = vxor.u32 %v3511, 2147483648
    %v3528 = vxor.u32 %v3512, 2147483648
    %v3529 = vxor.u32 %v3513, 2147483648
    %v3530 = vxor.u32 %v3514, 2147483648
    %v3531 = vxor.u32 %v3515, 2147483648
    %v3532 = vxor.u32 %v3516, 2147483648
    %v3533 = vxor.u32 %v3517, 2147483648
    %v3534 = vxor.u32 %v3518, 2147483648
    %v3535 = vxor.u32 %v3519, 2147483648
    %v3536 = vmul.f32 %v3520, 1.442695
    %v3537 = vpow.pop %v3536
    %v3538 = vmul.f32 %v3521, 1.442695
    %v3539 = vpow.pop %v3538
    %v3540 = vmul.f32 %v3522, 1.442695
    %v3541 = vpow.pop %v3540
    %v3542 = vmul.f32 %v3523, 1.442695
    %v3543 = vpow.pop %v3542
    %v3544 = vmul.f32 %v3524, 1.442695
    %v3545 = vpow.pop %v3544
    %v3546 = vmul.f32 %v3525, 1.442695
    %v3547 = vpow.pop %v3546
    %v3548 = vmul.f32 %v3526, 1.442695
    %v3549 = vpow.pop %v3548
    %v3550 = vmul.f32 %v3527, 1.442695
    %v3551 = vpow.pop %v3550
    %v3552 = vmul.f32 %v3528, 1.442695
    %v3553 = vpow.pop %v3552
    %v3554 = vmul.f32 %v3529, 1.442695
    %v3555 = vpow.pop %v3554
    %v3556 = vmul.f32 %v3530, 1.442695
    %v3557 = vpow.pop %v3556
    %v3558 = vmul.f32 %v3531, 1.442695
    %v3559 = vpow.pop %v3558
    %v3560 = vmul.f32 %v3532, 1.442695
    %v3561 = vpow.pop %v3560
    %v3562 = vmul.f32 %v3533, 1.442695
    %v3563 = vpow.pop %v3562
    %v3564 = vmul.f32 %v3534, 1.442695
    %v3565 = vpow.pop %v3564
    %v3566 = vmul.f32 %v3535, 1.442695
    %v3567 = vpow.pop %v3566
    %v3568 = vadd.f32 %v3537, 1.0
    %v3569 = vadd.f32 %v3539, 1.0
    %v3570 = vadd.f32 %v3541, 1.0
    %v3571 = vadd.f32 %v3543, 1.0
    %v3572 = vadd.f32 %v3545, 1.0
    %v3573 = vadd.f32 %v3547, 1.0
    %v3574 = vadd.f32 %v3549, 1.0
    %v3575 = vadd.f32 %v3551, 1.0
    %v3576 = vadd.f32 %v3553, 1.0
    %v3577 = vadd.f32 %v3555, 1.0
    %v3578 = vadd.f32 %v3557, 1.0
    %v3579 = vadd.f32 %v3559, 1.0
    %v3580 = vadd.f32 %v3561, 1.0
    %v3581 = vadd.f32 %v3563, 1.0
    %v3582 = vadd.f32 %v3565, 1.0
    %v3583 = vadd.f32 %v3567, 1.0
    %v3584 = vrcp.pop %v3568
    %v3585 = vmul.f32 1.0, %v3584
    %v3586 = vrcp.pop %v3569
    %v3587 = vmul.f32 1.0, %v3586
    %v3588 = vrcp.pop %v3570
    %v3589 = vmul.f32 1.0, %v3588
    %v3590 = vrcp.pop %v3571
    %v3591 = vmul.f32 1.0, %v3590
    %v3592 = vrcp.pop %v3572
    %v3593 = vmul.f32 1.0, %v3592
    %v3594 = vrcp.pop %v3573
    %v3595 = vmul.f32 1.0, %v3594
    %v3596 = vrcp.pop %v3574
    %v3597 = vmul.f32 1.0, %v3596
    %v3598 = vrcp.pop %v3575
    %v3599 = vmul.f32 1.0, %v3598
    %v3600 = vrcp.pop %v3576
    %v3601 = vmul.f32 1.0, %v3600
    %v3602 = vrcp.pop %v3577
    %v3603 = vmul.f32 1.0, %v3602
    %v3604 = vrcp.pop %v3578
    %v3605 = vmul.f32 1.0, %v3604
    %v3606 = vrcp.pop %v3579
    %v3607 = vmul.f32 1.0, %v3606
    %v3608 = vrcp.pop %v3580
    %v3609 = vmul.f32 1.0, %v3608
    %v3610 = vrcp.pop %v3581
    %v3611 = vmul.f32 1.0, %v3610
    %v3612 = vrcp.pop %v3582
    %v3613 = vmul.f32 1.0, %v3612
    %v3614 = vrcp.pop %v3583
    %v3615 = vmul.f32 1.0, %v3614
    %v3616 = vmul.f32 %v3367, %v3585
    %v3617 = vmul.f32 %v3369, %v3587
    %v3618 = vmul.f32 %v3410, %v3589
    %v3619 = vmul.f32 %v3412, %v3591
    %v3620 = vmul.f32 %v3453, %v3593
    %v3621 = vmul.f32 %v3455, %v3595
    %v3622 = vmul.f32 %v3496, %v3597
    %v3623 = vmul.f32 %v3498, %v3599
    %v3624 = vmul.f32 %v3371, %v3601
    %v3625 = vmul.f32 %v3373, %v3603
    %v3626 = vmul.f32 %v3414, %v3605
    %v3627 = vmul.f32 %v3416, %v3607
    %v3628 = vmul.f32 %v3457, %v3609
    %v3629 = vmul.f32 %v3459, %v3611
    %v3630 = vmul.f32 %v3500, %v3613
    %v3631 = vmul.f32 %v3502, %v3615
    %v3632 = vpack.c.bf16 %v3624, %v3616
    %v3633 = vpack.c.bf16 %v3625, %v3617
    %v3634 = vpack.c.bf16 %v3626, %v3618
    %v3635 = vpack.c.bf16 %v3627, %v3619
    %v3636 = vpack.c.bf16 %v3628, %v3620
    %v3637 = vpack.c.bf16 %v3629, %v3621
    %v3638 = vpack.c.bf16 %v3630, %v3622
    %v3639 = vpack.c.bf16 %v3631, %v3623
    %v3640 = vld [vmem:[%s16] sm:$0xff]
    %v3641 = vld [vmem:[%s16 + $0x8] sm:$0xff]
    %v3642 = vld [vmem:[%s16 + $0x10] sm:$0xff]
    %v3643 = vld [vmem:[%s16 + $0x18] sm:$0xff]
    %v3644 = vld [vmem:[%s16 + $0x20] sm:$0xff]
    %v3645 = vld [vmem:[%s16 + $0x28] sm:$0xff]
    %v3646 = vld [vmem:[%s16 + $0x30] sm:$0xff]
    %v3647 = vld [vmem:[%s16 + $0x38] sm:$0xff]
    %v3648 = vld [vmem:[%s16 + $0x40] sm:$0xff]
    %v3649 = vld [vmem:[%s16 + $0x48] sm:$0xff]
    %v3650 = vld [vmem:[%s16 + $0x50] sm:$0xff]
    %v3651 = vld [vmem:[%s16 + $0x58] sm:$0xff]
    %v3652 = vld [vmem:[%s16 + $0x60] sm:$0xff]
    %v3653 = vld [vmem:[%s16 + $0x68] sm:$0xff]
    %v3654 = vld [vmem:[%s16 + $0x70] sm:$0xff]
    %v3655 = vld [vmem:[%s16 + $0x78] sm:$0xff]
    %v3656 = vld [vmem:[%s16 + $0x80] sm:$0xff]
    %v3657 = vld [vmem:[%s16 + $0x88] sm:$0xff]
    %v3658 = vld [vmem:[%s16 + $0x90] sm:$0xff]
    %v3659 = vld [vmem:[%s16 + $0x98] sm:$0xff]
    %v3660 = vld [vmem:[%s16 + $0xa0] sm:$0xff]
    %v3661 = vld [vmem:[%s16 + $0xa8] sm:$0xff]
    %v3662 = vld [vmem:[%s16 + $0xb0] sm:$0xff]
    %v3663 = vld [vmem:[%s16 + $0xb8] sm:$0xff]
    %v3664 = vld [vmem:[%s16 + $0xc0] sm:$0xff]
    %v3665 = vld [vmem:[%s16 + $0xc8] sm:$0xff]
    %v3666 = vld [vmem:[%s16 + $0xd0] sm:$0xff]
    %v3667 = vld [vmem:[%s16 + $0xd8] sm:$0xff]
    %v3668 = vld [vmem:[%s16 + $0xe0] sm:$0xff]
    %v3669 = vld [vmem:[%s16 + $0xe8] sm:$0xff]
    %v3670 = vld [vmem:[%s16 + $0xf0] sm:$0xff]
    %v3671 = vld [vmem:[%s16 + $0xf8] sm:$0xff]
    %v3672 = vld [vmem:[%s16 + $0x100] sm:$0xff]
    %v3673 = vld [vmem:[%s16 + $0x108] sm:$0xff]
    %v3674 = vld [vmem:[%s16 + $0x110] sm:$0xff]
    %v3675 = vld [vmem:[%s16 + $0x118] sm:$0xff]
    %v3676 = vld [vmem:[%s16 + $0x120] sm:$0xff]
    %v3677 = vld [vmem:[%s16 + $0x128] sm:$0xff]
    %v3678 = vld [vmem:[%s16 + $0x130] sm:$0xff]
    %v3679 = vld [vmem:[%s16 + $0x138] sm:$0xff]
    %v3680 = vld [vmem:[%s16 + $0x140] sm:$0xff]
    %v3681 = vld [vmem:[%s16 + $0x148] sm:$0xff]
    %v3682 = vld [vmem:[%s16 + $0x150] sm:$0xff]
    %v3683 = vld [vmem:[%s16 + $0x158] sm:$0xff]
    %v3684 = vld [vmem:[%s16 + $0x160] sm:$0xff]
    %v3685 = vld [vmem:[%s16 + $0x168] sm:$0xff]
    %v3686 = vld [vmem:[%s16 + $0x170] sm:$0xff]
    %v3687 = vld [vmem:[%s16 + $0x178] sm:$0xff]
    %v3688 = vld [vmem:[%s16 + $0x180] sm:$0xff]
    %v3689 = vld [vmem:[%s16 + $0x188] sm:$0xff]
    %v3690 = vld [vmem:[%s16 + $0x190] sm:$0xff]
    %v3691 = vld [vmem:[%s16 + $0x198] sm:$0xff]
    %v3692 = vld [vmem:[%s16 + $0x1a0] sm:$0xff]
    %v3693 = vld [vmem:[%s16 + $0x1a8] sm:$0xff]
    %v3694 = vld [vmem:[%s16 + $0x1b0] sm:$0xff]
    %v3695 = vld [vmem:[%s16 + $0x1b8] sm:$0xff]
    %v3696 = vld [vmem:[%s16 + $0x1c0] sm:$0xff]
    %v3697 = vld [vmem:[%s16 + $0x1c8] sm:$0xff]
    %v3698 = vld [vmem:[%s16 + $0x1d0] sm:$0xff]
    %v3699 = vld [vmem:[%s16 + $0x1d8] sm:$0xff]
    %v3700 = vld [vmem:[%s16 + $0x1e0] sm:$0xff]
    %v3701 = vld [vmem:[%s16 + $0x1e8] sm:$0xff]
    %v3702 = vld [vmem:[%s16 + $0x1f0] sm:$0xff]
    %v3703 = vld [vmem:[%s16 + $0x1f8] sm:$0xff]
    %v3704 = vld [vmem:[%s16 + $0x200] sm:$0xff]
    %v3705 = vld [vmem:[%s16 + $0x208] sm:$0xff]
    %v3706 = vld [vmem:[%s16 + $0x210] sm:$0xff]
    %v3707 = vld [vmem:[%s16 + $0x218] sm:$0xff]
    %v3708 = vld [vmem:[%s16 + $0x220] sm:$0xff]
    %v3709 = vld [vmem:[%s16 + $0x228] sm:$0xff]
    %v3710 = vld [vmem:[%s16 + $0x230] sm:$0xff]
    %v3711 = vld [vmem:[%s16 + $0x238] sm:$0xff]
    %v3712 = vld [vmem:[%s16 + $0x240] sm:$0xff]
    %v3713 = vld [vmem:[%s16 + $0x248] sm:$0xff]
    %v3714 = vld [vmem:[%s16 + $0x250] sm:$0xff]
    %v3715 = vld [vmem:[%s16 + $0x258] sm:$0xff]
    %v3716 = vld [vmem:[%s16 + $0x260] sm:$0xff]
    %v3717 = vld [vmem:[%s16 + $0x268] sm:$0xff]
    %v3718 = vld [vmem:[%s16 + $0x270] sm:$0xff]
    %v3719 = vld [vmem:[%s16 + $0x278] sm:$0xff]
    %v3720 = vld [vmem:[%s16 + $0x280] sm:$0xff]
    %v3721 = vld [vmem:[%s16 + $0x288] sm:$0xff]
    %v3722 = vld [vmem:[%s16 + $0x290] sm:$0xff]
    %v3723 = vld [vmem:[%s16 + $0x298] sm:$0xff]
    %v3724 = vld [vmem:[%s16 + $0x2a0] sm:$0xff]
    %v3725 = vld [vmem:[%s16 + $0x2a8] sm:$0xff]
    %v3726 = vld [vmem:[%s16 + $0x2b0] sm:$0xff]
    %v3727 = vld [vmem:[%s16 + $0x2b8] sm:$0xff]
    %v3728 = vld [vmem:[%s16 + $0x2c0] sm:$0xff]
    %v3729 = vld [vmem:[%s16 + $0x2c8] sm:$0xff]
    %v3730 = vld [vmem:[%s16 + $0x2d0] sm:$0xff]
    %v3731 = vld [vmem:[%s16 + $0x2d8] sm:$0xff]
    %v3732 = vld [vmem:[%s16 + $0x2e0] sm:$0xff]
    %v3733 = vld [vmem:[%s16 + $0x2e8] sm:$0xff]
    %v3734 = vld [vmem:[%s16 + $0x2f0] sm:$0xff]
    %v3735 = vld [vmem:[%s16 + $0x2f8] sm:$0xff]
    %v3736 = vld [vmem:[%s16 + $0x300] sm:$0xff]
    %v3737 = vld [vmem:[%s16 + $0x308] sm:$0xff]
    %v3738 = vld [vmem:[%s16 + $0x310] sm:$0xff]
    %v3739 = vld [vmem:[%s16 + $0x318] sm:$0xff]
    %v3740 = vld [vmem:[%s16 + $0x320] sm:$0xff]
    %v3741 = vld [vmem:[%s16 + $0x328] sm:$0xff]
    %v3742 = vld [vmem:[%s16 + $0x330] sm:$0xff]
    %v3743 = vld [vmem:[%s16 + $0x338] sm:$0xff]
    %v3744 = vld [vmem:[%s16 + $0x340] sm:$0xff]
    %v3745 = vld [vmem:[%s16 + $0x348] sm:$0xff]
    %v3746 = vld [vmem:[%s16 + $0x350] sm:$0xff]
    %v3747 = vld [vmem:[%s16 + $0x358] sm:$0xff]
    %v3748 = vld [vmem:[%s16 + $0x360] sm:$0xff]
    %v3749 = vld [vmem:[%s16 + $0x368] sm:$0xff]
    %v3750 = vld [vmem:[%s16 + $0x370] sm:$0xff]
    %v3751 = vld [vmem:[%s16 + $0x378] sm:$0xff]
    %v3752 = vld [vmem:[%s16 + $0x380] sm:$0xff]
    %v3753 = vld [vmem:[%s16 + $0x388] sm:$0xff]
    %v3754 = vld [vmem:[%s16 + $0x390] sm:$0xff]
    %v3755 = vld [vmem:[%s16 + $0x398] sm:$0xff]
    %v3756 = vld [vmem:[%s16 + $0x3a0] sm:$0xff]
    %v3757 = vld [vmem:[%s16 + $0x3a8] sm:$0xff]
    %v3758 = vld [vmem:[%s16 + $0x3b0] sm:$0xff]
    %v3759 = vld [vmem:[%s16 + $0x3b8] sm:$0xff]
    %v3760 = vld [vmem:[%s16 + $0x3c0] sm:$0xff]
    %v3761 = vld [vmem:[%s16 + $0x3c8] sm:$0xff]
    %v3762 = vld [vmem:[%s16 + $0x3d0] sm:$0xff]
    %v3763 = vld [vmem:[%s16 + $0x3d8] sm:$0xff]
    %v3764 = vld [vmem:[%s16 + $0x3e0] sm:$0xff]
    %v3765 = vld [vmem:[%s16 + $0x3e8] sm:$0xff]
    %v3766 = vld [vmem:[%s16 + $0x3f0] sm:$0xff]
    %v3767 = vld [vmem:[%s16 + $0x3f8] sm:$0xff]
    %v3896 = vunpack.c.l.b16 %v3640
    %v3897 = vunpack.c.h.b16 %v3640
    %v3898 = vunpack.c.l.b16 %v3641
    %v3899 = vunpack.c.h.b16 %v3641
    %v3900 = vunpack.c.l.b16 %v3642
    %v3901 = vunpack.c.h.b16 %v3642
    %v3902 = vunpack.c.l.b16 %v3643
    %v3903 = vunpack.c.h.b16 %v3643
    %v3904 = vunpack.c.l.b16 %v3644
    %v3905 = vunpack.c.h.b16 %v3644
    %v3906 = vunpack.c.l.b16 %v3645
    %v3907 = vunpack.c.h.b16 %v3645
    %v3908 = vunpack.c.l.b16 %v3646
    %v3909 = vunpack.c.h.b16 %v3646
    %v3910 = vunpack.c.l.b16 %v3647
    %v3911 = vunpack.c.h.b16 %v3647
    %v3912 = vunpack.c.l.b16 %v3648
    %v3913 = vunpack.c.h.b16 %v3648
    %v3914 = vunpack.c.l.b16 %v3649
    %v3915 = vunpack.c.h.b16 %v3649
    %v3916 = vunpack.c.l.b16 %v3650
    %v3917 = vunpack.c.h.b16 %v3650
    %v3918 = vunpack.c.l.b16 %v3651
    %v3919 = vunpack.c.h.b16 %v3651
    %v3920 = vunpack.c.l.b16 %v3652
    %v3921 = vunpack.c.h.b16 %v3652
    %v3922 = vunpack.c.l.b16 %v3653
    %v3923 = vunpack.c.h.b16 %v3653
    %v3924 = vunpack.c.l.b16 %v3654
    %v3925 = vunpack.c.h.b16 %v3654
    %v3926 = vunpack.c.l.b16 %v3655
    %v3927 = vunpack.c.h.b16 %v3655
    %v3928 = vunpack.c.l.b16 %v3656
    %v3929 = vunpack.c.h.b16 %v3656
    %v3930 = vunpack.c.l.b16 %v3657
    %v3931 = vunpack.c.h.b16 %v3657
    %v3932 = vunpack.c.l.b16 %v3658
    %v3933 = vunpack.c.h.b16 %v3658
    %v3934 = vunpack.c.l.b16 %v3659
    %v3935 = vunpack.c.h.b16 %v3659
    %v3936 = vunpack.c.l.b16 %v3660
    %v3937 = vunpack.c.h.b16 %v3660
    %v3938 = vunpack.c.l.b16 %v3661
    %v3939 = vunpack.c.h.b16 %v3661
    %v3940 = vunpack.c.l.b16 %v3662
    %v3941 = vunpack.c.h.b16 %v3662
    %v3942 = vunpack.c.l.b16 %v3663
    %v3943 = vunpack.c.h.b16 %v3663
    %v3944 = vunpack.c.l.b16 %v3664
    %v3945 = vunpack.c.h.b16 %v3664
    %v3946 = vunpack.c.l.b16 %v3665
    %v3947 = vunpack.c.h.b16 %v3665
    %v3948 = vunpack.c.l.b16 %v3666
    %v3949 = vunpack.c.h.b16 %v3666
    %v3950 = vunpack.c.l.b16 %v3667
    %v3951 = vunpack.c.h.b16 %v3667
    %v3952 = vunpack.c.l.b16 %v3668
    %v3953 = vunpack.c.h.b16 %v3668
    %v3954 = vunpack.c.l.b16 %v3669
    %v3955 = vunpack.c.h.b16 %v3669
    %v3956 = vunpack.c.l.b16 %v3670
    %v3957 = vunpack.c.h.b16 %v3670
    %v3958 = vunpack.c.l.b16 %v3671
    %v3959 = vunpack.c.h.b16 %v3671
    %v3960 = vunpack.c.l.b16 %v3672
    %v3961 = vunpack.c.h.b16 %v3672
    %v3962 = vunpack.c.l.b16 %v3673
    %v3963 = vunpack.c.h.b16 %v3673
    %v3964 = vunpack.c.l.b16 %v3674
    %v3965 = vunpack.c.h.b16 %v3674
    %v3966 = vunpack.c.l.b16 %v3675
    %v3967 = vunpack.c.h.b16 %v3675
    %v3968 = vunpack.c.l.b16 %v3676
    %v3969 = vunpack.c.h.b16 %v3676
    %v3970 = vunpack.c.l.b16 %v3677
    %v3971 = vunpack.c.h.b16 %v3677
    %v3972 = vunpack.c.l.b16 %v3678
    %v3973 = vunpack.c.h.b16 %v3678
    %v3974 = vunpack.c.l.b16 %v3679
    %v3975 = vunpack.c.h.b16 %v3679
    %v3976 = vunpack.c.l.b16 %v3680
    %v3977 = vunpack.c.h.b16 %v3680
    %v3978 = vunpack.c.l.b16 %v3681
    %v3979 = vunpack.c.h.b16 %v3681
    %v3980 = vunpack.c.l.b16 %v3682
    %v3981 = vunpack.c.h.b16 %v3682
    %v3982 = vunpack.c.l.b16 %v3683
    %v3983 = vunpack.c.h.b16 %v3683
    %v3984 = vunpack.c.l.b16 %v3684
    %v3985 = vunpack.c.h.b16 %v3684
    %v3986 = vunpack.c.l.b16 %v3685
    %v3987 = vunpack.c.h.b16 %v3685
    %v3988 = vunpack.c.l.b16 %v3686
    %v3989 = vunpack.c.h.b16 %v3686
    %v3990 = vunpack.c.l.b16 %v3687
    %v3991 = vunpack.c.h.b16 %v3687
    %v3992 = vunpack.c.l.b16 %v3688
    %v3993 = vunpack.c.h.b16 %v3688
    %v3994 = vunpack.c.l.b16 %v3689
    %v3995 = vunpack.c.h.b16 %v3689
    %v3996 = vunpack.c.l.b16 %v3690
    %v3997 = vunpack.c.h.b16 %v3690
    %v3998 = vunpack.c.l.b16 %v3691
    %v3999 = vunpack.c.h.b16 %v3691
    %v4000 = vunpack.c.l.b16 %v3692
    %v4001 = vunpack.c.h.b16 %v3692
    %v4002 = vunpack.c.l.b16 %v3693
    %v4003 = vunpack.c.h.b16 %v3693
    %v4004 = vunpack.c.l.b16 %v3694
    %v4005 = vunpack.c.h.b16 %v3694
    %v4006 = vunpack.c.l.b16 %v3695
    %v4007 = vunpack.c.h.b16 %v3695
    %v4008 = vunpack.c.l.b16 %v3696
    %v4009 = vunpack.c.h.b16 %v3696
    %v4010 = vunpack.c.l.b16 %v3697
    %v4011 = vunpack.c.h.b16 %v3697
    %v4012 = vunpack.c.l.b16 %v3698
    %v4013 = vunpack.c.h.b16 %v3698
    %v4014 = vunpack.c.l.b16 %v3699
    %v4015 = vunpack.c.h.b16 %v3699
    %v4016 = vunpack.c.l.b16 %v3700
    %v4017 = vunpack.c.h.b16 %v3700
    %v4018 = vunpack.c.l.b16 %v3701
    %v4019 = vunpack.c.h.b16 %v3701
    %v4020 = vunpack.c.l.b16 %v3702
    %v4021 = vunpack.c.h.b16 %v3702
    %v4022 = vunpack.c.l.b16 %v3703
    %v4023 = vunpack.c.h.b16 %v3703
    %v4024 = vunpack.c.l.b16 %v3704
    %v4025 = vunpack.c.h.b16 %v3704
    %v4026 = vunpack.c.l.b16 %v3705
    %v4027 = vunpack.c.h.b16 %v3705
    %v4028 = vunpack.c.l.b16 %v3706
    %v4029 = vunpack.c.h.b16 %v3706
    %v4030 = vunpack.c.l.b16 %v3707
    %v4031 = vunpack.c.h.b16 %v3707
    %v4032 = vunpack.c.l.b16 %v3708
    %v4033 = vunpack.c.h.b16 %v3708
    %v4034 = vunpack.c.l.b16 %v3709
    %v4035 = vunpack.c.h.b16 %v3709
    %v4036 = vunpack.c.l.b16 %v3710
    %v4037 = vunpack.c.h.b16 %v3710
    %v4038 = vunpack.c.l.b16 %v3711
    %v4039 = vunpack.c.h.b16 %v3711
    %v4040 = vunpack.c.l.b16 %v3712
    %v4041 = vunpack.c.h.b16 %v3712
    %v4042 = vunpack.c.l.b16 %v3713
    %v4043 = vunpack.c.h.b16 %v3713
    %v4044 = vunpack.c.l.b16 %v3714
    %v4045 = vunpack.c.h.b16 %v3714
    %v4046 = vunpack.c.l.b16 %v3715
    %v4047 = vunpack.c.h.b16 %v3715
    %v4048 = vunpack.c.l.b16 %v3716
    %v4049 = vunpack.c.h.b16 %v3716
    %v4050 = vunpack.c.l.b16 %v3717
    %v4051 = vunpack.c.h.b16 %v3717
    %v4052 = vunpack.c.l.b16 %v3718
    %v4053 = vunpack.c.h.b16 %v3718
    %v4054 = vunpack.c.l.b16 %v3719
    %v4055 = vunpack.c.h.b16 %v3719
    %v4056 = vunpack.c.l.b16 %v3720
    %v4057 = vunpack.c.h.b16 %v3720
    %v4058 = vunpack.c.l.b16 %v3721
    %v4059 = vunpack.c.h.b16 %v3721
    %v4060 = vunpack.c.l.b16 %v3722
    %v4061 = vunpack.c.h.b16 %v3722
    %v4062 = vunpack.c.l.b16 %v3723
    %v4063 = vunpack.c.h.b16 %v3723
    %v4064 = vunpack.c.l.b16 %v3724
    %v4065 = vunpack.c.h.b16 %v3724
    %v4066 = vunpack.c.l.b16 %v3725
    %v4067 = vunpack.c.h.b16 %v3725
    %v4068 = vunpack.c.l.b16 %v3726
    %v4069 = vunpack.c.h.b16 %v3726
    %v4070 = vunpack.c.l.b16 %v3727
    %v4071 = vunpack.c.h.b16 %v3727
    %v4072 = vunpack.c.l.b16 %v3728
    %v4073 = vunpack.c.h.b16 %v3728
    %v4074 = vunpack.c.l.b16 %v3729
    %v4075 = vunpack.c.h.b16 %v3729
    %v4076 = vunpack.c.l.b16 %v3730
    %v4077 = vunpack.c.h.b16 %v3730
    %v4078 = vunpack.c.l.b16 %v3731
    %v4079 = vunpack.c.h.b16 %v3731
    %v4080 = vunpack.c.l.b16 %v3732
    %v4081 = vunpack.c.h.b16 %v3732
    %v4082 = vunpack.c.l.b16 %v3733
    %v4083 = vunpack.c.h.b16 %v3733
    %v4084 = vunpack.c.l.b16 %v3734
    %v4085 = vunpack.c.h.b16 %v3734
    %v4086 = vunpack.c.l.b16 %v3735
    %v4087 = vunpack.c.h.b16 %v3735
    %v4088 = vunpack.c.l.b16 %v3736
    %v4089 = vunpack.c.h.b16 %v3736
    %v4090 = vunpack.c.l.b16 %v3737
    %v4091 = vunpack.c.h.b16 %v3737
    %v4092 = vunpack.c.l.b16 %v3738
    %v4093 = vunpack.c.h.b16 %v3738
    %v4094 = vunpack.c.l.b16 %v3739
    %v4095 = vunpack.c.h.b16 %v3739
    %v4096 = vunpack.c.l.b16 %v3740
    %v4097 = vunpack.c.h.b16 %v3740
    %v4098 = vunpack.c.l.b16 %v3741
    %v4099 = vunpack.c.h.b16 %v3741
    %v4100 = vunpack.c.l.b16 %v3742
    %v4101 = vunpack.c.h.b16 %v3742
    %v4102 = vunpack.c.l.b16 %v3743
    %v4103 = vunpack.c.h.b16 %v3743
    %v4104 = vunpack.c.l.b16 %v3744
    %v4105 = vunpack.c.h.b16 %v3744
    %v4106 = vunpack.c.l.b16 %v3745
    %v4107 = vunpack.c.h.b16 %v3745
    %v4108 = vunpack.c.l.b16 %v3746
    %v4109 = vunpack.c.h.b16 %v3746
    %v4110 = vunpack.c.l.b16 %v3747
    %v4111 = vunpack.c.h.b16 %v3747
    %v4112 = vunpack.c.l.b16 %v3748
    %v4113 = vunpack.c.h.b16 %v3748
    %v4114 = vunpack.c.l.b16 %v3749
    %v4115 = vunpack.c.h.b16 %v3749
    %v4116 = vunpack.c.l.b16 %v3750
    %v4117 = vunpack.c.h.b16 %v3750
    %v4118 = vunpack.c.l.b16 %v3751
    %v4119 = vunpack.c.h.b16 %v3751
    %v4120 = vunpack.c.l.b16 %v3752
    %v4121 = vunpack.c.h.b16 %v3752
    %v4122 = vunpack.c.l.b16 %v3753
    %v4123 = vunpack.c.h.b16 %v3753
    %v4124 = vunpack.c.l.b16 %v3754
    %v4125 = vunpack.c.h.b16 %v3754
    %v4126 = vunpack.c.l.b16 %v3755
    %v4127 = vunpack.c.h.b16 %v3755
    %v4128 = vunpack.c.l.b16 %v3756
    %v4129 = vunpack.c.h.b16 %v3756
    %v4130 = vunpack.c.l.b16 %v3757
    %v4131 = vunpack.c.h.b16 %v3757
    %v4132 = vunpack.c.l.b16 %v3758
    %v4133 = vunpack.c.h.b16 %v3758
    %v4134 = vunpack.c.l.b16 %v3759
    %v4135 = vunpack.c.h.b16 %v3759
    %v4136 = vunpack.c.l.b16 %v3760
    %v4137 = vunpack.c.h.b16 %v3760
    %v4138 = vunpack.c.l.b16 %v3761
    %v4139 = vunpack.c.h.b16 %v3761
    %v4140 = vunpack.c.l.b16 %v3762
    %v4141 = vunpack.c.h.b16 %v3762
    %v4142 = vunpack.c.l.b16 %v3763
    %v4143 = vunpack.c.h.b16 %v3763
    %v4144 = vunpack.c.l.b16 %v3764
    %v4145 = vunpack.c.h.b16 %v3764
    %v4146 = vunpack.c.l.b16 %v3765
    %v4147 = vunpack.c.h.b16 %v3765
    %v4148 = vunpack.c.l.b16 %v3766
    %v4149 = vunpack.c.h.b16 %v3766
    %v4150 = vunpack.c.l.b16 %v3767
    %v4151 = vunpack.c.h.b16 %v3767
    %v4152 = vpack.c.b16 %v3898, %v3896
    %v4153 = vpack.c.b16 %v3899, %v3897
    %v4154 = vpack.c.b16 %v3902, %v3900
    %v4155 = vpack.c.b16 %v3903, %v3901
    %v4156 = vpack.c.b16 %v3906, %v3904
    %v4157 = vpack.c.b16 %v3907, %v3905
    %v4158 = vpack.c.b16 %v3910, %v3908
    %v4159 = vpack.c.b16 %v3911, %v3909
    %v4160 = vpack.c.b16 %v3914, %v3912
    %v4161 = vpack.c.b16 %v3915, %v3913
    %v4162 = vpack.c.b16 %v3918, %v3916
    %v4163 = vpack.c.b16 %v3919, %v3917
    %v4164 = vpack.c.b16 %v3922, %v3920
    %v4165 = vpack.c.b16 %v3923, %v3921
    %v4166 = vpack.c.b16 %v3926, %v3924
    %v4167 = vpack.c.b16 %v3927, %v3925
    %v4168 = vpack.c.b16 %v3930, %v3928
    %v4169 = vpack.c.b16 %v3931, %v3929
    %v4170 = vpack.c.b16 %v3934, %v3932
    %v4171 = vpack.c.b16 %v3935, %v3933
    %v4172 = vpack.c.b16 %v3938, %v3936
    %v4173 = vpack.c.b16 %v3939, %v3937
    %v4174 = vpack.c.b16 %v3942, %v3940
    %v4175 = vpack.c.b16 %v3943, %v3941
    %v4176 = vpack.c.b16 %v3946, %v3944
    %v4177 = vpack.c.b16 %v3947, %v3945
    %v4178 = vpack.c.b16 %v3950, %v3948
    %v4179 = vpack.c.b16 %v3951, %v3949
    %v4180 = vpack.c.b16 %v3954, %v3952
    %v4181 = vpack.c.b16 %v3955, %v3953
    %v4182 = vpack.c.b16 %v3958, %v3956
    %v4183 = vpack.c.b16 %v3959, %v3957
    %v4184 = vpack.c.b16 %v3962, %v3960
    %v4185 = vpack.c.b16 %v3963, %v3961
    %v4186 = vpack.c.b16 %v3966, %v3964
    %v4187 = vpack.c.b16 %v3967, %v3965
    %v4188 = vpack.c.b16 %v3970, %v3968
    %v4189 = vpack.c.b16 %v3971, %v3969
    %v4190 = vpack.c.b16 %v3974, %v3972
    %v4191 = vpack.c.b16 %v3975, %v3973
    %v4192 = vpack.c.b16 %v3978, %v3976
    %v4193 = vpack.c.b16 %v3979, %v3977
    %v4194 = vpack.c.b16 %v3982, %v3980
    %v4195 = vpack.c.b16 %v3983, %v3981
    %v4196 = vpack.c.b16 %v3986, %v3984
    %v4197 = vpack.c.b16 %v3987, %v3985
    %v4198 = vpack.c.b16 %v3990, %v3988
    %v4199 = vpack.c.b16 %v3991, %v3989
    %v4200 = vpack.c.b16 %v3994, %v3992
    %v4201 = vpack.c.b16 %v3995, %v3993
    %v4202 = vpack.c.b16 %v3998, %v3996
    %v4203 = vpack.c.b16 %v3999, %v3997
    %v4204 = vpack.c.b16 %v4002, %v4000
    %v4205 = vpack.c.b16 %v4003, %v4001
    %v4206 = vpack.c.b16 %v4006, %v4004
    %v4207 = vpack.c.b16 %v4007, %v4005
    %v4208 = vpack.c.b16 %v4010, %v4008
    %v4209 = vpack.c.b16 %v4011, %v4009
    %v4210 = vpack.c.b16 %v4014, %v4012
    %v4211 = vpack.c.b16 %v4015, %v4013
    %v4212 = vpack.c.b16 %v4018, %v4016
    %v4213 = vpack.c.b16 %v4019, %v4017
    %v4214 = vpack.c.b16 %v4022, %v4020
    %v4215 = vpack.c.b16 %v4023, %v4021
    %v4216 = vpack.c.b16 %v4026, %v4024
    %v4217 = vpack.c.b16 %v4027, %v4025
    %v4218 = vpack.c.b16 %v4030, %v4028
    %v4219 = vpack.c.b16 %v4031, %v4029
    %v4220 = vpack.c.b16 %v4034, %v4032
    %v4221 = vpack.c.b16 %v4035, %v4033
    %v4222 = vpack.c.b16 %v4038, %v4036
    %v4223 = vpack.c.b16 %v4039, %v4037
    %v4224 = vpack.c.b16 %v4042, %v4040
    %v4225 = vpack.c.b16 %v4043, %v4041
    %v4226 = vpack.c.b16 %v4046, %v4044
    %v4227 = vpack.c.b16 %v4047, %v4045
    %v4228 = vpack.c.b16 %v4050, %v4048
    %v4229 = vpack.c.b16 %v4051, %v4049
    %v4230 = vpack.c.b16 %v4054, %v4052
    %v4231 = vpack.c.b16 %v4055, %v4053
    %v4232 = vpack.c.b16 %v4058, %v4056
    %v4233 = vpack.c.b16 %v4059, %v4057
    %v4234 = vpack.c.b16 %v4062, %v4060
    %v4235 = vpack.c.b16 %v4063, %v4061
    %v4236 = vpack.c.b16 %v4066, %v4064
    %v4237 = vpack.c.b16 %v4067, %v4065
    %v4238 = vpack.c.b16 %v4070, %v4068
    %v4239 = vpack.c.b16 %v4071, %v4069
    %v4240 = vpack.c.b16 %v4074, %v4072
    %v4241 = vpack.c.b16 %v4075, %v4073
    %v4242 = vpack.c.b16 %v4078, %v4076
    %v4243 = vpack.c.b16 %v4079, %v4077
    %v4244 = vpack.c.b16 %v4082, %v4080
    %v4245 = vpack.c.b16 %v4083, %v4081
    %v4246 = vpack.c.b16 %v4086, %v4084
    %v4247 = vpack.c.b16 %v4087, %v4085
    %v4248 = vpack.c.b16 %v4090, %v4088
    %v4249 = vpack.c.b16 %v4091, %v4089
    %v4250 = vpack.c.b16 %v4094, %v4092
    %v4251 = vpack.c.b16 %v4095, %v4093
    %v4252 = vpack.c.b16 %v4098, %v4096
    %v4253 = vpack.c.b16 %v4099, %v4097
    %v4254 = vpack.c.b16 %v4102, %v4100
    %v4255 = vpack.c.b16 %v4103, %v4101
    %v4256 = vpack.c.b16 %v4106, %v4104
    %v4257 = vpack.c.b16 %v4107, %v4105
    %v4258 = vpack.c.b16 %v4110, %v4108
    %v4259 = vpack.c.b16 %v4111, %v4109
    %v4260 = vpack.c.b16 %v4114, %v4112
    %v4261 = vpack.c.b16 %v4115, %v4113
    %v4262 = vpack.c.b16 %v4118, %v4116
    %v4263 = vpack.c.b16 %v4119, %v4117
    %v4264 = vpack.c.b16 %v4122, %v4120
    %v4265 = vpack.c.b16 %v4123, %v4121
    %v4266 = vpack.c.b16 %v4126, %v4124
    %v4267 = vpack.c.b16 %v4127, %v4125
    %v4268 = vpack.c.b16 %v4130, %v4128
    %v4269 = vpack.c.b16 %v4131, %v4129
    %v4270 = vpack.c.b16 %v4134, %v4132
    %v4271 = vpack.c.b16 %v4135, %v4133
    %v4272 = vpack.c.b16 %v4138, %v4136
    %v4273 = vpack.c.b16 %v4139, %v4137
    %v4274 = vpack.c.b16 %v4142, %v4140
    %v4275 = vpack.c.b16 %v4143, %v4141
    %v4276 = vpack.c.b16 %v4146, %v4144
    %v4277 = vpack.c.b16 %v4147, %v4145
    %v4278 = vpack.c.b16 %v4150, %v4148
    %v4279 = vpack.c.b16 %v4151, %v4149
    %4408 = vmatprep.subr.bf16.mxu0 %v4153
    %4409 = vmatpush1.bf16.msra.mxu0 %v4152
    %4410 = vmatprep.subr.bf16.mxu0 %v4155
    %4411 = vmatpush1.bf16.msra.mxu0 %v4154
    %4412 = vmatprep.subr.bf16.mxu0 %v4157
    %4413 = vmatpush1.bf16.msra.mxu0 %v4156
    %4414 = vmatprep.subr.bf16.mxu0 %v4159
    %4415 = vmatpush1.bf16.msra.mxu0 %v4158
    %4416 = vmatprep.subr.bf16.mxu0 %v4161
    %4417 = vmatpush1.bf16.msra.mxu0 %v4160
    %4418 = vmatprep.subr.bf16.mxu0 %v4163
    %4419 = vmatpush1.bf16.msra.mxu0 %v4162
    %4420 = vmatprep.subr.bf16.mxu0 %v4165
    %4421 = vmatpush1.bf16.msra.mxu0 %v4164
    %4422 = vmatprep.subr.bf16.mxu0 %v4167
    %4423 = vmatpush1.bf16.msra.mxu0 %v4166
    %4424 = vmatprep.subr.bf16.mxu0 %v4169
    %4425 = vmatpush1.bf16.msra.mxu0 %v4168
    %4426 = vmatprep.subr.bf16.mxu0 %v4171
    %4427 = vmatpush1.bf16.msra.mxu0 %v4170
    %4428 = vmatprep.subr.bf16.mxu0 %v4173
    %4429 = vmatpush1.bf16.msra.mxu0 %v4172
    %4430 = vmatprep.subr.bf16.mxu0 %v4175
    %4431 = vmatpush1.bf16.msra.mxu0 %v4174
    %4432 = vmatprep.subr.bf16.mxu0 %v4177
    %4433 = vmatpush1.bf16.msra.mxu0 %v4176
    %4434 = vmatprep.subr.bf16.mxu0 %v4179
    %4435 = vmatpush1.bf16.msra.mxu0 %v4178
    %4436 = vmatprep.subr.bf16.mxu0 %v4181
    %4437 = vmatpush1.bf16.msra.mxu0 %v4180
    %4438 = vmatprep.subr.bf16.mxu0 %v4183
    %4439 = vmatpush1.bf16.msra.mxu0 %v4182
    %4440 = vmatprep.mubr.bf16.mxu0 %v3633
    %4441 = vmatmul.mubr.bf16.gmra.mrb[0].mxu0 %v3632
    %v4442 = vpop.f32.mrb[0].mxu0
    %v4443 = vadd.f32 0.0, %v4442
    %v4444 = vpop.f32.mrb[0].mxu0
    %v4445 = vadd.f32 0.0, %v4444
    %v4446 = vpop.f32.mrb[0].mxu0
    %v4447 = vadd.f32 0.0, %v4446
    %v4448 = vpop.f32.mrb[0].mxu0
    %v4449 = vadd.f32 0.0, %v4448
    %4450 = vdwg.mxu0
    %4451 = vmatprep.subr.bf16.mxu0 %v4185
    %4452 = vmatpush1.bf16.msra.mxu0 %v4184
    %4453 = vmatprep.subr.bf16.mxu0 %v4187
    %4454 = vmatpush1.bf16.msra.mxu0 %v4186
    %4455 = vmatprep.subr.bf16.mxu0 %v4189
    %4456 = vmatpush1.bf16.msra.mxu0 %v4188
    %4457 = vmatprep.subr.bf16.mxu0 %v4191
    %4458 = vmatpush1.bf16.msra.mxu0 %v4190
    %4459 = vmatprep.subr.bf16.mxu0 %v4193
    %4460 = vmatpush1.bf16.msra.mxu0 %v4192
    %4461 = vmatprep.subr.bf16.mxu0 %v4195
    %4462 = vmatpush1.bf16.msra.mxu0 %v4194
    %4463 = vmatprep.subr.bf16.mxu0 %v4197
    %4464 = vmatpush1.bf16.msra.mxu0 %v4196
    %4465 = vmatprep.subr.bf16.mxu0 %v4199
    %4466 = vmatpush1.bf16.msra.mxu0 %v4198
    %4467 = vmatprep.subr.bf16.mxu0 %v4201
    %4468 = vmatpush1.bf16.msra.mxu0 %v4200
    %4469 = vmatprep.subr.bf16.mxu0 %v4203
    %4470 = vmatpush1.bf16.msra.mxu0 %v4202
    %4471 = vmatprep.subr.bf16.mxu0 %v4205
    %4472 = vmatpush1.bf16.msra.mxu0 %v4204
    %4473 = vmatprep.subr.bf16.mxu0 %v4207
    %4474 = vmatpush1.bf16.msra.mxu0 %v4206
    %4475 = vmatprep.subr.bf16.mxu0 %v4209
    %4476 = vmatpush1.bf16.msra.mxu0 %v4208
    %4477 = vmatprep.subr.bf16.mxu0 %v4211
    %4478 = vmatpush1.bf16.msra.mxu0 %v4210
    %4479 = vmatprep.subr.bf16.mxu0 %v4213
    %4480 = vmatpush1.bf16.msra.mxu0 %v4212
    %4481 = vmatprep.subr.bf16.mxu0 %v4215
    %4482 = vmatpush1.bf16.msra.mxu0 %v4214
    %4483 = vmatprep.mubr.bf16.mxu0 %v3635
    %4484 = vmatmul.mubr.bf16.gmra.mrb[0].mxu0 %v3634
    %v4485 = vpop.f32.mrb[0].mxu0
    %v4486 = vadd.f32 %v4443, %v4485
    %v4487 = vpop.f32.mrb[0].mxu0
    %v4488 = vadd.f32 %v4445, %v4487
    %v4489 = vpop.f32.mrb[0].mxu0
    %v4490 = vadd.f32 %v4447, %v4489
    %v4491 = vpop.f32.mrb[0].mxu0
    %v4492 = vadd.f32 %v4449, %v4491
    %4493 = vdwg.mxu0
    %4494 = vmatprep.subr.bf16.mxu0 %v4217
    %4495 = vmatpush1.bf16.msra.mxu0 %v4216
    %4496 = vmatprep.subr.bf16.mxu0 %v4219
    %4497 = vmatpush1.bf16.msra.mxu0 %v4218
    %4498 = vmatprep.subr.bf16.mxu0 %v4221
    %4499 = vmatpush1.bf16.msra.mxu0 %v4220
    %4500 = vmatprep.subr.bf16.mxu0 %v4223
    %4501 = vmatpush1.bf16.msra.mxu0 %v4222
    %4502 = vmatprep.subr.bf16.mxu0 %v4225
    %4503 = vmatpush1.bf16.msra.mxu0 %v4224
    %4504 = vmatprep.subr.bf16.mxu0 %v4227
    %4505 = vmatpush1.bf16.msra.mxu0 %v4226
    %4506 = vmatprep.subr.bf16.mxu0 %v4229
    %4507 = vmatpush1.bf16.msra.mxu0 %v4228
    %4508 = vmatprep.subr.bf16.mxu0 %v4231
    %4509 = vmatpush1.bf16.msra.mxu0 %v4230
    %4510 = vmatprep.subr.bf16.mxu0 %v4233
    %4511 = vmatpush1.bf16.msra.mxu0 %v4232
    %4512 = vmatprep.subr.bf16.mxu0 %v4235
    %4513 = vmatpush1.bf16.msra.mxu0 %v4234
    %4514 = vmatprep.subr.bf16.mxu0 %v4237
    %4515 = vmatpush1.bf16.msra.mxu0 %v4236
    %4516 = vmatprep.subr.bf16.mxu0 %v4239
    %4517 = vmatpush1.bf16.msra.mxu0 %v4238
    %4518 = vmatprep.subr.bf16.mxu0 %v4241
    %4519 = vmatpush1.bf16.msra.mxu0 %v4240
    %4520 = vmatprep.subr.bf16.mxu0 %v4243
    %4521 = vmatpush1.bf16.msra.mxu0 %v4242
    %4522 = vmatprep.subr.bf16.mxu0 %v4245
    %4523 = vmatpush1.bf16.msra.mxu0 %v4244
    %4524 = vmatprep.subr.bf16.mxu0 %v4247
    %4525 = vmatpush1.bf16.msra.mxu0 %v4246
    %4526 = vmatprep.mubr.bf16.mxu0 %v3637
    %4527 = vmatmul.mubr.bf16.gmra.mrb[0].mxu0 %v3636
    %v4528 = vpop.f32.mrb[0].mxu0
    %v4529 = vadd.f32 %v4486, %v4528
    %v4530 = vpop.f32.mrb[0].mxu0
    %v4531 = vadd.f32 %v4488, %v4530
    %v4532 = vpop.f32.mrb[0].mxu0
    %v4533 = vadd.f32 %v4490, %v4532
    %v4534 = vpop.f32.mrb[0].mxu0
    %v4535 = vadd.f32 %v4492, %v4534
    %4536 = vdwg.mxu0
    %4537 = vmatprep.subr.bf16.mxu0 %v4249
    %4538 = vmatpush1.bf16.msra.mxu0 %v4248
    %4539 = vmatprep.subr.bf16.mxu0 %v4251
    %4540 = vmatpush1.bf16.msra.mxu0 %v4250
    %4541 = vmatprep.subr.bf16.mxu0 %v4253
    %4542 = vmatpush1.bf16.msra.mxu0 %v4252
    %4543 = vmatprep.subr.bf16.mxu0 %v4255
    %4544 = vmatpush1.bf16.msra.mxu0 %v4254
    %4545 = vmatprep.subr.bf16.mxu0 %v4257
    %4546 = vmatpush1.bf16.msra.mxu0 %v4256
    %4547 = vmatprep.subr.bf16.mxu0 %v4259
    %4548 = vmatpush1.bf16.msra.mxu0 %v4258
    %4549 = vmatprep.subr.bf16.mxu0 %v4261
    %4550 = vmatpush1.bf16.msra.mxu0 %v4260
    %4551 = vmatprep.subr.bf16.mxu0 %v4263
    %4552 = vmatpush1.bf16.msra.mxu0 %v4262
    %4553 = vmatprep.subr.bf16.mxu0 %v4265
    %4554 = vmatpush1.bf16.msra.mxu0 %v4264
    %4555 = vmatprep.subr.bf16.mxu0 %v4267
    %4556 = vmatpush1.bf16.msra.mxu0 %v4266
    %4557 = vmatprep.subr.bf16.mxu0 %v4269
    %4558 = vmatpush1.bf16.msra.mxu0 %v4268
    %4559 = vmatprep.subr.bf16.mxu0 %v4271
    %4560 = vmatpush1.bf16.msra.mxu0 %v4270
    %4561 = vmatprep.subr.bf16.mxu0 %v4273
    %4562 = vmatpush1.bf16.msra.mxu0 %v4272
    %4563 = vmatprep.subr.bf16.mxu0 %v4275
    %4564 = vmatpush1.bf16.msra.mxu0 %v4274
    %4565 = vmatprep.subr.bf16.mxu0 %v4277
    %4566 = vmatpush1.bf16.msra.mxu0 %v4276
    %4567 = vmatprep.subr.bf16.mxu0 %v4279
    %4568 = vmatpush1.bf16.msra.mxu0 %v4278
    %4569 = vmatprep.mubr.bf16.mxu0 %v3639
    %4570 = vmatmul.mubr.bf16.gmra.mrb[0].mxu0 %v3638
    %v4571 = vpop.f32.mrb[0].mxu0
    %v4572 = vadd.f32 %v4529, %v4571
    %v4573 = vpop.f32.mrb[0].mxu0
    %v4574 = vadd.f32 %v4531, %v4573
    %v4575 = vpop.f32.mrb[0].mxu0
    %v4576 = vadd.f32 %v4533, %v4575
    %v4577 = vpop.f32.mrb[0].mxu0
    %v4578 = vadd.f32 %v4535, %v4577
    %4579 = vdwg.mxu0
    %v4580 = vadd.f32 %v2452, %v4572
    %v4581 = vadd.f32 %v2453, %v4574
    %v4582 = vadd.f32 %v2454, %v4576
    %v4583 = vadd.f32 %v2455, %v4578
    %v4584 = vld [vmem:[%s17] sm:$0x3]
    %v4586 = vlaneseq
    %v4587 = vshrl.u32 %v4586, 7
    %v4588 = vsub.s32 0, %v4587
    %v4589 = vrot.slane %v4584, %v4588
    %v4590 = vlaneseq
    %v4591 = vshrl.u32 %v4590, 7
    %v4592 = vsub.s32 1, %v4591
    %v4593 = vrot.slane %v4584, %v4592
    %v4596 = vadd.f32 %v4580, %v4589
    %v4597 = vadd.f32 %v4581, %v4593
    %v4598 = vadd.f32 %v4582, %v4589
    %v4599 = vadd.f32 %v4583, %v4593
    %s4600 = scalar_lea.vmem %s6, 2
    %v4601 = vld [vmem:[%s4600] sm:$0x3]
    %s4602 = scalar_lea.vmem %s7, 2
    %v4603 = vld [vmem:[%s4602] sm:$0x3]
    %v4604 = vadd.f32 %v4596, %v4597
    %4605 = vadd.xlane.f32.xlu0 %v4604
    %v4606 = vpop.xlane.xlu0 %4605
    %v4607 = vadd.f32 %v4598, %v4599
    %4608 = vadd.xlane.f32.xlu0 %v4607
    %v4609 = vpop.xlane.xlu0 %4608
    %v4610 = vmul.f32 %v4606, %v829
    %v4611 = vmul.f32 %v4609, %v829
    %v4612 = vsub.f32 %v4596, %v4610
    %v4613 = vsub.f32 %v4597, %v4610
    %v4614 = vsub.f32 %v4598, %v4611
    %v4615 = vsub.f32 %v4599, %v4611
    %v4616 = vmul.f32 %v4612, %v4612
    %v4617 = vmul.f32 %v4613, %v4613
    %v4618 = vmul.f32 %v4614, %v4614
    %v4619 = vmul.f32 %v4615, %v4615
    %v4620 = vadd.f32 %v4616, %v4617
    %4621 = vadd.xlane.f32.xlu0 %v4620
    %v4622 = vpop.xlane.xlu0 %4621
    %v4623 = vadd.f32 %v4618, %v4619
    %4624 = vadd.xlane.f32.xlu0 %v4623
    %v4625 = vpop.xlane.xlu0 %4624
    %v4626 = vmul.f32 %v4622, %v829
    %v4627 = vmul.f32 %v4625, %v829
    %v4628 = vadd.f32 %v4626, 1e-05
    %v4629 = vadd.f32 %v4627, 1e-05
    %v4630 = vrsqrt.pop %v4628
    %v4631 = vrsqrt.pop %v4629
    %v4632 = vmul.f32 %v4612, %v4630
    %v4633 = vmul.f32 %v4613, %v4630
    %v4634 = vmul.f32 %v4614, %v4631
    %v4635 = vmul.f32 %v4615, %v4631
    %v4637 = vlaneseq
    %v4638 = vshrl.u32 %v4637, 7
    %v4639 = vsub.s32 0, %v4638
    %v4640 = vrot.slane %v4601, %v4639
    %v4641 = vlaneseq
    %v4642 = vshrl.u32 %v4641, 7
    %v4643 = vsub.s32 1, %v4642
    %v4644 = vrot.slane %v4601, %v4643
    %v4647 = vmul.f32 %v4632, %v4640
    %v4648 = vmul.f32 %v4633, %v4644
    %v4649 = vmul.f32 %v4634, %v4640
    %v4650 = vmul.f32 %v4635, %v4644
    %v4652 = vlaneseq
    %v4653 = vshrl.u32 %v4652, 7
    %v4654 = vsub.s32 0, %v4653
    %v4655 = vrot.slane %v4603, %v4654
    %v4656 = vlaneseq
    %v4657 = vshrl.u32 %v4656, 7
    %v4658 = vsub.s32 1, %v4657
    %v4659 = vrot.slane %v4603, %v4658
    %v4662 = vadd.f32 %v4647, %v4655
    %v4663 = vadd.f32 %v4648, %v4659
    %v4664 = vadd.f32 %v4649, %v4655
    %v4665 = vadd.f32 %v4650, %v4659
    %v4666 = vpack.c.bf16 %v4664, %v4662
    %v4667 = vpack.c.bf16 %v4665, %v4663
    %s4668 = scalar_lea.vmem %s8, 768
    %v4669 = vld [vmem:[%s4668] sm:$0xff]
    %v4670 = vld [vmem:[%s4668 + $0x8] sm:$0xff]
    %v4671 = vld [vmem:[%s4668 + $0x10] sm:$0xff]
    %v4672 = vld [vmem:[%s4668 + $0x18] sm:$0xff]
    %v4673 = vld [vmem:[%s4668 + $0x20] sm:$0xff]
    %v4674 = vld [vmem:[%s4668 + $0x28] sm:$0xff]
    %v4675 = vld [vmem:[%s4668 + $0x30] sm:$0xff]
    %v4676 = vld [vmem:[%s4668 + $0x38] sm:$0xff]
    %v4677 = vld [vmem:[%s4668 + $0x40] sm:$0xff]
    %v4678 = vld [vmem:[%s4668 + $0x48] sm:$0xff]
    %v4679 = vld [vmem:[%s4668 + $0x50] sm:$0xff]
    %v4680 = vld [vmem:[%s4668 + $0x58] sm:$0xff]
    %v4681 = vld [vmem:[%s4668 + $0x60] sm:$0xff]
    %v4682 = vld [vmem:[%s4668 + $0x68] sm:$0xff]
    %v4683 = vld [vmem:[%s4668 + $0x70] sm:$0xff]
    %v4684 = vld [vmem:[%s4668 + $0x78] sm:$0xff]
    %v4685 = vld [vmem:[%s4668 + $0x80] sm:$0xff]
    %v4686 = vld [vmem:[%s4668 + $0x88] sm:$0xff]
    %v4687 = vld [vmem:[%s4668 + $0x90] sm:$0xff]
    %v4688 = vld [vmem:[%s4668 + $0x98] sm:$0xff]
    %v4689 = vld [vmem:[%s4668 + $0xa0] sm:$0xff]
    %v4690 = vld [vmem:[%s4668 + $0xa8] sm:$0xff]
    %v4691 = vld [vmem:[%s4668 + $0xb0] sm:$0xff]
    %v4692 = vld [vmem:[%s4668 + $0xb8] sm:$0xff]
    %v4693 = vld [vmem:[%s4668 + $0xc0] sm:$0xff]
    %v4694 = vld [vmem:[%s4668 + $0xc8] sm:$0xff]
    %v4695 = vld [vmem:[%s4668 + $0xd0] sm:$0xff]
    %v4696 = vld [vmem:[%s4668 + $0xd8] sm:$0xff]
    %v4697 = vld [vmem:[%s4668 + $0xe0] sm:$0xff]
    %v4698 = vld [vmem:[%s4668 + $0xe8] sm:$0xff]
    %v4699 = vld [vmem:[%s4668 + $0xf0] sm:$0xff]
    %v4700 = vld [vmem:[%s4668 + $0xf8] sm:$0xff]
    %v4701 = vld [vmem:[%s4668 + $0x100] sm:$0xff]
    %v4702 = vld [vmem:[%s4668 + $0x108] sm:$0xff]
    %v4703 = vld [vmem:[%s4668 + $0x110] sm:$0xff]
    %v4704 = vld [vmem:[%s4668 + $0x118] sm:$0xff]
    %v4705 = vld [vmem:[%s4668 + $0x120] sm:$0xff]
    %v4706 = vld [vmem:[%s4668 + $0x128] sm:$0xff]
    %v4707 = vld [vmem:[%s4668 + $0x130] sm:$0xff]
    %v4708 = vld [vmem:[%s4668 + $0x138] sm:$0xff]
    %v4709 = vld [vmem:[%s4668 + $0x140] sm:$0xff]
    %v4710 = vld [vmem:[%s4668 + $0x148] sm:$0xff]
    %v4711 = vld [vmem:[%s4668 + $0x150] sm:$0xff]
    %v4712 = vld [vmem:[%s4668 + $0x158] sm:$0xff]
    %v4713 = vld [vmem:[%s4668 + $0x160] sm:$0xff]
    %v4714 = vld [vmem:[%s4668 + $0x168] sm:$0xff]
    %v4715 = vld [vmem:[%s4668 + $0x170] sm:$0xff]
    %v4716 = vld [vmem:[%s4668 + $0x178] sm:$0xff]
    %v4717 = vld [vmem:[%s4668 + $0x180] sm:$0xff]
    %v4718 = vld [vmem:[%s4668 + $0x188] sm:$0xff]
    %v4719 = vld [vmem:[%s4668 + $0x190] sm:$0xff]
    %v4720 = vld [vmem:[%s4668 + $0x198] sm:$0xff]
    %v4721 = vld [vmem:[%s4668 + $0x1a0] sm:$0xff]
    %v4722 = vld [vmem:[%s4668 + $0x1a8] sm:$0xff]
    %v4723 = vld [vmem:[%s4668 + $0x1b0] sm:$0xff]
    %v4724 = vld [vmem:[%s4668 + $0x1b8] sm:$0xff]
    %v4725 = vld [vmem:[%s4668 + $0x1c0] sm:$0xff]
    %v4726 = vld [vmem:[%s4668 + $0x1c8] sm:$0xff]
    %v4727 = vld [vmem:[%s4668 + $0x1d0] sm:$0xff]
    %v4728 = vld [vmem:[%s4668 + $0x1d8] sm:$0xff]
    %v4729 = vld [vmem:[%s4668 + $0x1e0] sm:$0xff]
    %v4730 = vld [vmem:[%s4668 + $0x1e8] sm:$0xff]
    %v4731 = vld [vmem:[%s4668 + $0x1f0] sm:$0xff]
    %v4732 = vld [vmem:[%s4668 + $0x1f8] sm:$0xff]
    %v4733 = vld [vmem:[%s4668 + $0x200] sm:$0xff]
    %v4734 = vld [vmem:[%s4668 + $0x208] sm:$0xff]
    %v4735 = vld [vmem:[%s4668 + $0x210] sm:$0xff]
    %v4736 = vld [vmem:[%s4668 + $0x218] sm:$0xff]
    %v4737 = vld [vmem:[%s4668 + $0x220] sm:$0xff]
    %v4738 = vld [vmem:[%s4668 + $0x228] sm:$0xff]
    %v4739 = vld [vmem:[%s4668 + $0x230] sm:$0xff]
    %v4740 = vld [vmem:[%s4668 + $0x238] sm:$0xff]
    %v4741 = vld [vmem:[%s4668 + $0x240] sm:$0xff]
    %v4742 = vld [vmem:[%s4668 + $0x248] sm:$0xff]
    %v4743 = vld [vmem:[%s4668 + $0x250] sm:$0xff]
    %v4744 = vld [vmem:[%s4668 + $0x258] sm:$0xff]
    %v4745 = vld [vmem:[%s4668 + $0x260] sm:$0xff]
    %v4746 = vld [vmem:[%s4668 + $0x268] sm:$0xff]
    %v4747 = vld [vmem:[%s4668 + $0x270] sm:$0xff]
    %v4748 = vld [vmem:[%s4668 + $0x278] sm:$0xff]
    %v4749 = vld [vmem:[%s4668 + $0x280] sm:$0xff]
    %v4750 = vld [vmem:[%s4668 + $0x288] sm:$0xff]
    %v4751 = vld [vmem:[%s4668 + $0x290] sm:$0xff]
    %v4752 = vld [vmem:[%s4668 + $0x298] sm:$0xff]
    %v4753 = vld [vmem:[%s4668 + $0x2a0] sm:$0xff]
    %v4754 = vld [vmem:[%s4668 + $0x2a8] sm:$0xff]
    %v4755 = vld [vmem:[%s4668 + $0x2b0] sm:$0xff]
    %v4756 = vld [vmem:[%s4668 + $0x2b8] sm:$0xff]
    %v4757 = vld [vmem:[%s4668 + $0x2c0] sm:$0xff]
    %v4758 = vld [vmem:[%s4668 + $0x2c8] sm:$0xff]
    %v4759 = vld [vmem:[%s4668 + $0x2d0] sm:$0xff]
    %v4760 = vld [vmem:[%s4668 + $0x2d8] sm:$0xff]
    %v4761 = vld [vmem:[%s4668 + $0x2e0] sm:$0xff]
    %v4762 = vld [vmem:[%s4668 + $0x2e8] sm:$0xff]
    %v4763 = vld [vmem:[%s4668 + $0x2f0] sm:$0xff]
    %v4764 = vld [vmem:[%s4668 + $0x2f8] sm:$0xff]
    %s4765 = scalar_lea.vmem %s9, 6
    %v4766 = vld [vmem:[%s4765] sm:$0x3f]
    %v4768 = vlaneseq
    %v4769 = vshrl.u32 %v4768, 7
    %v4770 = vsub.s32 0, %v4769
    %v4771 = vrot.slane %v4766, %v4770
    %v4772 = vlaneseq
    %v4773 = vshrl.u32 %v4772, 7
    %v4774 = vsub.s32 1, %v4773
    %v4775 = vrot.slane %v4766, %v4774
    %v4776 = vlaneseq
    %v4777 = vshrl.u32 %v4776, 7
    %v4778 = vsub.s32 2, %v4777
    %v4779 = vrot.slane %v4766, %v4778
    %v4780 = vlaneseq
    %v4781 = vshrl.u32 %v4780, 7
    %v4782 = vsub.s32 3, %v4781
    %v4783 = vrot.slane %v4766, %v4782
    %v4784 = vlaneseq
    %v4785 = vshrl.u32 %v4784, 7
    %v4786 = vsub.s32 4, %v4785
    %v4787 = vrot.slane %v4766, %v4786
    %v4788 = vlaneseq
    %v4789 = vshrl.u32 %v4788, 7
    %v4790 = vsub.s32 5, %v4789
    %v4791 = vrot.slane %v4766, %v4790
    %v4894 = vunpack.c.l.b16 %v4669
    %v4895 = vunpack.c.h.b16 %v4669
    %v4896 = vunpack.c.l.b16 %v4670
    %v4897 = vunpack.c.h.b16 %v4670
    %v4898 = vunpack.c.l.b16 %v4671
    %v4899 = vunpack.c.h.b16 %v4671
    %v4900 = vunpack.c.l.b16 %v4672
    %v4901 = vunpack.c.h.b16 %v4672
    %v4902 = vunpack.c.l.b16 %v4673
    %v4903 = vunpack.c.h.b16 %v4673
    %v4904 = vunpack.c.l.b16 %v4674
    %v4905 = vunpack.c.h.b16 %v4674
    %v4906 = vunpack.c.l.b16 %v4675
    %v4907 = vunpack.c.h.b16 %v4675
    %v4908 = vunpack.c.l.b16 %v4676
    %v4909 = vunpack.c.h.b16 %v4676
    %v4910 = vunpack.c.l.b16 %v4677
    %v4911 = vunpack.c.h.b16 %v4677
    %v4912 = vunpack.c.l.b16 %v4678
    %v4913 = vunpack.c.h.b16 %v4678
    %v4914 = vunpack.c.l.b16 %v4679
    %v4915 = vunpack.c.h.b16 %v4679
    %v4916 = vunpack.c.l.b16 %v4680
    %v4917 = vunpack.c.h.b16 %v4680
    %v4918 = vunpack.c.l.b16 %v4681
    %v4919 = vunpack.c.h.b16 %v4681
    %v4920 = vunpack.c.l.b16 %v4682
    %v4921 = vunpack.c.h.b16 %v4682
    %v4922 = vunpack.c.l.b16 %v4683
    %v4923 = vunpack.c.h.b16 %v4683
    %v4924 = vunpack.c.l.b16 %v4684
    %v4925 = vunpack.c.h.b16 %v4684
    %v4926 = vunpack.c.l.b16 %v4685
    %v4927 = vunpack.c.h.b16 %v4685
    %v4928 = vunpack.c.l.b16 %v4686
    %v4929 = vunpack.c.h.b16 %v4686
    %v4930 = vunpack.c.l.b16 %v4687
    %v4931 = vunpack.c.h.b16 %v4687
    %v4932 = vunpack.c.l.b16 %v4688
    %v4933 = vunpack.c.h.b16 %v4688
    %v4934 = vunpack.c.l.b16 %v4689
    %v4935 = vunpack.c.h.b16 %v4689
    %v4936 = vunpack.c.l.b16 %v4690
    %v4937 = vunpack.c.h.b16 %v4690
    %v4938 = vunpack.c.l.b16 %v4691
    %v4939 = vunpack.c.h.b16 %v4691
    %v4940 = vunpack.c.l.b16 %v4692
    %v4941 = vunpack.c.h.b16 %v4692
    %v4942 = vunpack.c.l.b16 %v4693
    %v4943 = vunpack.c.h.b16 %v4693
    %v4944 = vunpack.c.l.b16 %v4694
    %v4945 = vunpack.c.h.b16 %v4694
    %v4946 = vunpack.c.l.b16 %v4695
    %v4947 = vunpack.c.h.b16 %v4695
    %v4948 = vunpack.c.l.b16 %v4696
    %v4949 = vunpack.c.h.b16 %v4696
    %v4950 = vunpack.c.l.b16 %v4697
    %v4951 = vunpack.c.h.b16 %v4697
    %v4952 = vunpack.c.l.b16 %v4698
    %v4953 = vunpack.c.h.b16 %v4698
    %v4954 = vunpack.c.l.b16 %v4699
    %v4955 = vunpack.c.h.b16 %v4699
    %v4956 = vunpack.c.l.b16 %v4700
    %v4957 = vunpack.c.h.b16 %v4700
    %v4958 = vunpack.c.l.b16 %v4701
    %v4959 = vunpack.c.h.b16 %v4701
    %v4960 = vunpack.c.l.b16 %v4702
    %v4961 = vunpack.c.h.b16 %v4702
    %v4962 = vunpack.c.l.b16 %v4703
    %v4963 = vunpack.c.h.b16 %v4703
    %v4964 = vunpack.c.l.b16 %v4704
    %v4965 = vunpack.c.h.b16 %v4704
    %v4966 = vunpack.c.l.b16 %v4705
    %v4967 = vunpack.c.h.b16 %v4705
    %v4968 = vunpack.c.l.b16 %v4706
    %v4969 = vunpack.c.h.b16 %v4706
    %v4970 = vunpack.c.l.b16 %v4707
    %v4971 = vunpack.c.h.b16 %v4707
    %v4972 = vunpack.c.l.b16 %v4708
    %v4973 = vunpack.c.h.b16 %v4708
    %v4974 = vunpack.c.l.b16 %v4709
    %v4975 = vunpack.c.h.b16 %v4709
    %v4976 = vunpack.c.l.b16 %v4710
    %v4977 = vunpack.c.h.b16 %v4710
    %v4978 = vunpack.c.l.b16 %v4711
    %v4979 = vunpack.c.h.b16 %v4711
    %v4980 = vunpack.c.l.b16 %v4712
    %v4981 = vunpack.c.h.b16 %v4712
    %v4982 = vunpack.c.l.b16 %v4713
    %v4983 = vunpack.c.h.b16 %v4713
    %v4984 = vunpack.c.l.b16 %v4714
    %v4985 = vunpack.c.h.b16 %v4714
    %v4986 = vunpack.c.l.b16 %v4715
    %v4987 = vunpack.c.h.b16 %v4715
    %v4988 = vunpack.c.l.b16 %v4716
    %v4989 = vunpack.c.h.b16 %v4716
    %v4990 = vunpack.c.l.b16 %v4717
    %v4991 = vunpack.c.h.b16 %v4717
    %v4992 = vunpack.c.l.b16 %v4718
    %v4993 = vunpack.c.h.b16 %v4718
    %v4994 = vunpack.c.l.b16 %v4719
    %v4995 = vunpack.c.h.b16 %v4719
    %v4996 = vunpack.c.l.b16 %v4720
    %v4997 = vunpack.c.h.b16 %v4720
    %v4998 = vunpack.c.l.b16 %v4721
    %v4999 = vunpack.c.h.b16 %v4721
    %v5000 = vunpack.c.l.b16 %v4722
    %v5001 = vunpack.c.h.b16 %v4722
    %v5002 = vunpack.c.l.b16 %v4723
    %v5003 = vunpack.c.h.b16 %v4723
    %v5004 = vunpack.c.l.b16 %v4724
    %v5005 = vunpack.c.h.b16 %v4724
    %v5006 = vunpack.c.l.b16 %v4725
    %v5007 = vunpack.c.h.b16 %v4725
    %v5008 = vunpack.c.l.b16 %v4726
    %v5009 = vunpack.c.h.b16 %v4726
    %v5010 = vunpack.c.l.b16 %v4727
    %v5011 = vunpack.c.h.b16 %v4727
    %v5012 = vunpack.c.l.b16 %v4728
    %v5013 = vunpack.c.h.b16 %v4728
    %v5014 = vunpack.c.l.b16 %v4729
    %v5015 = vunpack.c.h.b16 %v4729
    %v5016 = vunpack.c.l.b16 %v4730
    %v5017 = vunpack.c.h.b16 %v4730
    %v5018 = vunpack.c.l.b16 %v4731
    %v5019 = vunpack.c.h.b16 %v4731
    %v5020 = vunpack.c.l.b16 %v4732
    %v5021 = vunpack.c.h.b16 %v4732
    %v5022 = vunpack.c.l.b16 %v4733
    %v5023 = vunpack.c.h.b16 %v4733
    %v5024 = vunpack.c.l.b16 %v4734
    %v5025 = vunpack.c.h.b16 %v4734
    %v5026 = vunpack.c.l.b16 %v4735
    %v5027 = vunpack.c.h.b16 %v4735
    %v5028 = vunpack.c.l.b16 %v4736
    %v5029 = vunpack.c.h.b16 %v4736
    %v5030 = vunpack.c.l.b16 %v4737
    %v5031 = vunpack.c.h.b16 %v4737
    %v5032 = vunpack.c.l.b16 %v4738
    %v5033 = vunpack.c.h.b16 %v4738
    %v5034 = vunpack.c.l.b16 %v4739
    %v5035 = vunpack.c.h.b16 %v4739
    %v5036 = vunpack.c.l.b16 %v4740
    %v5037 = vunpack.c.h.b16 %v4740
    %v5038 = vunpack.c.l.b16 %v4741
    %v5039 = vunpack.c.h.b16 %v4741
    %v5040 = vunpack.c.l.b16 %v4742
    %v5041 = vunpack.c.h.b16 %v4742
    %v5042 = vunpack.c.l.b16 %v4743
    %v5043 = vunpack.c.h.b16 %v4743
    %v5044 = vunpack.c.l.b16 %v4744
    %v5045 = vunpack.c.h.b16 %v4744
    %v5046 = vunpack.c.l.b16 %v4745
    %v5047 = vunpack.c.h.b16 %v4745
    %v5048 = vunpack.c.l.b16 %v4746
    %v5049 = vunpack.c.h.b16 %v4746
    %v5050 = vunpack.c.l.b16 %v4747
    %v5051 = vunpack.c.h.b16 %v4747
    %v5052 = vunpack.c.l.b16 %v4748
    %v5053 = vunpack.c.h.b16 %v4748
    %v5054 = vunpack.c.l.b16 %v4749
    %v5055 = vunpack.c.h.b16 %v4749
    %v5056 = vunpack.c.l.b16 %v4750
    %v5057 = vunpack.c.h.b16 %v4750
    %v5058 = vunpack.c.l.b16 %v4751
    %v5059 = vunpack.c.h.b16 %v4751
    %v5060 = vunpack.c.l.b16 %v4752
    %v5061 = vunpack.c.h.b16 %v4752
    %v5062 = vunpack.c.l.b16 %v4753
    %v5063 = vunpack.c.h.b16 %v4753
    %v5064 = vunpack.c.l.b16 %v4754
    %v5065 = vunpack.c.h.b16 %v4754
    %v5066 = vunpack.c.l.b16 %v4755
    %v5067 = vunpack.c.h.b16 %v4755
    %v5068 = vunpack.c.l.b16 %v4756
    %v5069 = vunpack.c.h.b16 %v4756
    %v5070 = vunpack.c.l.b16 %v4757
    %v5071 = vunpack.c.h.b16 %v4757
    %v5072 = vunpack.c.l.b16 %v4758
    %v5073 = vunpack.c.h.b16 %v4758
    %v5074 = vunpack.c.l.b16 %v4759
    %v5075 = vunpack.c.h.b16 %v4759
    %v5076 = vunpack.c.l.b16 %v4760
    %v5077 = vunpack.c.h.b16 %v4760
    %v5078 = vunpack.c.l.b16 %v4761
    %v5079 = vunpack.c.h.b16 %v4761
    %v5080 = vunpack.c.l.b16 %v4762
    %v5081 = vunpack.c.h.b16 %v4762
    %v5082 = vunpack.c.l.b16 %v4763
    %v5083 = vunpack.c.h.b16 %v4763
    %v5084 = vunpack.c.l.b16 %v4764
    %v5085 = vunpack.c.h.b16 %v4764
    %v5086 = vpack.c.b16 %v4900, %v4894
    %v5087 = vpack.c.b16 %v4901, %v4895
    %v5088 = vpack.c.b16 %v4902, %v4896
    %v5089 = vpack.c.b16 %v4903, %v4897
    %v5090 = vpack.c.b16 %v4904, %v4898
    %v5091 = vpack.c.b16 %v4905, %v4899
    %v5092 = vpack.c.b16 %v4912, %v4906
    %v5093 = vpack.c.b16 %v4913, %v4907
    %v5094 = vpack.c.b16 %v4914, %v4908
    %v5095 = vpack.c.b16 %v4915, %v4909
    %v5096 = vpack.c.b16 %v4916, %v4910
    %v5097 = vpack.c.b16 %v4917, %v4911
    %v5098 = vpack.c.b16 %v4924, %v4918
    %v5099 = vpack.c.b16 %v4925, %v4919
    %v5100 = vpack.c.b16 %v4926, %v4920
    %v5101 = vpack.c.b16 %v4927, %v4921
    %v5102 = vpack.c.b16 %v4928, %v4922
    %v5103 = vpack.c.b16 %v4929, %v4923
    %v5104 = vpack.c.b16 %v4936, %v4930
    %v5105 = vpack.c.b16 %v4937, %v4931
    %v5106 = vpack.c.b16 %v4938, %v4932
    %v5107 = vpack.c.b16 %v4939, %v4933
    %v5108 = vpack.c.b16 %v4940, %v4934
    %v5109 = vpack.c.b16 %v4941, %v4935
    %v5110 = vpack.c.b16 %v4948, %v4942
    %v5111 = vpack.c.b16 %v4949, %v4943
    %v5112 = vpack.c.b16 %v4950, %v4944
    %v5113 = vpack.c.b16 %v4951, %v4945
    %v5114 = vpack.c.b16 %v4952, %v4946
    %v5115 = vpack.c.b16 %v4953, %v4947
    %v5116 = vpack.c.b16 %v4960, %v4954
    %v5117 = vpack.c.b16 %v4961, %v4955
    %v5118 = vpack.c.b16 %v4962, %v4956
    %v5119 = vpack.c.b16 %v4963, %v4957
    %v5120 = vpack.c.b16 %v4964, %v4958
    %v5121 = vpack.c.b16 %v4965, %v4959
    %v5122 = vpack.c.b16 %v4972, %v4966
    %v5123 = vpack.c.b16 %v4973, %v4967
    %v5124 = vpack.c.b16 %v4974, %v4968
    %v5125 = vpack.c.b16 %v4975, %v4969
    %v5126 = vpack.c.b16 %v4976, %v4970
    %v5127 = vpack.c.b16 %v4977, %v4971
    %v5128 = vpack.c.b16 %v4984, %v4978
    %v5129 = vpack.c.b16 %v4985, %v4979
    %v5130 = vpack.c.b16 %v4986, %v4980
    %v5131 = vpack.c.b16 %v4987, %v4981
    %v5132 = vpack.c.b16 %v4988, %v4982
    %v5133 = vpack.c.b16 %v4989, %v4983
    %v5134 = vpack.c.b16 %v4996, %v4990
    %v5135 = vpack.c.b16 %v4997, %v4991
    %v5136 = vpack.c.b16 %v4998, %v4992
    %v5137 = vpack.c.b16 %v4999, %v4993
    %v5138 = vpack.c.b16 %v5000, %v4994
    %v5139 = vpack.c.b16 %v5001, %v4995
    %v5140 = vpack.c.b16 %v5008, %v5002
    %v5141 = vpack.c.b16 %v5009, %v5003
    %v5142 = vpack.c.b16 %v5010, %v5004
    %v5143 = vpack.c.b16 %v5011, %v5005
    %v5144 = vpack.c.b16 %v5012, %v5006
    %v5145 = vpack.c.b16 %v5013, %v5007
    %v5146 = vpack.c.b16 %v5020, %v5014
    %v5147 = vpack.c.b16 %v5021, %v5015
    %v5148 = vpack.c.b16 %v5022, %v5016
    %v5149 = vpack.c.b16 %v5023, %v5017
    %v5150 = vpack.c.b16 %v5024, %v5018
    %v5151 = vpack.c.b16 %v5025, %v5019
    %v5152 = vpack.c.b16 %v5032, %v5026
    %v5153 = vpack.c.b16 %v5033, %v5027
    %v5154 = vpack.c.b16 %v5034, %v5028
    %v5155 = vpack.c.b16 %v5035, %v5029
    %v5156 = vpack.c.b16 %v5036, %v5030
    %v5157 = vpack.c.b16 %v5037, %v5031
    %v5158 = vpack.c.b16 %v5044, %v5038
    %v5159 = vpack.c.b16 %v5045, %v5039
    %v5160 = vpack.c.b16 %v5046, %v5040
    %v5161 = vpack.c.b16 %v5047, %v5041
    %v5162 = vpack.c.b16 %v5048, %v5042
    %v5163 = vpack.c.b16 %v5049, %v5043
    %v5164 = vpack.c.b16 %v5056, %v5050
    %v5165 = vpack.c.b16 %v5057, %v5051
    %v5166 = vpack.c.b16 %v5058, %v5052
    %v5167 = vpack.c.b16 %v5059, %v5053
    %v5168 = vpack.c.b16 %v5060, %v5054
    %v5169 = vpack.c.b16 %v5061, %v5055
    %v5170 = vpack.c.b16 %v5068, %v5062
    %v5171 = vpack.c.b16 %v5069, %v5063
    %v5172 = vpack.c.b16 %v5070, %v5064
    %v5173 = vpack.c.b16 %v5071, %v5065
    %v5174 = vpack.c.b16 %v5072, %v5066
    %v5175 = vpack.c.b16 %v5073, %v5067
    %v5176 = vpack.c.b16 %v5080, %v5074
    %v5177 = vpack.c.b16 %v5081, %v5075
    %v5178 = vpack.c.b16 %v5082, %v5076
    %v5179 = vpack.c.b16 %v5083, %v5077
    %v5180 = vpack.c.b16 %v5084, %v5078
    %v5181 = vpack.c.b16 %v5085, %v5079
    %5278 = vmatprep.subr.bf16.mxu0 %v5087
    %5279 = vmatpush1.bf16.msra.mxu0 %v5086
    %5280 = vmatprep.subr.bf16.mxu0 %v5093
    %5281 = vmatpush1.bf16.msra.mxu0 %v5092
    %5282 = vmatprep.subr.bf16.mxu0 %v5099
    %5283 = vmatpush1.bf16.msra.mxu0 %v5098
    %5284 = vmatprep.subr.bf16.mxu0 %v5105
    %5285 = vmatpush1.bf16.msra.mxu0 %v5104
    %5286 = vmatprep.subr.bf16.mxu0 %v5111
    %5287 = vmatpush1.bf16.msra.mxu0 %v5110
    %5288 = vmatprep.subr.bf16.mxu0 %v5117
    %5289 = vmatpush1.bf16.msra.mxu0 %v5116
    %5290 = vmatprep.subr.bf16.mxu0 %v5123
    %5291 = vmatpush1.bf16.msra.mxu0 %v5122
    %5292 = vmatprep.subr.bf16.mxu0 %v5129
    %5293 = vmatpush1.bf16.msra.mxu0 %v5128
    %5294 = vmatprep.subr.bf16.mxu0 %v5135
    %5295 = vmatpush1.bf16.msra.mxu0 %v5134
    %5296 = vmatprep.subr.bf16.mxu0 %v5141
    %5297 = vmatpush1.bf16.msra.mxu0 %v5140
    %5298 = vmatprep.subr.bf16.mxu0 %v5147
    %5299 = vmatpush1.bf16.msra.mxu0 %v5146
    %5300 = vmatprep.subr.bf16.mxu0 %v5153
    %5301 = vmatpush1.bf16.msra.mxu0 %v5152
    %5302 = vmatprep.subr.bf16.mxu0 %v5159
    %5303 = vmatpush1.bf16.msra.mxu0 %v5158
    %5304 = vmatprep.subr.bf16.mxu0 %v5165
    %5305 = vmatpush1.bf16.msra.mxu0 %v5164
    %5306 = vmatprep.subr.bf16.mxu0 %v5171
    %5307 = vmatpush1.bf16.msra.mxu0 %v5170
    %5308 = vmatprep.subr.bf16.mxu0 %v5177
    %5309 = vmatpush1.bf16.msra.mxu0 %v5176
    %5310 = vmatprep.mubr.bf16.mxu0 %v4667
    %5311 = vmatmul.mubr.bf16.gmra.mrb[0].mxu0 %v4666
    %v5312 = vpop.f32.mrb[0].mxu0
    %v5313 = vadd.f32 %v4771, %v5312
    %v5314 = vpop.f32.mrb[0].mxu0
    %v5315 = vadd.f32 %v4775, %v5314
    %v5316 = vpop.f32.mrb[0].mxu0
    %v5317 = vadd.f32 %v4771, %v5316
    %v5318 = vpop.f32.mrb[0].mxu0
    %v5319 = vadd.f32 %v4775, %v5318
    %5320 = vdwg.mxu0
    %5321 = vmatprep.subr.bf16.mxu0 %v5089
    %5322 = vmatpush1.bf16.msra.mxu0 %v5088
    %5323 = vmatprep.subr.bf16.mxu0 %v5095
    %5324 = vmatpush1.bf16.msra.mxu0 %v5094
    %5325 = vmatprep.subr.bf16.mxu0 %v5101
    %5326 = vmatpush1.bf16.msra.mxu0 %v5100
    %5327 = vmatprep.subr.bf16.mxu0 %v5107
    %5328 = vmatpush1.bf16.msra.mxu0 %v5106
    %5329 = vmatprep.subr.bf16.mxu0 %v5113
    %5330 = vmatpush1.bf16.msra.mxu0 %v5112
    %5331 = vmatprep.subr.bf16.mxu0 %v5119
    %5332 = vmatpush1.bf16.msra.mxu0 %v5118
    %5333 = vmatprep.subr.bf16.mxu0 %v5125
    %5334 = vmatpush1.bf16.msra.mxu0 %v5124
    %5335 = vmatprep.subr.bf16.mxu0 %v5131
    %5336 = vmatpush1.bf16.msra.mxu0 %v5130
    %5337 = vmatprep.subr.bf16.mxu0 %v5137
    %5338 = vmatpush1.bf16.msra.mxu0 %v5136
    %5339 = vmatprep.subr.bf16.mxu0 %v5143
    %5340 = vmatpush1.bf16.msra.mxu0 %v5142
    %5341 = vmatprep.subr.bf16.mxu0 %v5149
    %5342 = vmatpush1.bf16.msra.mxu0 %v5148
    %5343 = vmatprep.subr.bf16.mxu0 %v5155
    %5344 = vmatpush1.bf16.msra.mxu0 %v5154
    %5345 = vmatprep.subr.bf16.mxu0 %v5161
    %5346 = vmatpush1.bf16.msra.mxu0 %v5160
    %5347 = vmatprep.subr.bf16.mxu0 %v5167
    %5348 = vmatpush1.bf16.msra.mxu0 %v5166
    %5349 = vmatprep.subr.bf16.mxu0 %v5173
    %5350 = vmatpush1.bf16.msra.mxu0 %v5172
    %5351 = vmatprep.subr.bf16.mxu0 %v5179
    %5352 = vmatpush1.bf16.msra.mxu0 %v5178
    %5353 = vmatprep.mubr.bf16.mxu0 %v4667
    %5354 = vmatmul.mubr.bf16.gmra.mrb[0].mxu0 %v4666
    %v5355 = vpop.f32.mrb[0].mxu0
    %v5356 = vadd.f32 %v4779, %v5355
    %v5357 = vpop.f32.mrb[0].mxu0
    %v5358 = vadd.f32 %v4783, %v5357
    %v5359 = vpop.f32.mrb[0].mxu0
    %v5360 = vadd.f32 %v4779, %v5359
    %v5361 = vpop.f32.mrb[0].mxu0
    %v5362 = vadd.f32 %v4783, %v5361
    %5363 = vdwg.mxu0
    %5364 = vmatprep.subr.bf16.mxu0 %v5091
    %5365 = vmatpush1.bf16.msra.mxu0 %v5090
    %5366 = vmatprep.subr.bf16.mxu0 %v5097
    %5367 = vmatpush1.bf16.msra.mxu0 %v5096
    %5368 = vmatprep.subr.bf16.mxu0 %v5103
    %5369 = vmatpush1.bf16.msra.mxu0 %v5102
    %5370 = vmatprep.subr.bf16.mxu0 %v5109
    %5371 = vmatpush1.bf16.msra.mxu0 %v5108
    %5372 = vmatprep.subr.bf16.mxu0 %v5115
    %5373 = vmatpush1.bf16.msra.mxu0 %v5114
    %5374 = vmatprep.subr.bf16.mxu0 %v5121
    %5375 = vmatpush1.bf16.msra.mxu0 %v5120
    %5376 = vmatprep.subr.bf16.mxu0 %v5127
    %5377 = vmatpush1.bf16.msra.mxu0 %v5126
    %5378 = vmatprep.subr.bf16.mxu0 %v5133
    %5379 = vmatpush1.bf16.msra.mxu0 %v5132
    %5380 = vmatprep.subr.bf16.mxu0 %v5139
    %5381 = vmatpush1.bf16.msra.mxu0 %v5138
    %5382 = vmatprep.subr.bf16.mxu0 %v5145
    %5383 = vmatpush1.bf16.msra.mxu0 %v5144
    %5384 = vmatprep.subr.bf16.mxu0 %v5151
    %5385 = vmatpush1.bf16.msra.mxu0 %v5150
    %5386 = vmatprep.subr.bf16.mxu0 %v5157
    %5387 = vmatpush1.bf16.msra.mxu0 %v5156
    %5388 = vmatprep.subr.bf16.mxu0 %v5163
    %5389 = vmatpush1.bf16.msra.mxu0 %v5162
    %5390 = vmatprep.subr.bf16.mxu0 %v5169
    %5391 = vmatpush1.bf16.msra.mxu0 %v5168
    %5392 = vmatprep.subr.bf16.mxu0 %v5175
    %5393 = vmatpush1.bf16.msra.mxu0 %v5174
    %5394 = vmatprep.subr.bf16.mxu0 %v5181
    %5395 = vmatpush1.bf16.msra.mxu0 %v5180
    %5396 = vmatprep.mubr.bf16.mxu0 %v4667
    %5397 = vmatmul.mubr.bf16.gmra.mrb[0].mxu0 %v4666
    %v5398 = vpop.f32.mrb[0].mxu0
    %v5399 = vadd.f32 %v4787, %v5398
    %v5400 = vpop.f32.mrb[0].mxu0
    %v5401 = vadd.f32 %v4791, %v5400
    %v5402 = vpop.f32.mrb[0].mxu0
    %v5403 = vadd.f32 %v4787, %v5402
    %v5404 = vpop.f32.mrb[0].mxu0
    %v5405 = vadd.f32 %v4791, %v5404
    %5406 = vdwg.mxu0
    %v5407 = vmul.f32 %v5313, 0.125
    %v5408 = vmul.f32 %v5317, 0.125
    %v5409 = vpack.c.bf16 %v5408, %v5407
    %v5410 = vpack.c.bf16 %v5360, %v5356
    %v5411 = vpack.c.bf16 %v5403, %v5399
    %v5413 = vsel %vm1696, %v5409, 0
    %v5416 = vsel %vm1696, %v5410, 0
    %5418 = vmatprep.subr.bf16.mxu0 0
    %5419 = vmatpush1.bf16.xpose.msra.mxu0 %v5416
    %5420 = vmatprep.subr.bf16.mxu0 0
    %5421 = vmatpush1.bf16.xpose.msra.mxu0 0
    %5422 = vmatprep.subr.bf16.mxu0 0
    %5423 = vmatpush1.bf16.xpose.msra.mxu0 0
    %5424 = vmatprep.subr.bf16.mxu0 0
    %5425 = vmatpush1.bf16.xpose.msra.mxu0 0
    %5426 = vmatprep.subr.bf16.mxu0 0
    %5427 = vmatpush1.bf16.xpose.msra.mxu0 0
    %5428 = vmatprep.subr.bf16.mxu0 0
    %5429 = vmatpush1.bf16.xpose.msra.mxu0 0
    %5430 = vmatprep.subr.bf16.mxu0 0
    %5431 = vmatpush1.bf16.xpose.msra.mxu0 0
    %5432 = vmatprep.subr.bf16.mxu0 0
    %5433 = vmatpush1.bf16.xpose.msra.mxu0 0
    %5434 = vmatprep.subr.bf16.mxu0 0
    %5435 = vmatpush1.bf16.xpose.msra.mxu0 0
    %5436 = vmatprep.subr.bf16.mxu0 0
    %5437 = vmatpush1.bf16.xpose.msra.mxu0 0
    %5438 = vmatprep.subr.bf16.mxu0 0
    %5439 = vmatpush1.bf16.xpose.msra.mxu0 0
    %5440 = vmatprep.subr.bf16.mxu0 0
    %5441 = vmatpush1.bf16.xpose.msra.mxu0 0
    %5442 = vmatprep.subr.bf16.mxu0 0
    %5443 = vmatpush1.bf16.xpose.msra.mxu0 0
    %5444 = vmatprep.subr.bf16.mxu0 0
    %5445 = vmatpush1.bf16.xpose.msra.mxu0 0
    %5446 = vmatprep.subr.bf16.mxu0 0
    %5447 = vmatpush1.bf16.xpose.msra.mxu0 0
    %5448 = vmatprep.subr.bf16.mxu0 0
    %5449 = vmatpush1.bf16.xpose.msra.mxu0 0
    %5450 = vmatprep.mubr.bf16.mxu0 0
    %5451 = vmatmul.mubr.bf16.gmra.mrb[0].mxu0 %v5413
    %v5452 = vpop.f32.mrb[0].mxu0
    %v5453 = vadd.f32 %v886, %v5452
    %v5454 = vpop.f32.mrb[0].mxu0
    %v5455 = vpop.f32.mrb[0].mxu0
    %v5456 = vadd.f32 %v887, %v5455
    %v5457 = vpop.f32.mrb[0].mxu0
    %5458 = vdwg.mxu0
    %v5459 = vsel %vm1744, %v5453, -inf
    %5460 = vmax.xlane.f32.xlu0 %v5459
    %v5461 = vpop.xlane.xlu0 %5460
    %v5462 = vsel %vm1744, %v5456, -inf
    %5463 = vmax.xlane.f32.xlu0 %v5462
    %v5464 = vpop.xlane.xlu0 %5463
    %v5465 = vsub.f32 %v5453, %v5461
    %v5466 = vsub.f32 %v5456, %v5464
    %v5467 = vmul.f32 %v5465, 1.442695
    %v5468 = vpow.pop %v5467
    %v5469 = vmul.f32 %v5466, 1.442695
    %v5470 = vpow.pop %v5469
    %v5471 = vsel %vm1744, %v5468, 0.0
    %5472 = vadd.xlane.f32.xlu0 %v5471
    %v5473 = vpop.xlane.xlu0 %5472
    %v5474 = vsel %vm1744, %v5470, 0.0
    %5475 = vadd.xlane.f32.xlu0 %v5474
    %v5476 = vpop.xlane.xlu0 %5475
    %v5477 = vrcp.pop %v5473
    %v5478 = vmul.f32 %v5468, %v5477
    %v5479 = vrcp.pop %v5476
    %v5480 = vmul.f32 %v5470, %v5479
    %v5481 = vpack.c.bf16 %v5480, %v5478
    %v5483 = vsel %vm1744, %v5481, 0
    %5485 = vmatprep.subr.bf16.mxu0 0
    %5486 = vmatpush1.bf16.msra.mxu0 %v5411
    %5487 = vmatprep.subr.bf16.mxu0 0
    %5488 = vmatpush1.bf16.msra.mxu0 0
    %5489 = vmatprep.subr.bf16.mxu0 0
    %5490 = vmatpush1.bf16.msra.mxu0 0
    %5491 = vmatprep.subr.bf16.mxu0 0
    %5492 = vmatpush1.bf16.msra.mxu0 0
    %5493 = vmatprep.subr.bf16.mxu0 0
    %5494 = vmatpush1.bf16.msra.mxu0 0
    %5495 = vmatprep.subr.bf16.mxu0 0
    %5496 = vmatpush1.bf16.msra.mxu0 0
    %5497 = vmatprep.subr.bf16.mxu0 0
    %5498 = vmatpush1.bf16.msra.mxu0 0
    %5499 = vmatprep.subr.bf16.mxu0 0
    %5500 = vmatpush1.bf16.msra.mxu0 0
    %5501 = vmatprep.subr.bf16.mxu0 0
    %5502 = vmatpush1.bf16.msra.mxu0 0
    %5503 = vmatprep.subr.bf16.mxu0 0
    %5504 = vmatpush1.bf16.msra.mxu0 0
    %5505 = vmatprep.subr.bf16.mxu0 0
    %5506 = vmatpush1.bf16.msra.mxu0 0
    %5507 = vmatprep.subr.bf16.mxu0 0
    %5508 = vmatpush1.bf16.msra.mxu0 0
    %5509 = vmatprep.subr.bf16.mxu0 0
    %5510 = vmatpush1.bf16.msra.mxu0 0
    %5511 = vmatprep.subr.bf16.mxu0 0
    %5512 = vmatpush1.bf16.msra.mxu0 0
    %5513 = vmatprep.subr.bf16.mxu0 0
    %5514 = vmatpush1.bf16.msra.mxu0 0
    %5515 = vmatprep.subr.bf16.mxu0 0
    %5516 = vmatpush1.bf16.msra.mxu0 0
    %5517 = vmatprep.mubr.bf16.mxu0 0
    %5518 = vmatmul.mubr.bf16.gmra.mrb[0].mxu0 %v5483
    %v5519 = vpop.f32.mrb[0].mxu0
    %v5520 = vadd.f32 0.0, %v5519
    %v5521 = vpop.f32.mrb[0].mxu0
    %v5522 = vpop.f32.mrb[0].mxu0
    %v5523 = vadd.f32 0.0, %v5522
    %v5524 = vpop.f32.mrb[0].mxu0
    %5525 = vdwg.mxu0
    %5527 = vrot.lane.b32.xlu0 %v5409, 64
    %v5528 = vpop.permute.xlu0 %5527
    %5530 = vrot.lane.b32.xlu0 %v5410, 64
    %v5531 = vpop.permute.xlu0 %5530
    %v5533 = vsel %vm1696, %v5528, 0
    %v5536 = vsel %vm1696, %v5531, 0
    %5538 = vmatprep.subr.bf16.mxu0 0
    %5539 = vmatpush1.bf16.xpose.msra.mxu0 %v5536
    %5540 = vmatprep.subr.bf16.mxu0 0
    %5541 = vmatpush1.bf16.xpose.msra.mxu0 0
    %5542 = vmatprep.subr.bf16.mxu0 0
    %5543 = vmatpush1.bf16.xpose.msra.mxu0 0
    %5544 = vmatprep.subr.bf16.mxu0 0
    %5545 = vmatpush1.bf16.xpose.msra.mxu0 0
    %5546 = vmatprep.subr.bf16.mxu0 0
    %5547 = vmatpush1.bf16.xpose.msra.mxu0 0
    %5548 = vmatprep.subr.bf16.mxu0 0
    %5549 = vmatpush1.bf16.xpose.msra.mxu0 0
    %5550 = vmatprep.subr.bf16.mxu0 0
    %5551 = vmatpush1.bf16.xpose.msra.mxu0 0
    %5552 = vmatprep.subr.bf16.mxu0 0
    %5553 = vmatpush1.bf16.xpose.msra.mxu0 0
    %5554 = vmatprep.subr.bf16.mxu0 0
    %5555 = vmatpush1.bf16.xpose.msra.mxu0 0
    %5556 = vmatprep.subr.bf16.mxu0 0
    %5557 = vmatpush1.bf16.xpose.msra.mxu0 0
    %5558 = vmatprep.subr.bf16.mxu0 0
    %5559 = vmatpush1.bf16.xpose.msra.mxu0 0
    %5560 = vmatprep.subr.bf16.mxu0 0
    %5561 = vmatpush1.bf16.xpose.msra.mxu0 0
    %5562 = vmatprep.subr.bf16.mxu0 0
    %5563 = vmatpush1.bf16.xpose.msra.mxu0 0
    %5564 = vmatprep.subr.bf16.mxu0 0
    %5565 = vmatpush1.bf16.xpose.msra.mxu0 0
    %5566 = vmatprep.subr.bf16.mxu0 0
    %5567 = vmatpush1.bf16.xpose.msra.mxu0 0
    %5568 = vmatprep.subr.bf16.mxu0 0
    %5569 = vmatpush1.bf16.xpose.msra.mxu0 0
    %5570 = vmatprep.mubr.bf16.mxu0 0
    %5571 = vmatmul.mubr.bf16.gmra.mrb[0].mxu0 %v5533
    %v5572 = vpop.f32.mrb[0].mxu0
    %v5573 = vadd.f32 %v886, %v5572
    %v5574 = vpop.f32.mrb[0].mxu0
    %v5575 = vpop.f32.mrb[0].mxu0
    %v5576 = vadd.f32 %v887, %v5575
    %v5577 = vpop.f32.mrb[0].mxu0
    %5578 = vdwg.mxu0
    %v5579 = vsel %vm1744, %v5573, -inf
    %5580 = vmax.xlane.f32.xlu0 %v5579
    %v5581 = vpop.xlane.xlu0 %5580
    %v5582 = vsel %vm1744, %v5576, -inf
    %5583 = vmax.xlane.f32.xlu0 %v5582
    %v5584 = vpop.xlane.xlu0 %5583
    %v5585 = vsub.f32 %v5573, %v5581
    %v5586 = vsub.f32 %v5576, %v5584
    %v5587 = vmul.f32 %v5585, 1.442695
    %v5588 = vpow.pop %v5587
    %v5589 = vmul.f32 %v5586, 1.442695
    %v5590 = vpow.pop %v5589
    %v5591 = vsel %vm1744, %v5588, 0.0
    %5592 = vadd.xlane.f32.xlu0 %v5591
    %v5593 = vpop.xlane.xlu0 %5592
    %v5594 = vsel %vm1744, %v5590, 0.0
    %5595 = vadd.xlane.f32.xlu0 %v5594
    %v5596 = vpop.xlane.xlu0 %5595
    %v5597 = vrcp.pop %v5593
    %v5598 = vmul.f32 %v5588, %v5597
    %v5599 = vrcp.pop %v5596
    %v5600 = vmul.f32 %v5590, %v5599
    %v5601 = vpack.c.bf16 %v5600, %v5598
    %5603 = vrot.lane.b32.xlu0 %v5411, 64
    %v5604 = vpop.permute.xlu0 %5603
    %v5607 = vsel %vm1744, %v5601, 0
    %5609 = vmatprep.subr.bf16.mxu0 0
    %5610 = vmatpush1.bf16.msra.mxu0 %v5604
    %5611 = vmatprep.subr.bf16.mxu0 0
    %5612 = vmatpush1.bf16.msra.mxu0 0
    %5613 = vmatprep.subr.bf16.mxu0 0
    %5614 = vmatpush1.bf16.msra.mxu0 0
    %5615 = vmatprep.subr.bf16.mxu0 0
    %5616 = vmatpush1.bf16.msra.mxu0 0
    %5617 = vmatprep.subr.bf16.mxu0 0
    %5618 = vmatpush1.bf16.msra.mxu0 0
    %5619 = vmatprep.subr.bf16.mxu0 0
    %5620 = vmatpush1.bf16.msra.mxu0 0
    %5621 = vmatprep.subr.bf16.mxu0 0
    %5622 = vmatpush1.bf16.msra.mxu0 0
    %5623 = vmatprep.subr.bf16.mxu0 0
    %5624 = vmatpush1.bf16.msra.mxu0 0
    %5625 = vmatprep.subr.bf16.mxu0 0
    %5626 = vmatpush1.bf16.msra.mxu0 0
    %5627 = vmatprep.subr.bf16.mxu0 0
    %5628 = vmatpush1.bf16.msra.mxu0 0
    %5629 = vmatprep.subr.bf16.mxu0 0
    %5630 = vmatpush1.bf16.msra.mxu0 0
    %5631 = vmatprep.subr.bf16.mxu0 0
    %5632 = vmatpush1.bf16.msra.mxu0 0
    %5633 = vmatprep.subr.bf16.mxu0 0
    %5634 = vmatpush1.bf16.msra.mxu0 0
    %5635 = vmatprep.subr.bf16.mxu0 0
    %5636 = vmatpush1.bf16.msra.mxu0 0
    %5637 = vmatprep.subr.bf16.mxu0 0
    %5638 = vmatpush1.bf16.msra.mxu0 0
    %5639 = vmatprep.subr.bf16.mxu0 0
    %5640 = vmatpush1.bf16.msra.mxu0 0
    %5641 = vmatprep.mubr.bf16.mxu0 0
    %5642 = vmatmul.mubr.bf16.gmra.mrb[0].mxu0 %v5607
    %v5643 = vpop.f32.mrb[0].mxu0
    %v5644 = vadd.f32 0.0, %v5643
    %v5645 = vpop.f32.mrb[0].mxu0
    %v5646 = vpop.f32.mrb[0].mxu0
    %v5647 = vadd.f32 0.0, %v5646
    %v5648 = vpop.f32.mrb[0].mxu0
    %5649 = vdwg.mxu0
    %v5650 = vmul.f32 %v5315, 0.125
    %v5651 = vmul.f32 %v5319, 0.125
    %v5652 = vpack.c.bf16 %v5651, %v5650
    %v5653 = vpack.c.bf16 %v5362, %v5358
    %v5654 = vpack.c.bf16 %v5405, %v5401
    %v5656 = vsel %vm1696, %v5652, 0
    %v5659 = vsel %vm1696, %v5653, 0
    %5661 = vmatprep.subr.bf16.mxu0 0
    %5662 = vmatpush1.bf16.xpose.msra.mxu0 %v5659
    %5663 = vmatprep.subr.bf16.mxu0 0
    %5664 = vmatpush1.bf16.xpose.msra.mxu0 0
    %5665 = vmatprep.subr.bf16.mxu0 0
    %5666 = vmatpush1.bf16.xpose.msra.mxu0 0
    %5667 = vmatprep.subr.bf16.mxu0 0
    %5668 = vmatpush1.bf16.xpose.msra.mxu0 0
    %5669 = vmatprep.subr.bf16.mxu0 0
    %5670 = vmatpush1.bf16.xpose.msra.mxu0 0
    %5671 = vmatprep.subr.bf16.mxu0 0
    %5672 = vmatpush1.bf16.xpose.msra.mxu0 0
    %5673 = vmatprep.subr.bf16.mxu0 0
    %5674 = vmatpush1.bf16.xpose.msra.mxu0 0
    %5675 = vmatprep.subr.bf16.mxu0 0
    %5676 = vmatpush1.bf16.xpose.msra.mxu0 0
    %5677 = vmatprep.subr.bf16.mxu0 0
    %5678 = vmatpush1.bf16.xpose.msra.mxu0 0
    %5679 = vmatprep.subr.bf16.mxu0 0
    %5680 = vmatpush1.bf16.xpose.msra.mxu0 0
    %5681 = vmatprep.subr.bf16.mxu0 0
    %5682 = vmatpush1.bf16.xpose.msra.mxu0 0
    %5683 = vmatprep.subr.bf16.mxu0 0
    %5684 = vmatpush1.bf16.xpose.msra.mxu0 0
    %5685 = vmatprep.subr.bf16.mxu0 0
    %5686 = vmatpush1.bf16.xpose.msra.mxu0 0
    %5687 = vmatprep.subr.bf16.mxu0 0
    %5688 = vmatpush1.bf16.xpose.msra.mxu0 0
    %5689 = vmatprep.subr.bf16.mxu0 0
    %5690 = vmatpush1.bf16.xpose.msra.mxu0 0
    %5691 = vmatprep.subr.bf16.mxu0 0
    %5692 = vmatpush1.bf16.xpose.msra.mxu0 0
    %5693 = vmatprep.mubr.bf16.mxu0 0
    %5694 = vmatmul.mubr.bf16.gmra.mrb[0].mxu0 %v5656
    %v5695 = vpop.f32.mrb[0].mxu0
    %v5696 = vadd.f32 %v886, %v5695
    %v5697 = vpop.f32.mrb[0].mxu0
    %v5698 = vpop.f32.mrb[0].mxu0
    %v5699 = vadd.f32 %v887, %v5698
    %v5700 = vpop.f32.mrb[0].mxu0
    %5701 = vdwg.mxu0
    %v5702 = vsel %vm1744, %v5696, -inf
    %5703 = vmax.xlane.f32.xlu0 %v5702
    %v5704 = vpop.xlane.xlu0 %5703
    %v5705 = vsel %vm1744, %v5699, -inf
    %5706 = vmax.xlane.f32.xlu0 %v5705
    %v5707 = vpop.xlane.xlu0 %5706
    %v5708 = vsub.f32 %v5696, %v5704
    %v5709 = vsub.f32 %v5699, %v5707
    %v5710 = vmul.f32 %v5708, 1.442695
    %v5711 = vpow.pop %v5710
    %v5712 = vmul.f32 %v5709, 1.442695
    %v5713 = vpow.pop %v5712
    %v5714 = vsel %vm1744, %v5711, 0.0
    %5715 = vadd.xlane.f32.xlu0 %v5714
    %v5716 = vpop.xlane.xlu0 %5715
    %v5717 = vsel %vm1744, %v5713, 0.0
    %5718 = vadd.xlane.f32.xlu0 %v5717
    %v5719 = vpop.xlane.xlu0 %5718
    %v5720 = vrcp.pop %v5716
    %v5721 = vmul.f32 %v5711, %v5720
    %v5722 = vrcp.pop %v5719
    %v5723 = vmul.f32 %v5713, %v5722
    %v5724 = vpack.c.bf16 %v5723, %v5721
    %v5726 = vsel %vm1744, %v5724, 0
    %5728 = vmatprep.subr.bf16.mxu0 0
    %5729 = vmatpush1.bf16.msra.mxu0 %v5654
    %5730 = vmatprep.subr.bf16.mxu0 0
    %5731 = vmatpush1.bf16.msra.mxu0 0
    %5732 = vmatprep.subr.bf16.mxu0 0
    %5733 = vmatpush1.bf16.msra.mxu0 0
    %5734 = vmatprep.subr.bf16.mxu0 0
    %5735 = vmatpush1.bf16.msra.mxu0 0
    %5736 = vmatprep.subr.bf16.mxu0 0
    %5737 = vmatpush1.bf16.msra.mxu0 0
    %5738 = vmatprep.subr.bf16.mxu0 0
    %5739 = vmatpush1.bf16.msra.mxu0 0
    %5740 = vmatprep.subr.bf16.mxu0 0
    %5741 = vmatpush1.bf16.msra.mxu0 0
    %5742 = vmatprep.subr.bf16.mxu0 0
    %5743 = vmatpush1.bf16.msra.mxu0 0
    %5744 = vmatprep.subr.bf16.mxu0 0
    %5745 = vmatpush1.bf16.msra.mxu0 0
    %5746 = vmatprep.subr.bf16.mxu0 0
    %5747 = vmatpush1.bf16.msra.mxu0 0
    %5748 = vmatprep.subr.bf16.mxu0 0
    %5749 = vmatpush1.bf16.msra.mxu0 0
    %5750 = vmatprep.subr.bf16.mxu0 0
    %5751 = vmatpush1.bf16.msra.mxu0 0
    %5752 = vmatprep.subr.bf16.mxu0 0
    %5753 = vmatpush1.bf16.msra.mxu0 0
    %5754 = vmatprep.subr.bf16.mxu0 0
    %5755 = vmatpush1.bf16.msra.mxu0 0
    %5756 = vmatprep.subr.bf16.mxu0 0
    %5757 = vmatpush1.bf16.msra.mxu0 0
    %5758 = vmatprep.subr.bf16.mxu0 0
    %5759 = vmatpush1.bf16.msra.mxu0 0
    %5760 = vmatprep.mubr.bf16.mxu0 0
    %5761 = vmatmul.mubr.bf16.gmra.mrb[0].mxu0 %v5726
    %v5762 = vpop.f32.mrb[0].mxu0
    %v5763 = vadd.f32 0.0, %v5762
    %v5764 = vpop.f32.mrb[0].mxu0
    %v5765 = vpop.f32.mrb[0].mxu0
    %v5766 = vadd.f32 0.0, %v5765
    %v5767 = vpop.f32.mrb[0].mxu0
    %5768 = vdwg.mxu0
    %5770 = vrot.lane.b32.xlu0 %v5652, 64
    %v5771 = vpop.permute.xlu0 %5770
    %5773 = vrot.lane.b32.xlu0 %v5653, 64
    %v5774 = vpop.permute.xlu0 %5773
    %v5776 = vsel %vm1696, %v5771, 0
    %v5779 = vsel %vm1696, %v5774, 0
    %5781 = vmatprep.subr.bf16.mxu0 0
    %5782 = vmatpush1.bf16.xpose.msra.mxu0 %v5779
    %5783 = vmatprep.subr.bf16.mxu0 0
    %5784 = vmatpush1.bf16.xpose.msra.mxu0 0
    %5785 = vmatprep.subr.bf16.mxu0 0
    %5786 = vmatpush1.bf16.xpose.msra.mxu0 0
    %5787 = vmatprep.subr.bf16.mxu0 0
    %5788 = vmatpush1.bf16.xpose.msra.mxu0 0
    %5789 = vmatprep.subr.bf16.mxu0 0
    %5790 = vmatpush1.bf16.xpose.msra.mxu0 0
    %5791 = vmatprep.subr.bf16.mxu0 0
    %5792 = vmatpush1.bf16.xpose.msra.mxu0 0
    %5793 = vmatprep.subr.bf16.mxu0 0
    %5794 = vmatpush1.bf16.xpose.msra.mxu0 0
    %5795 = vmatprep.subr.bf16.mxu0 0
    %5796 = vmatpush1.bf16.xpose.msra.mxu0 0
    %5797 = vmatprep.subr.bf16.mxu0 0
    %5798 = vmatpush1.bf16.xpose.msra.mxu0 0
    %5799 = vmatprep.subr.bf16.mxu0 0
    %5800 = vmatpush1.bf16.xpose.msra.mxu0 0
    %5801 = vmatprep.subr.bf16.mxu0 0
    %5802 = vmatpush1.bf16.xpose.msra.mxu0 0
    %5803 = vmatprep.subr.bf16.mxu0 0
    %5804 = vmatpush1.bf16.xpose.msra.mxu0 0
    %5805 = vmatprep.subr.bf16.mxu0 0
    %5806 = vmatpush1.bf16.xpose.msra.mxu0 0
    %5807 = vmatprep.subr.bf16.mxu0 0
    %5808 = vmatpush1.bf16.xpose.msra.mxu0 0
    %5809 = vmatprep.subr.bf16.mxu0 0
    %5810 = vmatpush1.bf16.xpose.msra.mxu0 0
    %5811 = vmatprep.subr.bf16.mxu0 0
    %5812 = vmatpush1.bf16.xpose.msra.mxu0 0
    %5813 = vmatprep.mubr.bf16.mxu0 0
    %5814 = vmatmul.mubr.bf16.gmra.mrb[0].mxu0 %v5776
    %v5815 = vpop.f32.mrb[0].mxu0
    %v5816 = vadd.f32 %v886, %v5815
    %v5817 = vpop.f32.mrb[0].mxu0
    %v5818 = vpop.f32.mrb[0].mxu0
    %v5819 = vadd.f32 %v887, %v5818
    %v5820 = vpop.f32.mrb[0].mxu0
    %5821 = vdwg.mxu0
    %v5822 = vsel %vm1744, %v5816, -inf
    %5823 = vmax.xlane.f32.xlu0 %v5822
    %v5824 = vpop.xlane.xlu0 %5823
    %v5825 = vsel %vm1744, %v5819, -inf
    %5826 = vmax.xlane.f32.xlu0 %v5825
    %v5827 = vpop.xlane.xlu0 %5826
    %v5828 = vsub.f32 %v5816, %v5824
    %v5829 = vsub.f32 %v5819, %v5827
    %v5830 = vmul.f32 %v5828, 1.442695
    %v5831 = vpow.pop %v5830
    %v5832 = vmul.f32 %v5829, 1.442695
    %v5833 = vpow.pop %v5832
    %v5834 = vsel %vm1744, %v5831, 0.0
    %5835 = vadd.xlane.f32.xlu0 %v5834
    %v5836 = vpop.xlane.xlu0 %5835
    %v5837 = vsel %vm1744, %v5833, 0.0
    %5838 = vadd.xlane.f32.xlu0 %v5837
    %v5839 = vpop.xlane.xlu0 %5838
    %v5840 = vrcp.pop %v5836
    %v5841 = vmul.f32 %v5831, %v5840
    %v5842 = vrcp.pop %v5839
    %v5843 = vmul.f32 %v5833, %v5842
    %v5844 = vpack.c.bf16 %v5843, %v5841
    %5846 = vrot.lane.b32.xlu0 %v5654, 64
    %v5847 = vpop.permute.xlu0 %5846
    %v5850 = vsel %vm1744, %v5844, 0
    %5852 = vmatprep.subr.bf16.mxu0 0
    %5853 = vmatpush1.bf16.msra.mxu0 %v5847
    %5854 = vmatprep.subr.bf16.mxu0 0
    %5855 = vmatpush1.bf16.msra.mxu0 0
    %5856 = vmatprep.subr.bf16.mxu0 0
    %5857 = vmatpush1.bf16.msra.mxu0 0
    %5858 = vmatprep.subr.bf16.mxu0 0
    %5859 = vmatpush1.bf16.msra.mxu0 0
    %5860 = vmatprep.subr.bf16.mxu0 0
    %5861 = vmatpush1.bf16.msra.mxu0 0
    %5862 = vmatprep.subr.bf16.mxu0 0
    %5863 = vmatpush1.bf16.msra.mxu0 0
    %5864 = vmatprep.subr.bf16.mxu0 0
    %5865 = vmatpush1.bf16.msra.mxu0 0
    %5866 = vmatprep.subr.bf16.mxu0 0
    %5867 = vmatpush1.bf16.msra.mxu0 0
    %5868 = vmatprep.subr.bf16.mxu0 0
    %5869 = vmatpush1.bf16.msra.mxu0 0
    %5870 = vmatprep.subr.bf16.mxu0 0
    %5871 = vmatpush1.bf16.msra.mxu0 0
    %5872 = vmatprep.subr.bf16.mxu0 0
    %5873 = vmatpush1.bf16.msra.mxu0 0
    %5874 = vmatprep.subr.bf16.mxu0 0
    %5875 = vmatpush1.bf16.msra.mxu0 0
    %5876 = vmatprep.subr.bf16.mxu0 0
    %5877 = vmatpush1.bf16.msra.mxu0 0
    %5878 = vmatprep.subr.bf16.mxu0 0
    %5879 = vmatpush1.bf16.msra.mxu0 0
    %5880 = vmatprep.subr.bf16.mxu0 0
    %5881 = vmatpush1.bf16.msra.mxu0 0
    %5882 = vmatprep.subr.bf16.mxu0 0
    %5883 = vmatpush1.bf16.msra.mxu0 0
    %5884 = vmatprep.mubr.bf16.mxu0 0
    %5885 = vmatmul.mubr.bf16.gmra.mrb[0].mxu0 %v5850
    %v5886 = vpop.f32.mrb[0].mxu0
    %v5887 = vadd.f32 0.0, %v5886
    %v5888 = vpop.f32.mrb[0].mxu0
    %v5889 = vpop.f32.mrb[0].mxu0
    %v5890 = vadd.f32 0.0, %v5889
    %v5891 = vpop.f32.mrb[0].mxu0
    %5892 = vdwg.mxu0
    %5895 = vrot.lane.b32.xlu0 %v5644, 64
    %v5896 = vpop.permute.xlu0 %5895
    %5897 = vrot.lane.b32.xlu0 %v5647, 64
    %v5898 = vpop.permute.xlu0 %5897
    %5903 = vrot.lane.b32.xlu0 %v5887, 64
    %v5904 = vpop.permute.xlu0 %5903
    %5905 = vrot.lane.b32.xlu0 %v5890, 64
    %v5906 = vpop.permute.xlu0 %5905
    %v5909 = vsel %vm1696, %v5520, %v5896
    %v5910 = vsel %vm1696, %v5523, %v5898
    %v5911 = vsel %vm1696, %v5763, %v5904
    %v5912 = vsel %vm1696, %v5766, %v5906
    %v5913 = vpack.c.bf16 %v5910, %v5909
    %v5914 = vpack.c.bf16 %v5912, %v5911
    %s5915 = scalar_lea.vmem %s10, 256
    %v5916 = vld [vmem:[%s5915] sm:$0xff]
    %v5917 = vld [vmem:[%s5915 + $0x8] sm:$0xff]
    %v5918 = vld [vmem:[%s5915 + $0x10] sm:$0xff]
    %v5919 = vld [vmem:[%s5915 + $0x18] sm:$0xff]
    %v5920 = vld [vmem:[%s5915 + $0x20] sm:$0xff]
    %v5921 = vld [vmem:[%s5915 + $0x28] sm:$0xff]
    %v5922 = vld [vmem:[%s5915 + $0x30] sm:$0xff]
    %v5923 = vld [vmem:[%s5915 + $0x38] sm:$0xff]
    %v5924 = vld [vmem:[%s5915 + $0x40] sm:$0xff]
    %v5925 = vld [vmem:[%s5915 + $0x48] sm:$0xff]
    %v5926 = vld [vmem:[%s5915 + $0x50] sm:$0xff]
    %v5927 = vld [vmem:[%s5915 + $0x58] sm:$0xff]
    %v5928 = vld [vmem:[%s5915 + $0x60] sm:$0xff]
    %v5929 = vld [vmem:[%s5915 + $0x68] sm:$0xff]
    %v5930 = vld [vmem:[%s5915 + $0x70] sm:$0xff]
    %v5931 = vld [vmem:[%s5915 + $0x78] sm:$0xff]
    %v5932 = vld [vmem:[%s5915 + $0x80] sm:$0xff]
    %v5933 = vld [vmem:[%s5915 + $0x88] sm:$0xff]
    %v5934 = vld [vmem:[%s5915 + $0x90] sm:$0xff]
    %v5935 = vld [vmem:[%s5915 + $0x98] sm:$0xff]
    %v5936 = vld [vmem:[%s5915 + $0xa0] sm:$0xff]
    %v5937 = vld [vmem:[%s5915 + $0xa8] sm:$0xff]
    %v5938 = vld [vmem:[%s5915 + $0xb0] sm:$0xff]
    %v5939 = vld [vmem:[%s5915 + $0xb8] sm:$0xff]
    %v5940 = vld [vmem:[%s5915 + $0xc0] sm:$0xff]
    %v5941 = vld [vmem:[%s5915 + $0xc8] sm:$0xff]
    %v5942 = vld [vmem:[%s5915 + $0xd0] sm:$0xff]
    %v5943 = vld [vmem:[%s5915 + $0xd8] sm:$0xff]
    %v5944 = vld [vmem:[%s5915 + $0xe0] sm:$0xff]
    %v5945 = vld [vmem:[%s5915 + $0xe8] sm:$0xff]
    %v5946 = vld [vmem:[%s5915 + $0xf0] sm:$0xff]
    %v5947 = vld [vmem:[%s5915 + $0xf8] sm:$0xff]
    %v5980 = vunpack.c.l.b16 %v5916
    %v5981 = vunpack.c.h.b16 %v5916
    %v5982 = vunpack.c.l.b16 %v5917
    %v5983 = vunpack.c.h.b16 %v5917
    %v5984 = vunpack.c.l.b16 %v5918
    %v5985 = vunpack.c.h.b16 %v5918
    %v5986 = vunpack.c.l.b16 %v5919
    %v5987 = vunpack.c.h.b16 %v5919
    %v5988 = vunpack.c.l.b16 %v5920
    %v5989 = vunpack.c.h.b16 %v5920
    %v5990 = vunpack.c.l.b16 %v5921
    %v5991 = vunpack.c.h.b16 %v5921
    %v5992 = vunpack.c.l.b16 %v5922
    %v5993 = vunpack.c.h.b16 %v5922
    %v5994 = vunpack.c.l.b16 %v5923
    %v5995 = vunpack.c.h.b16 %v5923
    %v5996 = vunpack.c.l.b16 %v5924
    %v5997 = vunpack.c.h.b16 %v5924
    %v5998 = vunpack.c.l.b16 %v5925
    %v5999 = vunpack.c.h.b16 %v5925
    %v6000 = vunpack.c.l.b16 %v5926
    %v6001 = vunpack.c.h.b16 %v5926
    %v6002 = vunpack.c.l.b16 %v5927
    %v6003 = vunpack.c.h.b16 %v5927
    %v6004 = vunpack.c.l.b16 %v5928
    %v6005 = vunpack.c.h.b16 %v5928
    %v6006 = vunpack.c.l.b16 %v5929
    %v6007 = vunpack.c.h.b16 %v5929
    %v6008 = vunpack.c.l.b16 %v5930
    %v6009 = vunpack.c.h.b16 %v5930
    %v6010 = vunpack.c.l.b16 %v5931
    %v6011 = vunpack.c.h.b16 %v5931
    %v6012 = vunpack.c.l.b16 %v5932
    %v6013 = vunpack.c.h.b16 %v5932
    %v6014 = vunpack.c.l.b16 %v5933
    %v6015 = vunpack.c.h.b16 %v5933
    %v6016 = vunpack.c.l.b16 %v5934
    %v6017 = vunpack.c.h.b16 %v5934
    %v6018 = vunpack.c.l.b16 %v5935
    %v6019 = vunpack.c.h.b16 %v5935
    %v6020 = vunpack.c.l.b16 %v5936
    %v6021 = vunpack.c.h.b16 %v5936
    %v6022 = vunpack.c.l.b16 %v5937
    %v6023 = vunpack.c.h.b16 %v5937
    %v6024 = vunpack.c.l.b16 %v5938
    %v6025 = vunpack.c.h.b16 %v5938
    %v6026 = vunpack.c.l.b16 %v5939
    %v6027 = vunpack.c.h.b16 %v5939
    %v6028 = vunpack.c.l.b16 %v5940
    %v6029 = vunpack.c.h.b16 %v5940
    %v6030 = vunpack.c.l.b16 %v5941
    %v6031 = vunpack.c.h.b16 %v5941
    %v6032 = vunpack.c.l.b16 %v5942
    %v6033 = vunpack.c.h.b16 %v5942
    %v6034 = vunpack.c.l.b16 %v5943
    %v6035 = vunpack.c.h.b16 %v5943
    %v6036 = vunpack.c.l.b16 %v5944
    %v6037 = vunpack.c.h.b16 %v5944
    %v6038 = vunpack.c.l.b16 %v5945
    %v6039 = vunpack.c.h.b16 %v5945
    %v6040 = vunpack.c.l.b16 %v5946
    %v6041 = vunpack.c.h.b16 %v5946
    %v6042 = vunpack.c.l.b16 %v5947
    %v6043 = vunpack.c.h.b16 %v5947
    %v6044 = vpack.c.b16 %v5982, %v5980
    %v6045 = vpack.c.b16 %v5983, %v5981
    %v6046 = vpack.c.b16 %v5986, %v5984
    %v6047 = vpack.c.b16 %v5987, %v5985
    %v6048 = vpack.c.b16 %v5990, %v5988
    %v6049 = vpack.c.b16 %v5991, %v5989
    %v6050 = vpack.c.b16 %v5994, %v5992
    %v6051 = vpack.c.b16 %v5995, %v5993
    %v6052 = vpack.c.b16 %v5998, %v5996
    %v6053 = vpack.c.b16 %v5999, %v5997
    %v6054 = vpack.c.b16 %v6002, %v6000
    %v6055 = vpack.c.b16 %v6003, %v6001
    %v6056 = vpack.c.b16 %v6006, %v6004
    %v6057 = vpack.c.b16 %v6007, %v6005
    %v6058 = vpack.c.b16 %v6010, %v6008
    %v6059 = vpack.c.b16 %v6011, %v6009
    %v6060 = vpack.c.b16 %v6014, %v6012
    %v6061 = vpack.c.b16 %v6015, %v6013
    %v6062 = vpack.c.b16 %v6018, %v6016
    %v6063 = vpack.c.b16 %v6019, %v6017
    %v6064 = vpack.c.b16 %v6022, %v6020
    %v6065 = vpack.c.b16 %v6023, %v6021
    %v6066 = vpack.c.b16 %v6026, %v6024
    %v6067 = vpack.c.b16 %v6027, %v6025
    %v6068 = vpack.c.b16 %v6030, %v6028
    %v6069 = vpack.c.b16 %v6031, %v6029
    %v6070 = vpack.c.b16 %v6034, %v6032
    %v6071 = vpack.c.b16 %v6035, %v6033
    %v6072 = vpack.c.b16 %v6038, %v6036
    %v6073 = vpack.c.b16 %v6039, %v6037
    %v6074 = vpack.c.b16 %v6042, %v6040
    %v6075 = vpack.c.b16 %v6043, %v6041
    %6108 = vmatprep.subr.bf16.mxu0 %v6045
    %6109 = vmatpush1.bf16.msra.mxu0 %v6044
    %6110 = vmatprep.subr.bf16.mxu0 %v6047
    %6111 = vmatpush1.bf16.msra.mxu0 %v6046
    %6112 = vmatprep.subr.bf16.mxu0 %v6049
    %6113 = vmatpush1.bf16.msra.mxu0 %v6048
    %6114 = vmatprep.subr.bf16.mxu0 %v6051
    %6115 = vmatpush1.bf16.msra.mxu0 %v6050
    %6116 = vmatprep.subr.bf16.mxu0 %v6053
    %6117 = vmatpush1.bf16.msra.mxu0 %v6052
    %6118 = vmatprep.subr.bf16.mxu0 %v6055
    %6119 = vmatpush1.bf16.msra.mxu0 %v6054
    %6120 = vmatprep.subr.bf16.mxu0 %v6057
    %6121 = vmatpush1.bf16.msra.mxu0 %v6056
    %6122 = vmatprep.subr.bf16.mxu0 %v6059
    %6123 = vmatpush1.bf16.msra.mxu0 %v6058
    %6124 = vmatprep.subr.bf16.mxu0 %v6061
    %6125 = vmatpush1.bf16.msra.mxu0 %v6060
    %6126 = vmatprep.subr.bf16.mxu0 %v6063
    %6127 = vmatpush1.bf16.msra.mxu0 %v6062
    %6128 = vmatprep.subr.bf16.mxu0 %v6065
    %6129 = vmatpush1.bf16.msra.mxu0 %v6064
    %6130 = vmatprep.subr.bf16.mxu0 %v6067
    %6131 = vmatpush1.bf16.msra.mxu0 %v6066
    %6132 = vmatprep.subr.bf16.mxu0 %v6069
    %6133 = vmatpush1.bf16.msra.mxu0 %v6068
    %6134 = vmatprep.subr.bf16.mxu0 %v6071
    %6135 = vmatpush1.bf16.msra.mxu0 %v6070
    %6136 = vmatprep.subr.bf16.mxu0 %v6073
    %6137 = vmatpush1.bf16.msra.mxu0 %v6072
    %6138 = vmatprep.subr.bf16.mxu0 %v6075
    %6139 = vmatpush1.bf16.msra.mxu0 %v6074
    %6140 = vmatprep.mubr.bf16.mxu0 %v5914
    %6141 = vmatmul.mubr.bf16.gmra.mrb[0].mxu0 %v5913
    %v6142 = vpop.f32.mrb[0].mxu0
    %v6143 = vadd.f32 0.0, %v6142
    %v6144 = vpop.f32.mrb[0].mxu0
    %v6145 = vadd.f32 0.0, %v6144
    %v6146 = vpop.f32.mrb[0].mxu0
    %v6147 = vadd.f32 0.0, %v6146
    %v6148 = vpop.f32.mrb[0].mxu0
    %v6149 = vadd.f32 0.0, %v6148
    %6150 = vdwg.mxu0
    %v6151 = vadd.f32 %v4596, %v6143
    %v6152 = vadd.f32 %v4597, %v6145
    %v6153 = vadd.f32 %v4598, %v6147
    %v6154 = vadd.f32 %v4599, %v6149
    %s6155 = scalar_lea.vmem %s11, 2
    %v6156 = vld [vmem:[%s6155] sm:$0x3]
    %v6158 = vlaneseq
    %v6159 = vshrl.u32 %v6158, 7
    %v6160 = vsub.s32 0, %v6159
    %v6161 = vrot.slane %v6156, %v6160
    %v6162 = vlaneseq
    %v6163 = vshrl.u32 %v6162, 7
    %v6164 = vsub.s32 1, %v6163
    %v6165 = vrot.slane %v6156, %v6164
    %v6168 = vadd.f32 %v6151, %v6161
    %v6169 = vadd.f32 %v6152, %v6165
    %v6170 = vadd.f32 %v6153, %v6161
    %v6171 = vadd.f32 %v6154, %v6165
    %s6172 = scalar_lea.vmem %s12, 2
    %v6173 = vld [vmem:[%s6172] sm:$0x3]
    %s6174 = scalar_lea.vmem %s13, 2
    %v6175 = vld [vmem:[%s6174] sm:$0x3]
    %v6176 = vadd.f32 %v6168, %v6169
    %6177 = vadd.xlane.f32.xlu0 %v6176
    %v6178 = vpop.xlane.xlu0 %6177
    %v6179 = vadd.f32 %v6170, %v6171
    %6180 = vadd.xlane.f32.xlu0 %v6179
    %v6181 = vpop.xlane.xlu0 %6180
    %v6182 = vmul.f32 %v6178, %v829
    %v6183 = vmul.f32 %v6181, %v829
    %v6184 = vsub.f32 %v6168, %v6182
    %v6185 = vsub.f32 %v6169, %v6182
    %v6186 = vsub.f32 %v6170, %v6183
    %v6187 = vsub.f32 %v6171, %v6183
    %v6188 = vmul.f32 %v6184, %v6184
    %v6189 = vmul.f32 %v6185, %v6185
    %v6190 = vmul.f32 %v6186, %v6186
    %v6191 = vmul.f32 %v6187, %v6187
    %v6192 = vadd.f32 %v6188, %v6189
    %6193 = vadd.xlane.f32.xlu0 %v6192
    %v6194 = vpop.xlane.xlu0 %6193
    %v6195 = vadd.f32 %v6190, %v6191
    %6196 = vadd.xlane.f32.xlu0 %v6195
    %v6197 = vpop.xlane.xlu0 %6196
    %v6198 = vmul.f32 %v6194, %v829
    %v6199 = vmul.f32 %v6197, %v829
    %v6200 = vadd.f32 %v6198, 1e-05
    %v6201 = vadd.f32 %v6199, 1e-05
    %v6202 = vrsqrt.pop %v6200
    %v6203 = vrsqrt.pop %v6201
    %v6204 = vmul.f32 %v6184, %v6202
    %v6205 = vmul.f32 %v6185, %v6202
    %v6206 = vmul.f32 %v6186, %v6203
    %v6207 = vmul.f32 %v6187, %v6203
    %v6209 = vlaneseq
    %v6210 = vshrl.u32 %v6209, 7
    %v6211 = vsub.s32 0, %v6210
    %v6212 = vrot.slane %v6173, %v6211
    %v6213 = vlaneseq
    %v6214 = vshrl.u32 %v6213, 7
    %v6215 = vsub.s32 1, %v6214
    %v6216 = vrot.slane %v6173, %v6215
    %v6219 = vmul.f32 %v6204, %v6212
    %v6220 = vmul.f32 %v6205, %v6216
    %v6221 = vmul.f32 %v6206, %v6212
    %v6222 = vmul.f32 %v6207, %v6216
    %v6224 = vlaneseq
    %v6225 = vshrl.u32 %v6224, 7
    %v6226 = vsub.s32 0, %v6225
    %v6227 = vrot.slane %v6175, %v6226
    %v6228 = vlaneseq
    %v6229 = vshrl.u32 %v6228, 7
    %v6230 = vsub.s32 1, %v6229
    %v6231 = vrot.slane %v6175, %v6230
    %v6234 = vadd.f32 %v6219, %v6227
    %v6235 = vadd.f32 %v6220, %v6231
    %v6236 = vadd.f32 %v6221, %v6227
    %v6237 = vadd.f32 %v6222, %v6231
    %v6238 = vpack.c.bf16 %v6236, %v6234
    %v6239 = vpack.c.bf16 %v6237, %v6235
    %s6240 = scalar_lea.vmem %s14, 1024
    %v6241 = vld [vmem:[%s6240] sm:$0xff]
    %v6242 = vld [vmem:[%s6240 + $0x8] sm:$0xff]
    %v6243 = vld [vmem:[%s6240 + $0x10] sm:$0xff]
    %v6244 = vld [vmem:[%s6240 + $0x18] sm:$0xff]
    %v6245 = vld [vmem:[%s6240 + $0x20] sm:$0xff]
    %v6246 = vld [vmem:[%s6240 + $0x28] sm:$0xff]
    %v6247 = vld [vmem:[%s6240 + $0x30] sm:$0xff]
    %v6248 = vld [vmem:[%s6240 + $0x38] sm:$0xff]
    %v6249 = vld [vmem:[%s6240 + $0x40] sm:$0xff]
    %v6250 = vld [vmem:[%s6240 + $0x48] sm:$0xff]
    %v6251 = vld [vmem:[%s6240 + $0x50] sm:$0xff]
    %v6252 = vld [vmem:[%s6240 + $0x58] sm:$0xff]
    %v6253 = vld [vmem:[%s6240 + $0x60] sm:$0xff]
    %v6254 = vld [vmem:[%s6240 + $0x68] sm:$0xff]
    %v6255 = vld [vmem:[%s6240 + $0x70] sm:$0xff]
    %v6256 = vld [vmem:[%s6240 + $0x78] sm:$0xff]
    %v6257 = vld [vmem:[%s6240 + $0x80] sm:$0xff]
    %v6258 = vld [vmem:[%s6240 + $0x88] sm:$0xff]
    %v6259 = vld [vmem:[%s6240 + $0x90] sm:$0xff]
    %v6260 = vld [vmem:[%s6240 + $0x98] sm:$0xff]
    %v6261 = vld [vmem:[%s6240 + $0xa0] sm:$0xff]
    %v6262 = vld [vmem:[%s6240 + $0xa8] sm:$0xff]
    %v6263 = vld [vmem:[%s6240 + $0xb0] sm:$0xff]
    %v6264 = vld [vmem:[%s6240 + $0xb8] sm:$0xff]
    %v6265 = vld [vmem:[%s6240 + $0xc0] sm:$0xff]
    %v6266 = vld [vmem:[%s6240 + $0xc8] sm:$0xff]
    %v6267 = vld [vmem:[%s6240 + $0xd0] sm:$0xff]
    %v6268 = vld [vmem:[%s6240 + $0xd8] sm:$0xff]
    %v6269 = vld [vmem:[%s6240 + $0xe0] sm:$0xff]
    %v6270 = vld [vmem:[%s6240 + $0xe8] sm:$0xff]
    %v6271 = vld [vmem:[%s6240 + $0xf0] sm:$0xff]
    %v6272 = vld [vmem:[%s6240 + $0xf8] sm:$0xff]
    %v6273 = vld [vmem:[%s6240 + $0x100] sm:$0xff]
    %v6274 = vld [vmem:[%s6240 + $0x108] sm:$0xff]
    %v6275 = vld [vmem:[%s6240 + $0x110] sm:$0xff]
    %v6276 = vld [vmem:[%s6240 + $0x118] sm:$0xff]
    %v6277 = vld [vmem:[%s6240 + $0x120] sm:$0xff]
    %v6278 = vld [vmem:[%s6240 + $0x128] sm:$0xff]
    %v6279 = vld [vmem:[%s6240 + $0x130] sm:$0xff]
    %v6280 = vld [vmem:[%s6240 + $0x138] sm:$0xff]
    %v6281 = vld [vmem:[%s6240 + $0x140] sm:$0xff]
    %v6282 = vld [vmem:[%s6240 + $0x148] sm:$0xff]
    %v6283 = vld [vmem:[%s6240 + $0x150] sm:$0xff]
    %v6284 = vld [vmem:[%s6240 + $0x158] sm:$0xff]
    %v6285 = vld [vmem:[%s6240 + $0x160] sm:$0xff]
    %v6286 = vld [vmem:[%s6240 + $0x168] sm:$0xff]
    %v6287 = vld [vmem:[%s6240 + $0x170] sm:$0xff]
    %v6288 = vld [vmem:[%s6240 + $0x178] sm:$0xff]
    %v6289 = vld [vmem:[%s6240 + $0x180] sm:$0xff]
    %v6290 = vld [vmem:[%s6240 + $0x188] sm:$0xff]
    %v6291 = vld [vmem:[%s6240 + $0x190] sm:$0xff]
    %v6292 = vld [vmem:[%s6240 + $0x198] sm:$0xff]
    %v6293 = vld [vmem:[%s6240 + $0x1a0] sm:$0xff]
    %v6294 = vld [vmem:[%s6240 + $0x1a8] sm:$0xff]
    %v6295 = vld [vmem:[%s6240 + $0x1b0] sm:$0xff]
    %v6296 = vld [vmem:[%s6240 + $0x1b8] sm:$0xff]
    %v6297 = vld [vmem:[%s6240 + $0x1c0] sm:$0xff]
    %v6298 = vld [vmem:[%s6240 + $0x1c8] sm:$0xff]
    %v6299 = vld [vmem:[%s6240 + $0x1d0] sm:$0xff]
    %v6300 = vld [vmem:[%s6240 + $0x1d8] sm:$0xff]
    %v6301 = vld [vmem:[%s6240 + $0x1e0] sm:$0xff]
    %v6302 = vld [vmem:[%s6240 + $0x1e8] sm:$0xff]
    %v6303 = vld [vmem:[%s6240 + $0x1f0] sm:$0xff]
    %v6304 = vld [vmem:[%s6240 + $0x1f8] sm:$0xff]
    %v6305 = vld [vmem:[%s6240 + $0x200] sm:$0xff]
    %v6306 = vld [vmem:[%s6240 + $0x208] sm:$0xff]
    %v6307 = vld [vmem:[%s6240 + $0x210] sm:$0xff]
    %v6308 = vld [vmem:[%s6240 + $0x218] sm:$0xff]
    %v6309 = vld [vmem:[%s6240 + $0x220] sm:$0xff]
    %v6310 = vld [vmem:[%s6240 + $0x228] sm:$0xff]
    %v6311 = vld [vmem:[%s6240 + $0x230] sm:$0xff]
    %v6312 = vld [vmem:[%s6240 + $0x238] sm:$0xff]
    %v6313 = vld [vmem:[%s6240 + $0x240] sm:$0xff]
    %v6314 = vld [vmem:[%s6240 + $0x248] sm:$0xff]
    %v6315 = vld [vmem:[%s6240 + $0x250] sm:$0xff]
    %v6316 = vld [vmem:[%s6240 + $0x258] sm:$0xff]
    %v6317 = vld [vmem:[%s6240 + $0x260] sm:$0xff]
    %v6318 = vld [vmem:[%s6240 + $0x268] sm:$0xff]
    %v6319 = vld [vmem:[%s6240 + $0x270] sm:$0xff]
    %v6320 = vld [vmem:[%s6240 + $0x278] sm:$0xff]
    %v6321 = vld [vmem:[%s6240 + $0x280] sm:$0xff]
    %v6322 = vld [vmem:[%s6240 + $0x288] sm:$0xff]
    %v6323 = vld [vmem:[%s6240 + $0x290] sm:$0xff]
    %v6324 = vld [vmem:[%s6240 + $0x298] sm:$0xff]
    %v6325 = vld [vmem:[%s6240 + $0x2a0] sm:$0xff]
    %v6326 = vld [vmem:[%s6240 + $0x2a8] sm:$0xff]
    %v6327 = vld [vmem:[%s6240 + $0x2b0] sm:$0xff]
    %v6328 = vld [vmem:[%s6240 + $0x2b8] sm:$0xff]
    %v6329 = vld [vmem:[%s6240 + $0x2c0] sm:$0xff]
    %v6330 = vld [vmem:[%s6240 + $0x2c8] sm:$0xff]
    %v6331 = vld [vmem:[%s6240 + $0x2d0] sm:$0xff]
    %v6332 = vld [vmem:[%s6240 + $0x2d8] sm:$0xff]
    %v6333 = vld [vmem:[%s6240 + $0x2e0] sm:$0xff]
    %v6334 = vld [vmem:[%s6240 + $0x2e8] sm:$0xff]
    %v6335 = vld [vmem:[%s6240 + $0x2f0] sm:$0xff]
    %v6336 = vld [vmem:[%s6240 + $0x2f8] sm:$0xff]
    %v6337 = vld [vmem:[%s6240 + $0x300] sm:$0xff]
    %v6338 = vld [vmem:[%s6240 + $0x308] sm:$0xff]
    %v6339 = vld [vmem:[%s6240 + $0x310] sm:$0xff]
    %v6340 = vld [vmem:[%s6240 + $0x318] sm:$0xff]
    %v6341 = vld [vmem:[%s6240 + $0x320] sm:$0xff]
    %v6342 = vld [vmem:[%s6240 + $0x328] sm:$0xff]
    %v6343 = vld [vmem:[%s6240 + $0x330] sm:$0xff]
    %v6344 = vld [vmem:[%s6240 + $0x338] sm:$0xff]
    %v6345 = vld [vmem:[%s6240 + $0x340] sm:$0xff]
    %v6346 = vld [vmem:[%s6240 + $0x348] sm:$0xff]
    %v6347 = vld [vmem:[%s6240 + $0x350] sm:$0xff]
    %v6348 = vld [vmem:[%s6240 + $0x358] sm:$0xff]
    %v6349 = vld [vmem:[%s6240 + $0x360] sm:$0xff]
    %v6350 = vld [vmem:[%s6240 + $0x368] sm:$0xff]
    %v6351 = vld [vmem:[%s6240 + $0x370] sm:$0xff]
    %v6352 = vld [vmem:[%s6240 + $0x378] sm:$0xff]
    %v6353 = vld [vmem:[%s6240 + $0x380] sm:$0xff]
    %v6354 = vld [vmem:[%s6240 + $0x388] sm:$0xff]
    %v6355 = vld [vmem:[%s6240 + $0x390] sm:$0xff]
    %v6356 = vld [vmem:[%s6240 + $0x398] sm:$0xff]
    %v6357 = vld [vmem:[%s6240 + $0x3a0] sm:$0xff]
    %v6358 = vld [vmem:[%s6240 + $0x3a8] sm:$0xff]
    %v6359 = vld [vmem:[%s6240 + $0x3b0] sm:$0xff]
    %v6360 = vld [vmem:[%s6240 + $0x3b8] sm:$0xff]
    %v6361 = vld [vmem:[%s6240 + $0x3c0] sm:$0xff]
    %v6362 = vld [vmem:[%s6240 + $0x3c8] sm:$0xff]
    %v6363 = vld [vmem:[%s6240 + $0x3d0] sm:$0xff]
    %v6364 = vld [vmem:[%s6240 + $0x3d8] sm:$0xff]
    %v6365 = vld [vmem:[%s6240 + $0x3e0] sm:$0xff]
    %v6366 = vld [vmem:[%s6240 + $0x3e8] sm:$0xff]
    %v6367 = vld [vmem:[%s6240 + $0x3f0] sm:$0xff]
    %v6368 = vld [vmem:[%s6240 + $0x3f8] sm:$0xff]
    %s6369 = scalar_lea.vmem %s15, 8
    %v6370 = vld [vmem:[%s6369] sm:$0xff]
    %v6372 = vlaneseq
    %v6373 = vshrl.u32 %v6372, 7
    %v6374 = vsub.s32 0, %v6373
    %v6375 = vrot.slane %v6370, %v6374
    %v6376 = vlaneseq
    %v6377 = vshrl.u32 %v6376, 7
    %v6378 = vsub.s32 1, %v6377
    %v6379 = vrot.slane %v6370, %v6378
    %v6380 = vlaneseq
    %v6381 = vshrl.u32 %v6380, 7
    %v6382 = vsub.s32 2, %v6381
    %v6383 = vrot.slane %v6370, %v6382
    %v6384 = vlaneseq
    %v6385 = vshrl.u32 %v6384, 7
    %v6386 = vsub.s32 3, %v6385
    %v6387 = vrot.slane %v6370, %v6386
    %v6388 = vlaneseq
    %v6389 = vshrl.u32 %v6388, 7
    %v6390 = vsub.s32 4, %v6389
    %v6391 = vrot.slane %v6370, %v6390
    %v6392 = vlaneseq
    %v6393 = vshrl.u32 %v6392, 7
    %v6394 = vsub.s32 5, %v6393
    %v6395 = vrot.slane %v6370, %v6394
    %v6396 = vlaneseq
    %v6397 = vshrl.u32 %v6396, 7
    %v6398 = vsub.s32 6, %v6397
    %v6399 = vrot.slane %v6370, %v6398
    %v6400 = vlaneseq
    %v6401 = vshrl.u32 %v6400, 7
    %v6402 = vsub.s32 7, %v6401
    %v6403 = vrot.slane %v6370, %v6402
    %v6540 = vunpack.c.l.b16 %v6241
    %v6541 = vunpack.c.h.b16 %v6241
    %v6542 = vunpack.c.l.b16 %v6242
    %v6543 = vunpack.c.h.b16 %v6242
    %v6544 = vunpack.c.l.b16 %v6243
    %v6545 = vunpack.c.h.b16 %v6243
    %v6546 = vunpack.c.l.b16 %v6244
    %v6547 = vunpack.c.h.b16 %v6244
    %v6548 = vunpack.c.l.b16 %v6245
    %v6549 = vunpack.c.h.b16 %v6245
    %v6550 = vunpack.c.l.b16 %v6246
    %v6551 = vunpack.c.h.b16 %v6246
    %v6552 = vunpack.c.l.b16 %v6247
    %v6553 = vunpack.c.h.b16 %v6247
    %v6554 = vunpack.c.l.b16 %v6248
    %v6555 = vunpack.c.h.b16 %v6248
    %v6556 = vunpack.c.l.b16 %v6249
    %v6557 = vunpack.c.h.b16 %v6249
    %v6558 = vunpack.c.l.b16 %v6250
    %v6559 = vunpack.c.h.b16 %v6250
    %v6560 = vunpack.c.l.b16 %v6251
    %v6561 = vunpack.c.h.b16 %v6251
    %v6562 = vunpack.c.l.b16 %v6252
    %v6563 = vunpack.c.h.b16 %v6252
    %v6564 = vunpack.c.l.b16 %v6253
    %v6565 = vunpack.c.h.b16 %v6253
    %v6566 = vunpack.c.l.b16 %v6254
    %v6567 = vunpack.c.h.b16 %v6254
    %v6568 = vunpack.c.l.b16 %v6255
    %v6569 = vunpack.c.h.b16 %v6255
    %v6570 = vunpack.c.l.b16 %v6256
    %v6571 = vunpack.c.h.b16 %v6256
    %v6572 = vunpack.c.l.b16 %v6257
    %v6573 = vunpack.c.h.b16 %v6257
    %v6574 = vunpack.c.l.b16 %v6258
    %v6575 = vunpack.c.h.b16 %v6258
    %v6576 = vunpack.c.l.b16 %v6259
    %v6577 = vunpack.c.h.b16 %v6259
    %v6578 = vunpack.c.l.b16 %v6260
    %v6579 = vunpack.c.h.b16 %v6260
    %v6580 = vunpack.c.l.b16 %v6261
    %v6581 = vunpack.c.h.b16 %v6261
    %v6582 = vunpack.c.l.b16 %v6262
    %v6583 = vunpack.c.h.b16 %v6262
    %v6584 = vunpack.c.l.b16 %v6263
    %v6585 = vunpack.c.h.b16 %v6263
    %v6586 = vunpack.c.l.b16 %v6264
    %v6587 = vunpack.c.h.b16 %v6264
    %v6588 = vunpack.c.l.b16 %v6265
    %v6589 = vunpack.c.h.b16 %v6265
    %v6590 = vunpack.c.l.b16 %v6266
    %v6591 = vunpack.c.h.b16 %v6266
    %v6592 = vunpack.c.l.b16 %v6267
    %v6593 = vunpack.c.h.b16 %v6267
    %v6594 = vunpack.c.l.b16 %v6268
    %v6595 = vunpack.c.h.b16 %v6268
    %v6596 = vunpack.c.l.b16 %v6269
    %v6597 = vunpack.c.h.b16 %v6269
    %v6598 = vunpack.c.l.b16 %v6270
    %v6599 = vunpack.c.h.b16 %v6270
    %v6600 = vunpack.c.l.b16 %v6271
    %v6601 = vunpack.c.h.b16 %v6271
    %v6602 = vunpack.c.l.b16 %v6272
    %v6603 = vunpack.c.h.b16 %v6272
    %v6604 = vunpack.c.l.b16 %v6273
    %v6605 = vunpack.c.h.b16 %v6273
    %v6606 = vunpack.c.l.b16 %v6274
    %v6607 = vunpack.c.h.b16 %v6274
    %v6608 = vunpack.c.l.b16 %v6275
    %v6609 = vunpack.c.h.b16 %v6275
    %v6610 = vunpack.c.l.b16 %v6276
    %v6611 = vunpack.c.h.b16 %v6276
    %v6612 = vunpack.c.l.b16 %v6277
    %v6613 = vunpack.c.h.b16 %v6277
    %v6614 = vunpack.c.l.b16 %v6278
    %v6615 = vunpack.c.h.b16 %v6278
    %v6616 = vunpack.c.l.b16 %v6279
    %v6617 = vunpack.c.h.b16 %v6279
    %v6618 = vunpack.c.l.b16 %v6280
    %v6619 = vunpack.c.h.b16 %v6280
    %v6620 = vunpack.c.l.b16 %v6281
    %v6621 = vunpack.c.h.b16 %v6281
    %v6622 = vunpack.c.l.b16 %v6282
    %v6623 = vunpack.c.h.b16 %v6282
    %v6624 = vunpack.c.l.b16 %v6283
    %v6625 = vunpack.c.h.b16 %v6283
    %v6626 = vunpack.c.l.b16 %v6284
    %v6627 = vunpack.c.h.b16 %v6284
    %v6628 = vunpack.c.l.b16 %v6285
    %v6629 = vunpack.c.h.b16 %v6285
    %v6630 = vunpack.c.l.b16 %v6286
    %v6631 = vunpack.c.h.b16 %v6286
    %v6632 = vunpack.c.l.b16 %v6287
    %v6633 = vunpack.c.h.b16 %v6287
    %v6634 = vunpack.c.l.b16 %v6288
    %v6635 = vunpack.c.h.b16 %v6288
    %v6636 = vunpack.c.l.b16 %v6289
    %v6637 = vunpack.c.h.b16 %v6289
    %v6638 = vunpack.c.l.b16 %v6290
    %v6639 = vunpack.c.h.b16 %v6290
    %v6640 = vunpack.c.l.b16 %v6291
    %v6641 = vunpack.c.h.b16 %v6291
    %v6642 = vunpack.c.l.b16 %v6292
    %v6643 = vunpack.c.h.b16 %v6292
    %v6644 = vunpack.c.l.b16 %v6293
    %v6645 = vunpack.c.h.b16 %v6293
    %v6646 = vunpack.c.l.b16 %v6294
    %v6647 = vunpack.c.h.b16 %v6294
    %v6648 = vunpack.c.l.b16 %v6295
    %v6649 = vunpack.c.h.b16 %v6295
    %v6650 = vunpack.c.l.b16 %v6296
    %v6651 = vunpack.c.h.b16 %v6296
    %v6652 = vunpack.c.l.b16 %v6297
    %v6653 = vunpack.c.h.b16 %v6297
    %v6654 = vunpack.c.l.b16 %v6298
    %v6655 = vunpack.c.h.b16 %v6298
    %v6656 = vunpack.c.l.b16 %v6299
    %v6657 = vunpack.c.h.b16 %v6299
    %v6658 = vunpack.c.l.b16 %v6300
    %v6659 = vunpack.c.h.b16 %v6300
    %v6660 = vunpack.c.l.b16 %v6301
    %v6661 = vunpack.c.h.b16 %v6301
    %v6662 = vunpack.c.l.b16 %v6302
    %v6663 = vunpack.c.h.b16 %v6302
    %v6664 = vunpack.c.l.b16 %v6303
    %v6665 = vunpack.c.h.b16 %v6303
    %v6666 = vunpack.c.l.b16 %v6304
    %v6667 = vunpack.c.h.b16 %v6304
    %v6668 = vunpack.c.l.b16 %v6305
    %v6669 = vunpack.c.h.b16 %v6305
    %v6670 = vunpack.c.l.b16 %v6306
    %v6671 = vunpack.c.h.b16 %v6306
    %v6672 = vunpack.c.l.b16 %v6307
    %v6673 = vunpack.c.h.b16 %v6307
    %v6674 = vunpack.c.l.b16 %v6308
    %v6675 = vunpack.c.h.b16 %v6308
    %v6676 = vunpack.c.l.b16 %v6309
    %v6677 = vunpack.c.h.b16 %v6309
    %v6678 = vunpack.c.l.b16 %v6310
    %v6679 = vunpack.c.h.b16 %v6310
    %v6680 = vunpack.c.l.b16 %v6311
    %v6681 = vunpack.c.h.b16 %v6311
    %v6682 = vunpack.c.l.b16 %v6312
    %v6683 = vunpack.c.h.b16 %v6312
    %v6684 = vunpack.c.l.b16 %v6313
    %v6685 = vunpack.c.h.b16 %v6313
    %v6686 = vunpack.c.l.b16 %v6314
    %v6687 = vunpack.c.h.b16 %v6314
    %v6688 = vunpack.c.l.b16 %v6315
    %v6689 = vunpack.c.h.b16 %v6315
    %v6690 = vunpack.c.l.b16 %v6316
    %v6691 = vunpack.c.h.b16 %v6316
    %v6692 = vunpack.c.l.b16 %v6317
    %v6693 = vunpack.c.h.b16 %v6317
    %v6694 = vunpack.c.l.b16 %v6318
    %v6695 = vunpack.c.h.b16 %v6318
    %v6696 = vunpack.c.l.b16 %v6319
    %v6697 = vunpack.c.h.b16 %v6319
    %v6698 = vunpack.c.l.b16 %v6320
    %v6699 = vunpack.c.h.b16 %v6320
    %v6700 = vunpack.c.l.b16 %v6321
    %v6701 = vunpack.c.h.b16 %v6321
    %v6702 = vunpack.c.l.b16 %v6322
    %v6703 = vunpack.c.h.b16 %v6322
    %v6704 = vunpack.c.l.b16 %v6323
    %v6705 = vunpack.c.h.b16 %v6323
    %v6706 = vunpack.c.l.b16 %v6324
    %v6707 = vunpack.c.h.b16 %v6324
    %v6708 = vunpack.c.l.b16 %v6325
    %v6709 = vunpack.c.h.b16 %v6325
    %v6710 = vunpack.c.l.b16 %v6326
    %v6711 = vunpack.c.h.b16 %v6326
    %v6712 = vunpack.c.l.b16 %v6327
    %v6713 = vunpack.c.h.b16 %v6327
    %v6714 = vunpack.c.l.b16 %v6328
    %v6715 = vunpack.c.h.b16 %v6328
    %v6716 = vunpack.c.l.b16 %v6329
    %v6717 = vunpack.c.h.b16 %v6329
    %v6718 = vunpack.c.l.b16 %v6330
    %v6719 = vunpack.c.h.b16 %v6330
    %v6720 = vunpack.c.l.b16 %v6331
    %v6721 = vunpack.c.h.b16 %v6331
    %v6722 = vunpack.c.l.b16 %v6332
    %v6723 = vunpack.c.h.b16 %v6332
    %v6724 = vunpack.c.l.b16 %v6333
    %v6725 = vunpack.c.h.b16 %v6333
    %v6726 = vunpack.c.l.b16 %v6334
    %v6727 = vunpack.c.h.b16 %v6334
    %v6728 = vunpack.c.l.b16 %v6335
    %v6729 = vunpack.c.h.b16 %v6335
    %v6730 = vunpack.c.l.b16 %v6336
    %v6731 = vunpack.c.h.b16 %v6336
    %v6732 = vunpack.c.l.b16 %v6337
    %v6733 = vunpack.c.h.b16 %v6337
    %v6734 = vunpack.c.l.b16 %v6338
    %v6735 = vunpack.c.h.b16 %v6338
    %v6736 = vunpack.c.l.b16 %v6339
    %v6737 = vunpack.c.h.b16 %v6339
    %v6738 = vunpack.c.l.b16 %v6340
    %v6739 = vunpack.c.h.b16 %v6340
    %v6740 = vunpack.c.l.b16 %v6341
    %v6741 = vunpack.c.h.b16 %v6341
    %v6742 = vunpack.c.l.b16 %v6342
    %v6743 = vunpack.c.h.b16 %v6342
    %v6744 = vunpack.c.l.b16 %v6343
    %v6745 = vunpack.c.h.b16 %v6343
    %v6746 = vunpack.c.l.b16 %v6344
    %v6747 = vunpack.c.h.b16 %v6344
    %v6748 = vunpack.c.l.b16 %v6345
    %v6749 = vunpack.c.h.b16 %v6345
    %v6750 = vunpack.c.l.b16 %v6346
    %v6751 = vunpack.c.h.b16 %v6346
    %v6752 = vunpack.c.l.b16 %v6347
    %v6753 = vunpack.c.h.b16 %v6347
    %v6754 = vunpack.c.l.b16 %v6348
    %v6755 = vunpack.c.h.b16 %v6348
    %v6756 = vunpack.c.l.b16 %v6349
    %v6757 = vunpack.c.h.b16 %v6349
    %v6758 = vunpack.c.l.b16 %v6350
    %v6759 = vunpack.c.h.b16 %v6350
    %v6760 = vunpack.c.l.b16 %v6351
    %v6761 = vunpack.c.h.b16 %v6351
    %v6762 = vunpack.c.l.b16 %v6352
    %v6763 = vunpack.c.h.b16 %v6352
    %v6764 = vunpack.c.l.b16 %v6353
    %v6765 = vunpack.c.h.b16 %v6353
    %v6766 = vunpack.c.l.b16 %v6354
    %v6767 = vunpack.c.h.b16 %v6354
    %v6768 = vunpack.c.l.b16 %v6355
    %v6769 = vunpack.c.h.b16 %v6355
    %v6770 = vunpack.c.l.b16 %v6356
    %v6771 = vunpack.c.h.b16 %v6356
    %v6772 = vunpack.c.l.b16 %v6357
    %v6773 = vunpack.c.h.b16 %v6357
    %v6774 = vunpack.c.l.b16 %v6358
    %v6775 = vunpack.c.h.b16 %v6358
    %v6776 = vunpack.c.l.b16 %v6359
    %v6777 = vunpack.c.h.b16 %v6359
    %v6778 = vunpack.c.l.b16 %v6360
    %v6779 = vunpack.c.h.b16 %v6360
    %v6780 = vunpack.c.l.b16 %v6361
    %v6781 = vunpack.c.h.b16 %v6361
    %v6782 = vunpack.c.l.b16 %v6362
    %v6783 = vunpack.c.h.b16 %v6362
    %v6784 = vunpack.c.l.b16 %v6363
    %v6785 = vunpack.c.h.b16 %v6363
    %v6786 = vunpack.c.l.b16 %v6364
    %v6787 = vunpack.c.h.b16 %v6364
    %v6788 = vunpack.c.l.b16 %v6365
    %v6789 = vunpack.c.h.b16 %v6365
    %v6790 = vunpack.c.l.b16 %v6366
    %v6791 = vunpack.c.h.b16 %v6366
    %v6792 = vunpack.c.l.b16 %v6367
    %v6793 = vunpack.c.h.b16 %v6367
    %v6794 = vunpack.c.l.b16 %v6368
    %v6795 = vunpack.c.h.b16 %v6368
    %v6796 = vpack.c.b16 %v6548, %v6540
    %v6797 = vpack.c.b16 %v6549, %v6541
    %v6798 = vpack.c.b16 %v6550, %v6542
    %v6799 = vpack.c.b16 %v6551, %v6543
    %v6800 = vpack.c.b16 %v6552, %v6544
    %v6801 = vpack.c.b16 %v6553, %v6545
    %v6802 = vpack.c.b16 %v6554, %v6546
    %v6803 = vpack.c.b16 %v6555, %v6547
    %v6804 = vpack.c.b16 %v6564, %v6556
    %v6805 = vpack.c.b16 %v6565, %v6557
    %v6806 = vpack.c.b16 %v6566, %v6558
    %v6807 = vpack.c.b16 %v6567, %v6559
    %v6808 = vpack.c.b16 %v6568, %v6560
    %v6809 = vpack.c.b16 %v6569, %v6561
    %v6810 = vpack.c.b16 %v6570, %v6562
    %v6811 = vpack.c.b16 %v6571, %v6563
    %v6812 = vpack.c.b16 %v6580, %v6572
    %v6813 = vpack.c.b16 %v6581, %v6573
    %v6814 = vpack.c.b16 %v6582, %v6574
    %v6815 = vpack.c.b16 %v6583, %v6575
    %v6816 = vpack.c.b16 %v6584, %v6576
    %v6817 = vpack.c.b16 %v6585, %v6577
    %v6818 = vpack.c.b16 %v6586, %v6578
    %v6819 = vpack.c.b16 %v6587, %v6579
    %v6820 = vpack.c.b16 %v6596, %v6588
    %v6821 = vpack.c.b16 %v6597, %v6589
    %v6822 = vpack.c.b16 %v6598, %v6590
    %v6823 = vpack.c.b16 %v6599, %v6591
    %v6824 = vpack.c.b16 %v6600, %v6592
    %v6825 = vpack.c.b16 %v6601, %v6593
    %v6826 = vpack.c.b16 %v6602, %v6594
    %v6827 = vpack.c.b16 %v6603, %v6595
    %v6828 = vpack.c.b16 %v6612, %v6604
    %v6829 = vpack.c.b16 %v6613, %v6605
    %v6830 = vpack.c.b16 %v6614, %v6606
    %v6831 = vpack.c.b16 %v6615, %v6607
    %v6832 = vpack.c.b16 %v6616, %v6608
    %v6833 = vpack.c.b16 %v6617, %v6609
    %v6834 = vpack.c.b16 %v6618, %v6610
    %v6835 = vpack.c.b16 %v6619, %v6611
    %v6836 = vpack.c.b16 %v6628, %v6620
    %v6837 = vpack.c.b16 %v6629, %v6621
    %v6838 = vpack.c.b16 %v6630, %v6622
    %v6839 = vpack.c.b16 %v6631, %v6623
    %v6840 = vpack.c.b16 %v6632, %v6624
    %v6841 = vpack.c.b16 %v6633, %v6625
    %v6842 = vpack.c.b16 %v6634, %v6626
    %v6843 = vpack.c.b16 %v6635, %v6627
    %v6844 = vpack.c.b16 %v6644, %v6636
    %v6845 = vpack.c.b16 %v6645, %v6637
    %v6846 = vpack.c.b16 %v6646, %v6638
    %v6847 = vpack.c.b16 %v6647, %v6639
    %v6848 = vpack.c.b16 %v6648, %v6640
    %v6849 = vpack.c.b16 %v6649, %v6641
    %v6850 = vpack.c.b16 %v6650, %v6642
    %v6851 = vpack.c.b16 %v6651, %v6643
    %v6852 = vpack.c.b16 %v6660, %v6652
    %v6853 = vpack.c.b16 %v6661, %v6653
    %v6854 = vpack.c.b16 %v6662, %v6654
    %v6855 = vpack.c.b16 %v6663, %v6655
    %v6856 = vpack.c.b16 %v6664, %v6656
    %v6857 = vpack.c.b16 %v6665, %v6657
    %v6858 = vpack.c.b16 %v6666, %v6658
    %v6859 = vpack.c.b16 %v6667, %v6659
    %v6860 = vpack.c.b16 %v6676, %v6668
    %v6861 = vpack.c.b16 %v6677, %v6669
    %v6862 = vpack.c.b16 %v6678, %v6670
    %v6863 = vpack.c.b16 %v6679, %v6671
    %v6864 = vpack.c.b16 %v6680, %v6672
    %v6865 = vpack.c.b16 %v6681, %v6673
    %v6866 = vpack.c.b16 %v6682, %v6674
    %v6867 = vpack.c.b16 %v6683, %v6675
    %v6868 = vpack.c.b16 %v6692, %v6684
    %v6869 = vpack.c.b16 %v6693, %v6685
    %v6870 = vpack.c.b16 %v6694, %v6686
    %v6871 = vpack.c.b16 %v6695, %v6687
    %v6872 = vpack.c.b16 %v6696, %v6688
    %v6873 = vpack.c.b16 %v6697, %v6689
    %v6874 = vpack.c.b16 %v6698, %v6690
    %v6875 = vpack.c.b16 %v6699, %v6691
    %v6876 = vpack.c.b16 %v6708, %v6700
    %v6877 = vpack.c.b16 %v6709, %v6701
    %v6878 = vpack.c.b16 %v6710, %v6702
    %v6879 = vpack.c.b16 %v6711, %v6703
    %v6880 = vpack.c.b16 %v6712, %v6704
    %v6881 = vpack.c.b16 %v6713, %v6705
    %v6882 = vpack.c.b16 %v6714, %v6706
    %v6883 = vpack.c.b16 %v6715, %v6707
    %v6884 = vpack.c.b16 %v6724, %v6716
    %v6885 = vpack.c.b16 %v6725, %v6717
    %v6886 = vpack.c.b16 %v6726, %v6718
    %v6887 = vpack.c.b16 %v6727, %v6719
    %v6888 = vpack.c.b16 %v6728, %v6720
    %v6889 = vpack.c.b16 %v6729, %v6721
    %v6890 = vpack.c.b16 %v6730, %v6722
    %v6891 = vpack.c.b16 %v6731, %v6723
    %v6892 = vpack.c.b16 %v6740, %v6732
    %v6893 = vpack.c.b16 %v6741, %v6733
    %v6894 = vpack.c.b16 %v6742, %v6734
    %v6895 = vpack.c.b16 %v6743, %v6735
    %v6896 = vpack.c.b16 %v6744, %v6736
    %v6897 = vpack.c.b16 %v6745, %v6737
    %v6898 = vpack.c.b16 %v6746, %v6738
    %v6899 = vpack.c.b16 %v6747, %v6739
    %v6900 = vpack.c.b16 %v6756, %v6748
    %v6901 = vpack.c.b16 %v6757, %v6749
    %v6902 = vpack.c.b16 %v6758, %v6750
    %v6903 = vpack.c.b16 %v6759, %v6751
    %v6904 = vpack.c.b16 %v6760, %v6752
    %v6905 = vpack.c.b16 %v6761, %v6753
    %v6906 = vpack.c.b16 %v6762, %v6754
    %v6907 = vpack.c.b16 %v6763, %v6755
    %v6908 = vpack.c.b16 %v6772, %v6764
    %v6909 = vpack.c.b16 %v6773, %v6765
    %v6910 = vpack.c.b16 %v6774, %v6766
    %v6911 = vpack.c.b16 %v6775, %v6767
    %v6912 = vpack.c.b16 %v6776, %v6768
    %v6913 = vpack.c.b16 %v6777, %v6769
    %v6914 = vpack.c.b16 %v6778, %v6770
    %v6915 = vpack.c.b16 %v6779, %v6771
    %v6916 = vpack.c.b16 %v6788, %v6780
    %v6917 = vpack.c.b16 %v6789, %v6781
    %v6918 = vpack.c.b16 %v6790, %v6782
    %v6919 = vpack.c.b16 %v6791, %v6783
    %v6920 = vpack.c.b16 %v6792, %v6784
    %v6921 = vpack.c.b16 %v6793, %v6785
    %v6922 = vpack.c.b16 %v6794, %v6786
    %v6923 = vpack.c.b16 %v6795, %v6787
    %7052 = vmatprep.subr.bf16.mxu0 %v6797
    %7053 = vmatpush1.bf16.msra.mxu0 %v6796
    %7054 = vmatprep.subr.bf16.mxu0 %v6805
    %7055 = vmatpush1.bf16.msra.mxu0 %v6804
    %7056 = vmatprep.subr.bf16.mxu0 %v6813
    %7057 = vmatpush1.bf16.msra.mxu0 %v6812
    %7058 = vmatprep.subr.bf16.mxu0 %v6821
    %7059 = vmatpush1.bf16.msra.mxu0 %v6820
    %7060 = vmatprep.subr.bf16.mxu0 %v6829
    %7061 = vmatpush1.bf16.msra.mxu0 %v6828
    %7062 = vmatprep.subr.bf16.mxu0 %v6837
    %7063 = vmatpush1.bf16.msra.mxu0 %v6836
    %7064 = vmatprep.subr.bf16.mxu0 %v6845
    %7065 = vmatpush1.bf16.msra.mxu0 %v6844
    %7066 = vmatprep.subr.bf16.mxu0 %v6853
    %7067 = vmatpush1.bf16.msra.mxu0 %v6852
    %7068 = vmatprep.subr.bf16.mxu0 %v6861
    %7069 = vmatpush1.bf16.msra.mxu0 %v6860
    %7070 = vmatprep.subr.bf16.mxu0 %v6869
    %7071 = vmatpush1.bf16.msra.mxu0 %v6868
    %7072 = vmatprep.subr.bf16.mxu0 %v6877
    %7073 = vmatpush1.bf16.msra.mxu0 %v6876
    %7074 = vmatprep.subr.bf16.mxu0 %v6885
    %7075 = vmatpush1.bf16.msra.mxu0 %v6884
    %7076 = vmatprep.subr.bf16.mxu0 %v6893
    %7077 = vmatpush1.bf16.msra.mxu0 %v6892
    %7078 = vmatprep.subr.bf16.mxu0 %v6901
    %7079 = vmatpush1.bf16.msra.mxu0 %v6900
    %7080 = vmatprep.subr.bf16.mxu0 %v6909
    %7081 = vmatpush1.bf16.msra.mxu0 %v6908
    %7082 = vmatprep.subr.bf16.mxu0 %v6917
    %7083 = vmatpush1.bf16.msra.mxu0 %v6916
    %7084 = vmatprep.mubr.bf16.mxu0 %v6239
    %7085 = vmatmul.mubr.bf16.gmra.mrb[0].mxu0 %v6238
    %v7086 = vpop.f32.mrb[0].mxu0
    %v7087 = vadd.f32 %v6375, %v7086
    %v7088 = vpop.f32.mrb[0].mxu0
    %v7089 = vadd.f32 %v6379, %v7088
    %v7090 = vpop.f32.mrb[0].mxu0
    %v7091 = vadd.f32 %v6375, %v7090
    %v7092 = vpop.f32.mrb[0].mxu0
    %v7093 = vadd.f32 %v6379, %v7092
    %7094 = vdwg.mxu0
    %7095 = vmatprep.subr.bf16.mxu0 %v6799
    %7096 = vmatpush1.bf16.msra.mxu0 %v6798
    %7097 = vmatprep.subr.bf16.mxu0 %v6807
    %7098 = vmatpush1.bf16.msra.mxu0 %v6806
    %7099 = vmatprep.subr.bf16.mxu0 %v6815
    %7100 = vmatpush1.bf16.msra.mxu0 %v6814
    %7101 = vmatprep.subr.bf16.mxu0 %v6823
    %7102 = vmatpush1.bf16.msra.mxu0 %v6822
    %7103 = vmatprep.subr.bf16.mxu0 %v6831
    %7104 = vmatpush1.bf16.msra.mxu0 %v6830
    %7105 = vmatprep.subr.bf16.mxu0 %v6839
    %7106 = vmatpush1.bf16.msra.mxu0 %v6838
    %7107 = vmatprep.subr.bf16.mxu0 %v6847
    %7108 = vmatpush1.bf16.msra.mxu0 %v6846
    %7109 = vmatprep.subr.bf16.mxu0 %v6855
    %7110 = vmatpush1.bf16.msra.mxu0 %v6854
    %7111 = vmatprep.subr.bf16.mxu0 %v6863
    %7112 = vmatpush1.bf16.msra.mxu0 %v6862
    %7113 = vmatprep.subr.bf16.mxu0 %v6871
    %7114 = vmatpush1.bf16.msra.mxu0 %v6870
    %7115 = vmatprep.subr.bf16.mxu0 %v6879
    %7116 = vmatpush1.bf16.msra.mxu0 %v6878
    %7117 = vmatprep.subr.bf16.mxu0 %v6887
    %7118 = vmatpush1.bf16.msra.mxu0 %v6886
    %7119 = vmatprep.subr.bf16.mxu0 %v6895
    %7120 = vmatpush1.bf16.msra.mxu0 %v6894
    %7121 = vmatprep.subr.bf16.mxu0 %v6903
    %7122 = vmatpush1.bf16.msra.mxu0 %v6902
    %7123 = vmatprep.subr.bf16.mxu0 %v6911
    %7124 = vmatpush1.bf16.msra.mxu0 %v6910
    %7125 = vmatprep.subr.bf16.mxu0 %v6919
    %7126 = vmatpush1.bf16.msra.mxu0 %v6918
    %7127 = vmatprep.mubr.bf16.mxu0 %v6239
    %7128 = vmatmul.mubr.bf16.gmra.mrb[0].mxu0 %v6238
    %v7129 = vpop.f32.mrb[0].mxu0
    %v7130 = vadd.f32 %v6383, %v7129
    %v7131 = vpop.f32.mrb[0].mxu0
    %v7132 = vadd.f32 %v6387, %v7131
    %v7133 = vpop.f32.mrb[0].mxu0
    %v7134 = vadd.f32 %v6383, %v7133
    %v7135 = vpop.f32.mrb[0].mxu0
    %v7136 = vadd.f32 %v6387, %v7135
    %7137 = vdwg.mxu0
    %7138 = vmatprep.subr.bf16.mxu0 %v6801
    %7139 = vmatpush1.bf16.msra.mxu0 %v6800
    %7140 = vmatprep.subr.bf16.mxu0 %v6809
    %7141 = vmatpush1.bf16.msra.mxu0 %v6808
    %7142 = vmatprep.subr.bf16.mxu0 %v6817
    %7143 = vmatpush1.bf16.msra.mxu0 %v6816
    %7144 = vmatprep.subr.bf16.mxu0 %v6825
    %7145 = vmatpush1.bf16.msra.mxu0 %v6824
    %7146 = vmatprep.subr.bf16.mxu0 %v6833
    %7147 = vmatpush1.bf16.msra.mxu0 %v6832
    %7148 = vmatprep.subr.bf16.mxu0 %v6841
    %7149 = vmatpush1.bf16.msra.mxu0 %v6840
    %7150 = vmatprep.subr.bf16.mxu0 %v6849
    %7151 = vmatpush1.bf16.msra.mxu0 %v6848
    %7152 = vmatprep.subr.bf16.mxu0 %v6857
    %7153 = vmatpush1.bf16.msra.mxu0 %v6856
    %7154 = vmatprep.subr.bf16.mxu0 %v6865
    %7155 = vmatpush1.bf16.msra.mxu0 %v6864
    %7156 = vmatprep.subr.bf16.mxu0 %v6873
    %7157 = vmatpush1.bf16.msra.mxu0 %v6872
    %7158 = vmatprep.subr.bf16.mxu0 %v6881
    %7159 = vmatpush1.bf16.msra.mxu0 %v6880
    %7160 = vmatprep.subr.bf16.mxu0 %v6889
    %7161 = vmatpush1.bf16.msra.mxu0 %v6888
    %7162 = vmatprep.subr.bf16.mxu0 %v6897
    %7163 = vmatpush1.bf16.msra.mxu0 %v6896
    %7164 = vmatprep.subr.bf16.mxu0 %v6905
    %7165 = vmatpush1.bf16.msra.mxu0 %v6904
    %7166 = vmatprep.subr.bf16.mxu0 %v6913
    %7167 = vmatpush1.bf16.msra.mxu0 %v6912
    %7168 = vmatprep.subr.bf16.mxu0 %v6921
    %7169 = vmatpush1.bf16.msra.mxu0 %v6920
    %7170 = vmatprep.mubr.bf16.mxu0 %v6239
    %7171 = vmatmul.mubr.bf16.gmra.mrb[0].mxu0 %v6238
    %v7172 = vpop.f32.mrb[0].mxu0
    %v7173 = vadd.f32 %v6391, %v7172
    %v7174 = vpop.f32.mrb[0].mxu0
    %v7175 = vadd.f32 %v6395, %v7174
    %v7176 = vpop.f32.mrb[0].mxu0
    %v7177 = vadd.f32 %v6391, %v7176
    %v7178 = vpop.f32.mrb[0].mxu0
    %v7179 = vadd.f32 %v6395, %v7178
    %7180 = vdwg.mxu0
    %7181 = vmatprep.subr.bf16.mxu0 %v6803
    %7182 = vmatpush1.bf16.msra.mxu0 %v6802
    %7183 = vmatprep.subr.bf16.mxu0 %v6811
    %7184 = vmatpush1.bf16.msra.mxu0 %v6810
    %7185 = vmatprep.subr.bf16.mxu0 %v6819
    %7186 = vmatpush1.bf16.msra.mxu0 %v6818
    %7187 = vmatprep.subr.bf16.mxu0 %v6827
    %7188 = vmatpush1.bf16.msra.mxu0 %v6826
    %7189 = vmatprep.subr.bf16.mxu0 %v6835
    %7190 = vmatpush1.bf16.msra.mxu0 %v6834
    %7191 = vmatprep.subr.bf16.mxu0 %v6843
    %7192 = vmatpush1.bf16.msra.mxu0 %v6842
    %7193 = vmatprep.subr.bf16.mxu0 %v6851
    %7194 = vmatpush1.bf16.msra.mxu0 %v6850
    %7195 = vmatprep.subr.bf16.mxu0 %v6859
    %7196 = vmatpush1.bf16.msra.mxu0 %v6858
    %7197 = vmatprep.subr.bf16.mxu0 %v6867
    %7198 = vmatpush1.bf16.msra.mxu0 %v6866
    %7199 = vmatprep.subr.bf16.mxu0 %v6875
    %7200 = vmatpush1.bf16.msra.mxu0 %v6874
    %7201 = vmatprep.subr.bf16.mxu0 %v6883
    %7202 = vmatpush1.bf16.msra.mxu0 %v6882
    %7203 = vmatprep.subr.bf16.mxu0 %v6891
    %7204 = vmatpush1.bf16.msra.mxu0 %v6890
    %7205 = vmatprep.subr.bf16.mxu0 %v6899
    %7206 = vmatpush1.bf16.msra.mxu0 %v6898
    %7207 = vmatprep.subr.bf16.mxu0 %v6907
    %7208 = vmatpush1.bf16.msra.mxu0 %v6906
    %7209 = vmatprep.subr.bf16.mxu0 %v6915
    %7210 = vmatpush1.bf16.msra.mxu0 %v6914
    %7211 = vmatprep.subr.bf16.mxu0 %v6923
    %7212 = vmatpush1.bf16.msra.mxu0 %v6922
    %7213 = vmatprep.mubr.bf16.mxu0 %v6239
    %7214 = vmatmul.mubr.bf16.gmra.mrb[0].mxu0 %v6238
    %v7215 = vpop.f32.mrb[0].mxu0
    %v7216 = vadd.f32 %v6399, %v7215
    %v7217 = vpop.f32.mrb[0].mxu0
    %v7218 = vadd.f32 %v6403, %v7217
    %v7219 = vpop.f32.mrb[0].mxu0
    %v7220 = vadd.f32 %v6399, %v7219
    %v7221 = vpop.f32.mrb[0].mxu0
    %v7222 = vadd.f32 %v6403, %v7221
    %7223 = vdwg.mxu0
    %v7224 = vmul.f32 %v7087, 1.702
    %v7225 = vmul.f32 %v7089, 1.702
    %v7226 = vmul.f32 %v7130, 1.702
    %v7227 = vmul.f32 %v7132, 1.702
    %v7228 = vmul.f32 %v7173, 1.702
    %v7229 = vmul.f32 %v7175, 1.702
    %v7230 = vmul.f32 %v7216, 1.702
    %v7231 = vmul.f32 %v7218, 1.702
    %v7232 = vmul.f32 %v7091, 1.702
    %v7233 = vmul.f32 %v7093, 1.702
    %v7234 = vmul.f32 %v7134, 1.702
    %v7235 = vmul.f32 %v7136, 1.702
    %v7236 = vmul.f32 %v7177, 1.702
    %v7237 = vmul.f32 %v7179, 1.702
    %v7238 = vmul.f32 %v7220, 1.702
    %v7239 = vmul.f32 %v7222, 1.702
    %v7240 = vxor.u32 %v7224, 2147483648
    %v7241 = vxor.u32 %v7225, 2147483648
    %v7242 = vxor.u32 %v7226, 2147483648
    %v7243 = vxor.u32 %v7227, 2147483648
    %v7244 = vxor.u32 %v7228, 2147483648
    %v7245 = vxor.u32 %v7229, 2147483648
    %v7246 = vxor.u32 %v7230, 2147483648
    %v7247 = vxor.u32 %v7231, 2147483648
    %v7248 = vxor.u32 %v7232, 2147483648
    %v7249 = vxor.u32 %v7233, 2147483648
    %v7250 = vxor.u32 %v7234, 2147483648
    %v7251 = vxor.u32 %v7235, 2147483648
    %v7252 = vxor.u32 %v7236, 2147483648
    %v7253 = vxor.u32 %v7237, 2147483648
    %v7254 = vxor.u32 %v7238, 2147483648
    %v7255 = vxor.u32 %v7239, 2147483648
    %v7256 = vmul.f32 %v7240, 1.442695
    %v7257 = vpow.pop %v7256
    %v7258 = vmul.f32 %v7241, 1.442695
    %v7259 = vpow.pop %v7258
    %v7260 = vmul.f32 %v7242, 1.442695
    %v7261 = vpow.pop %v7260
    %v7262 = vmul.f32 %v7243, 1.442695
    %v7263 = vpow.pop %v7262
    %v7264 = vmul.f32 %v7244, 1.442695
    %v7265 = vpow.pop %v7264
    %v7266 = vmul.f32 %v7245, 1.442695
    %v7267 = vpow.pop %v7266
    %v7268 = vmul.f32 %v7246, 1.442695
    %v7269 = vpow.pop %v7268
    %v7270 = vmul.f32 %v7247, 1.442695
    %v7271 = vpow.pop %v7270
    %v7272 = vmul.f32 %v7248, 1.442695
    %v7273 = vpow.pop %v7272
    %v7274 = vmul.f32 %v7249, 1.442695
    %v7275 = vpow.pop %v7274
    %v7276 = vmul.f32 %v7250, 1.442695
    %v7277 = vpow.pop %v7276
    %v7278 = vmul.f32 %v7251, 1.442695
    %v7279 = vpow.pop %v7278
    %v7280 = vmul.f32 %v7252, 1.442695
    %v7281 = vpow.pop %v7280
    %v7282 = vmul.f32 %v7253, 1.442695
    %v7283 = vpow.pop %v7282
    %v7284 = vmul.f32 %v7254, 1.442695
    %v7285 = vpow.pop %v7284
    %v7286 = vmul.f32 %v7255, 1.442695
    %v7287 = vpow.pop %v7286
    %v7288 = vadd.f32 %v7257, 1.0
    %v7289 = vadd.f32 %v7259, 1.0
    %v7290 = vadd.f32 %v7261, 1.0
    %v7291 = vadd.f32 %v7263, 1.0
    %v7292 = vadd.f32 %v7265, 1.0
    %v7293 = vadd.f32 %v7267, 1.0
    %v7294 = vadd.f32 %v7269, 1.0
    %v7295 = vadd.f32 %v7271, 1.0
    %v7296 = vadd.f32 %v7273, 1.0
    %v7297 = vadd.f32 %v7275, 1.0
    %v7298 = vadd.f32 %v7277, 1.0
    %v7299 = vadd.f32 %v7279, 1.0
    %v7300 = vadd.f32 %v7281, 1.0
    %v7301 = vadd.f32 %v7283, 1.0
    %v7302 = vadd.f32 %v7285, 1.0
    %v7303 = vadd.f32 %v7287, 1.0
    %v7304 = vrcp.pop %v7288
    %v7305 = vmul.f32 1.0, %v7304
    %v7306 = vrcp.pop %v7289
    %v7307 = vmul.f32 1.0, %v7306
    %v7308 = vrcp.pop %v7290
    %v7309 = vmul.f32 1.0, %v7308
    %v7310 = vrcp.pop %v7291
    %v7311 = vmul.f32 1.0, %v7310
    %v7312 = vrcp.pop %v7292
    %v7313 = vmul.f32 1.0, %v7312
    %v7314 = vrcp.pop %v7293
    %v7315 = vmul.f32 1.0, %v7314
    %v7316 = vrcp.pop %v7294
    %v7317 = vmul.f32 1.0, %v7316
    %v7318 = vrcp.pop %v7295
    %v7319 = vmul.f32 1.0, %v7318
    %v7320 = vrcp.pop %v7296
    %v7321 = vmul.f32 1.0, %v7320
    %v7322 = vrcp.pop %v7297
    %v7323 = vmul.f32 1.0, %v7322
    %v7324 = vrcp.pop %v7298
    %v7325 = vmul.f32 1.0, %v7324
    %v7326 = vrcp.pop %v7299
    %v7327 = vmul.f32 1.0, %v7326
    %v7328 = vrcp.pop %v7300
    %v7329 = vmul.f32 1.0, %v7328
    %v7330 = vrcp.pop %v7301
    %v7331 = vmul.f32 1.0, %v7330
    %v7332 = vrcp.pop %v7302
    %v7333 = vmul.f32 1.0, %v7332
    %v7334 = vrcp.pop %v7303
    %v7335 = vmul.f32 1.0, %v7334
    %v7336 = vmul.f32 %v7087, %v7305
    %v7337 = vmul.f32 %v7089, %v7307
    %v7338 = vmul.f32 %v7130, %v7309
    %v7339 = vmul.f32 %v7132, %v7311
    %v7340 = vmul.f32 %v7173, %v7313
    %v7341 = vmul.f32 %v7175, %v7315
    %v7342 = vmul.f32 %v7216, %v7317
    %v7343 = vmul.f32 %v7218, %v7319
    %v7344 = vmul.f32 %v7091, %v7321
    %v7345 = vmul.f32 %v7093, %v7323
    %v7346 = vmul.f32 %v7134, %v7325
    %v7347 = vmul.f32 %v7136, %v7327
    %v7348 = vmul.f32 %v7177, %v7329
    %v7349 = vmul.f32 %v7179, %v7331
    %v7350 = vmul.f32 %v7220, %v7333
    %v7351 = vmul.f32 %v7222, %v7335
    %v7352 = vpack.c.bf16 %v7344, %v7336
    %v7353 = vpack.c.bf16 %v7345, %v7337
    %v7354 = vpack.c.bf16 %v7346, %v7338
    %v7355 = vpack.c.bf16 %v7347, %v7339
    %v7356 = vpack.c.bf16 %v7348, %v7340
    %v7357 = vpack.c.bf16 %v7349, %v7341
    %v7358 = vpack.c.bf16 %v7350, %v7342
    %v7359 = vpack.c.bf16 %v7351, %v7343
    %s7360 = scalar_lea.vmem %s16, 1024
    %v7361 = vld [vmem:[%s7360] sm:$0xff]
    %v7362 = vld [vmem:[%s7360 + $0x8] sm:$0xff]
    %v7363 = vld [vmem:[%s7360 + $0x10] sm:$0xff]
    %v7364 = vld [vmem:[%s7360 + $0x18] sm:$0xff]
    %v7365 = vld [vmem:[%s7360 + $0x20] sm:$0xff]
    %v7366 = vld [vmem:[%s7360 + $0x28] sm:$0xff]
    %v7367 = vld [vmem:[%s7360 + $0x30] sm:$0xff]
    %v7368 = vld [vmem:[%s7360 + $0x38] sm:$0xff]
    %v7369 = vld [vmem:[%s7360 + $0x40] sm:$0xff]
    %v7370 = vld [vmem:[%s7360 + $0x48] sm:$0xff]
    %v7371 = vld [vmem:[%s7360 + $0x50] sm:$0xff]
    %v7372 = vld [vmem:[%s7360 + $0x58] sm:$0xff]
    %v7373 = vld [vmem:[%s7360 + $0x60] sm:$0xff]
    %v7374 = vld [vmem:[%s7360 + $0x68] sm:$0xff]
    %v7375 = vld [vmem:[%s7360 + $0x70] sm:$0xff]
    %v7376 = vld [vmem:[%s7360 + $0x78] sm:$0xff]
    %v7377 = vld [vmem:[%s7360 + $0x80] sm:$0xff]
    %v7378 = vld [vmem:[%s7360 + $0x88] sm:$0xff]
    %v7379 = vld [vmem:[%s7360 + $0x90] sm:$0xff]
    %v7380 = vld [vmem:[%s7360 + $0x98] sm:$0xff]
    %v7381 = vld [vmem:[%s7360 + $0xa0] sm:$0xff]
    %v7382 = vld [vmem:[%s7360 + $0xa8] sm:$0xff]
    %v7383 = vld [vmem:[%s7360 + $0xb0] sm:$0xff]
    %v7384 = vld [vmem:[%s7360 + $0xb8] sm:$0xff]
    %v7385 = vld [vmem:[%s7360 + $0xc0] sm:$0xff]
    %v7386 = vld [vmem:[%s7360 + $0xc8] sm:$0xff]
    %v7387 = vld [vmem:[%s7360 + $0xd0] sm:$0xff]
    %v7388 = vld [vmem:[%s7360 + $0xd8] sm:$0xff]
    %v7389 = vld [vmem:[%s7360 + $0xe0] sm:$0xff]
    %v7390 = vld [vmem:[%s7360 + $0xe8] sm:$0xff]
    %v7391 = vld [vmem:[%s7360 + $0xf0] sm:$0xff]
    %v7392 = vld [vmem:[%s7360 + $0xf8] sm:$0xff]
    %v7393 = vld [vmem:[%s7360 + $0x100] sm:$0xff]
    %v7394 = vld [vmem:[%s7360 + $0x108] sm:$0xff]
    %v7395 = vld [vmem:[%s7360 + $0x110] sm:$0xff]
    %v7396 = vld [vmem:[%s7360 + $0x118] sm:$0xff]
    %v7397 = vld [vmem:[%s7360 + $0x120] sm:$0xff]
    %v7398 = vld [vmem:[%s7360 + $0x128] sm:$0xff]
    %v7399 = vld [vmem:[%s7360 + $0x130] sm:$0xff]
    %v7400 = vld [vmem:[%s7360 + $0x138] sm:$0xff]
    %v7401 = vld [vmem:[%s7360 + $0x140] sm:$0xff]
    %v7402 = vld [vmem:[%s7360 + $0x148] sm:$0xff]
    %v7403 = vld [vmem:[%s7360 + $0x150] sm:$0xff]
    %v7404 = vld [vmem:[%s7360 + $0x158] sm:$0xff]
    %v7405 = vld [vmem:[%s7360 + $0x160] sm:$0xff]
    %v7406 = vld [vmem:[%s7360 + $0x168] sm:$0xff]
    %v7407 = vld [vmem:[%s7360 + $0x170] sm:$0xff]
    %v7408 = vld [vmem:[%s7360 + $0x178] sm:$0xff]
    %v7409 = vld [vmem:[%s7360 + $0x180] sm:$0xff]
    %v7410 = vld [vmem:[%s7360 + $0x188] sm:$0xff]
    %v7411 = vld [vmem:[%s7360 + $0x190] sm:$0xff]
    %v7412 = vld [vmem:[%s7360 + $0x198] sm:$0xff]
    %v7413 = vld [vmem:[%s7360 + $0x1a0] sm:$0xff]
    %v7414 = vld [vmem:[%s7360 + $0x1a8] sm:$0xff]
    %v7415 = vld [vmem:[%s7360 + $0x1b0] sm:$0xff]
    %v7416 = vld [vmem:[%s7360 + $0x1b8] sm:$0xff]
    %v7417 = vld [vmem:[%s7360 + $0x1c0] sm:$0xff]
    %v7418 = vld [vmem:[%s7360 + $0x1c8] sm:$0xff]
    %v7419 = vld [vmem:[%s7360 + $0x1d0] sm:$0xff]
    %v7420 = vld [vmem:[%s7360 + $0x1d8] sm:$0xff]
    %v7421 = vld [vmem:[%s7360 + $0x1e0] sm:$0xff]
    %v7422 = vld [vmem:[%s7360 + $0x1e8] sm:$0xff]
    %v7423 = vld [vmem:[%s7360 + $0x1f0] sm:$0xff]
    %v7424 = vld [vmem:[%s7360 + $0x1f8] sm:$0xff]
    %v7425 = vld [vmem:[%s7360 + $0x200] sm:$0xff]
    %v7426 = vld [vmem:[%s7360 + $0x208] sm:$0xff]
    %v7427 = vld [vmem:[%s7360 + $0x210] sm:$0xff]
    %v7428 = vld [vmem:[%s7360 + $0x218] sm:$0xff]
    %v7429 = vld [vmem:[%s7360 + $0x220] sm:$0xff]
    %v7430 = vld [vmem:[%s7360 + $0x228] sm:$0xff]
    %v7431 = vld [vmem:[%s7360 + $0x230] sm:$0xff]
    %v7432 = vld [vmem:[%s7360 + $0x238] sm:$0xff]
    %v7433 = vld [vmem:[%s7360 + $0x240] sm:$0xff]
    %v7434 = vld [vmem:[%s7360 + $0x248] sm:$0xff]
    %v7435 = vld [vmem:[%s7360 + $0x250] sm:$0xff]
    %v7436 = vld [vmem:[%s7360 + $0x258] sm:$0xff]
    %v7437 = vld [vmem:[%s7360 + $0x260] sm:$0xff]
    %v7438 = vld [vmem:[%s7360 + $0x268] sm:$0xff]
    %v7439 = vld [vmem:[%s7360 + $0x270] sm:$0xff]
    %v7440 = vld [vmem:[%s7360 + $0x278] sm:$0xff]
    %v7441 = vld [vmem:[%s7360 + $0x280] sm:$0xff]
    %v7442 = vld [vmem:[%s7360 + $0x288] sm:$0xff]
    %v7443 = vld [vmem:[%s7360 + $0x290] sm:$0xff]
    %v7444 = vld [vmem:[%s7360 + $0x298] sm:$0xff]
    %v7445 = vld [vmem:[%s7360 + $0x2a0] sm:$0xff]
    %v7446 = vld [vmem:[%s7360 + $0x2a8] sm:$0xff]
    %v7447 = vld [vmem:[%s7360 + $0x2b0] sm:$0xff]
    %v7448 = vld [vmem:[%s7360 + $0x2b8] sm:$0xff]
    %v7449 = vld [vmem:[%s7360 + $0x2c0] sm:$0xff]
    %v7450 = vld [vmem:[%s7360 + $0x2c8] sm:$0xff]
    %v7451 = vld [vmem:[%s7360 + $0x2d0] sm:$0xff]
    %v7452 = vld [vmem:[%s7360 + $0x2d8] sm:$0xff]
    %v7453 = vld [vmem:[%s7360 + $0x2e0] sm:$0xff]
    %v7454 = vld [vmem:[%s7360 + $0x2e8] sm:$0xff]
    %v7455 = vld [vmem:[%s7360 + $0x2f0] sm:$0xff]
    %v7456 = vld [vmem:[%s7360 + $0x2f8] sm:$0xff]
    %v7457 = vld [vmem:[%s7360 + $0x300] sm:$0xff]
    %v7458 = vld [vmem:[%s7360 + $0x308] sm:$0xff]
    %v7459 = vld [vmem:[%s7360 + $0x310] sm:$0xff]
    %v7460 = vld [vmem:[%s7360 + $0x318] sm:$0xff]
    %v7461 = vld [vmem:[%s7360 + $0x320] sm:$0xff]
    %v7462 = vld [vmem:[%s7360 + $0x328] sm:$0xff]
    %v7463 = vld [vmem:[%s7360 + $0x330] sm:$0xff]
    %v7464 = vld [vmem:[%s7360 + $0x338] sm:$0xff]
    %v7465 = vld [vmem:[%s7360 + $0x340] sm:$0xff]
    %v7466 = vld [vmem:[%s7360 + $0x348] sm:$0xff]
    %v7467 = vld [vmem:[%s7360 + $0x350] sm:$0xff]
    %v7468 = vld [vmem:[%s7360 + $0x358] sm:$0xff]
    %v7469 = vld [vmem:[%s7360 + $0x360] sm:$0xff]
    %v7470 = vld [vmem:[%s7360 + $0x368] sm:$0xff]
    %v7471 = vld [vmem:[%s7360 + $0x370] sm:$0xff]
    %v7472 = vld [vmem:[%s7360 + $0x378] sm:$0xff]
    %v7473 = vld [vmem:[%s7360 + $0x380] sm:$0xff]
    %v7474 = vld [vmem:[%s7360 + $0x388] sm:$0xff]
    %v7475 = vld [vmem:[%s7360 + $0x390] sm:$0xff]
    %v7476 = vld [vmem:[%s7360 + $0x398] sm:$0xff]
    %v7477 = vld [vmem:[%s7360 + $0x3a0] sm:$0xff]
    %v7478 = vld [vmem:[%s7360 + $0x3a8] sm:$0xff]
    %v7479 = vld [vmem:[%s7360 + $0x3b0] sm:$0xff]
    %v7480 = vld [vmem:[%s7360 + $0x3b8] sm:$0xff]
    %v7481 = vld [vmem:[%s7360 + $0x3c0] sm:$0xff]
    %v7482 = vld [vmem:[%s7360 + $0x3c8] sm:$0xff]
    %v7483 = vld [vmem:[%s7360 + $0x3d0] sm:$0xff]
    %v7484 = vld [vmem:[%s7360 + $0x3d8] sm:$0xff]
    %v7485 = vld [vmem:[%s7360 + $0x3e0] sm:$0xff]
    %v7486 = vld [vmem:[%s7360 + $0x3e8] sm:$0xff]
    %v7487 = vld [vmem:[%s7360 + $0x3f0] sm:$0xff]
    %v7488 = vld [vmem:[%s7360 + $0x3f8] sm:$0xff]
    %v7617 = vunpack.c.l.b16 %v7361
    %v7618 = vunpack.c.h.b16 %v7361
    %v7619 = vunpack.c.l.b16 %v7362
    %v7620 = vunpack.c.h.b16 %v7362
    %v7621 = vunpack.c.l.b16 %v7363
    %v7622 = vunpack.c.h.b16 %v7363
    %v7623 = vunpack.c.l.b16 %v7364
    %v7624 = vunpack.c.h.b16 %v7364
    %v7625 = vunpack.c.l.b16 %v7365
    %v7626 = vunpack.c.h.b16 %v7365
    %v7627 = vunpack.c.l.b16 %v7366
    %v7628 = vunpack.c.h.b16 %v7366
    %v7629 = vunpack.c.l.b16 %v7367
    %v7630 = vunpack.c.h.b16 %v7367
    %v7631 = vunpack.c.l.b16 %v7368
    %v7632 = vunpack.c.h.b16 %v7368
    %v7633 = vunpack.c.l.b16 %v7369
    %v7634 = vunpack.c.h.b16 %v7369
    %v7635 = vunpack.c.l.b16 %v7370
    %v7636 = vunpack.c.h.b16 %v7370
    %v7637 = vunpack.c.l.b16 %v7371
    %v7638 = vunpack.c.h.b16 %v7371
    %v7639 = vunpack.c.l.b16 %v7372
    %v7640 = vunpack.c.h.b16 %v7372
    %v7641 = vunpack.c.l.b16 %v7373
    %v7642 = vunpack.c.h.b16 %v7373
    %v7643 = vunpack.c.l.b16 %v7374
    %v7644 = vunpack.c.h.b16 %v7374
    %v7645 = vunpack.c.l.b16 %v7375
    %v7646 = vunpack.c.h.b16 %v7375
    %v7647 = vunpack.c.l.b16 %v7376
    %v7648 = vunpack.c.h.b16 %v7376
    %v7649 = vunpack.c.l.b16 %v7377
    %v7650 = vunpack.c.h.b16 %v7377
    %v7651 = vunpack.c.l.b16 %v7378
    %v7652 = vunpack.c.h.b16 %v7378
    %v7653 = vunpack.c.l.b16 %v7379
    %v7654 = vunpack.c.h.b16 %v7379
    %v7655 = vunpack.c.l.b16 %v7380
    %v7656 = vunpack.c.h.b16 %v7380
    %v7657 = vunpack.c.l.b16 %v7381
    %v7658 = vunpack.c.h.b16 %v7381
    %v7659 = vunpack.c.l.b16 %v7382
    %v7660 = vunpack.c.h.b16 %v7382
    %v7661 = vunpack.c.l.b16 %v7383
    %v7662 = vunpack.c.h.b16 %v7383
    %v7663 = vunpack.c.l.b16 %v7384
    %v7664 = vunpack.c.h.b16 %v7384
    %v7665 = vunpack.c.l.b16 %v7385
    %v7666 = vunpack.c.h.b16 %v7385
    %v7667 = vunpack.c.l.b16 %v7386
    %v7668 = vunpack.c.h.b16 %v7386
    %v7669 = vunpack.c.l.b16 %v7387
    %v7670 = vunpack.c.h.b16 %v7387
    %v7671 = vunpack.c.l.b16 %v7388
    %v7672 = vunpack.c.h.b16 %v7388
    %v7673 = vunpack.c.l.b16 %v7389
    %v7674 = vunpack.c.h.b16 %v7389
    %v7675 = vunpack.c.l.b16 %v7390
    %v7676 = vunpack.c.h.b16 %v7390
    %v7677 = vunpack.c.l.b16 %v7391
    %v7678 = vunpack.c.h.b16 %v7391
    %v7679 = vunpack.c.l.b16 %v7392
    %v7680 = vunpack.c.h.b16 %v7392
    %v7681 = vunpack.c.l.b16 %v7393
    %v7682 = vunpack.c.h.b16 %v7393
    %v7683 = vunpack.c.l.b16 %v7394
    %v7684 = vunpack.c.h.b16 %v7394
    %v7685 = vunpack.c.l.b16 %v7395
    %v7686 = vunpack.c.h.b16 %v7395
    %v7687 = vunpack.c.l.b16 %v7396
    %v7688 = vunpack.c.h.b16 %v7396
    %v7689 = vunpack.c.l.b16 %v7397
    %v7690 = vunpack.c.h.b16 %v7397
    %v7691 = vunpack.c.l.b16 %v7398
    %v7692 = vunpack.c.h.b16 %v7398
    %v7693 = vunpack.c.l.b16 %v7399
    %v7694 = vunpack.c.h.b16 %v7399
    %v7695 = vunpack.c.l.b16 %v7400
    %v7696 = vunpack.c.h.b16 %v7400
    %v7697 = vunpack.c.l.b16 %v7401
    %v7698 = vunpack.c.h.b16 %v7401
    %v7699 = vunpack.c.l.b16 %v7402
    %v7700 = vunpack.c.h.b16 %v7402
    %v7701 = vunpack.c.l.b16 %v7403
    %v7702 = vunpack.c.h.b16 %v7403
    %v7703 = vunpack.c.l.b16 %v7404
    %v7704 = vunpack.c.h.b16 %v7404
    %v7705 = vunpack.c.l.b16 %v7405
    %v7706 = vunpack.c.h.b16 %v7405
    %v7707 = vunpack.c.l.b16 %v7406
    %v7708 = vunpack.c.h.b16 %v7406
    %v7709 = vunpack.c.l.b16 %v7407
    %v7710 = vunpack.c.h.b16 %v7407
    %v7711 = vunpack.c.l.b16 %v7408
    %v7712 = vunpack.c.h.b16 %v7408
    %v7713 = vunpack.c.l.b16 %v7409
    %v7714 = vunpack.c.h.b16 %v7409
    %v7715 = vunpack.c.l.b16 %v7410
    %v7716 = vunpack.c.h.b16 %v7410
    %v7717 = vunpack.c.l.b16 %v7411
    %v7718 = vunpack.c.h.b16 %v7411
    %v7719 = vunpack.c.l.b16 %v7412
    %v7720 = vunpack.c.h.b16 %v7412
    %v7721 = vunpack.c.l.b16 %v7413
    %v7722 = vunpack.c.h.b16 %v7413
    %v7723 = vunpack.c.l.b16 %v7414
    %v7724 = vunpack.c.h.b16 %v7414
    %v7725 = vunpack.c.l.b16 %v7415
    %v7726 = vunpack.c.h.b16 %v7415
    %v7727 = vunpack.c.l.b16 %v7416
    %v7728 = vunpack.c.h.b16 %v7416
    %v7729 = vunpack.c.l.b16 %v7417
    %v7730 = vunpack.c.h.b16 %v7417
    %v7731 = vunpack.c.l.b16 %v7418
    %v7732 = vunpack.c.h.b16 %v7418
    %v7733 = vunpack.c.l.b16 %v7419
    %v7734 = vunpack.c.h.b16 %v7419
    %v7735 = vunpack.c.l.b16 %v7420
    %v7736 = vunpack.c.h.b16 %v7420
    %v7737 = vunpack.c.l.b16 %v7421
    %v7738 = vunpack.c.h.b16 %v7421
    %v7739 = vunpack.c.l.b16 %v7422
    %v7740 = vunpack.c.h.b16 %v7422
    %v7741 = vunpack.c.l.b16 %v7423
    %v7742 = vunpack.c.h.b16 %v7423
    %v7743 = vunpack.c.l.b16 %v7424
    %v7744 = vunpack.c.h.b16 %v7424
    %v7745 = vunpack.c.l.b16 %v7425
    %v7746 = vunpack.c.h.b16 %v7425
    %v7747 = vunpack.c.l.b16 %v7426
    %v7748 = vunpack.c.h.b16 %v7426
    %v7749 = vunpack.c.l.b16 %v7427
    %v7750 = vunpack.c.h.b16 %v7427
    %v7751 = vunpack.c.l.b16 %v7428
    %v7752 = vunpack.c.h.b16 %v7428
    %v7753 = vunpack.c.l.b16 %v7429
    %v7754 = vunpack.c.h.b16 %v7429
    %v7755 = vunpack.c.l.b16 %v7430
    %v7756 = vunpack.c.h.b16 %v7430
    %v7757 = vunpack.c.l.b16 %v7431
    %v7758 = vunpack.c.h.b16 %v7431
    %v7759 = vunpack.c.l.b16 %v7432
    %v7760 = vunpack.c.h.b16 %v7432
    %v7761 = vunpack.c.l.b16 %v7433
    %v7762 = vunpack.c.h.b16 %v7433
    %v7763 = vunpack.c.l.b16 %v7434
    %v7764 = vunpack.c.h.b16 %v7434
    %v7765 = vunpack.c.l.b16 %v7435
    %v7766 = vunpack.c.h.b16 %v7435
    %v7767 = vunpack.c.l.b16 %v7436
    %v7768 = vunpack.c.h.b16 %v7436
    %v7769 = vunpack.c.l.b16 %v7437
    %v7770 = vunpack.c.h.b16 %v7437
    %v7771 = vunpack.c.l.b16 %v7438
    %v7772 = vunpack.c.h.b16 %v7438
    %v7773 = vunpack.c.l.b16 %v7439
    %v7774 = vunpack.c.h.b16 %v7439
    %v7775 = vunpack.c.l.b16 %v7440
    %v7776 = vunpack.c.h.b16 %v7440
    %v7777 = vunpack.c.l.b16 %v7441
    %v7778 = vunpack.c.h.b16 %v7441
    %v7779 = vunpack.c.l.b16 %v7442
    %v7780 = vunpack.c.h.b16 %v7442
    %v7781 = vunpack.c.l.b16 %v7443
    %v7782 = vunpack.c.h.b16 %v7443
    %v7783 = vunpack.c.l.b16 %v7444
    %v7784 = vunpack.c.h.b16 %v7444
    %v7785 = vunpack.c.l.b16 %v7445
    %v7786 = vunpack.c.h.b16 %v7445
    %v7787 = vunpack.c.l.b16 %v7446
    %v7788 = vunpack.c.h.b16 %v7446
    %v7789 = vunpack.c.l.b16 %v7447
    %v7790 = vunpack.c.h.b16 %v7447
    %v7791 = vunpack.c.l.b16 %v7448
    %v7792 = vunpack.c.h.b16 %v7448
    %v7793 = vunpack.c.l.b16 %v7449
    %v7794 = vunpack.c.h.b16 %v7449
    %v7795 = vunpack.c.l.b16 %v7450
    %v7796 = vunpack.c.h.b16 %v7450
    %v7797 = vunpack.c.l.b16 %v7451
    %v7798 = vunpack.c.h.b16 %v7451
    %v7799 = vunpack.c.l.b16 %v7452
    %v7800 = vunpack.c.h.b16 %v7452
    %v7801 = vunpack.c.l.b16 %v7453
    %v7802 = vunpack.c.h.b16 %v7453
    %v7803 = vunpack.c.l.b16 %v7454
    %v7804 = vunpack.c.h.b16 %v7454
    %v7805 = vunpack.c.l.b16 %v7455
    %v7806 = vunpack.c.h.b16 %v7455
    %v7807 = vunpack.c.l.b16 %v7456
    %v7808 = vunpack.c.h.b16 %v7456
    %v7809 = vunpack.c.l.b16 %v7457
    %v7810 = vunpack.c.h.b16 %v7457
    %v7811 = vunpack.c.l.b16 %v7458
    %v7812 = vunpack.c.h.b16 %v7458
    %v7813 = vunpack.c.l.b16 %v7459
    %v7814 = vunpack.c.h.b16 %v7459
    %v7815 = vunpack.c.l.b16 %v7460
    %v7816 = vunpack.c.h.b16 %v7460
    %v7817 = vunpack.c.l.b16 %v7461
    %v7818 = vunpack.c.h.b16 %v7461
    %v7819 = vunpack.c.l.b16 %v7462
    %v7820 = vunpack.c.h.b16 %v7462
    %v7821 = vunpack.c.l.b16 %v7463
    %v7822 = vunpack.c.h.b16 %v7463
    %v7823 = vunpack.c.l.b16 %v7464
    %v7824 = vunpack.c.h.b16 %v7464
    %v7825 = vunpack.c.l.b16 %v7465
    %v7826 = vunpack.c.h.b16 %v7465
    %v7827 = vunpack.c.l.b16 %v7466
    %v7828 = vunpack.c.h.b16 %v7466
    %v7829 = vunpack.c.l.b16 %v7467
    %v7830 = vunpack.c.h.b16 %v7467
    %v7831 = vunpack.c.l.b16 %v7468
    %v7832 = vunpack.c.h.b16 %v7468
    %v7833 = vunpack.c.l.b16 %v7469
    %v7834 = vunpack.c.h.b16 %v7469
    %v7835 = vunpack.c.l.b16 %v7470
    %v7836 = vunpack.c.h.b16 %v7470
    %v7837 = vunpack.c.l.b16 %v7471
    %v7838 = vunpack.c.h.b16 %v7471
    %v7839 = vunpack.c.l.b16 %v7472
    %v7840 = vunpack.c.h.b16 %v7472
    %v7841 = vunpack.c.l.b16 %v7473
    %v7842 = vunpack.c.h.b16 %v7473
    %v7843 = vunpack.c.l.b16 %v7474
    %v7844 = vunpack.c.h.b16 %v7474
    %v7845 = vunpack.c.l.b16 %v7475
    %v7846 = vunpack.c.h.b16 %v7475
    %v7847 = vunpack.c.l.b16 %v7476
    %v7848 = vunpack.c.h.b16 %v7476
    %v7849 = vunpack.c.l.b16 %v7477
    %v7850 = vunpack.c.h.b16 %v7477
    %v7851 = vunpack.c.l.b16 %v7478
    %v7852 = vunpack.c.h.b16 %v7478
    %v7853 = vunpack.c.l.b16 %v7479
    %v7854 = vunpack.c.h.b16 %v7479
    %v7855 = vunpack.c.l.b16 %v7480
    %v7856 = vunpack.c.h.b16 %v7480
    %v7857 = vunpack.c.l.b16 %v7481
    %v7858 = vunpack.c.h.b16 %v7481
    %v7859 = vunpack.c.l.b16 %v7482
    %v7860 = vunpack.c.h.b16 %v7482
    %v7861 = vunpack.c.l.b16 %v7483
    %v7862 = vunpack.c.h.b16 %v7483
    %v7863 = vunpack.c.l.b16 %v7484
    %v7864 = vunpack.c.h.b16 %v7484
    %v7865 = vunpack.c.l.b16 %v7485
    %v7866 = vunpack.c.h.b16 %v7485
    %v7867 = vunpack.c.l.b16 %v7486
    %v7868 = vunpack.c.h.b16 %v7486
    %v7869 = vunpack.c.l.b16 %v7487
    %v7870 = vunpack.c.h.b16 %v7487
    %v7871 = vunpack.c.l.b16 %v7488
    %v7872 = vunpack.c.h.b16 %v7488
    %v7873 = vpack.c.b16 %v7619, %v7617
    %v7874 = vpack.c.b16 %v7620, %v7618
    %v7875 = vpack.c.b16 %v7623, %v7621
    %v7876 = vpack.c.b16 %v7624, %v7622
    %v7877 = vpack.c.b16 %v7627, %v7625
    %v7878 = vpack.c.b16 %v7628, %v7626
    %v7879 = vpack.c.b16 %v7631, %v7629
    %v7880 = vpack.c.b16 %v7632, %v7630
    %v7881 = vpack.c.b16 %v7635, %v7633
    %v7882 = vpack.c.b16 %v7636, %v7634
    %v7883 = vpack.c.b16 %v7639, %v7637
    %v7884 = vpack.c.b16 %v7640, %v7638
    %v7885 = vpack.c.b16 %v7643, %v7641
    %v7886 = vpack.c.b16 %v7644, %v7642
    %v7887 = vpack.c.b16 %v7647, %v7645
    %v7888 = vpack.c.b16 %v7648, %v7646
    %v7889 = vpack.c.b16 %v7651, %v7649
    %v7890 = vpack.c.b16 %v7652, %v7650
    %v7891 = vpack.c.b16 %v7655, %v7653
    %v7892 = vpack.c.b16 %v7656, %v7654
    %v7893 = vpack.c.b16 %v7659, %v7657
    %v7894 = vpack.c.b16 %v7660, %v7658
    %v7895 = vpack.c.b16 %v7663, %v7661
    %v7896 = vpack.c.b16 %v7664, %v7662
    %v7897 = vpack.c.b16 %v7667, %v7665
    %v7898 = vpack.c.b16 %v7668, %v7666
    %v7899 = vpack.c.b16 %v7671, %v7669
    %v7900 = vpack.c.b16 %v7672, %v7670
    %v7901 = vpack.c.b16 %v7675, %v7673
    %v7902 = vpack.c.b16 %v7676, %v7674
    %v7903 = vpack.c.b16 %v7679, %v7677
    %v7904 = vpack.c.b16 %v7680, %v7678
    %v7905 = vpack.c.b16 %v7683, %v7681
    %v7906 = vpack.c.b16 %v7684, %v7682
    %v7907 = vpack.c.b16 %v7687, %v7685
    %v7908 = vpack.c.b16 %v7688, %v7686
    %v7909 = vpack.c.b16 %v7691, %v7689
    %v7910 = vpack.c.b16 %v7692, %v7690
    %v7911 = vpack.c.b16 %v7695, %v7693
    %v7912 = vpack.c.b16 %v7696, %v7694
    %v7913 = vpack.c.b16 %v7699, %v7697
    %v7914 = vpack.c.b16 %v7700, %v7698
    %v7915 = vpack.c.b16 %v7703, %v7701
    %v7916 = vpack.c.b16 %v7704, %v7702
    %v7917 = vpack.c.b16 %v7707, %v7705
    %v7918 = vpack.c.b16 %v7708, %v7706
    %v7919 = vpack.c.b16 %v7711, %v7709
    %v7920 = vpack.c.b16 %v7712, %v7710
    %v7921 = vpack.c.b16 %v7715, %v7713
    %v7922 = vpack.c.b16 %v7716, %v7714
    %v7923 = vpack.c.b16 %v7719, %v7717
    %v7924 = vpack.c.b16 %v7720, %v7718
    %v7925 = vpack.c.b16 %v7723, %v7721
    %v7926 = vpack.c.b16 %v7724, %v7722
    %v7927 = vpack.c.b16 %v7727, %v7725
    %v7928 = vpack.c.b16 %v7728, %v7726
    %v7929 = vpack.c.b16 %v7731, %v7729
    %v7930 = vpack.c.b16 %v7732, %v7730
    %v7931 = vpack.c.b16 %v7735, %v7733
    %v7932 = vpack.c.b16 %v7736, %v7734
    %v7933 = vpack.c.b16 %v7739, %v7737
    %v7934 = vpack.c.b16 %v7740, %v7738
    %v7935 = vpack.c.b16 %v7743, %v7741
    %v7936 = vpack.c.b16 %v7744, %v7742
    %v7937 = vpack.c.b16 %v7747, %v7745
    %v7938 = vpack.c.b16 %v7748, %v7746
    %v7939 = vpack.c.b16 %v7751, %v7749
    %v7940 = vpack.c.b16 %v7752, %v7750
    %v7941 = vpack.c.b16 %v7755, %v7753
    %v7942 = vpack.c.b16 %v7756, %v7754
    %v7943 = vpack.c.b16 %v7759, %v7757
    %v7944 = vpack.c.b16 %v7760, %v7758
    %v7945 = vpack.c.b16 %v7763, %v7761
    %v7946 = vpack.c.b16 %v7764, %v7762
    %v7947 = vpack.c.b16 %v7767, %v7765
    %v7948 = vpack.c.b16 %v7768, %v7766
    %v7949 = vpack.c.b16 %v7771, %v7769
    %v7950 = vpack.c.b16 %v7772, %v7770
    %v7951 = vpack.c.b16 %v7775, %v7773
    %v7952 = vpack.c.b16 %v7776, %v7774
    %v7953 = vpack.c.b16 %v7779, %v7777
    %v7954 = vpack.c.b16 %v7780, %v7778
    %v7955 = vpack.c.b16 %v7783, %v7781
    %v7956 = vpack.c.b16 %v7784, %v7782
    %v7957 = vpack.c.b16 %v7787, %v7785
    %v7958 = vpack.c.b16 %v7788, %v7786
    %v7959 = vpack.c.b16 %v7791, %v7789
    %v7960 = vpack.c.b16 %v7792, %v7790
    %v7961 = vpack.c.b16 %v7795, %v7793
    %v7962 = vpack.c.b16 %v7796, %v7794
    %v7963 = vpack.c.b16 %v7799, %v7797
    %v7964 = vpack.c.b16 %v7800, %v7798
    %v7965 = vpack.c.b16 %v7803, %v7801
    %v7966 = vpack.c.b16 %v7804, %v7802
    %v7967 = vpack.c.b16 %v7807, %v7805
    %v7968 = vpack.c.b16 %v7808, %v7806
    %v7969 = vpack.c.b16 %v7811, %v7809
    %v7970 = vpack.c.b16 %v7812, %v7810
    %v7971 = vpack.c.b16 %v7815, %v7813
    %v7972 = vpack.c.b16 %v7816, %v7814
    %v7973 = vpack.c.b16 %v7819, %v7817
    %v7974 = vpack.c.b16 %v7820, %v7818
    %v7975 = vpack.c.b16 %v7823, %v7821
    %v7976 = vpack.c.b16 %v7824, %v7822
    %v7977 = vpack.c.b16 %v7827, %v7825
    %v7978 = vpack.c.b16 %v7828, %v7826
    %v7979 = vpack.c.b16 %v7831, %v7829
    %v7980 = vpack.c.b16 %v7832, %v7830
    %v7981 = vpack.c.b16 %v7835, %v7833
    %v7982 = vpack.c.b16 %v7836, %v7834
    %v7983 = vpack.c.b16 %v7839, %v7837
    %v7984 = vpack.c.b16 %v7840, %v7838
    %v7985 = vpack.c.b16 %v7843, %v7841
    %v7986 = vpack.c.b16 %v7844, %v7842
    %v7987 = vpack.c.b16 %v7847, %v7845
    %v7988 = vpack.c.b16 %v7848, %v7846
    %v7989 = vpack.c.b16 %v7851, %v7849
    %v7990 = vpack.c.b16 %v7852, %v7850
    %v7991 = vpack.c.b16 %v7855, %v7853
    %v7992 = vpack.c.b16 %v7856, %v7854
    %v7993 = vpack.c.b16 %v7859, %v7857
    %v7994 = vpack.c.b16 %v7860, %v7858
    %v7995 = vpack.c.b16 %v7863, %v7861
    %v7996 = vpack.c.b16 %v7864, %v7862
    %v7997 = vpack.c.b16 %v7867, %v7865
    %v7998 = vpack.c.b16 %v7868, %v7866
    %v7999 = vpack.c.b16 %v7871, %v7869
    %v8000 = vpack.c.b16 %v7872, %v7870
    %8129 = vmatprep.subr.bf16.mxu0 %v7874
    %8130 = vmatpush1.bf16.msra.mxu0 %v7873
    %8131 = vmatprep.subr.bf16.mxu0 %v7876
    %8132 = vmatpush1.bf16.msra.mxu0 %v7875
    %8133 = vmatprep.subr.bf16.mxu0 %v7878
    %8134 = vmatpush1.bf16.msra.mxu0 %v7877
    %8135 = vmatprep.subr.bf16.mxu0 %v7880
    %8136 = vmatpush1.bf16.msra.mxu0 %v7879
    %8137 = vmatprep.subr.bf16.mxu0 %v7882
    %8138 = vmatpush1.bf16.msra.mxu0 %v7881
    %8139 = vmatprep.subr.bf16.mxu0 %v7884
    %8140 = vmatpush1.bf16.msra.mxu0 %v7883
    %8141 = vmatprep.subr.bf16.mxu0 %v7886
    %8142 = vmatpush1.bf16.msra.mxu0 %v7885
    %8143 = vmatprep.subr.bf16.mxu0 %v7888
    %8144 = vmatpush1.bf16.msra.mxu0 %v7887
    %8145 = vmatprep.subr.bf16.mxu0 %v7890
    %8146 = vmatpush1.bf16.msra.mxu0 %v7889
    %8147 = vmatprep.subr.bf16.mxu0 %v7892
    %8148 = vmatpush1.bf16.msra.mxu0 %v7891
    %8149 = vmatprep.subr.bf16.mxu0 %v7894
    %8150 = vmatpush1.bf16.msra.mxu0 %v7893
    %8151 = vmatprep.subr.bf16.mxu0 %v7896
    %8152 = vmatpush1.bf16.msra.mxu0 %v7895
    %8153 = vmatprep.subr.bf16.mxu0 %v7898
    %8154 = vmatpush1.bf16.msra.mxu0 %v7897
    %8155 = vmatprep.subr.bf16.mxu0 %v7900
    %8156 = vmatpush1.bf16.msra.mxu0 %v7899
    %8157 = vmatprep.subr.bf16.mxu0 %v7902
    %8158 = vmatpush1.bf16.msra.mxu0 %v7901
    %8159 = vmatprep.subr.bf16.mxu0 %v7904
    %8160 = vmatpush1.bf16.msra.mxu0 %v7903
    %8161 = vmatprep.mubr.bf16.mxu0 %v7353
    %8162 = vmatmul.mubr.bf16.gmra.mrb[0].mxu0 %v7352
    %v8163 = vpop.f32.mrb[0].mxu0
    %v8164 = vadd.f32 0.0, %v8163
    %v8165 = vpop.f32.mrb[0].mxu0
    %v8166 = vadd.f32 0.0, %v8165
    %v8167 = vpop.f32.mrb[0].mxu0
    %v8168 = vadd.f32 0.0, %v8167
    %v8169 = vpop.f32.mrb[0].mxu0
    %v8170 = vadd.f32 0.0, %v8169
    %8171 = vdwg.mxu0
    %8172 = vmatprep.subr.bf16.mxu0 %v7906
    %8173 = vmatpush1.bf16.msra.mxu0 %v7905
    %8174 = vmatprep.subr.bf16.mxu0 %v7908
    %8175 = vmatpush1.bf16.msra.mxu0 %v7907
    %8176 = vmatprep.subr.bf16.mxu0 %v7910
    %8177 = vmatpush1.bf16.msra.mxu0 %v7909
    %8178 = vmatprep.subr.bf16.mxu0 %v7912
    %8179 = vmatpush1.bf16.msra.mxu0 %v7911
    %8180 = vmatprep.subr.bf16.mxu0 %v7914
    %8181 = vmatpush1.bf16.msra.mxu0 %v7913
    %8182 = vmatprep.subr.bf16.mxu0 %v7916
    %8183 = vmatpush1.bf16.msra.mxu0 %v7915
    %8184 = vmatprep.subr.bf16.mxu0 %v7918
    %8185 = vmatpush1.bf16.msra.mxu0 %v7917
    %8186 = vmatprep.subr.bf16.mxu0 %v7920
    %8187 = vmatpush1.bf16.msra.mxu0 %v7919
    %8188 = vmatprep.subr.bf16.mxu0 %v7922
    %8189 = vmatpush1.bf16.msra.mxu0 %v7921
    %8190 = vmatprep.subr.bf16.mxu0 %v7924
    %8191 = vmatpush1.bf16.msra.mxu0 %v7923
    %8192 = vmatprep.subr.bf16.mxu0 %v7926
    %8193 = vmatpush1.bf16.msra.mxu0 %v7925
    %8194 = vmatprep.subr.bf16.mxu0 %v7928
    %8195 = vmatpush1.bf16.msra.mxu0 %v7927
    %8196 = vmatprep.subr.bf16.mxu0 %v7930
    %8197 = vmatpush1.bf16.msra.mxu0 %v7929
    %8198 = vmatprep.subr.bf16.mxu0 %v7932
    %8199 = vmatpush1.bf16.msra.mxu0 %v7931
    %8200 = vmatprep.subr.bf16.mxu0 %v7934
    %8201 = vmatpush1.bf16.msra.mxu0 %v7933
    %8202 = vmatprep.subr.bf16.mxu0 %v7936
    %8203 = vmatpush1.bf16.msra.mxu0 %v7935
    %8204 = vmatprep.mubr.bf16.mxu0 %v7355
    %8205 = vmatmul.mubr.bf16.gmra.mrb[0].mxu0 %v7354
    %v8206 = vpop.f32.mrb[0].mxu0
    %v8207 = vadd.f32 %v8164, %v8206
    %v8208 = vpop.f32.mrb[0].mxu0
    %v8209 = vadd.f32 %v8166, %v8208
    %v8210 = vpop.f32.mrb[0].mxu0
    %v8211 = vadd.f32 %v8168, %v8210
    %v8212 = vpop.f32.mrb[0].mxu0
    %v8213 = vadd.f32 %v8170, %v8212
    %8214 = vdwg.mxu0
    %8215 = vmatprep.subr.bf16.mxu0 %v7938
    %8216 = vmatpush1.bf16.msra.mxu0 %v7937
    %8217 = vmatprep.subr.bf16.mxu0 %v7940
    %8218 = vmatpush1.bf16.msra.mxu0 %v7939
    %8219 = vmatprep.subr.bf16.mxu0 %v7942
    %8220 = vmatpush1.bf16.msra.mxu0 %v7941
    %8221 = vmatprep.subr.bf16.mxu0 %v7944
    %8222 = vmatpush1.bf16.msra.mxu0 %v7943
    %8223 = vmatprep.subr.bf16.mxu0 %v7946
    %8224 = vmatpush1.bf16.msra.mxu0 %v7945
    %8225 = vmatprep.subr.bf16.mxu0 %v7948
    %8226 = vmatpush1.bf16.msra.mxu0 %v7947
    %8227 = vmatprep.subr.bf16.mxu0 %v7950
    %8228 = vmatpush1.bf16.msra.mxu0 %v7949
    %8229 = vmatprep.subr.bf16.mxu0 %v7952
    %8230 = vmatpush1.bf16.msra.mxu0 %v7951
    %8231 = vmatprep.subr.bf16.mxu0 %v7954
    %8232 = vmatpush1.bf16.msra.mxu0 %v7953
    %8233 = vmatprep.subr.bf16.mxu0 %v7956
    %8234 = vmatpush1.bf16.msra.mxu0 %v7955
    %8235 = vmatprep.subr.bf16.mxu0 %v7958
    %8236 = vmatpush1.bf16.msra.mxu0 %v7957
    %8237 = vmatprep.subr.bf16.mxu0 %v7960
    %8238 = vmatpush1.bf16.msra.mxu0 %v7959
    %8239 = vmatprep.subr.bf16.mxu0 %v7962
    %8240 = vmatpush1.bf16.msra.mxu0 %v7961
    %8241 = vmatprep.subr.bf16.mxu0 %v7964
    %8242 = vmatpush1.bf16.msra.mxu0 %v7963
    %8243 = vmatprep.subr.bf16.mxu0 %v7966
    %8244 = vmatpush1.bf16.msra.mxu0 %v7965
    %8245 = vmatprep.subr.bf16.mxu0 %v7968
    %8246 = vmatpush1.bf16.msra.mxu0 %v7967
    %8247 = vmatprep.mubr.bf16.mxu0 %v7357
    %8248 = vmatmul.mubr.bf16.gmra.mrb[0].mxu0 %v7356
    %v8249 = vpop.f32.mrb[0].mxu0
    %v8250 = vadd.f32 %v8207, %v8249
    %v8251 = vpop.f32.mrb[0].mxu0
    %v8252 = vadd.f32 %v8209, %v8251
    %v8253 = vpop.f32.mrb[0].mxu0
    %v8254 = vadd.f32 %v8211, %v8253
    %v8255 = vpop.f32.mrb[0].mxu0
    %v8256 = vadd.f32 %v8213, %v8255
    %8257 = vdwg.mxu0
    %8258 = vmatprep.subr.bf16.mxu0 %v7970
    %8259 = vmatpush1.bf16.msra.mxu0 %v7969
    %8260 = vmatprep.subr.bf16.mxu0 %v7972
    %8261 = vmatpush1.bf16.msra.mxu0 %v7971
    %8262 = vmatprep.subr.bf16.mxu0 %v7974
    %8263 = vmatpush1.bf16.msra.mxu0 %v7973
    %8264 = vmatprep.subr.bf16.mxu0 %v7976
    %8265 = vmatpush1.bf16.msra.mxu0 %v7975
    %8266 = vmatprep.subr.bf16.mxu0 %v7978
    %8267 = vmatpush1.bf16.msra.mxu0 %v7977
    %8268 = vmatprep.subr.bf16.mxu0 %v7980
    %8269 = vmatpush1.bf16.msra.mxu0 %v7979
    %8270 = vmatprep.subr.bf16.mxu0 %v7982
    %8271 = vmatpush1.bf16.msra.mxu0 %v7981
    %8272 = vmatprep.subr.bf16.mxu0 %v7984
    %8273 = vmatpush1.bf16.msra.mxu0 %v7983
    %8274 = vmatprep.subr.bf16.mxu0 %v7986
    %8275 = vmatpush1.bf16.msra.mxu0 %v7985
    %8276 = vmatprep.subr.bf16.mxu0 %v7988
    %8277 = vmatpush1.bf16.msra.mxu0 %v7987
    %8278 = vmatprep.subr.bf16.mxu0 %v7990
    %8279 = vmatpush1.bf16.msra.mxu0 %v7989
    %8280 = vmatprep.subr.bf16.mxu0 %v7992
    %8281 = vmatpush1.bf16.msra.mxu0 %v7991
    %8282 = vmatprep.subr.bf16.mxu0 %v7994
    %8283 = vmatpush1.bf16.msra.mxu0 %v7993
    %8284 = vmatprep.subr.bf16.mxu0 %v7996
    %8285 = vmatpush1.bf16.msra.mxu0 %v7995
    %8286 = vmatprep.subr.bf16.mxu0 %v7998
    %8287 = vmatpush1.bf16.msra.mxu0 %v7997
    %8288 = vmatprep.subr.bf16.mxu0 %v8000
    %8289 = vmatpush1.bf16.msra.mxu0 %v7999
    %8290 = vmatprep.mubr.bf16.mxu0 %v7359
    %8291 = vmatmul.mubr.bf16.gmra.mrb[0].mxu0 %v7358
    %v8292 = vpop.f32.mrb[0].mxu0
    %v8293 = vadd.f32 %v8250, %v8292
    %v8294 = vpop.f32.mrb[0].mxu0
    %v8295 = vadd.f32 %v8252, %v8294
    %v8296 = vpop.f32.mrb[0].mxu0
    %v8297 = vadd.f32 %v8254, %v8296
    %v8298 = vpop.f32.mrb[0].mxu0
    %v8299 = vadd.f32 %v8256, %v8298
    %8300 = vdwg.mxu0
    %v8301 = vadd.f32 %v6168, %v8293
    %v8302 = vadd.f32 %v6169, %v8295
    %v8303 = vadd.f32 %v6170, %v8297
    %v8304 = vadd.f32 %v6171, %v8299
    %s8305 = scalar_lea.vmem %s17, 2
    %v8306 = vld [vmem:[%s8305] sm:$0x3]
    %v8308 = vlaneseq
    %v8309 = vshrl.u32 %v8308, 7
    %v8310 = vsub.s32 0, %v8309
    %v8311 = vrot.slane %v8306, %v8310
    %v8312 = vlaneseq
    %v8313 = vshrl.u32 %v8312, 7
    %v8314 = vsub.s32 1, %v8313
    %v8315 = vrot.slane %v8306, %v8314
    %v8318 = vadd.f32 %v8301, %v8311
    %v8319 = vadd.f32 %v8302, %v8315
    %v8320 = vadd.f32 %v8303, %v8311
    %v8321 = vadd.f32 %v8304, %v8315
    %v8324 = vrot.slane %v8320, 7
    %v8325 = vrot.slane %v8321, 7
    %vm8328 = vcmask 1040384
    %v8329 = vsel %vm8328, %v8318, %v8324
    %v8330 = vsel %vm8328, %v8319, %v8325
    %v8331 = vld [vmem:[%s18] sm:$0x3]
    %v8332 = vld [vmem:[%s19] sm:$0x3]
    %vm8333 = vcmask 1041408
    %v8334 = vsel %vm8333, %v8329, 0.0
    %v8335 = vsel %vm8333, %v8330, 0.0
    %v8336 = vadd.f32 %v8334, %v8335
    %8337 = vadd.xlane.f32.xlu0 %v8336
    %v8338 = vpop.xlane.xlu0 %8337
    %v8339 = vmul.f32 %v8338, %v829
    %v8340 = vsub.f32 %v8329, %v8339
    %v8341 = vsub.f32 %v8330, %v8339
    %v8342 = vmul.f32 %v8340, %v8340
    %v8343 = vmul.f32 %v8341, %v8341
    %v8344 = vsel %vm8333, %v8342, 0.0
    %v8345 = vsel %vm8333, %v8343, 0.0
    %v8346 = vadd.f32 %v8344, %v8345
    %8347 = vadd.xlane.f32.xlu0 %v8346
    %v8348 = vpop.xlane.xlu0 %8347
    %v8349 = vmul.f32 %v8348, %v829
    %v8350 = vadd.f32 %v8349, 1e-05
    %v8351 = vrsqrt.pop %v8350
    %v8352 = vmul.f32 %v8340, %v8351
    %v8353 = vmul.f32 %v8341, %v8351
    %v8355 = vlaneseq
    %v8356 = vshrl.u32 %v8355, 7
    %v8357 = vsub.s32 0, %v8356
    %v8358 = vrot.slane %v8331, %v8357
    %v8359 = vlaneseq
    %v8360 = vshrl.u32 %v8359, 7
    %v8361 = vsub.s32 1, %v8360
    %v8362 = vrot.slane %v8331, %v8361
    %v8365 = vmul.f32 %v8352, %v8358
    %v8366 = vmul.f32 %v8353, %v8362
    %v8368 = vlaneseq
    %v8369 = vshrl.u32 %v8368, 7
    %v8370 = vsub.s32 0, %v8369
    %v8371 = vrot.slane %v8332, %v8370
    %v8372 = vlaneseq
    %v8373 = vshrl.u32 %v8372, 7
    %v8374 = vsub.s32 1, %v8373
    %v8375 = vrot.slane %v8332, %v8374
    %v8378 = vadd.f32 %v8365, %v8371
    %v8379 = vadd.f32 %v8366, %v8375
    %v8380 = vpack.c.bf16 %v8378, %v8378
    %v8381 = vpack.c.bf16 %v8379, %v8379
    %v8382 = vld [vmem:[%s20] sm:$0xff]
    %v8383 = vld [vmem:[%s20 + $0x8] sm:$0xff]
    %v8384 = vld [vmem:[%s20 + $0x10] sm:$0xff]
    %v8385 = vld [vmem:[%s20 + $0x18] sm:$0xff]
    %v8386 = vld [vmem:[%s20 + $0x20] sm:$0xff]
    %v8387 = vld [vmem:[%s20 + $0x28] sm:$0xff]
    %v8388 = vld [vmem:[%s20 + $0x30] sm:$0xff]
    %v8389 = vld [vmem:[%s20 + $0x38] sm:$0xff]
    %v8390 = vld [vmem:[%s20 + $0x40] sm:$0xff]
    %v8391 = vld [vmem:[%s20 + $0x48] sm:$0xff]
    %v8392 = vld [vmem:[%s20 + $0x50] sm:$0xff]
    %v8393 = vld [vmem:[%s20 + $0x58] sm:$0xff]
    %v8394 = vld [vmem:[%s20 + $0x60] sm:$0xff]
    %v8395 = vld [vmem:[%s20 + $0x68] sm:$0xff]
    %v8396 = vld [vmem:[%s20 + $0x70] sm:$0xff]
    %v8397 = vld [vmem:[%s20 + $0x78] sm:$0xff]
    %v8398 = vld [vmem:[%s20 + $0x80] sm:$0xff]
    %v8399 = vld [vmem:[%s20 + $0x88] sm:$0xff]
    %v8400 = vld [vmem:[%s20 + $0x90] sm:$0xff]
    %v8401 = vld [vmem:[%s20 + $0x98] sm:$0xff]
    %v8402 = vld [vmem:[%s20 + $0xa0] sm:$0xff]
    %v8403 = vld [vmem:[%s20 + $0xa8] sm:$0xff]
    %v8404 = vld [vmem:[%s20 + $0xb0] sm:$0xff]
    %v8405 = vld [vmem:[%s20 + $0xb8] sm:$0xff]
    %v8406 = vld [vmem:[%s20 + $0xc0] sm:$0xff]
    %v8407 = vld [vmem:[%s20 + $0xc8] sm:$0xff]
    %v8408 = vld [vmem:[%s20 + $0xd0] sm:$0xff]
    %v8409 = vld [vmem:[%s20 + $0xd8] sm:$0xff]
    %v8410 = vld [vmem:[%s20 + $0xe0] sm:$0xff]
    %v8411 = vld [vmem:[%s20 + $0xe8] sm:$0xff]
    %v8412 = vld [vmem:[%s20 + $0xf0] sm:$0xff]
    %v8413 = vld [vmem:[%s20 + $0xf8] sm:$0xff]
    %v8414 = vld [vmem:[%s20 + $0x100] sm:$0xff]
    %v8415 = vld [vmem:[%s20 + $0x108] sm:$0xff]
    %v8416 = vld [vmem:[%s20 + $0x110] sm:$0xff]
    %v8417 = vld [vmem:[%s20 + $0x118] sm:$0xff]
    %v8418 = vld [vmem:[%s20 + $0x120] sm:$0xff]
    %v8419 = vld [vmem:[%s20 + $0x128] sm:$0xff]
    %v8420 = vld [vmem:[%s20 + $0x130] sm:$0xff]
    %v8421 = vld [vmem:[%s20 + $0x138] sm:$0xff]
    %v8422 = vld [vmem:[%s20 + $0x140] sm:$0xff]
    %v8423 = vld [vmem:[%s20 + $0x148] sm:$0xff]
    %v8424 = vld [vmem:[%s20 + $0x150] sm:$0xff]
    %v8425 = vld [vmem:[%s20 + $0x158] sm:$0xff]
    %v8426 = vld [vmem:[%s20 + $0x160] sm:$0xff]
    %v8427 = vld [vmem:[%s20 + $0x168] sm:$0xff]
    %v8428 = vld [vmem:[%s20 + $0x170] sm:$0xff]
    %v8429 = vld [vmem:[%s20 + $0x178] sm:$0xff]
    %v8430 = vld [vmem:[%s20 + $0x180] sm:$0xff]
    %v8431 = vld [vmem:[%s20 + $0x188] sm:$0xff]
    %v8432 = vld [vmem:[%s20 + $0x190] sm:$0xff]
    %v8433 = vld [vmem:[%s20 + $0x198] sm:$0xff]
    %v8434 = vld [vmem:[%s20 + $0x1a0] sm:$0xff]
    %v8435 = vld [vmem:[%s20 + $0x1a8] sm:$0xff]
    %v8436 = vld [vmem:[%s20 + $0x1b0] sm:$0xff]
    %v8437 = vld [vmem:[%s20 + $0x1b8] sm:$0xff]
    %v8438 = vld [vmem:[%s20 + $0x1c0] sm:$0xff]
    %v8439 = vld [vmem:[%s20 + $0x1c8] sm:$0xff]
    %v8440 = vld [vmem:[%s20 + $0x1d0] sm:$0xff]
    %v8441 = vld [vmem:[%s20 + $0x1d8] sm:$0xff]
    %v8442 = vld [vmem:[%s20 + $0x1e0] sm:$0xff]
    %v8443 = vld [vmem:[%s20 + $0x1e8] sm:$0xff]
    %v8444 = vld [vmem:[%s20 + $0x1f0] sm:$0xff]
    %v8445 = vld [vmem:[%s20 + $0x1f8] sm:$0xff]
    %v8446 = vld [vmem:[%s20 + $0x200] sm:$0xff]
    %v8447 = vld [vmem:[%s20 + $0x208] sm:$0xff]
    %v8448 = vld [vmem:[%s20 + $0x210] sm:$0xff]
    %v8449 = vld [vmem:[%s20 + $0x218] sm:$0xff]
    %v8450 = vld [vmem:[%s20 + $0x220] sm:$0xff]
    %v8451 = vld [vmem:[%s20 + $0x228] sm:$0xff]
    %v8452 = vld [vmem:[%s20 + $0x230] sm:$0xff]
    %v8453 = vld [vmem:[%s20 + $0x238] sm:$0xff]
    %v8454 = vld [vmem:[%s20 + $0x240] sm:$0xff]
    %v8455 = vld [vmem:[%s20 + $0x248] sm:$0xff]
    %v8456 = vld [vmem:[%s20 + $0x250] sm:$0xff]
    %v8457 = vld [vmem:[%s20 + $0x258] sm:$0xff]
    %v8458 = vld [vmem:[%s20 + $0x260] sm:$0xff]
    %v8459 = vld [vmem:[%s20 + $0x268] sm:$0xff]
    %v8460 = vld [vmem:[%s20 + $0x270] sm:$0xff]
    %v8461 = vld [vmem:[%s20 + $0x278] sm:$0xff]
    %v8462 = vld [vmem:[%s20 + $0x280] sm:$0xff]
    %v8463 = vld [vmem:[%s20 + $0x288] sm:$0xff]
    %v8464 = vld [vmem:[%s20 + $0x290] sm:$0xff]
    %v8465 = vld [vmem:[%s20 + $0x298] sm:$0xff]
    %v8466 = vld [vmem:[%s20 + $0x2a0] sm:$0xff]
    %v8467 = vld [vmem:[%s20 + $0x2a8] sm:$0xff]
    %v8468 = vld [vmem:[%s20 + $0x2b0] sm:$0xff]
    %v8469 = vld [vmem:[%s20 + $0x2b8] sm:$0xff]
    %v8470 = vld [vmem:[%s20 + $0x2c0] sm:$0xff]
    %v8471 = vld [vmem:[%s20 + $0x2c8] sm:$0xff]
    %v8472 = vld [vmem:[%s20 + $0x2d0] sm:$0xff]
    %v8473 = vld [vmem:[%s20 + $0x2d8] sm:$0xff]
    %v8474 = vld [vmem:[%s20 + $0x2e0] sm:$0xff]
    %v8475 = vld [vmem:[%s20 + $0x2e8] sm:$0xff]
    %v8476 = vld [vmem:[%s20 + $0x2f0] sm:$0xff]
    %v8477 = vld [vmem:[%s20 + $0x2f8] sm:$0xff]
    %v8574 = vunpack.c.l.b16 %v8382
    %v8575 = vunpack.c.h.b16 %v8382
    %v8576 = vunpack.c.l.b16 %v8383
    %v8577 = vunpack.c.h.b16 %v8383
    %v8578 = vunpack.c.l.b16 %v8384
    %v8579 = vunpack.c.h.b16 %v8384
    %v8580 = vunpack.c.l.b16 %v8385
    %v8581 = vunpack.c.h.b16 %v8385
    %v8582 = vunpack.c.l.b16 %v8386
    %v8583 = vunpack.c.h.b16 %v8386
    %v8584 = vunpack.c.l.b16 %v8387
    %v8585 = vunpack.c.h.b16 %v8387
    %v8586 = vunpack.c.l.b16 %v8388
    %v8587 = vunpack.c.h.b16 %v8388
    %v8588 = vunpack.c.l.b16 %v8389
    %v8589 = vunpack.c.h.b16 %v8389
    %v8590 = vunpack.c.l.b16 %v8390
    %v8591 = vunpack.c.h.b16 %v8390
    %v8592 = vunpack.c.l.b16 %v8391
    %v8593 = vunpack.c.h.b16 %v8391
    %v8594 = vunpack.c.l.b16 %v8392
    %v8595 = vunpack.c.h.b16 %v8392
    %v8596 = vunpack.c.l.b16 %v8393
    %v8597 = vunpack.c.h.b16 %v8393
    %v8598 = vunpack.c.l.b16 %v8394
    %v8599 = vunpack.c.h.b16 %v8394
    %v8600 = vunpack.c.l.b16 %v8395
    %v8601 = vunpack.c.h.b16 %v8395
    %v8602 = vunpack.c.l.b16 %v8396
    %v8603 = vunpack.c.h.b16 %v8396
    %v8604 = vunpack.c.l.b16 %v8397
    %v8605 = vunpack.c.h.b16 %v8397
    %v8606 = vunpack.c.l.b16 %v8398
    %v8607 = vunpack.c.h.b16 %v8398
    %v8608 = vunpack.c.l.b16 %v8399
    %v8609 = vunpack.c.h.b16 %v8399
    %v8610 = vunpack.c.l.b16 %v8400
    %v8611 = vunpack.c.h.b16 %v8400
    %v8612 = vunpack.c.l.b16 %v8401
    %v8613 = vunpack.c.h.b16 %v8401
    %v8614 = vunpack.c.l.b16 %v8402
    %v8615 = vunpack.c.h.b16 %v8402
    %v8616 = vunpack.c.l.b16 %v8403
    %v8617 = vunpack.c.h.b16 %v8403
    %v8618 = vunpack.c.l.b16 %v8404
    %v8619 = vunpack.c.h.b16 %v8404
    %v8620 = vunpack.c.l.b16 %v8405
    %v8621 = vunpack.c.h.b16 %v8405
    %v8622 = vunpack.c.l.b16 %v8406
    %v8623 = vunpack.c.h.b16 %v8406
    %v8624 = vunpack.c.l.b16 %v8407
    %v8625 = vunpack.c.h.b16 %v8407
    %v8626 = vunpack.c.l.b16 %v8408
    %v8627 = vunpack.c.h.b16 %v8408
    %v8628 = vunpack.c.l.b16 %v8409
    %v8629 = vunpack.c.h.b16 %v8409
    %v8630 = vunpack.c.l.b16 %v8410
    %v8631 = vunpack.c.h.b16 %v8410
    %v8632 = vunpack.c.l.b16 %v8411
    %v8633 = vunpack.c.h.b16 %v8411
    %v8634 = vunpack.c.l.b16 %v8412
    %v8635 = vunpack.c.h.b16 %v8412
    %v8636 = vunpack.c.l.b16 %v8413
    %v8637 = vunpack.c.h.b16 %v8413
    %v8638 = vunpack.c.l.b16 %v8414
    %v8639 = vunpack.c.h.b16 %v8414
    %v8640 = vunpack.c.l.b16 %v8415
    %v8641 = vunpack.c.h.b16 %v8415
    %v8642 = vunpack.c.l.b16 %v8416
    %v8643 = vunpack.c.h.b16 %v8416
    %v8644 = vunpack.c.l.b16 %v8417
    %v8645 = vunpack.c.h.b16 %v8417
    %v8646 = vunpack.c.l.b16 %v8418
    %v8647 = vunpack.c.h.b16 %v8418
    %v8648 = vunpack.c.l.b16 %v8419
    %v8649 = vunpack.c.h.b16 %v8419
    %v8650 = vunpack.c.l.b16 %v8420
    %v8651 = vunpack.c.h.b16 %v8420
    %v8652 = vunpack.c.l.b16 %v8421
    %v8653 = vunpack.c.h.b16 %v8421
    %v8654 = vunpack.c.l.b16 %v8422
    %v8655 = vunpack.c.h.b16 %v8422
    %v8656 = vunpack.c.l.b16 %v8423
    %v8657 = vunpack.c.h.b16 %v8423
    %v8658 = vunpack.c.l.b16 %v8424
    %v8659 = vunpack.c.h.b16 %v8424
    %v8660 = vunpack.c.l.b16 %v8425
    %v8661 = vunpack.c.h.b16 %v8425
    %v8662 = vunpack.c.l.b16 %v8426
    %v8663 = vunpack.c.h.b16 %v8426
    %v8664 = vunpack.c.l.b16 %v8427
    %v8665 = vunpack.c.h.b16 %v8427
    %v8666 = vunpack.c.l.b16 %v8428
    %v8667 = vunpack.c.h.b16 %v8428
    %v8668 = vunpack.c.l.b16 %v8429
    %v8669 = vunpack.c.h.b16 %v8429
    %v8670 = vunpack.c.l.b16 %v8430
    %v8671 = vunpack.c.h.b16 %v8430
    %v8672 = vunpack.c.l.b16 %v8431
    %v8673 = vunpack.c.h.b16 %v8431
    %v8674 = vunpack.c.l.b16 %v8432
    %v8675 = vunpack.c.h.b16 %v8432
    %v8676 = vunpack.c.l.b16 %v8433
    %v8677 = vunpack.c.h.b16 %v8433
    %v8678 = vunpack.c.l.b16 %v8434
    %v8679 = vunpack.c.h.b16 %v8434
    %v8680 = vunpack.c.l.b16 %v8435
    %v8681 = vunpack.c.h.b16 %v8435
    %v8682 = vunpack.c.l.b16 %v8436
    %v8683 = vunpack.c.h.b16 %v8436
    %v8684 = vunpack.c.l.b16 %v8437
    %v8685 = vunpack.c.h.b16 %v8437
    %v8686 = vunpack.c.l.b16 %v8438
    %v8687 = vunpack.c.h.b16 %v8438
    %v8688 = vunpack.c.l.b16 %v8439
    %v8689 = vunpack.c.h.b16 %v8439
    %v8690 = vunpack.c.l.b16 %v8440
    %v8691 = vunpack.c.h.b16 %v8440
    %v8692 = vunpack.c.l.b16 %v8441
    %v8693 = vunpack.c.h.b16 %v8441
    %v8694 = vunpack.c.l.b16 %v8442
    %v8695 = vunpack.c.h.b16 %v8442
    %v8696 = vunpack.c.l.b16 %v8443
    %v8697 = vunpack.c.h.b16 %v8443
    %v8698 = vunpack.c.l.b16 %v8444
    %v8699 = vunpack.c.h.b16 %v8444
    %v8700 = vunpack.c.l.b16 %v8445
    %v8701 = vunpack.c.h.b16 %v8445
    %v8702 = vunpack.c.l.b16 %v8446
    %v8703 = vunpack.c.h.b16 %v8446
    %v8704 = vunpack.c.l.b16 %v8447
    %v8705 = vunpack.c.h.b16 %v8447
    %v8706 = vunpack.c.l.b16 %v8448
    %v8707 = vunpack.c.h.b16 %v8448
    %v8708 = vunpack.c.l.b16 %v8449
    %v8709 = vunpack.c.h.b16 %v8449
    %v8710 = vunpack.c.l.b16 %v8450
    %v8711 = vunpack.c.h.b16 %v8450
    %v8712 = vunpack.c.l.b16 %v8451
    %v8713 = vunpack.c.h.b16 %v8451
    %v8714 = vunpack.c.l.b16 %v8452
    %v8715 = vunpack.c.h.b16 %v8452
    %v8716 = vunpack.c.l.b16 %v8453
    %v8717 = vunpack.c.h.b16 %v8453
    %v8718 = vunpack.c.l.b16 %v8454
    %v8719 = vunpack.c.h.b16 %v8454
    %v8720 = vunpack.c.l.b16 %v8455
    %v8721 = vunpack.c.h.b16 %v8455
    %v8722 = vunpack.c.l.b16 %v8456
    %v8723 = vunpack.c.h.b16 %v8456
    %v8724 = vunpack.c.l.b16 %v8457
    %v8725 = vunpack.c.h.b16 %v8457
    %v8726 = vunpack.c.l.b16 %v8458
    %v8727 = vunpack.c.h.b16 %v8458
    %v8728 = vunpack.c.l.b16 %v8459
    %v8729 = vunpack.c.h.b16 %v8459
    %v8730 = vunpack.c.l.b16 %v8460
    %v8731 = vunpack.c.h.b16 %v8460
    %v8732 = vunpack.c.l.b16 %v8461
    %v8733 = vunpack.c.h.b16 %v8461
    %v8734 = vunpack.c.l.b16 %v8462
    %v8735 = vunpack.c.h.b16 %v8462
    %v8736 = vunpack.c.l.b16 %v8463
    %v8737 = vunpack.c.h.b16 %v8463
    %v8738 = vunpack.c.l.b16 %v8464
    %v8739 = vunpack.c.h.b16 %v8464
    %v8740 = vunpack.c.l.b16 %v8465
    %v8741 = vunpack.c.h.b16 %v8465
    %v8742 = vunpack.c.l.b16 %v8466
    %v8743 = vunpack.c.h.b16 %v8466
    %v8744 = vunpack.c.l.b16 %v8467
    %v8745 = vunpack.c.h.b16 %v8467
    %v8746 = vunpack.c.l.b16 %v8468
    %v8747 = vunpack.c.h.b16 %v8468
    %v8748 = vunpack.c.l.b16 %v8469
    %v8749 = vunpack.c.h.b16 %v8469
    %v8750 = vunpack.c.l.b16 %v8470
    %v8751 = vunpack.c.h.b16 %v8470
    %v8752 = vunpack.c.l.b16 %v8471
    %v8753 = vunpack.c.h.b16 %v8471
    %v8754 = vunpack.c.l.b16 %v8472
    %v8755 = vunpack.c.h.b16 %v8472
    %v8756 = vunpack.c.l.b16 %v8473
    %v8757 = vunpack.c.h.b16 %v8473
    %v8758 = vunpack.c.l.b16 %v8474
    %v8759 = vunpack.c.h.b16 %v8474
    %v8760 = vunpack.c.l.b16 %v8475
    %v8761 = vunpack.c.h.b16 %v8475
    %v8762 = vunpack.c.l.b16 %v8476
    %v8763 = vunpack.c.h.b16 %v8476
    %v8764 = vunpack.c.l.b16 %v8477
    %v8765 = vunpack.c.h.b16 %v8477
    %v8766 = vpack.c.b16 %v8580, %v8574
    %v8767 = vpack.c.b16 %v8581, %v8575
    %v8768 = vpack.c.b16 %v8582, %v8576
    %v8769 = vpack.c.b16 %v8583, %v8577
    %v8770 = vpack.c.b16 %v8584, %v8578
    %v8771 = vpack.c.b16 %v8585, %v8579
    %v8772 = vpack.c.b16 %v8592, %v8586
    %v8773 = vpack.c.b16 %v8593, %v8587
    %v8774 = vpack.c.b16 %v8594, %v8588
    %v8775 = vpack.c.b16 %v8595, %v8589
    %v8776 = vpack.c.b16 %v8596, %v8590
    %v8777 = vpack.c.b16 %v8597, %v8591
    %v8778 = vpack.c.b16 %v8604, %v8598
    %v8779 = vpack.c.b16 %v8605, %v8599
    %v8780 = vpack.c.b16 %v8606, %v8600
    %v8781 = vpack.c.b16 %v8607, %v8601
    %v8782 = vpack.c.b16 %v8608, %v8602
    %v8783 = vpack.c.b16 %v8609, %v8603
    %v8784 = vpack.c.b16 %v8616, %v8610
    %v8785 = vpack.c.b16 %v8617, %v8611
    %v8786 = vpack.c.b16 %v8618, %v8612
    %v8787 = vpack.c.b16 %v8619, %v8613
    %v8788 = vpack.c.b16 %v8620, %v8614
    %v8789 = vpack.c.b16 %v8621, %v8615
    %v8790 = vpack.c.b16 %v8628, %v8622
    %v8791 = vpack.c.b16 %v8629, %v8623
    %v8792 = vpack.c.b16 %v8630, %v8624
    %v8793 = vpack.c.b16 %v8631, %v8625
    %v8794 = vpack.c.b16 %v8632, %v8626
    %v8795 = vpack.c.b16 %v8633, %v8627
    %v8796 = vpack.c.b16 %v8640, %v8634
    %v8797 = vpack.c.b16 %v8641, %v8635
    %v8798 = vpack.c.b16 %v8642, %v8636
    %v8799 = vpack.c.b16 %v8643, %v8637
    %v8800 = vpack.c.b16 %v8644, %v8638
    %v8801 = vpack.c.b16 %v8645, %v8639
    %v8802 = vpack.c.b16 %v8652, %v8646
    %v8803 = vpack.c.b16 %v8653, %v8647
    %v8804 = vpack.c.b16 %v8654, %v8648
    %v8805 = vpack.c.b16 %v8655, %v8649
    %v8806 = vpack.c.b16 %v8656, %v8650
    %v8807 = vpack.c.b16 %v8657, %v8651
    %v8808 = vpack.c.b16 %v8664, %v8658
    %v8809 = vpack.c.b16 %v8665, %v8659
    %v8810 = vpack.c.b16 %v8666, %v8660
    %v8811 = vpack.c.b16 %v8667, %v8661
    %v8812 = vpack.c.b16 %v8668, %v8662
    %v8813 = vpack.c.b16 %v8669, %v8663
    %v8814 = vpack.c.b16 %v8676, %v8670
    %v8815 = vpack.c.b16 %v8677, %v8671
    %v8816 = vpack.c.b16 %v8678, %v8672
    %v8817 = vpack.c.b16 %v8679, %v8673
    %v8818 = vpack.c.b16 %v8680, %v8674
    %v8819 = vpack.c.b16 %v8681, %v8675
    %v8820 = vpack.c.b16 %v8688, %v8682
    %v8821 = vpack.c.b16 %v8689, %v8683
    %v8822 = vpack.c.b16 %v8690, %v8684
    %v8823 = vpack.c.b16 %v8691, %v8685
    %v8824 = vpack.c.b16 %v8692, %v8686
    %v8825 = vpack.c.b16 %v8693, %v8687
    %v8826 = vpack.c.b16 %v8700, %v8694
    %v8827 = vpack.c.b16 %v8701, %v8695
    %v8828 = vpack.c.b16 %v8702, %v8696
    %v8829 = vpack.c.b16 %v8703, %v8697
    %v8830 = vpack.c.b16 %v8704, %v8698
    %v8831 = vpack.c.b16 %v8705, %v8699
    %v8832 = vpack.c.b16 %v8712, %v8706
    %v8833 = vpack.c.b16 %v8713, %v8707
    %v8834 = vpack.c.b16 %v8714, %v8708
    %v8835 = vpack.c.b16 %v8715, %v8709
    %v8836 = vpack.c.b16 %v8716, %v8710
    %v8837 = vpack.c.b16 %v8717, %v8711
    %v8838 = vpack.c.b16 %v8724, %v8718
    %v8839 = vpack.c.b16 %v8725, %v8719
    %v8840 = vpack.c.b16 %v8726, %v8720
    %v8841 = vpack.c.b16 %v8727, %v8721
    %v8842 = vpack.c.b16 %v8728, %v8722
    %v8843 = vpack.c.b16 %v8729, %v8723
    %v8844 = vpack.c.b16 %v8736, %v8730
    %v8845 = vpack.c.b16 %v8737, %v8731
    %v8846 = vpack.c.b16 %v8738, %v8732
    %v8847 = vpack.c.b16 %v8739, %v8733
    %v8848 = vpack.c.b16 %v8740, %v8734
    %v8849 = vpack.c.b16 %v8741, %v8735
    %v8850 = vpack.c.b16 %v8748, %v8742
    %v8851 = vpack.c.b16 %v8749, %v8743
    %v8852 = vpack.c.b16 %v8750, %v8744
    %v8853 = vpack.c.b16 %v8751, %v8745
    %v8854 = vpack.c.b16 %v8752, %v8746
    %v8855 = vpack.c.b16 %v8753, %v8747
    %v8856 = vpack.c.b16 %v8760, %v8754
    %v8857 = vpack.c.b16 %v8761, %v8755
    %v8858 = vpack.c.b16 %v8762, %v8756
    %v8859 = vpack.c.b16 %v8763, %v8757
    %v8860 = vpack.c.b16 %v8764, %v8758
    %v8861 = vpack.c.b16 %v8765, %v8759
    %8958 = vmatprep.subr.bf16.mxu0 %v8767
    %8959 = vmatpush1.bf16.msra.mxu0 %v8766
    %8960 = vmatprep.subr.bf16.mxu0 %v8773
    %8961 = vmatpush1.bf16.msra.mxu0 %v8772
    %8962 = vmatprep.subr.bf16.mxu0 %v8779
    %8963 = vmatpush1.bf16.msra.mxu0 %v8778
    %8964 = vmatprep.subr.bf16.mxu0 %v8785
    %8965 = vmatpush1.bf16.msra.mxu0 %v8784
    %8966 = vmatprep.subr.bf16.mxu0 %v8791
    %8967 = vmatpush1.bf16.msra.mxu0 %v8790
    %8968 = vmatprep.subr.bf16.mxu0 %v8797
    %8969 = vmatpush1.bf16.msra.mxu0 %v8796
    %8970 = vmatprep.subr.bf16.mxu0 %v8803
    %8971 = vmatpush1.bf16.msra.mxu0 %v8802
    %8972 = vmatprep.subr.bf16.mxu0 %v8809
    %8973 = vmatpush1.bf16.msra.mxu0 %v8808
    %8974 = vmatprep.subr.bf16.mxu0 %v8815
    %8975 = vmatpush1.bf16.msra.mxu0 %v8814
    %8976 = vmatprep.subr.bf16.mxu0 %v8821
    %8977 = vmatpush1.bf16.msra.mxu0 %v8820
    %8978 = vmatprep.subr.bf16.mxu0 %v8827
    %8979 = vmatpush1.bf16.msra.mxu0 %v8826
    %8980 = vmatprep.subr.bf16.mxu0 %v8833
    %8981 = vmatpush1.bf16.msra.mxu0 %v8832
    %8982 = vmatprep.subr.bf16.mxu0 %v8839
    %8983 = vmatpush1.bf16.msra.mxu0 %v8838
    %8984 = vmatprep.subr.bf16.mxu0 %v8845
    %8985 = vmatpush1.bf16.msra.mxu0 %v8844
    %8986 = vmatprep.subr.bf16.mxu0 %v8851
    %8987 = vmatpush1.bf16.msra.mxu0 %v8850
    %8988 = vmatprep.subr.bf16.mxu0 %v8857
    %8989 = vmatpush1.bf16.msra.mxu0 %v8856
    %8990 = vmatprep.mubr.bf16.mxu0 %v8381
    %8991 = vmatmul.mubr.bf16.gmra.mrb[0].mxu0 %v8380
    %v8992 = vpop.f32.mrb[0].mxu0
    %v8993 = vadd.f32 0.0, %v8992
    %v8994 = vpop.f32.mrb[0].mxu0
    %v8995 = vadd.f32 0.0, %v8994
    %v8996 = vpop.f32.mrb[0].mxu0
    %v8997 = vpop.f32.mrb[0].mxu0
    %8998 = vdwg.mxu0
    %8999 = vmatprep.subr.bf16.mxu0 %v8769
    %9000 = vmatpush1.bf16.msra.mxu0 %v8768
    %9001 = vmatprep.subr.bf16.mxu0 %v8775
    %9002 = vmatpush1.bf16.msra.mxu0 %v8774
    %9003 = vmatprep.subr.bf16.mxu0 %v8781
    %9004 = vmatpush1.bf16.msra.mxu0 %v8780
    %9005 = vmatprep.subr.bf16.mxu0 %v8787
    %9006 = vmatpush1.bf16.msra.mxu0 %v8786
    %9007 = vmatprep.subr.bf16.mxu0 %v8793
    %9008 = vmatpush1.bf16.msra.mxu0 %v8792
    %9009 = vmatprep.subr.bf16.mxu0 %v8799
    %9010 = vmatpush1.bf16.msra.mxu0 %v8798
    %9011 = vmatprep.subr.bf16.mxu0 %v8805
    %9012 = vmatpush1.bf16.msra.mxu0 %v8804
    %9013 = vmatprep.subr.bf16.mxu0 %v8811
    %9014 = vmatpush1.bf16.msra.mxu0 %v8810
    %9015 = vmatprep.subr.bf16.mxu0 %v8817
    %9016 = vmatpush1.bf16.msra.mxu0 %v8816
    %9017 = vmatprep.subr.bf16.mxu0 %v8823
    %9018 = vmatpush1.bf16.msra.mxu0 %v8822
    %9019 = vmatprep.subr.bf16.mxu0 %v8829
    %9020 = vmatpush1.bf16.msra.mxu0 %v8828
    %9021 = vmatprep.subr.bf16.mxu0 %v8835
    %9022 = vmatpush1.bf16.msra.mxu0 %v8834
    %9023 = vmatprep.subr.bf16.mxu0 %v8841
    %9024 = vmatpush1.bf16.msra.mxu0 %v8840
    %9025 = vmatprep.subr.bf16.mxu0 %v8847
    %9026 = vmatpush1.bf16.msra.mxu0 %v8846
    %9027 = vmatprep.subr.bf16.mxu0 %v8853
    %9028 = vmatpush1.bf16.msra.mxu0 %v8852
    %9029 = vmatprep.subr.bf16.mxu0 %v8859
    %9030 = vmatpush1.bf16.msra.mxu0 %v8858
    %9031 = vmatprep.mubr.bf16.mxu0 %v8381
    %9032 = vmatmul.mubr.bf16.gmra.mrb[0].mxu0 %v8380
    %v9033 = vpop.f32.mrb[0].mxu0
    %v9034 = vadd.f32 0.0, %v9033
    %v9035 = vpop.f32.mrb[0].mxu0
    %v9036 = vadd.f32 0.0, %v9035
    %v9037 = vpop.f32.mrb[0].mxu0
    %v9038 = vpop.f32.mrb[0].mxu0
    %9039 = vdwg.mxu0
    %9040 = vmatprep.subr.bf16.mxu0 %v8771
    %9041 = vmatpush1.bf16.msra.mxu0 %v8770
    %9042 = vmatprep.subr.bf16.mxu0 %v8777
    %9043 = vmatpush1.bf16.msra.mxu0 %v8776
    %9044 = vmatprep.subr.bf16.mxu0 %v8783
    %9045 = vmatpush1.bf16.msra.mxu0 %v8782
    %9046 = vmatprep.subr.bf16.mxu0 %v8789
    %9047 = vmatpush1.bf16.msra.mxu0 %v8788
    %9048 = vmatprep.subr.bf16.mxu0 %v8795
    %9049 = vmatpush1.bf16.msra.mxu0 %v8794
    %9050 = vmatprep.subr.bf16.mxu0 %v8801
    %9051 = vmatpush1.bf16.msra.mxu0 %v8800
    %9052 = vmatprep.subr.bf16.mxu0 %v8807
    %9053 = vmatpush1.bf16.msra.mxu0 %v8806
    %9054 = vmatprep.subr.bf16.mxu0 %v8813
    %9055 = vmatpush1.bf16.msra.mxu0 %v8812
    %9056 = vmatprep.subr.bf16.mxu0 %v8819
    %9057 = vmatpush1.bf16.msra.mxu0 %v8818
    %9058 = vmatprep.subr.bf16.mxu0 %v8825
    %9059 = vmatpush1.bf16.msra.mxu0 %v8824
    %9060 = vmatprep.subr.bf16.mxu0 %v8831
    %9061 = vmatpush1.bf16.msra.mxu0 %v8830
    %9062 = vmatprep.subr.bf16.mxu0 %v8837
    %9063 = vmatpush1.bf16.msra.mxu0 %v8836
    %9064 = vmatprep.subr.bf16.mxu0 %v8843
    %9065 = vmatpush1.bf16.msra.mxu0 %v8842
    %9066 = vmatprep.subr.bf16.mxu0 %v8849
    %9067 = vmatpush1.bf16.msra.mxu0 %v8848
    %9068 = vmatprep.subr.bf16.mxu0 %v8855
    %9069 = vmatpush1.bf16.msra.mxu0 %v8854
    %9070 = vmatprep.subr.bf16.mxu0 %v8861
    %9071 = vmatpush1.bf16.msra.mxu0 %v8860
    %9072 = vmatprep.mubr.bf16.mxu0 %v8381
    %9073 = vmatmul.mubr.bf16.gmra.mrb[0].mxu0 %v8380
    %v9074 = vpop.f32.mrb[0].mxu0
    %v9075 = vadd.f32 0.0, %v9074
    %v9076 = vpop.f32.mrb[0].mxu0
    %v9077 = vadd.f32 0.0, %v9076
    %v9078 = vpop.f32.mrb[0].mxu0
    %v9079 = vpop.f32.mrb[0].mxu0
    %9080 = vdwg.mxu0
    %v9081 = vmul.f32 %v8993, %v8993
    %v9082 = vmul.f32 %v8995, %v8995
    %v9083 = vmul.f32 %v9034, %v9034
    %v9084 = vmul.f32 %v9036, %v9036
    %v9085 = vmul.f32 %v9075, %v9075
    %v9086 = vmul.f32 %v9077, %v9077
    %v9087 = vsel %vm8333, %v9081, 0.0
    %v9088 = vsel %vm8333, %v9082, 0.0
    %v9089 = vadd.f32 %v9087, %v9088
    %v9090 = vsel %vm8333, %v9083, 0.0
    %v9091 = vadd.f32 %v9089, %v9090
    %v9092 = vsel %vm8333, %v9084, 0.0
    %v9093 = vadd.f32 %v9091, %v9092
    %v9094 = vsel %vm8333, %v9085, 0.0
    %v9095 = vadd.f32 %v9093, %v9094
    %v9096 = vsel %vm8333, %v9086, 0.0
    %v9097 = vadd.f32 %v9095, %v9096
    %9098 = vadd.xlane.f32.xlu0 %v9097
    %v9099 = vpop.xlane.xlu0 %9098
    %v9100 = vadd.f32 %v9099, 1e-12
    %v9101 = vrsqrt.pop %v9100
    %v9102 = vmul.f32 %v8993, %v9101
    %v9103 = vmul.f32 %v8995, %v9101
    %v9104 = vmul.f32 %v9034, %v9101
    %v9105 = vmul.f32 %v9036, %v9101
    %v9106 = vmul.f32 %v9075, %v9101
    %v9107 = vmul.f32 %v9077, %v9101
    %v9108 = vpack.c.bf16 %v9102, %v9102
    %v9109 = vpack.c.bf16 %v9103, %v9103
    %v9110 = vpack.c.bf16 %v9104, %v9104
    %v9111 = vpack.c.bf16 %v9105, %v9105
    %v9112 = vpack.c.bf16 %v9106, %v9106
    %v9113 = vpack.c.bf16 %v9107, %v9107
    %v9114 = vld [vmem:[%s21] sm:$0xff]
    %v9115 = vld [vmem:[%s21 + $0x8] sm:$0xff]
    %v9116 = vld [vmem:[%s21 + $0x10] sm:$0xff]
    %v9117 = vld [vmem:[%s21 + $0x18] sm:$0xff]
    %v9118 = vld [vmem:[%s21 + $0x20] sm:$0xff]
    %v9119 = vld [vmem:[%s21 + $0x28] sm:$0xff]
    %v9120 = vld [vmem:[%s21 + $0x30] sm:$0xff]
    %v9121 = vld [vmem:[%s21 + $0x38] sm:$0xff]
    %v9122 = vld [vmem:[%s21 + $0x40] sm:$0xff]
    %v9123 = vld [vmem:[%s21 + $0x48] sm:$0xff]
    %v9124 = vld [vmem:[%s21 + $0x50] sm:$0xff]
    %v9125 = vld [vmem:[%s21 + $0x58] sm:$0xff]
    %v9126 = vld [vmem:[%s21 + $0x60] sm:$0xff]
    %v9127 = vld [vmem:[%s21 + $0x68] sm:$0xff]
    %v9128 = vld [vmem:[%s21 + $0x70] sm:$0xff]
    %v9129 = vld [vmem:[%s21 + $0x78] sm:$0xff]
    %v9130 = vld [vmem:[%s21 + $0x80] sm:$0xff]
    %v9131 = vld [vmem:[%s21 + $0x88] sm:$0xff]
    %v9132 = vld [vmem:[%s21 + $0x90] sm:$0xff]
    %v9133 = vld [vmem:[%s21 + $0x98] sm:$0xff]
    %v9134 = vld [vmem:[%s21 + $0xa0] sm:$0xff]
    %v9135 = vld [vmem:[%s21 + $0xa8] sm:$0xff]
    %v9136 = vld [vmem:[%s21 + $0xb0] sm:$0xff]
    %v9137 = vld [vmem:[%s21 + $0xb8] sm:$0xff]
    %v9138 = vld [vmem:[%s21 + $0xc0] sm:$0xff]
    %v9139 = vld [vmem:[%s21 + $0xc8] sm:$0xff]
    %v9140 = vld [vmem:[%s21 + $0xd0] sm:$0xff]
    %v9141 = vld [vmem:[%s21 + $0xd8] sm:$0xff]
    %v9142 = vld [vmem:[%s21 + $0xe0] sm:$0xff]
    %v9143 = vld [vmem:[%s21 + $0xe8] sm:$0xff]
    %v9144 = vld [vmem:[%s21 + $0xf0] sm:$0xff]
    %v9145 = vld [vmem:[%s21 + $0xf8] sm:$0xff]
    %v9146 = vld [vmem:[%s21 + $0x100] sm:$0xff]
    %v9147 = vld [vmem:[%s21 + $0x108] sm:$0xff]
    %v9148 = vld [vmem:[%s21 + $0x110] sm:$0xff]
    %v9149 = vld [vmem:[%s21 + $0x118] sm:$0xff]
    %v9150 = vld [vmem:[%s21 + $0x120] sm:$0xff]
    %v9151 = vld [vmem:[%s21 + $0x128] sm:$0xff]
    %v9152 = vld [vmem:[%s21 + $0x130] sm:$0xff]
    %v9153 = vld [vmem:[%s21 + $0x138] sm:$0xff]
    %v9154 = vld [vmem:[%s21 + $0x140] sm:$0xff]
    %v9155 = vld [vmem:[%s21 + $0x148] sm:$0xff]
    %v9156 = vld [vmem:[%s21 + $0x150] sm:$0xff]
    %v9157 = vld [vmem:[%s21 + $0x158] sm:$0xff]
    %v9158 = vld [vmem:[%s21 + $0x160] sm:$0xff]
    %v9159 = vld [vmem:[%s21 + $0x168] sm:$0xff]
    %v9160 = vld [vmem:[%s21 + $0x170] sm:$0xff]
    %v9161 = vld [vmem:[%s21 + $0x178] sm:$0xff]
    %v9162 = vld [vmem:[%s21 + $0x180] sm:$0xff]
    %v9163 = vld [vmem:[%s21 + $0x188] sm:$0xff]
    %v9164 = vld [vmem:[%s21 + $0x190] sm:$0xff]
    %v9165 = vld [vmem:[%s21 + $0x198] sm:$0xff]
    %v9166 = vld [vmem:[%s21 + $0x1a0] sm:$0xff]
    %v9167 = vld [vmem:[%s21 + $0x1a8] sm:$0xff]
    %v9168 = vld [vmem:[%s21 + $0x1b0] sm:$0xff]
    %v9169 = vld [vmem:[%s21 + $0x1b8] sm:$0xff]
    %v9170 = vld [vmem:[%s21 + $0x1c0] sm:$0xff]
    %v9171 = vld [vmem:[%s21 + $0x1c8] sm:$0xff]
    %v9172 = vld [vmem:[%s21 + $0x1d0] sm:$0xff]
    %v9173 = vld [vmem:[%s21 + $0x1d8] sm:$0xff]
    %v9174 = vld [vmem:[%s21 + $0x1e0] sm:$0xff]
    %v9175 = vld [vmem:[%s21 + $0x1e8] sm:$0xff]
    %v9176 = vld [vmem:[%s21 + $0x1f0] sm:$0xff]
    %v9177 = vld [vmem:[%s21 + $0x1f8] sm:$0xff]
    %v9178 = vld [vmem:[%s21 + $0x200] sm:$0xff]
    %v9179 = vld [vmem:[%s21 + $0x208] sm:$0xff]
    %v9180 = vld [vmem:[%s21 + $0x210] sm:$0xff]
    %v9181 = vld [vmem:[%s21 + $0x218] sm:$0xff]
    %v9182 = vld [vmem:[%s21 + $0x220] sm:$0xff]
    %v9183 = vld [vmem:[%s21 + $0x228] sm:$0xff]
    %v9184 = vld [vmem:[%s21 + $0x230] sm:$0xff]
    %v9185 = vld [vmem:[%s21 + $0x238] sm:$0xff]
    %v9186 = vld [vmem:[%s21 + $0x240] sm:$0xff]
    %v9187 = vld [vmem:[%s21 + $0x248] sm:$0xff]
    %v9188 = vld [vmem:[%s21 + $0x250] sm:$0xff]
    %v9189 = vld [vmem:[%s21 + $0x258] sm:$0xff]
    %v9190 = vld [vmem:[%s21 + $0x260] sm:$0xff]
    %v9191 = vld [vmem:[%s21 + $0x268] sm:$0xff]
    %v9192 = vld [vmem:[%s21 + $0x270] sm:$0xff]
    %v9193 = vld [vmem:[%s21 + $0x278] sm:$0xff]
    %v9194 = vld [vmem:[%s21 + $0x280] sm:$0xff]
    %v9195 = vld [vmem:[%s21 + $0x288] sm:$0xff]
    %v9196 = vld [vmem:[%s21 + $0x290] sm:$0xff]
    %v9197 = vld [vmem:[%s21 + $0x298] sm:$0xff]
    %v9198 = vld [vmem:[%s21 + $0x2a0] sm:$0xff]
    %v9199 = vld [vmem:[%s21 + $0x2a8] sm:$0xff]
    %v9200 = vld [vmem:[%s21 + $0x2b0] sm:$0xff]
    %v9201 = vld [vmem:[%s21 + $0x2b8] sm:$0xff]
    %v9202 = vld [vmem:[%s21 + $0x2c0] sm:$0xff]
    %v9203 = vld [vmem:[%s21 + $0x2c8] sm:$0xff]
    %v9204 = vld [vmem:[%s21 + $0x2d0] sm:$0xff]
    %v9205 = vld [vmem:[%s21 + $0x2d8] sm:$0xff]
    %v9206 = vld [vmem:[%s21 + $0x2e0] sm:$0xff]
    %v9207 = vld [vmem:[%s21 + $0x2e8] sm:$0xff]
    %v9208 = vld [vmem:[%s21 + $0x2f0] sm:$0xff]
    %v9209 = vld [vmem:[%s21 + $0x2f8] sm:$0xff]
    %v9210 = vld [vmem:[%s21 + $0x300] sm:$0xff]
    %v9211 = vld [vmem:[%s21 + $0x308] sm:$0xff]
    %v9212 = vld [vmem:[%s21 + $0x310] sm:$0xff]
    %v9213 = vld [vmem:[%s21 + $0x318] sm:$0xff]
    %v9214 = vld [vmem:[%s21 + $0x320] sm:$0xff]
    %v9215 = vld [vmem:[%s21 + $0x328] sm:$0xff]
    %v9216 = vld [vmem:[%s21 + $0x330] sm:$0xff]
    %v9217 = vld [vmem:[%s21 + $0x338] sm:$0xff]
    %v9218 = vld [vmem:[%s21 + $0x340] sm:$0xff]
    %v9219 = vld [vmem:[%s21 + $0x348] sm:$0xff]
    %v9220 = vld [vmem:[%s21 + $0x350] sm:$0xff]
    %v9221 = vld [vmem:[%s21 + $0x358] sm:$0xff]
    %v9222 = vld [vmem:[%s21 + $0x360] sm:$0xff]
    %v9223 = vld [vmem:[%s21 + $0x368] sm:$0xff]
    %v9224 = vld [vmem:[%s21 + $0x370] sm:$0xff]
    %v9225 = vld [vmem:[%s21 + $0x378] sm:$0xff]
    %v9226 = vld [vmem:[%s21 + $0x380] sm:$0xff]
    %v9227 = vld [vmem:[%s21 + $0x388] sm:$0xff]
    %v9228 = vld [vmem:[%s21 + $0x390] sm:$0xff]
    %v9229 = vld [vmem:[%s21 + $0x398] sm:$0xff]
    %v9230 = vld [vmem:[%s21 + $0x3a0] sm:$0xff]
    %v9231 = vld [vmem:[%s21 + $0x3a8] sm:$0xff]
    %v9232 = vld [vmem:[%s21 + $0x3b0] sm:$0xff]
    %v9233 = vld [vmem:[%s21 + $0x3b8] sm:$0xff]
    %v9234 = vld [vmem:[%s21 + $0x3c0] sm:$0xff]
    %v9235 = vld [vmem:[%s21 + $0x3c8] sm:$0xff]
    %v9236 = vld [vmem:[%s21 + $0x3d0] sm:$0xff]
    %v9237 = vld [vmem:[%s21 + $0x3d8] sm:$0xff]
    %v9238 = vld [vmem:[%s21 + $0x3e0] sm:$0xff]
    %v9239 = vld [vmem:[%s21 + $0x3e8] sm:$0xff]
    %v9240 = vld [vmem:[%s21 + $0x3f0] sm:$0xff]
    %v9241 = vld [vmem:[%s21 + $0x3f8] sm:$0xff]
    %v9242 = vld [vmem:[%s21 + $0x400] sm:$0xff]
    %v9243 = vld [vmem:[%s21 + $0x408] sm:$0xff]
    %v9244 = vld [vmem:[%s21 + $0x410] sm:$0xff]
    %v9245 = vld [vmem:[%s21 + $0x418] sm:$0xff]
    %v9246 = vld [vmem:[%s21 + $0x420] sm:$0xff]
    %v9247 = vld [vmem:[%s21 + $0x428] sm:$0xff]
    %v9248 = vld [vmem:[%s21 + $0x430] sm:$0xff]
    %v9249 = vld [vmem:[%s21 + $0x438] sm:$0xff]
    %v9250 = vld [vmem:[%s21 + $0x440] sm:$0xff]
    %v9251 = vld [vmem:[%s21 + $0x448] sm:$0xff]
    %v9252 = vld [vmem:[%s21 + $0x450] sm:$0xff]
    %v9253 = vld [vmem:[%s21 + $0x458] sm:$0xff]
    %v9254 = vld [vmem:[%s21 + $0x460] sm:$0xff]
    %v9255 = vld [vmem:[%s21 + $0x468] sm:$0xff]
    %v9256 = vld [vmem:[%s21 + $0x470] sm:$0xff]
    %v9257 = vld [vmem:[%s21 + $0x478] sm:$0xff]
    %v9258 = vld [vmem:[%s21 + $0x480] sm:$0xff]
    %v9259 = vld [vmem:[%s21 + $0x488] sm:$0xff]
    %v9260 = vld [vmem:[%s21 + $0x490] sm:$0xff]
    %v9261 = vld [vmem:[%s21 + $0x498] sm:$0xff]
    %v9262 = vld [vmem:[%s21 + $0x4a0] sm:$0xff]
    %v9263 = vld [vmem:[%s21 + $0x4a8] sm:$0xff]
    %v9264 = vld [vmem:[%s21 + $0x4b0] sm:$0xff]
    %v9265 = vld [vmem:[%s21 + $0x4b8] sm:$0xff]
    %v9266 = vld [vmem:[%s21 + $0x4c0] sm:$0xff]
    %v9267 = vld [vmem:[%s21 + $0x4c8] sm:$0xff]
    %v9268 = vld [vmem:[%s21 + $0x4d0] sm:$0xff]
    %v9269 = vld [vmem:[%s21 + $0x4d8] sm:$0xff]
    %v9270 = vld [vmem:[%s21 + $0x4e0] sm:$0xff]
    %v9271 = vld [vmem:[%s21 + $0x4e8] sm:$0xff]
    %v9272 = vld [vmem:[%s21 + $0x4f0] sm:$0xff]
    %v9273 = vld [vmem:[%s21 + $0x4f8] sm:$0xff]
    %v9274 = vld [vmem:[%s21 + $0x500] sm:$0xff]
    %v9275 = vld [vmem:[%s21 + $0x508] sm:$0xff]
    %v9276 = vld [vmem:[%s21 + $0x510] sm:$0xff]
    %v9277 = vld [vmem:[%s21 + $0x518] sm:$0xff]
    %v9278 = vld [vmem:[%s21 + $0x520] sm:$0xff]
    %v9279 = vld [vmem:[%s21 + $0x528] sm:$0xff]
    %v9280 = vld [vmem:[%s21 + $0x530] sm:$0xff]
    %v9281 = vld [vmem:[%s21 + $0x538] sm:$0xff]
    %v9282 = vld [vmem:[%s21 + $0x540] sm:$0xff]
    %v9283 = vld [vmem:[%s21 + $0x548] sm:$0xff]
    %v9284 = vld [vmem:[%s21 + $0x550] sm:$0xff]
    %v9285 = vld [vmem:[%s21 + $0x558] sm:$0xff]
    %v9286 = vld [vmem:[%s21 + $0x560] sm:$0xff]
    %v9287 = vld [vmem:[%s21 + $0x568] sm:$0xff]
    %v9288 = vld [vmem:[%s21 + $0x570] sm:$0xff]
    %v9289 = vld [vmem:[%s21 + $0x578] sm:$0xff]
    %v9290 = vld [vmem:[%s21 + $0x580] sm:$0xff]
    %v9291 = vld [vmem:[%s21 + $0x588] sm:$0xff]
    %v9292 = vld [vmem:[%s21 + $0x590] sm:$0xff]
    %v9293 = vld [vmem:[%s21 + $0x598] sm:$0xff]
    %v9294 = vld [vmem:[%s21 + $0x5a0] sm:$0xff]
    %v9295 = vld [vmem:[%s21 + $0x5a8] sm:$0xff]
    %v9296 = vld [vmem:[%s21 + $0x5b0] sm:$0xff]
    %v9297 = vld [vmem:[%s21 + $0x5b8] sm:$0xff]
    %v9298 = vld [vmem:[%s21 + $0x5c0] sm:$0xff]
    %v9299 = vld [vmem:[%s21 + $0x5c8] sm:$0xff]
    %v9300 = vld [vmem:[%s21 + $0x5d0] sm:$0xff]
    %v9301 = vld [vmem:[%s21 + $0x5d8] sm:$0xff]
    %v9302 = vld [vmem:[%s21 + $0x5e0] sm:$0xff]
    %v9303 = vld [vmem:[%s21 + $0x5e8] sm:$0xff]
    %v9304 = vld [vmem:[%s21 + $0x5f0] sm:$0xff]
    %v9305 = vld [vmem:[%s21 + $0x5f8] sm:$0xff]
    %v9306 = vld [vmem:[%s22] sm:$0xf]
    %v9308 = vlaneseq
    %v9309 = vshrl.u32 %v9308, 7
    %v9310 = vsub.s32 0, %v9309
    %v9311 = vrot.slane %v9306, %v9310
    %v9312 = vlaneseq
    %v9313 = vshrl.u32 %v9312, 7
    %v9314 = vsub.s32 1, %v9313
    %v9315 = vrot.slane %v9306, %v9314
    %v9316 = vlaneseq
    %v9317 = vshrl.u32 %v9316, 7
    %v9318 = vsub.s32 2, %v9317
    %v9319 = vrot.slane %v9306, %v9318
    %v9320 = vlaneseq
    %v9321 = vshrl.u32 %v9320, 7
    %v9322 = vsub.s32 3, %v9321
    %v9323 = vrot.slane %v9306, %v9322
    %v9520 = vunpack.c.l.b16 %v9114
    %v9521 = vunpack.c.h.b16 %v9114
    %v9522 = vunpack.c.l.b16 %v9115
    %v9523 = vunpack.c.h.b16 %v9115
    %v9524 = vunpack.c.l.b16 %v9116
    %v9525 = vunpack.c.h.b16 %v9116
    %v9526 = vunpack.c.l.b16 %v9117
    %v9527 = vunpack.c.h.b16 %v9117
    %v9528 = vunpack.c.l.b16 %v9118
    %v9529 = vunpack.c.h.b16 %v9118
    %v9530 = vunpack.c.l.b16 %v9119
    %v9531 = vunpack.c.h.b16 %v9119
    %v9532 = vunpack.c.l.b16 %v9120
    %v9533 = vunpack.c.h.b16 %v9120
    %v9534 = vunpack.c.l.b16 %v9121
    %v9535 = vunpack.c.h.b16 %v9121
    %v9536 = vunpack.c.l.b16 %v9122
    %v9537 = vunpack.c.h.b16 %v9122
    %v9538 = vunpack.c.l.b16 %v9123
    %v9539 = vunpack.c.h.b16 %v9123
    %v9540 = vunpack.c.l.b16 %v9124
    %v9541 = vunpack.c.h.b16 %v9124
    %v9542 = vunpack.c.l.b16 %v9125
    %v9543 = vunpack.c.h.b16 %v9125
    %v9544 = vunpack.c.l.b16 %v9126
    %v9545 = vunpack.c.h.b16 %v9126
    %v9546 = vunpack.c.l.b16 %v9127
    %v9547 = vunpack.c.h.b16 %v9127
    %v9548 = vunpack.c.l.b16 %v9128
    %v9549 = vunpack.c.h.b16 %v9128
    %v9550 = vunpack.c.l.b16 %v9129
    %v9551 = vunpack.c.h.b16 %v9129
    %v9552 = vunpack.c.l.b16 %v9130
    %v9553 = vunpack.c.h.b16 %v9130
    %v9554 = vunpack.c.l.b16 %v9131
    %v9555 = vunpack.c.h.b16 %v9131
    %v9556 = vunpack.c.l.b16 %v9132
    %v9557 = vunpack.c.h.b16 %v9132
    %v9558 = vunpack.c.l.b16 %v9133
    %v9559 = vunpack.c.h.b16 %v9133
    %v9560 = vunpack.c.l.b16 %v9134
    %v9561 = vunpack.c.h.b16 %v9134
    %v9562 = vunpack.c.l.b16 %v9135
    %v9563 = vunpack.c.h.b16 %v9135
    %v9564 = vunpack.c.l.b16 %v9136
    %v9565 = vunpack.c.h.b16 %v9136
    %v9566 = vunpack.c.l.b16 %v9137
    %v9567 = vunpack.c.h.b16 %v9137
    %v9568 = vunpack.c.l.b16 %v9138
    %v9569 = vunpack.c.h.b16 %v9138
    %v9570 = vunpack.c.l.b16 %v9139
    %v9571 = vunpack.c.h.b16 %v9139
    %v9572 = vunpack.c.l.b16 %v9140
    %v9573 = vunpack.c.h.b16 %v9140
    %v9574 = vunpack.c.l.b16 %v9141
    %v9575 = vunpack.c.h.b16 %v9141
    %v9576 = vunpack.c.l.b16 %v9142
    %v9577 = vunpack.c.h.b16 %v9142
    %v9578 = vunpack.c.l.b16 %v9143
    %v9579 = vunpack.c.h.b16 %v9143
    %v9580 = vunpack.c.l.b16 %v9144
    %v9581 = vunpack.c.h.b16 %v9144
    %v9582 = vunpack.c.l.b16 %v9145
    %v9583 = vunpack.c.h.b16 %v9145
    %v9584 = vunpack.c.l.b16 %v9146
    %v9585 = vunpack.c.h.b16 %v9146
    %v9586 = vunpack.c.l.b16 %v9147
    %v9587 = vunpack.c.h.b16 %v9147
    %v9588 = vunpack.c.l.b16 %v9148
    %v9589 = vunpack.c.h.b16 %v9148
    %v9590 = vunpack.c.l.b16 %v9149
    %v9591 = vunpack.c.h.b16 %v9149
    %v9592 = vunpack.c.l.b16 %v9150
    %v9593 = vunpack.c.h.b16 %v9150
    %v9594 = vunpack.c.l.b16 %v9151
    %v9595 = vunpack.c.h.b16 %v9151
    %v9596 = vunpack.c.l.b16 %v9152
    %v9597 = vunpack.c.h.b16 %v9152
    %v9598 = vunpack.c.l.b16 %v9153
    %v9599 = vunpack.c.h.b16 %v9153
    %v9600 = vunpack.c.l.b16 %v9154
    %v9601 = vunpack.c.h.b16 %v9154
    %v9602 = vunpack.c.l.b16 %v9155
    %v9603 = vunpack.c.h.b16 %v9155
    %v9604 = vunpack.c.l.b16 %v9156
    %v9605 = vunpack.c.h.b16 %v9156
    %v9606 = vunpack.c.l.b16 %v9157
    %v9607 = vunpack.c.h.b16 %v9157
    %v9608 = vunpack.c.l.b16 %v9158
    %v9609 = vunpack.c.h.b16 %v9158
    %v9610 = vunpack.c.l.b16 %v9159
    %v9611 = vunpack.c.h.b16 %v9159
    %v9612 = vunpack.c.l.b16 %v9160
    %v9613 = vunpack.c.h.b16 %v9160
    %v9614 = vunpack.c.l.b16 %v9161
    %v9615 = vunpack.c.h.b16 %v9161
    %v9616 = vunpack.c.l.b16 %v9162
    %v9617 = vunpack.c.h.b16 %v9162
    %v9618 = vunpack.c.l.b16 %v9163
    %v9619 = vunpack.c.h.b16 %v9163
    %v9620 = vunpack.c.l.b16 %v9164
    %v9621 = vunpack.c.h.b16 %v9164
    %v9622 = vunpack.c.l.b16 %v9165
    %v9623 = vunpack.c.h.b16 %v9165
    %v9624 = vunpack.c.l.b16 %v9166
    %v9625 = vunpack.c.h.b16 %v9166
    %v9626 = vunpack.c.l.b16 %v9167
    %v9627 = vunpack.c.h.b16 %v9167
    %v9628 = vunpack.c.l.b16 %v9168
    %v9629 = vunpack.c.h.b16 %v9168
    %v9630 = vunpack.c.l.b16 %v9169
    %v9631 = vunpack.c.h.b16 %v9169
    %v9632 = vunpack.c.l.b16 %v9170
    %v9633 = vunpack.c.h.b16 %v9170
    %v9634 = vunpack.c.l.b16 %v9171
    %v9635 = vunpack.c.h.b16 %v9171
    %v9636 = vunpack.c.l.b16 %v9172
    %v9637 = vunpack.c.h.b16 %v9172
    %v9638 = vunpack.c.l.b16 %v9173
    %v9639 = vunpack.c.h.b16 %v9173
    %v9640 = vunpack.c.l.b16 %v9174
    %v9641 = vunpack.c.h.b16 %v9174
    %v9642 = vunpack.c.l.b16 %v9175
    %v9643 = vunpack.c.h.b16 %v9175
    %v9644 = vunpack.c.l.b16 %v9176
    %v9645 = vunpack.c.h.b16 %v9176
    %v9646 = vunpack.c.l.b16 %v9177
    %v9647 = vunpack.c.h.b16 %v9177
    %v9648 = vunpack.c.l.b16 %v9178
    %v9649 = vunpack.c.h.b16 %v9178
    %v9650 = vunpack.c.l.b16 %v9179
    %v9651 = vunpack.c.h.b16 %v9179
    %v9652 = vunpack.c.l.b16 %v9180
    %v9653 = vunpack.c.h.b16 %v9180
    %v9654 = vunpack.c.l.b16 %v9181
    %v9655 = vunpack.c.h.b16 %v9181
    %v9656 = vunpack.c.l.b16 %v9182
    %v9657 = vunpack.c.h.b16 %v9182
    %v9658 = vunpack.c.l.b16 %v9183
    %v9659 = vunpack.c.h.b16 %v9183
    %v9660 = vunpack.c.l.b16 %v9184
    %v9661 = vunpack.c.h.b16 %v9184
    %v9662 = vunpack.c.l.b16 %v9185
    %v9663 = vunpack.c.h.b16 %v9185
    %v9664 = vunpack.c.l.b16 %v9186
    %v9665 = vunpack.c.h.b16 %v9186
    %v9666 = vunpack.c.l.b16 %v9187
    %v9667 = vunpack.c.h.b16 %v9187
    %v9668 = vunpack.c.l.b16 %v9188
    %v9669 = vunpack.c.h.b16 %v9188
    %v9670 = vunpack.c.l.b16 %v9189
    %v9671 = vunpack.c.h.b16 %v9189
    %v9672 = vunpack.c.l.b16 %v9190
    %v9673 = vunpack.c.h.b16 %v9190
    %v9674 = vunpack.c.l.b16 %v9191
    %v9675 = vunpack.c.h.b16 %v9191
    %v9676 = vunpack.c.l.b16 %v9192
    %v9677 = vunpack.c.h.b16 %v9192
    %v9678 = vunpack.c.l.b16 %v9193
    %v9679 = vunpack.c.h.b16 %v9193
    %v9680 = vunpack.c.l.b16 %v9194
    %v9681 = vunpack.c.h.b16 %v9194
    %v9682 = vunpack.c.l.b16 %v9195
    %v9683 = vunpack.c.h.b16 %v9195
    %v9684 = vunpack.c.l.b16 %v9196
    %v9685 = vunpack.c.h.b16 %v9196
    %v9686 = vunpack.c.l.b16 %v9197
    %v9687 = vunpack.c.h.b16 %v9197
    %v9688 = vunpack.c.l.b16 %v9198
    %v9689 = vunpack.c.h.b16 %v9198
    %v9690 = vunpack.c.l.b16 %v9199
    %v9691 = vunpack.c.h.b16 %v9199
    %v9692 = vunpack.c.l.b16 %v9200
    %v9693 = vunpack.c.h.b16 %v9200
    %v9694 = vunpack.c.l.b16 %v9201
    %v9695 = vunpack.c.h.b16 %v9201
    %v9696 = vunpack.c.l.b16 %v9202
    %v9697 = vunpack.c.h.b16 %v9202
    %v9698 = vunpack.c.l.b16 %v9203
    %v9699 = vunpack.c.h.b16 %v9203
    %v9700 = vunpack.c.l.b16 %v9204
    %v9701 = vunpack.c.h.b16 %v9204
    %v9702 = vunpack.c.l.b16 %v9205
    %v9703 = vunpack.c.h.b16 %v9205
    %v9704 = vunpack.c.l.b16 %v9206
    %v9705 = vunpack.c.h.b16 %v9206
    %v9706 = vunpack.c.l.b16 %v9207
    %v9707 = vunpack.c.h.b16 %v9207
    %v9708 = vunpack.c.l.b16 %v9208
    %v9709 = vunpack.c.h.b16 %v9208
    %v9710 = vunpack.c.l.b16 %v9209
    %v9711 = vunpack.c.h.b16 %v9209
    %v9712 = vunpack.c.l.b16 %v9210
    %v9713 = vunpack.c.h.b16 %v9210
    %v9714 = vunpack.c.l.b16 %v9211
    %v9715 = vunpack.c.h.b16 %v9211
    %v9716 = vunpack.c.l.b16 %v9212
    %v9717 = vunpack.c.h.b16 %v9212
    %v9718 = vunpack.c.l.b16 %v9213
    %v9719 = vunpack.c.h.b16 %v9213
    %v9720 = vunpack.c.l.b16 %v9214
    %v9721 = vunpack.c.h.b16 %v9214
    %v9722 = vunpack.c.l.b16 %v9215
    %v9723 = vunpack.c.h.b16 %v9215
    %v9724 = vunpack.c.l.b16 %v9216
    %v9725 = vunpack.c.h.b16 %v9216
    %v9726 = vunpack.c.l.b16 %v9217
    %v9727 = vunpack.c.h.b16 %v9217
    %v9728 = vunpack.c.l.b16 %v9218
    %v9729 = vunpack.c.h.b16 %v9218
    %v9730 = vunpack.c.l.b16 %v9219
    %v9731 = vunpack.c.h.b16 %v9219
    %v9732 = vunpack.c.l.b16 %v9220
    %v9733 = vunpack.c.h.b16 %v9220
    %v9734 = vunpack.c.l.b16 %v9221
    %v9735 = vunpack.c.h.b16 %v9221
    %v9736 = vunpack.c.l.b16 %v9222
    %v9737 = vunpack.c.h.b16 %v9222
    %v9738 = vunpack.c.l.b16 %v9223
    %v9739 = vunpack.c.h.b16 %v9223
    %v9740 = vunpack.c.l.b16 %v9224
    %v9741 = vunpack.c.h.b16 %v9224
    %v9742 = vunpack.c.l.b16 %v9225
    %v9743 = vunpack.c.h.b16 %v9225
    %v9744 = vunpack.c.l.b16 %v9226
    %v9745 = vunpack.c.h.b16 %v9226
    %v9746 = vunpack.c.l.b16 %v9227
    %v9747 = vunpack.c.h.b16 %v9227
    %v9748 = vunpack.c.l.b16 %v9228
    %v9749 = vunpack.c.h.b16 %v9228
    %v9750 = vunpack.c.l.b16 %v9229
    %v9751 = vunpack.c.h.b16 %v9229
    %v9752 = vunpack.c.l.b16 %v9230
    %v9753 = vunpack.c.h.b16 %v9230
    %v9754 = vunpack.c.l.b16 %v9231
    %v9755 = vunpack.c.h.b16 %v9231
    %v9756 = vunpack.c.l.b16 %v9232
    %v9757 = vunpack.c.h.b16 %v9232
    %v9758 = vunpack.c.l.b16 %v9233
    %v9759 = vunpack.c.h.b16 %v9233
    %v9760 = vunpack.c.l.b16 %v9234
    %v9761 = vunpack.c.h.b16 %v9234
    %v9762 = vunpack.c.l.b16 %v9235
    %v9763 = vunpack.c.h.b16 %v9235
    %v9764 = vunpack.c.l.b16 %v9236
    %v9765 = vunpack.c.h.b16 %v9236
    %v9766 = vunpack.c.l.b16 %v9237
    %v9767 = vunpack.c.h.b16 %v9237
    %v9768 = vunpack.c.l.b16 %v9238
    %v9769 = vunpack.c.h.b16 %v9238
    %v9770 = vunpack.c.l.b16 %v9239
    %v9771 = vunpack.c.h.b16 %v9239
    %v9772 = vunpack.c.l.b16 %v9240
    %v9773 = vunpack.c.h.b16 %v9240
    %v9774 = vunpack.c.l.b16 %v9241
    %v9775 = vunpack.c.h.b16 %v9241
    %v9776 = vunpack.c.l.b16 %v9242
    %v9777 = vunpack.c.h.b16 %v9242
    %v9778 = vunpack.c.l.b16 %v9243
    %v9779 = vunpack.c.h.b16 %v9243
    %v9780 = vunpack.c.l.b16 %v9244
    %v9781 = vunpack.c.h.b16 %v9244
    %v9782 = vunpack.c.l.b16 %v9245
    %v9783 = vunpack.c.h.b16 %v9245
    %v9784 = vunpack.c.l.b16 %v9246
    %v9785 = vunpack.c.h.b16 %v9246
    %v9786 = vunpack.c.l.b16 %v9247
    %v9787 = vunpack.c.h.b16 %v9247
    %v9788 = vunpack.c.l.b16 %v9248
    %v9789 = vunpack.c.h.b16 %v9248
    %v9790 = vunpack.c.l.b16 %v9249
    %v9791 = vunpack.c.h.b16 %v9249
    %v9792 = vunpack.c.l.b16 %v9250
    %v9793 = vunpack.c.h.b16 %v9250
    %v9794 = vunpack.c.l.b16 %v9251
    %v9795 = vunpack.c.h.b16 %v9251
    %v9796 = vunpack.c.l.b16 %v9252
    %v9797 = vunpack.c.h.b16 %v9252
    %v9798 = vunpack.c.l.b16 %v9253
    %v9799 = vunpack.c.h.b16 %v9253
    %v9800 = vunpack.c.l.b16 %v9254
    %v9801 = vunpack.c.h.b16 %v9254
    %v9802 = vunpack.c.l.b16 %v9255
    %v9803 = vunpack.c.h.b16 %v9255
    %v9804 = vunpack.c.l.b16 %v9256
    %v9805 = vunpack.c.h.b16 %v9256
    %v9806 = vunpack.c.l.b16 %v9257
    %v9807 = vunpack.c.h.b16 %v9257
    %v9808 = vunpack.c.l.b16 %v9258
    %v9809 = vunpack.c.h.b16 %v9258
    %v9810 = vunpack.c.l.b16 %v9259
    %v9811 = vunpack.c.h.b16 %v9259
    %v9812 = vunpack.c.l.b16 %v9260
    %v9813 = vunpack.c.h.b16 %v9260
    %v9814 = vunpack.c.l.b16 %v9261
    %v9815 = vunpack.c.h.b16 %v9261
    %v9816 = vunpack.c.l.b16 %v9262
    %v9817 = vunpack.c.h.b16 %v9262
    %v9818 = vunpack.c.l.b16 %v9263
    %v9819 = vunpack.c.h.b16 %v9263
    %v9820 = vunpack.c.l.b16 %v9264
    %v9821 = vunpack.c.h.b16 %v9264
    %v9822 = vunpack.c.l.b16 %v9265
    %v9823 = vunpack.c.h.b16 %v9265
    %v9824 = vunpack.c.l.b16 %v9266
    %v9825 = vunpack.c.h.b16 %v9266
    %v9826 = vunpack.c.l.b16 %v9267
    %v9827 = vunpack.c.h.b16 %v9267
    %v9828 = vunpack.c.l.b16 %v9268
    %v9829 = vunpack.c.h.b16 %v9268
    %v9830 = vunpack.c.l.b16 %v9269
    %v9831 = vunpack.c.h.b16 %v9269
    %v9832 = vunpack.c.l.b16 %v9270
    %v9833 = vunpack.c.h.b16 %v9270
    %v9834 = vunpack.c.l.b16 %v9271
    %v9835 = vunpack.c.h.b16 %v9271
    %v9836 = vunpack.c.l.b16 %v9272
    %v9837 = vunpack.c.h.b16 %v9272
    %v9838 = vunpack.c.l.b16 %v9273
    %v9839 = vunpack.c.h.b16 %v9273
    %v9840 = vunpack.c.l.b16 %v9274
    %v9841 = vunpack.c.h.b16 %v9274
    %v9842 = vunpack.c.l.b16 %v9275
    %v9843 = vunpack.c.h.b16 %v9275
    %v9844 = vunpack.c.l.b16 %v9276
    %v9845 = vunpack.c.h.b16 %v9276
    %v9846 = vunpack.c.l.b16 %v9277
    %v9847 = vunpack.c.h.b16 %v9277
    %v9848 = vunpack.c.l.b16 %v9278
    %v9849 = vunpack.c.h.b16 %v9278
    %v9850 = vunpack.c.l.b16 %v9279
    %v9851 = vunpack.c.h.b16 %v9279
    %v9852 = vunpack.c.l.b16 %v9280
    %v9853 = vunpack.c.h.b16 %v9280
    %v9854 = vunpack.c.l.b16 %v9281
    %v9855 = vunpack.c.h.b16 %v9281
    %v9856 = vunpack.c.l.b16 %v9282
    %v9857 = vunpack.c.h.b16 %v9282
    %v9858 = vunpack.c.l.b16 %v9283
    %v9859 = vunpack.c.h.b16 %v9283
    %v9860 = vunpack.c.l.b16 %v9284
    %v9861 = vunpack.c.h.b16 %v9284
    %v9862 = vunpack.c.l.b16 %v9285
    %v9863 = vunpack.c.h.b16 %v9285
    %v9864 = vunpack.c.l.b16 %v9286
    %v9865 = vunpack.c.h.b16 %v9286
    %v9866 = vunpack.c.l.b16 %v9287
    %v9867 = vunpack.c.h.b16 %v9287
    %v9868 = vunpack.c.l.b16 %v9288
    %v9869 = vunpack.c.h.b16 %v9288
    %v9870 = vunpack.c.l.b16 %v9289
    %v9871 = vunpack.c.h.b16 %v9289
    %v9872 = vunpack.c.l.b16 %v9290
    %v9873 = vunpack.c.h.b16 %v9290
    %v9874 = vunpack.c.l.b16 %v9291
    %v9875 = vunpack.c.h.b16 %v9291
    %v9876 = vunpack.c.l.b16 %v9292
    %v9877 = vunpack.c.h.b16 %v9292
    %v9878 = vunpack.c.l.b16 %v9293
    %v9879 = vunpack.c.h.b16 %v9293
    %v9880 = vunpack.c.l.b16 %v9294
    %v9881 = vunpack.c.h.b16 %v9294
    %v9882 = vunpack.c.l.b16 %v9295
    %v9883 = vunpack.c.h.b16 %v9295
    %v9884 = vunpack.c.l.b16 %v9296
    %v9885 = vunpack.c.h.b16 %v9296
    %v9886 = vunpack.c.l.b16 %v9297
    %v9887 = vunpack.c.h.b16 %v9297
    %v9888 = vunpack.c.l.b16 %v9298
    %v9889 = vunpack.c.h.b16 %v9298
    %v9890 = vunpack.c.l.b16 %v9299
    %v9891 = vunpack.c.h.b16 %v9299
    %v9892 = vunpack.c.l.b16 %v9300
    %v9893 = vunpack.c.h.b16 %v9300
    %v9894 = vunpack.c.l.b16 %v9301
    %v9895 = vunpack.c.h.b16 %v9301
    %v9896 = vunpack.c.l.b16 %v9302
    %v9897 = vunpack.c.h.b16 %v9302
    %v9898 = vunpack.c.l.b16 %v9303
    %v9899 = vunpack.c.h.b16 %v9303
    %v9900 = vunpack.c.l.b16 %v9304
    %v9901 = vunpack.c.h.b16 %v9304
    %v9902 = vunpack.c.l.b16 %v9305
    %v9903 = vunpack.c.h.b16 %v9305
    %v9904 = vpack.c.b16 %v9524, %v9520
    %v9905 = vpack.c.b16 %v9525, %v9521
    %v9906 = vpack.c.b16 %v9526, %v9522
    %v9907 = vpack.c.b16 %v9527, %v9523
    %v9908 = vpack.c.b16 %v9532, %v9528
    %v9909 = vpack.c.b16 %v9533, %v9529
    %v9910 = vpack.c.b16 %v9534, %v9530
    %v9911 = vpack.c.b16 %v9535, %v9531
    %v9912 = vpack.c.b16 %v9540, %v9536
    %v9913 = vpack.c.b16 %v9541, %v9537
    %v9914 = vpack.c.b16 %v9542, %v9538
    %v9915 = vpack.c.b16 %v9543, %v9539
    %v9916 = vpack.c.b16 %v9548, %v9544
    %v9917 = vpack.c.b16 %v9549, %v9545
    %v9918 = vpack.c.b16 %v9550, %v9546
    %v9919 = vpack.c.b16 %v9551, %v9547
    %v9920 = vpack.c.b16 %v9556, %v9552
    %v9921 = vpack.c.b16 %v9557, %v9553
    %v9922 = vpack.c.b16 %v9558, %v9554
    %v9923 = vpack.c.b16 %v9559, %v9555
    %v9924 = vpack.c.b16 %v9564, %v9560
    %v9925 = vpack.c.b16 %v9565, %v9561
    %v9926 = vpack.c.b16 %v9566, %v9562
    %v9927 = vpack.c.b16 %v9567, %v9563
    %v9928 = vpack.c.b16 %v9572, %v9568
    %v9929 = vpack.c.b16 %v9573, %v9569
    %v9930 = vpack.c.b16 %v9574, %v9570
    %v9931 = vpack.c.b16 %v9575, %v9571
    %v9932 = vpack.c.b16 %v9580, %v9576
    %v9933 = vpack.c.b16 %v9581, %v9577
    %v9934 = vpack.c.b16 %v9582, %v9578
    %v9935 = vpack.c.b16 %v9583, %v9579
    %v9936 = vpack.c.b16 %v9588, %v9584
    %v9937 = vpack.c.b16 %v9589, %v9585
    %v9938 = vpack.c.b16 %v9590, %v9586
    %v9939 = vpack.c.b16 %v9591, %v9587
    %v9940 = vpack.c.b16 %v9596, %v9592
    %v9941 = vpack.c.b16 %v9597, %v9593
    %v9942 = vpack.c.b16 %v9598, %v9594
    %v9943 = vpack.c.b16 %v9599, %v9595
    %v9944 = vpack.c.b16 %v9604, %v9600
    %v9945 = vpack.c.b16 %v9605, %v9601
    %v9946 = vpack.c.b16 %v9606, %v9602
    %v9947 = vpack.c.b16 %v9607, %v9603
    %v9948 = vpack.c.b16 %v9612, %v9608
    %v9949 = vpack.c.b16 %v9613, %v9609
    %v9950 = vpack.c.b16 %v9614, %v9610
    %v9951 = vpack.c.b16 %v9615, %v9611
    %v9952 = vpack.c.b16 %v9620, %v9616
    %v9953 = vpack.c.b16 %v9621, %v9617
    %v9954 = vpack.c.b16 %v9622, %v9618
    %v9955 = vpack.c.b16 %v9623, %v9619
    %v9956 = vpack.c.b16 %v9628, %v9624
    %v9957 = vpack.c.b16 %v9629, %v9625
    %v9958 = vpack.c.b16 %v9630, %v9626
    %v9959 = vpack.c.b16 %v9631, %v9627
    %v9960 = vpack.c.b16 %v9636, %v9632
    %v9961 = vpack.c.b16 %v9637, %v9633
    %v9962 = vpack.c.b16 %v9638, %v9634
    %v9963 = vpack.c.b16 %v9639, %v9635
    %v9964 = vpack.c.b16 %v9644, %v9640
    %v9965 = vpack.c.b16 %v9645, %v9641
    %v9966 = vpack.c.b16 %v9646, %v9642
    %v9967 = vpack.c.b16 %v9647, %v9643
    %v9968 = vpack.c.b16 %v9652, %v9648
    %v9969 = vpack.c.b16 %v9653, %v9649
    %v9970 = vpack.c.b16 %v9654, %v9650
    %v9971 = vpack.c.b16 %v9655, %v9651
    %v9972 = vpack.c.b16 %v9660, %v9656
    %v9973 = vpack.c.b16 %v9661, %v9657
    %v9974 = vpack.c.b16 %v9662, %v9658
    %v9975 = vpack.c.b16 %v9663, %v9659
    %v9976 = vpack.c.b16 %v9668, %v9664
    %v9977 = vpack.c.b16 %v9669, %v9665
    %v9978 = vpack.c.b16 %v9670, %v9666
    %v9979 = vpack.c.b16 %v9671, %v9667
    %v9980 = vpack.c.b16 %v9676, %v9672
    %v9981 = vpack.c.b16 %v9677, %v9673
    %v9982 = vpack.c.b16 %v9678, %v9674
    %v9983 = vpack.c.b16 %v9679, %v9675
    %v9984 = vpack.c.b16 %v9684, %v9680
    %v9985 = vpack.c.b16 %v9685, %v9681
    %v9986 = vpack.c.b16 %v9686, %v9682
    %v9987 = vpack.c.b16 %v9687, %v9683
    %v9988 = vpack.c.b16 %v9692, %v9688
    %v9989 = vpack.c.b16 %v9693, %v9689
    %v9990 = vpack.c.b16 %v9694, %v9690
    %v9991 = vpack.c.b16 %v9695, %v9691
    %v9992 = vpack.c.b16 %v9700, %v9696
    %v9993 = vpack.c.b16 %v9701, %v9697
    %v9994 = vpack.c.b16 %v9702, %v9698
    %v9995 = vpack.c.b16 %v9703, %v9699
    %v9996 = vpack.c.b16 %v9708, %v9704
    %v9997 = vpack.c.b16 %v9709, %v9705
    %v9998 = vpack.c.b16 %v9710, %v9706
    %v9999 = vpack.c.b16 %v9711, %v9707
    %v10000 = vpack.c.b16 %v9716, %v9712
    %v10001 = vpack.c.b16 %v9717, %v9713
    %v10002 = vpack.c.b16 %v9718, %v9714
    %v10003 = vpack.c.b16 %v9719, %v9715
    %v10004 = vpack.c.b16 %v9724, %v9720
    %v10005 = vpack.c.b16 %v9725, %v9721
    %v10006 = vpack.c.b16 %v9726, %v9722
    %v10007 = vpack.c.b16 %v9727, %v9723
    %v10008 = vpack.c.b16 %v9732, %v9728
    %v10009 = vpack.c.b16 %v9733, %v9729
    %v10010 = vpack.c.b16 %v9734, %v9730
    %v10011 = vpack.c.b16 %v9735, %v9731
    %v10012 = vpack.c.b16 %v9740, %v9736
    %v10013 = vpack.c.b16 %v9741, %v9737
    %v10014 = vpack.c.b16 %v9742, %v9738
    %v10015 = vpack.c.b16 %v9743, %v9739
    %v10016 = vpack.c.b16 %v9748, %v9744
    %v10017 = vpack.c.b16 %v9749, %v9745
    %v10018 = vpack.c.b16 %v9750, %v9746
    %v10019 = vpack.c.b16 %v9751, %v9747
    %v10020 = vpack.c.b16 %v9756, %v9752
    %v10021 = vpack.c.b16 %v9757, %v9753
    %v10022 = vpack.c.b16 %v9758, %v9754
    %v10023 = vpack.c.b16 %v9759, %v9755
    %v10024 = vpack.c.b16 %v9764, %v9760
    %v10025 = vpack.c.b16 %v9765, %v9761
    %v10026 = vpack.c.b16 %v9766, %v9762
    %v10027 = vpack.c.b16 %v9767, %v9763
    %v10028 = vpack.c.b16 %v9772, %v9768
    %v10029 = vpack.c.b16 %v9773, %v9769
    %v10030 = vpack.c.b16 %v9774, %v9770
    %v10031 = vpack.c.b16 %v9775, %v9771
    %v10032 = vpack.c.b16 %v9780, %v9776
    %v10033 = vpack.c.b16 %v9781, %v9777
    %v10034 = vpack.c.b16 %v9782, %v9778
    %v10035 = vpack.c.b16 %v9783, %v9779
    %v10036 = vpack.c.b16 %v9788, %v9784
    %v10037 = vpack.c.b16 %v9789, %v9785
    %v10038 = vpack.c.b16 %v9790, %v9786
    %v10039 = vpack.c.b16 %v9791, %v9787
    %v10040 = vpack.c.b16 %v9796, %v9792
    %v10041 = vpack.c.b16 %v9797, %v9793
    %v10042 = vpack.c.b16 %v9798, %v9794
    %v10043 = vpack.c.b16 %v9799, %v9795
    %v10044 = vpack.c.b16 %v9804, %v9800
    %v10045 = vpack.c.b16 %v9805, %v9801
    %v10046 = vpack.c.b16 %v9806, %v9802
    %v10047 = vpack.c.b16 %v9807, %v9803
    %v10048 = vpack.c.b16 %v9812, %v9808
    %v10049 = vpack.c.b16 %v9813, %v9809
    %v10050 = vpack.c.b16 %v9814, %v9810
    %v10051 = vpack.c.b16 %v9815, %v9811
    %v10052 = vpack.c.b16 %v9820, %v9816
    %v10053 = vpack.c.b16 %v9821, %v9817
    %v10054 = vpack.c.b16 %v9822, %v9818
    %v10055 = vpack.c.b16 %v9823, %v9819
    %v10056 = vpack.c.b16 %v9828, %v9824
    %v10057 = vpack.c.b16 %v9829, %v9825
    %v10058 = vpack.c.b16 %v9830, %v9826
    %v10059 = vpack.c.b16 %v9831, %v9827
    %v10060 = vpack.c.b16 %v9836, %v9832
    %v10061 = vpack.c.b16 %v9837, %v9833
    %v10062 = vpack.c.b16 %v9838, %v9834
    %v10063 = vpack.c.b16 %v9839, %v9835
    %v10064 = vpack.c.b16 %v9844, %v9840
    %v10065 = vpack.c.b16 %v9845, %v9841
    %v10066 = vpack.c.b16 %v9846, %v9842
    %v10067 = vpack.c.b16 %v9847, %v9843
    %v10068 = vpack.c.b16 %v9852, %v9848
    %v10069 = vpack.c.b16 %v9853, %v9849
    %v10070 = vpack.c.b16 %v9854, %v9850
    %v10071 = vpack.c.b16 %v9855, %v9851
    %v10072 = vpack.c.b16 %v9860, %v9856
    %v10073 = vpack.c.b16 %v9861, %v9857
    %v10074 = vpack.c.b16 %v9862, %v9858
    %v10075 = vpack.c.b16 %v9863, %v9859
    %v10076 = vpack.c.b16 %v9868, %v9864
    %v10077 = vpack.c.b16 %v9869, %v9865
    %v10078 = vpack.c.b16 %v9870, %v9866
    %v10079 = vpack.c.b16 %v9871, %v9867
    %v10080 = vpack.c.b16 %v9876, %v9872
    %v10081 = vpack.c.b16 %v9877, %v9873
    %v10082 = vpack.c.b16 %v9878, %v9874
    %v10083 = vpack.c.b16 %v9879, %v9875
    %v10084 = vpack.c.b16 %v9884, %v9880
    %v10085 = vpack.c.b16 %v9885, %v9881
    %v10086 = vpack.c.b16 %v9886, %v9882
    %v10087 = vpack.c.b16 %v9887, %v9883
    %v10088 = vpack.c.b16 %v9892, %v9888
    %v10089 = vpack.c.b16 %v9893, %v9889
    %v10090 = vpack.c.b16 %v9894, %v9890
    %v10091 = vpack.c.b16 %v9895, %v9891
    %v10092 = vpack.c.b16 %v9900, %v9896
    %v10093 = vpack.c.b16 %v9901, %v9897
    %v10094 = vpack.c.b16 %v9902, %v9898
    %v10095 = vpack.c.b16 %v9903, %v9899
    %10288 = vmatprep.subr.bf16.mxu0 %v9905
    %10289 = vmatpush1.bf16.msra.mxu0 %v9904
    %10290 = vmatprep.subr.bf16.mxu0 %v9909
    %10291 = vmatpush1.bf16.msra.mxu0 %v9908
    %10292 = vmatprep.subr.bf16.mxu0 %v9913
    %10293 = vmatpush1.bf16.msra.mxu0 %v9912
    %10294 = vmatprep.subr.bf16.mxu0 %v9917
    %10295 = vmatpush1.bf16.msra.mxu0 %v9916
    %10296 = vmatprep.subr.bf16.mxu0 %v9921
    %10297 = vmatpush1.bf16.msra.mxu0 %v9920
    %10298 = vmatprep.subr.bf16.mxu0 %v9925
    %10299 = vmatpush1.bf16.msra.mxu0 %v9924
    %10300 = vmatprep.subr.bf16.mxu0 %v9929
    %10301 = vmatpush1.bf16.msra.mxu0 %v9928
    %10302 = vmatprep.subr.bf16.mxu0 %v9933
    %10303 = vmatpush1.bf16.msra.mxu0 %v9932
    %10304 = vmatprep.subr.bf16.mxu0 %v9937
    %10305 = vmatpush1.bf16.msra.mxu0 %v9936
    %10306 = vmatprep.subr.bf16.mxu0 %v9941
    %10307 = vmatpush1.bf16.msra.mxu0 %v9940
    %10308 = vmatprep.subr.bf16.mxu0 %v9945
    %10309 = vmatpush1.bf16.msra.mxu0 %v9944
    %10310 = vmatprep.subr.bf16.mxu0 %v9949
    %10311 = vmatpush1.bf16.msra.mxu0 %v9948
    %10312 = vmatprep.subr.bf16.mxu0 %v9953
    %10313 = vmatpush1.bf16.msra.mxu0 %v9952
    %10314 = vmatprep.subr.bf16.mxu0 %v9957
    %10315 = vmatpush1.bf16.msra.mxu0 %v9956
    %10316 = vmatprep.subr.bf16.mxu0 %v9961
    %10317 = vmatpush1.bf16.msra.mxu0 %v9960
    %10318 = vmatprep.subr.bf16.mxu0 %v9965
    %10319 = vmatpush1.bf16.msra.mxu0 %v9964
    %10320 = vmatprep.mubr.bf16.mxu0 %v9109
    %10321 = vmatmul.mubr.bf16.gmra.mrb[0].mxu0 %v9108
    %v10322 = vpop.f32.mrb[0].mxu0
    %v10323 = vadd.f32 %v9311, %v10322
    %v10324 = vpop.f32.mrb[0].mxu0
    %v10325 = vadd.f32 %v9315, %v10324
    %v10326 = vpop.f32.mrb[0].mxu0
    %v10327 = vpop.f32.mrb[0].mxu0
    %10328 = vdwg.mxu0
    %10329 = vmatprep.subr.bf16.mxu0 %v9969
    %10330 = vmatpush1.bf16.msra.mxu0 %v9968
    %10331 = vmatprep.subr.bf16.mxu0 %v9973
    %10332 = vmatpush1.bf16.msra.mxu0 %v9972
    %10333 = vmatprep.subr.bf16.mxu0 %v9977
    %10334 = vmatpush1.bf16.msra.mxu0 %v9976
    %10335 = vmatprep.subr.bf16.mxu0 %v9981
    %10336 = vmatpush1.bf16.msra.mxu0 %v9980
    %10337 = vmatprep.subr.bf16.mxu0 %v9985
    %10338 = vmatpush1.bf16.msra.mxu0 %v9984
    %10339 = vmatprep.subr.bf16.mxu0 %v9989
    %10340 = vmatpush1.bf16.msra.mxu0 %v9988
    %10341 = vmatprep.subr.bf16.mxu0 %v9993
    %10342 = vmatpush1.bf16.msra.mxu0 %v9992
    %10343 = vmatprep.subr.bf16.mxu0 %v9997
    %10344 = vmatpush1.bf16.msra.mxu0 %v9996
    %10345 = vmatprep.subr.bf16.mxu0 %v10001
    %10346 = vmatpush1.bf16.msra.mxu0 %v10000
    %10347 = vmatprep.subr.bf16.mxu0 %v10005
    %10348 = vmatpush1.bf16.msra.mxu0 %v10004
    %10349 = vmatprep.subr.bf16.mxu0 %v10009
    %10350 = vmatpush1.bf16.msra.mxu0 %v10008
    %10351 = vmatprep.subr.bf16.mxu0 %v10013
    %10352 = vmatpush1.bf16.msra.mxu0 %v10012
    %10353 = vmatprep.subr.bf16.mxu0 %v10017
    %10354 = vmatpush1.bf16.msra.mxu0 %v10016
    %10355 = vmatprep.subr.bf16.mxu0 %v10021
    %10356 = vmatpush1.bf16.msra.mxu0 %v10020
    %10357 = vmatprep.subr.bf16.mxu0 %v10025
    %10358 = vmatpush1.bf16.msra.mxu0 %v10024
    %10359 = vmatprep.subr.bf16.mxu0 %v10029
    %10360 = vmatpush1.bf16.msra.mxu0 %v10028
    %10361 = vmatprep.mubr.bf16.mxu0 %v9111
    %10362 = vmatmul.mubr.bf16.gmra.mrb[0].mxu0 %v9110
    %v10363 = vpop.f32.mrb[0].mxu0
    %v10364 = vadd.f32 %v10323, %v10363
    %v10365 = vpop.f32.mrb[0].mxu0
    %v10366 = vadd.f32 %v10325, %v10365
    %v10367 = vpop.f32.mrb[0].mxu0
    %v10368 = vpop.f32.mrb[0].mxu0
    %10369 = vdwg.mxu0
    %10370 = vmatprep.subr.bf16.mxu0 %v10033
    %10371 = vmatpush1.bf16.msra.mxu0 %v10032
    %10372 = vmatprep.subr.bf16.mxu0 %v10037
    %10373 = vmatpush1.bf16.msra.mxu0 %v10036
    %10374 = vmatprep.subr.bf16.mxu0 %v10041
    %10375 = vmatpush1.bf16.msra.mxu0 %v10040
    %10376 = vmatprep.subr.bf16.mxu0 %v10045
    %10377 = vmatpush1.bf16.msra.mxu0 %v10044
    %10378 = vmatprep.subr.bf16.mxu0 %v10049
    %10379 = vmatpush1.bf16.msra.mxu0 %v10048
    %10380 = vmatprep.subr.bf16.mxu0 %v10053
    %10381 = vmatpush1.bf16.msra.mxu0 %v10052
    %10382 = vmatprep.subr.bf16.mxu0 %v10057
    %10383 = vmatpush1.bf16.msra.mxu0 %v10056
    %10384 = vmatprep.subr.bf16.mxu0 %v10061
    %10385 = vmatpush1.bf16.msra.mxu0 %v10060
    %10386 = vmatprep.subr.bf16.mxu0 %v10065
    %10387 = vmatpush1.bf16.msra.mxu0 %v10064
    %10388 = vmatprep.subr.bf16.mxu0 %v10069
    %10389 = vmatpush1.bf16.msra.mxu0 %v10068
    %10390 = vmatprep.subr.bf16.mxu0 %v10073
    %10391 = vmatpush1.bf16.msra.mxu0 %v10072
    %10392 = vmatprep.subr.bf16.mxu0 %v10077
    %10393 = vmatpush1.bf16.msra.mxu0 %v10076
    %10394 = vmatprep.subr.bf16.mxu0 %v10081
    %10395 = vmatpush1.bf16.msra.mxu0 %v10080
    %10396 = vmatprep.subr.bf16.mxu0 %v10085
    %10397 = vmatpush1.bf16.msra.mxu0 %v10084
    %10398 = vmatprep.subr.bf16.mxu0 %v10089
    %10399 = vmatpush1.bf16.msra.mxu0 %v10088
    %10400 = vmatprep.subr.bf16.mxu0 %v10093
    %10401 = vmatpush1.bf16.msra.mxu0 %v10092
    %10402 = vmatprep.mubr.bf16.mxu0 %v9113
    %10403 = vmatmul.mubr.bf16.gmra.mrb[0].mxu0 %v9112
    %v10404 = vpop.f32.mrb[0].mxu0
    %v10405 = vadd.f32 %v10364, %v10404
    %v10406 = vpop.f32.mrb[0].mxu0
    %v10407 = vadd.f32 %v10366, %v10406
    %v10408 = vpop.f32.mrb[0].mxu0
    %v10409 = vpop.f32.mrb[0].mxu0
    %10410 = vdwg.mxu0
    %10411 = vmatprep.subr.bf16.mxu0 %v9907
    %10412 = vmatpush1.bf16.msra.mxu0 %v9906
    %10413 = vmatprep.subr.bf16.mxu0 %v9911
    %10414 = vmatpush1.bf16.msra.mxu0 %v9910
    %10415 = vmatprep.subr.bf16.mxu0 %v9915
    %10416 = vmatpush1.bf16.msra.mxu0 %v9914
    %10417 = vmatprep.subr.bf16.mxu0 %v9919
    %10418 = vmatpush1.bf16.msra.mxu0 %v9918
    %10419 = vmatprep.subr.bf16.mxu0 %v9923
    %10420 = vmatpush1.bf16.msra.mxu0 %v9922
    %10421 = vmatprep.subr.bf16.mxu0 %v9927
    %10422 = vmatpush1.bf16.msra.mxu0 %v9926
    %10423 = vmatprep.subr.bf16.mxu0 %v9931
    %10424 = vmatpush1.bf16.msra.mxu0 %v9930
    %10425 = vmatprep.subr.bf16.mxu0 %v9935
    %10426 = vmatpush1.bf16.msra.mxu0 %v9934
    %10427 = vmatprep.subr.bf16.mxu0 %v9939
    %10428 = vmatpush1.bf16.msra.mxu0 %v9938
    %10429 = vmatprep.subr.bf16.mxu0 %v9943
    %10430 = vmatpush1.bf16.msra.mxu0 %v9942
    %10431 = vmatprep.subr.bf16.mxu0 %v9947
    %10432 = vmatpush1.bf16.msra.mxu0 %v9946
    %10433 = vmatprep.subr.bf16.mxu0 %v9951
    %10434 = vmatpush1.bf16.msra.mxu0 %v9950
    %10435 = vmatprep.subr.bf16.mxu0 %v9955
    %10436 = vmatpush1.bf16.msra.mxu0 %v9954
    %10437 = vmatprep.subr.bf16.mxu0 %v9959
    %10438 = vmatpush1.bf16.msra.mxu0 %v9958
    %10439 = vmatprep.subr.bf16.mxu0 %v9963
    %10440 = vmatpush1.bf16.msra.mxu0 %v9962
    %10441 = vmatprep.subr.bf16.mxu0 %v9967
    %10442 = vmatpush1.bf16.msra.mxu0 %v9966
    %10443 = vmatprep.mubr.bf16.mxu0 %v9109
    %10444 = vmatmul.mubr.bf16.gmra.mrb[0].mxu0 %v9108
    %v10445 = vpop.f32.mrb[0].mxu0
    %v10446 = vadd.f32 %v9319, %v10445
    %v10447 = vpop.f32.mrb[0].mxu0
    %v10448 = vadd.f32 %v9323, %v10447
    %v10449 = vpop.f32.mrb[0].mxu0
    %v10450 = vpop.f32.mrb[0].mxu0
    %10451 = vdwg.mxu0
    %10452 = vmatprep.subr.bf16.mxu0 %v9971
    %10453 = vmatpush1.bf16.msra.mxu0 %v9970
    %10454 = vmatprep.subr.bf16.mxu0 %v9975
    %10455 = vmatpush1.bf16.msra.mxu0 %v9974
    %10456 = vmatprep.subr.bf16.mxu0 %v9979
    %10457 = vmatpush1.bf16.msra.mxu0 %v9978
    %10458 = vmatprep.subr.bf16.mxu0 %v9983
    %10459 = vmatpush1.bf16.msra.mxu0 %v9982
    %10460 = vmatprep.subr.bf16.mxu0 %v9987
    %10461 = vmatpush1.bf16.msra.mxu0 %v9986
    %10462 = vmatprep.subr.bf16.mxu0 %v9991
    %10463 = vmatpush1.bf16.msra.mxu0 %v9990
    %10464 = vmatprep.subr.bf16.mxu0 %v9995
    %10465 = vmatpush1.bf16.msra.mxu0 %v9994
    %10466 = vmatprep.subr.bf16.mxu0 %v9999
    %10467 = vmatpush1.bf16.msra.mxu0 %v9998
    %10468 = vmatprep.subr.bf16.mxu0 %v10003
    %10469 = vmatpush1.bf16.msra.mxu0 %v10002
    %10470 = vmatprep.subr.bf16.mxu0 %v10007
    %10471 = vmatpush1.bf16.msra.mxu0 %v10006
    %10472 = vmatprep.subr.bf16.mxu0 %v10011
    %10473 = vmatpush1.bf16.msra.mxu0 %v10010
    %10474 = vmatprep.subr.bf16.mxu0 %v10015
    %10475 = vmatpush1.bf16.msra.mxu0 %v10014
    %10476 = vmatprep.subr.bf16.mxu0 %v10019
    %10477 = vmatpush1.bf16.msra.mxu0 %v10018
    %10478 = vmatprep.subr.bf16.mxu0 %v10023
    %10479 = vmatpush1.bf16.msra.mxu0 %v10022
    %10480 = vmatprep.subr.bf16.mxu0 %v10027
    %10481 = vmatpush1.bf16.msra.mxu0 %v10026
    %10482 = vmatprep.subr.bf16.mxu0 %v10031
    %10483 = vmatpush1.bf16.msra.mxu0 %v10030
    %10484 = vmatprep.mubr.bf16.mxu0 %v9111
    %10485 = vmatmul.mubr.bf16.gmra.mrb[0].mxu0 %v9110
    %v10486 = vpop.f32.mrb[0].mxu0
    %v10487 = vadd.f32 %v10446, %v10486
    %v10488 = vpop.f32.mrb[0].mxu0
    %v10489 = vadd.f32 %v10448, %v10488
    %v10490 = vpop.f32.mrb[0].mxu0
    %v10491 = vpop.f32.mrb[0].mxu0
    %10492 = vdwg.mxu0
    %10493 = vmatprep.subr.bf16.mxu0 %v10035
    %10494 = vmatpush1.bf16.msra.mxu0 %v10034
    %10495 = vmatprep.subr.bf16.mxu0 %v10039
    %10496 = vmatpush1.bf16.msra.mxu0 %v10038
    %10497 = vmatprep.subr.bf16.mxu0 %v10043
    %10498 = vmatpush1.bf16.msra.mxu0 %v10042
    %10499 = vmatprep.subr.bf16.mxu0 %v10047
    %10500 = vmatpush1.bf16.msra.mxu0 %v10046
    %10501 = vmatprep.subr.bf16.mxu0 %v10051
    %10502 = vmatpush1.bf16.msra.mxu0 %v10050
    %10503 = vmatprep.subr.bf16.mxu0 %v10055
    %10504 = vmatpush1.bf16.msra.mxu0 %v10054
    %10505 = vmatprep.subr.bf16.mxu0 %v10059
    %10506 = vmatpush1.bf16.msra.mxu0 %v10058
    %10507 = vmatprep.subr.bf16.mxu0 %v10063
    %10508 = vmatpush1.bf16.msra.mxu0 %v10062
    %10509 = vmatprep.subr.bf16.mxu0 %v10067
    %10510 = vmatpush1.bf16.msra.mxu0 %v10066
    %10511 = vmatprep.subr.bf16.mxu0 %v10071
    %10512 = vmatpush1.bf16.msra.mxu0 %v10070
    %10513 = vmatprep.subr.bf16.mxu0 %v10075
    %10514 = vmatpush1.bf16.msra.mxu0 %v10074
    %10515 = vmatprep.subr.bf16.mxu0 %v10079
    %10516 = vmatpush1.bf16.msra.mxu0 %v10078
    %10517 = vmatprep.subr.bf16.mxu0 %v10083
    %10518 = vmatpush1.bf16.msra.mxu0 %v10082
    %10519 = vmatprep.subr.bf16.mxu0 %v10087
    %10520 = vmatpush1.bf16.msra.mxu0 %v10086
    %10521 = vmatprep.subr.bf16.mxu0 %v10091
    %10522 = vmatpush1.bf16.msra.mxu0 %v10090
    %10523 = vmatprep.subr.bf16.mxu0 %v10095
    %10524 = vmatpush1.bf16.msra.mxu0 %v10094
    %10525 = vmatprep.mubr.bf16.mxu0 %v9113
    %10526 = vmatmul.mubr.bf16.gmra.mrb[0].mxu0 %v9112
    %v10527 = vpop.f32.mrb[0].mxu0
    %v10528 = vadd.f32 %v10487, %v10527
    %v10529 = vpop.f32.mrb[0].mxu0
    %v10530 = vadd.f32 %v10489, %v10529
    %v10531 = vpop.f32.mrb[0].mxu0
    %v10532 = vpop.f32.mrb[0].mxu0
    %10533 = vdwg.mxu0
    %v10538 = vcombine.low %v10405, %v10407
    %v10539 = vcombine.low %v10528, %v10530
    %v10541 = vunpack.c.l.s4 1983009808
    %v10542 = vunpack.c.0.s8 %v10541
    %v10543 = vlaneseq
    %v10544 = vshrl.u32 %v10543, 7
    %v10545 = vsub.s32 %v10542, %v10544
    %v10546 = vrot.slane %v10538, %v10545
    %v10548 = vunpack.c.l.s4 1983009808
    %v10549 = vunpack.c.0.s8 %v10548
    %v10550 = vlaneseq
    %v10551 = vshrl.u32 %v10550, 7
    %v10552 = vsub.s32 %v10549, %v10551
    %v10553 = vrot.slane %v10539, %v10552
    %v10554 = vcombine.low %v10546, %v10553
    %10556 = vst [vmem:[#allocation2] sm:$0xff] %v10554
    // Predicated region
    $region94: #{_lambda_.1} parent=1 // pred_check
      _
    $region95: #{_lambda_.1} parent=1 // pred_check_branch
      %10558 = sbr.rel (0) target = $region97
    $region96: #{_lambda_.1} parent=1 // pred_region
      %s10560 = ssub.s32 128, 128
      %10561 = vsyncadd [#allocation3], %s10560
      %s10563 = sshll.u32 [#allocation2], 4
      %s10564 = int_to_ptr.vmem [resolvable:$true] %s10563
      %10566 = dma.vmem_to_hbm [thread:$0]  %s10564, 128, %s23, [#allocation3]
    $region97: #{_lambda_.1} parent=1 // pred_fallthru
      _
    // Predicated region
    $region98: #{_lambda_.1} parent=1 // pred_check
      _
    $region99: #{_lambda_.1} parent=1 // pred_check_branch
      %10568 = sbr.rel (0) target = $region101
    $region100: #{_lambda_.1} parent=1 // pred_region
      %10569 = dma.done [#allocation3], 128
    $region101: #{_lambda_.1} parent=1 // pred_fallthru
      _
    %10570 = vsyncpa [#allocation3], 1

</llo_original>
